<compile_context>
chip_gen: v6e
topology: v6e:2x2x1
jax: 0.10.0
libtpu: 0.0.40
codegen_flags: <defaults>
</compile_context>

<pallas_src>
import math
from functools import partial

import numpy as np

import jax
import jax.numpy as jnp
from jax.experimental import pallas as pl
from jax.experimental.pallas import tpu as pltpu

# ----------------------------- configuration --------------------------------
OBS_DIM = 4                          # obs_dim
D_MODEL = 32                         # embedding_dim == encoder_dim == hidden_dim
LAG = 8                              # encoded_len
PRED_LEN = 8
HORIZON = LAG + PRED_LEN             # decoder SSM horizon
ENCODER_LAYERS = 2
N_KERNELS_PRE = 8                    # n_kernels of the preprocess SSM
ENC_N_KERNELS = D_MODEL // N_KERNELS_PRE     # 4 companion kernels per encoder SSM
ENC_KERNEL_DIM = D_MODEL // 2                # 16 companion state dim
DEC_N_KERNELS = D_MODEL                      # 32 (one companion SSM per channel)
DEC_KERNEL_DIM = D_MODEL // 2                # 16
MAX_DIFF_ORDER = 4
MIN_AVG_WINDOW = 4
MAX_AVG_WINDOW = D_MODEL // 2                # 16

_MAX_BATCH_TILE = 128                # batch rows folded into one grid step (mult. of 8)


# ----------------------------- fused Pallas kernel --------------------------
def _gelu(x):
    # TODO(synk): torch.nn.GELU default is the exact erf form; the tanh
    # approximation is used because erf is not guaranteed to lower in Mosaic
    # (tanh runs on the EUP slot, essentially free here).
    c = math.sqrt(2.0 / math.pi)
    return 0.5 * x * (1.0 + jnp.tanh(c * (x + 0.044715 * x * x * x)))


def _conv_taps(toep_ref, base, u_btd, n_taps):
    """Per-channel causal conv in (batch, time, channel) layout.

    y[b, t, d] = sum_s toep[base + s, t, d] * u[b, s, d]
    (any skip connection is already folded onto the Toeplitz diagonal).
    Two interleaved partial accumulators break the dependent FMA chain so the
    4 VALU slots are not serialized on result latency.
    """
    acc0 = toep_ref[base + 0][None] * u_btd[:, 0:1, :]
    acc1 = toep_ref[base + 1][None] * u_btd[:, 1:2, :]
    for s in range(2, n_taps, 2):                       # static unroll, n_taps <= 8
        acc0 = acc0 + toep_ref[base + s][None] * u_btd[:, s:s + 1, :]
    for s in range(3, n_taps, 2):
        acc1 = acc1 + toep_ref[base + s][None] * u_btd[:, s:s + 1, :]
    return acc0 + acc1


def _spacetime_fused_kernel(u_ref, emb_w_ref, emb_b_ref,
                            pre_toep_ref, ssm_toep_ref,
                            mlp_w_ref, mlp_b_ref,
                            dec_toep_ref, out_w_ref, out_b_ref,
                            o_ref, *, tb, cdt, lane_dense):
    # ---- linear embedding: (TB*LAG, OBS) @ (OBS, D) + b -> (TB, LAG, D) ----
    # (K=4 is degenerate for the MXU, but with batch folding M = TB*LAG is large
    #  enough that the single pass is fully amortized and stays off the VPU.)
    u2 = u_ref[...].reshape(tb * LAG, OBS_DIM).astype(cdt)
    z2 = (jnp.dot(u2, emb_w_ref[...], preferred_element_type=jnp.float32)
          + emb_b_ref[...])
    z = z2.astype(cdt).reshape(tb, LAG, D_MODEL)

    # ---- encoder blocks: preprocess SSM -> companion SSM -> GELU MLP ----
    for layer in range(ENCODER_LAYERS):
        base = layer * LAG
        z_in = z
        zp = _conv_taps(pre_toep_ref, base, z_in, LAG)   # fixed residual kernels, no skip
        y = _conv_taps(ssm_toep_ref, base, zp, LAG)      # companion conv (+ skip on diag)
        # MLP: pre-activation GELU -> Linear, residual (dropout = identity in eval)
        y2 = y.reshape(tb * LAG, D_MODEL)
        m = (jnp.dot(_gelu(y2), mlp_w_ref[layer],
                     preferred_element_type=jnp.float32) + mlp_b_ref[layer])
        z = m.astype(cdt).reshape(tb, LAG, D_MODEL) + y + z_in   # MLP skip + block skip

    # ---- closed-loop companion decoder, forecast rows only ----
    # dec_toep is pre-sliced to (LAG source taps, PRED_LEN forecast rows, D):
    # the decoder input is z zero-padded past LAG and only rows LAG: are used.
    acc = _conv_taps(dec_toep_ref, 0, z, LAG)            # (TB, PRED_LEN, D)

    # ---- output head (pre-activation GELU -> Linear) ----
    if lane_dense:
        g = _gelu(acc.reshape(tb * PRED_LEN, D_MODEL))
        yh = (jnp.dot(g, out_w_ref[...], preferred_element_type=jnp.float32)
              + out_b_ref[...])                          # (TB*PRED_LEN, OBS), f32
        # lane-dense (TB, 32) store instead of 4-lane masked stores
        o_ref[...] = yh.reshape(tb, PRED_LEN * OBS_DIM)
    else:
        # Guaranteed-lowering fallback: same HBM layout, per-step 4-lane stores.
        for p in range(PRED_LEN):
            gp = _gelu(acc[:, p, :])
            yp = (jnp.dot(gp, out_w_ref[...], preferred_element_type=jnp.float32)
                  + out_b_ref[...])                      # (TB, OBS)
            o_ref[:, p * OBS_DIM:(p + 1) * OBS_DIM] = yp


# --------------------- SSM kernel construction (param glue) ------------------
def l1_normalize(x):
    """Per-row L1 normalization with a per-row guard (no inf/NaN on zero rows)."""
    n = jnp.sum(jnp.abs(x), axis=-1, keepdims=True)
    safe = jnp.maximum(n, 1e-4)
    return jnp.where(n > 1e-4, x / safe, x)


def companion_matrix(a):
    """a: (H, N) -> (H, N, N) companion: sub-diagonal ones, last column = a."""
    h, n = a.shape
    shift = jnp.zeros((n, n), jnp.float32).at[1:, :-1].set(jnp.eye(n - 1, dtype=jnp.float32))
    A = jnp.broadcast_to(shift, (h, n, n))
    return A.at[:, :, -1].add(a)


def krylov_kernel(A, b, c=None, length=1):
    """k[h, l] = c[h] @ A[h]^l @ b[h] (Krylov matrix if c is None)."""
    cols = [b]
    x = b
    for _ in range(length - 1):
        x = jnp.einsum('hij,hj->hi', A, x)
        cols.append(x)
    K = jnp.stack(cols, axis=-1)                      # (H, N, L)
    if c is None:
        return K
    return jnp.einsum('hn,hnl->hl', c, K)


def conv_toeplitz(k_dl, skip_d=None):
    """Per-channel causal conv kernels -> Toeplitz tap slabs.

    k_dl: (D, T) -> toep: (T, T, D) with toep[s, t, d] = k[d, t - s] (t >= s, else 0),
    i.e. y[t, d] = sum_s toep[s, t, d] * u[s, d] == causal conv(k, u).
    If skip_d is given, skip[d] * u[t, d] is folded onto the diagonal (s == t).
    Note: the companion SSM has BOTH the s=0 tap (k[0] = c.b) and the skip D*u,
    matching the reference y = conv(k, u) + D*u — not double counting.
    """
    d, t = k_dl.shape
    idx = jnp.arange(t)
    diff = idx[None, :] - idx[:, None]                          # diff[s, t] = t - s
    taps = jnp.take(k_dl, jnp.clip(diff, 0, t - 1), axis=1)     # (D, s, t) = k[d, t-s]
    taps = jnp.where((diff >= 0)[None, :, :], taps, 0.0)
    toep = jnp.transpose(taps, (1, 2, 0))                       # (s, t, D)
    if skip_d is not None:
        toep = toep + jnp.eye(t, dtype=jnp.float32)[:, :, None] * skip_d[None, None, :]
    return toep


def residual_preprocess_kernels(length):
    """Fixed differencing + moving-average-residual kernels: (N_KERNELS_PRE, length)."""
    ks = []
    for order in range(MAX_DIFF_ORDER):               # differencing orders 0..3
        k = np.zeros(length, np.float32)
        for j in range(order + 1):
            k[j] = ((-1.0) ** j) * math.comb(order, j)
        ks.append(k)
    n_ma = N_KERNELS_PRE - MAX_DIFF_ORDER
    windows = np.linspace(MIN_AVG_WINDOW, MAX_AVG_WINDOW, n_ma).round().astype(int)
    for w in windows:                                  # x_t - moving_avg_w(x)
        k = np.full(min(int(w), length), -1.0 / float(w), np.float32)
        k = np.pad(k, (0, length - k.shape[0]))
        k[0] += 1.0
        ks.append(k.astype(np.float32))
    return jnp.asarray(np.stack(ks))


# ----------------------------- parameters ------------------------------------
def init_params(key):
    def uniform_linear(k, fan_in, shape):
        lim = 1.0 / math.sqrt(fan_in)
        return jax.random.uniform(k, shape, jnp.float32, -lim, lim)

    keys = iter(jax.random.split(key, 64))
    p = {}
    p['emb_w'] = uniform_linear(next(keys), OBS_DIM, (OBS_DIM, D_MODEL))
    p['emb_b'] = uniform_linear(next(keys), OBS_DIM, (D_MODEL,))

    pre_k = residual_preprocess_kernels(LAG)                        # (8, LAG)
    pre_k_full = jnp.tile(pre_k, (D_MODEL // N_KERNELS_PRE, 1))     # channel d -> kernel d % 8

    scale = 0.1                                                     # keeps the synthetic SSM stable
    p['encoder'] = []
    for _ in range(ENCODER_LAYERS):
        blk = {
            'pre_kernel': pre_k_full,
            'a': scale * jax.random.normal(next(keys), (ENC_N_KERNELS, ENC_KERNEL_DIM), jnp.float32),
            'b': scale * jax.random.normal(next(keys), (ENC_N_KERNELS, ENC_KERNEL_DIM), jnp.float32),
            'c': scale * jax.random.normal(next(keys), (ENC_N_KERNELS, ENC_KERNEL_DIM), jnp.float32),
            'skip': jax.random.normal(next(keys), (D_MODEL,), jnp.float32),
            'mlp_w': uniform_linear(next(keys), D_MODEL, (D_MODEL, D_MODEL)),
            'mlp_b': uniform_linear(next(keys), D_MODEL, (D_MODEL,)),
        }
        p['encoder'].append(blk)

    p['decoder'] = {
        'a': scale * jax.random.normal(next(keys), (DEC_N_KERNELS, DEC_KERNEL_DIM), jnp.float32),
        'b': scale * jax.random.normal(next(keys), (DEC_N_KERNELS, DEC_KERNEL_DIM), jnp.float32),
        'c': scale * jax.random.normal(next(keys), (DEC_N_KERNELS, DEC_KERNEL_DIM), jnp.float32),
        'k': scale * jax.random.normal(next(keys), (DEC_N_KERNELS, DEC_KERNEL_DIM), jnp.float32),
    }

    p['out_w'] = uniform_linear(next(keys), D_MODEL, (D_MODEL, OBS_DIM))
    p['out_b'] = uniform_linear(next(keys), D_MODEL, (OBS_DIM,))
    return p


# ----------------------------- forward pass ----------------------------------
def _select_compute_dtype():
    """bf16 taps/activations on bf16-native VPUs (v6e / v7x); f32 on v5e and
    older, where bf16 elementwise math is emulated with converts."""
    try:
        kind = jax.devices()[0].device_kind.lower()
    except Exception:
        return jnp.float32
    if ('v6' in kind) or ('v7' in kind) or ('tpu7' in kind) or ('7x' in kind):
        return jnp.bfloat16
    return jnp.float32


def _pick_batch_tile(bsz):
    """Batch rows folded per grid step.  Multiple of 8 (sublane tile of the 2D
    output block); when the batch is large enough, keep >=2 grid steps so the
    'parallel' grid axis can shard across v7x's two TensorCores."""
    if bsz > _MAX_BATCH_TILE:
        return _MAX_BATCH_TILE
    if bsz >= 32:
        return ((bsz // 2) + 7) // 8 * 8
    return bsz


def spacetime_forward(params, dataset, *, lane_dense=True, force_f32=False):
    """dataset: (B, T, OBS_DIM) with T >= LAG (mirrors tsdata.dataset)."""
    u = dataset[:, :LAG]                                             # (B, LAG, OBS_DIM)
    bsz = u.shape[0]
    cdt = jnp.float32 if force_f32 else _select_compute_dtype()

    # --- parameter-side SSM kernel construction (data-independent, tiny) ---
    pre_toeps, ssm_toeps, mlp_ws, mlp_bs = [], [], [], []
    for blk in params['encoder']:
        pre_toeps.append(conv_toeplitz(blk['pre_kernel']))                    # (LAG, LAG, D)
        A = companion_matrix(l1_normalize(blk['a']))
        k_ssm = krylov_kernel(A, blk['b'], blk['c'], LAG)                     # (4, LAG)
        k_full = jnp.repeat(k_ssm, D_MODEL // k_ssm.shape[0], axis=0)         # channel c -> kernel c // 8
        ssm_toeps.append(conv_toeplitz(k_full, blk['skip']))                  # skip folded on diagonal
        mlp_ws.append(blk['mlp_w'])
        mlp_bs.append(blk['mlp_b'].reshape(1, D_MODEL))
    dec = params['decoder']
    A = companion_matrix(l1_normalize(dec['a']))
    A_bk = A + jnp.einsum('hi,hj->hij', dec['b'], dec['k'])                   # A + B K (closed loop)
    k_dec = krylov_kernel(A_bk, dec['b'], dec['c'], HORIZON)                  # (D, HORIZON)
    # only the first LAG source taps (decoder input zero-padded past LAG) and
    # only the PRED_LEN forecast target rows are ever used: pre-slice both.
    dec_toep = conv_toeplitz(k_dec)[:LAG, LAG:, :].astype(cdt)                # (LAG, PRED_LEN, D)

    pre_toep = jnp.concatenate(pre_toeps, axis=0).astype(cdt)                 # (E*LAG, LAG, D)
    ssm_toep = jnp.concatenate(ssm_toeps, axis=0).astype(cdt)                 # (E*LAG, LAG, D)
    mlp_w = jnp.stack(mlp_ws).astype(cdt)                                     # (E, D, D)
    mlp_b = jnp.stack(mlp_bs)                                                 # (E, 1, D)  f32
    emb_w = params['emb_w'].astype(cdt)
    emb_b = params['emb_b'].reshape(1, D_MODEL)                               # f32
    out_w = params['out_w'].astype(cdt)
    out_b = params['out_b'].reshape(1, OBS_DIM)                               # f32

    # --- batch folding ---
    tb = _pick_batch_tile(bsz)
    n_blocks = int(pl.cdiv(bsz, tb))
    b_pad = n_blocks * tb
    u_in = u if b_pad == bsz else jnp.pad(u, ((0, b_pad - bsz), (0, 0), (0, 0)))

    # --- explicit VMEM budget (double-buffered I/O + weights + live activations) ---
    itemsize = jnp.dtype(cdt).itemsize
    w_elems = (2 * ENCODER_LAYERS * LAG * LAG * D_MODEL        # pre + companion Toeplitz
               + LAG * PRED_LEN * D_MODEL                      # decoder Toeplitz
               + ENCODER_LAYERS * D_MODEL * D_MODEL            # mlp_w
               + 2 * OBS_DIM * D_MODEL)                        # emb_w + out_w
    weight_bytes = w_elems * itemsize + (ENCODER_LAYERS + 2) * D_MODEL * 4    # + f32 biases
    act_bytes = tb * LAG * D_MODEL * 4
    io_bytes = 2 * (tb * LAG * OBS_DIM * 4 + tb * PRED_LEN * OBS_DIM * 4)
    vmem_limit = int(min(max(32 * act_bytes + 2 * weight_bytes + io_bytes + (4 << 20),
                             4 << 20),
                         48 << 20))                            # stay under v7x's 64 MiB physical

    # TODO(synk): grid-invariant weight inputs could be single-buffered with
    # pipeline_mode=pl.Buffered(1); left default (costs <120 KB of VMEM here).
    kernel = partial(_spacetime_fused_kernel, tb=tb, cdt=cdt, lane_dense=lane_dense)

    # --- one fused kernel: whole forward stays VMEM-resident ---
    y_flat = pl.pallas_call(
        kernel,
        out_shape=jax.ShapeDtypeStruct((b_pad, PRED_LEN * OBS_DIM), jnp.float32),
        grid=(n_blocks,),
        in_specs=[
            pl.BlockSpec((tb, LAG, OBS_DIM), lambda b: (b, 0, 0)),                     # u (TB batches)
            pl.BlockSpec((OBS_DIM, D_MODEL), lambda b: (0, 0)),                        # emb_w
            pl.BlockSpec((1, D_MODEL), lambda b: (0, 0)),                              # emb_b
            pl.BlockSpec((ENCODER_LAYERS * LAG, LAG, D_MODEL), lambda b: (0, 0, 0)),   # preprocess toeplitz
            pl.BlockSpec((ENCODER_LAYERS * LAG, LAG, D_MODEL), lambda b: (0, 0, 0)),   # companion toeplitz
            pl.BlockSpec((ENCODER_LAYERS, D_MODEL, D_MODEL), lambda b: (0, 0, 0)),     # mlp_w
            pl.BlockSpec((ENCODER_LAYERS, 1, D_MODEL), lambda b: (0, 0, 0)),           # mlp_b
            pl.BlockSpec((LAG, PRED_LEN, D_MODEL), lambda b: (0, 0, 0)),               # decoder toeplitz
            pl.BlockSpec((D_MODEL, OBS_DIM), lambda b: (0, 0)),                        # out_w
            pl.BlockSpec((1, OBS_DIM), lambda b: (0, 0)),                              # out_b
        ],
        out_specs=pl.BlockSpec((tb, PRED_LEN * OBS_DIM), lambda b: (b, 0)),            # lane-dense output
        compiler_params=pltpu.CompilerParams(
            dimension_semantics=("parallel",),      # batch blocks across TCs on v7x
            vmem_limit_bytes=vmem_limit),
    )(u_in, emb_w, emb_b, pre_toep, ssm_toep, mlp_w, mlp_b, dec_toep, out_w, out_b)

    # un-flatten, drop batch padding, prepend the observed lag window
    y_pred = y_flat[:bsz].reshape(bsz, PRED_LEN, OBS_DIM)
    pred_x = jnp.concatenate([u, y_pred], axis=1)                    # (B, LAG+PRED, OBS_DIM)
    return {'pred_x': pred_x, 'z0_mean': None, 'z0_std': None}


# ----------------------------- main ------------------------------------------
if __name__ == "__main__":
    root = jax.random.PRNGKey(0)
    k_data, k_param = jax.random.split(root)
    batch, total_len = 2, 16
    dataset = jax.random.normal(k_data, (batch, total_len, OBS_DIM), jnp.float32)
    params = init_params(k_param)

    # Preferred config first; the fallbacks are functionally identical and only
    # relax optional lowering features (lane-merging reshape, bf16 packing) in
    # case this Mosaic version rejects them.
    configs = [
        dict(lane_dense=True, force_f32=False),
        dict(lane_dense=True, force_f32=True),
        dict(lane_dense=False, force_f32=False),
        dict(lane_dense=False, force_f32=True),
    ]
    pred, last_err = None, None
    for cfg in configs:
        try:
            fwd = jax.jit(partial(spacetime_forward, **cfg))
            out = fwd(params, dataset)
            pred = jax.block_until_ready(out['pred_x'])
            break
        except Exception as e:          # lowering not supported -> try next config
            last_err = e
    if pred is None:
        raise last_err

    assert pred.shape == (batch, LAG + PRED_LEN, OBS_DIM), pred.shape
    assert bool(jnp.all(jnp.isfinite(pred)))
    print("KERNEL_OK")
</pallas_src>

<mosaic_0001>
module attributes {stable_mosaic.version = 11 : i64} {
  func.func @_spacetime_fused_kernel(%arg0: i32, %arg1: memref<2x8x4xf32, #tpu.memory_space<vmem>>, %arg2: memref<4x32xf32, #tpu.memory_space<vmem>>, %arg3: memref<1x32xf32, #tpu.memory_space<vmem>>, %arg4: memref<16x8x32xf32, #tpu.memory_space<vmem>>, %arg5: memref<16x8x32xf32, #tpu.memory_space<vmem>>, %arg6: memref<2x32x32xf32, #tpu.memory_space<vmem>>, %arg7: memref<2x1x32xf32, #tpu.memory_space<vmem>>, %arg8: memref<8x8x32xf32, #tpu.memory_space<vmem>>, %arg9: memref<32x4xf32, #tpu.memory_space<vmem>>, %arg10: memref<1x4xf32, #tpu.memory_space<vmem>>, %arg11: memref<2x32xf32, #tpu.memory_space<vmem>>) attributes {dimension_semantics = [#tpu.dimension_semantics<parallel>], iteration_bounds = array<i64: 1>, scalar_prefetch = 0 : i64, scratch_operands = 0 : i64, tpu.core_type = #tpu.core_type<tc>, window_params = [{transform_indices = @transform_0, window_bounds = array<i64: 2, 8, 4>}, {pipeline_mode = #tpu.pipeline_mode<synchronous>, transform_indices = @transform_1, window_bounds = array<i64: 4, 32>}, {pipeline_mode = #tpu.pipeline_mode<synchronous>, transform_indices = @transform_2, window_bounds = array<i64: 1, 32>}, {pipeline_mode = #tpu.pipeline_mode<synchronous>, transform_indices = @transform_3, window_bounds = array<i64: 16, 8, 32>}, {pipeline_mode = #tpu.pipeline_mode<synchronous>, transform_indices = @transform_4, window_bounds = array<i64: 16, 8, 32>}, {pipeline_mode = #tpu.pipeline_mode<synchronous>, transform_indices = @transform_5, window_bounds = array<i64: 2, 32, 32>}, {pipeline_mode = #tpu.pipeline_mode<synchronous>, transform_indices = @transform_6, window_bounds = array<i64: 2, 1, 32>}, {pipeline_mode = #tpu.pipeline_mode<synchronous>, transform_indices = @transform_7, window_bounds = array<i64: 8, 8, 32>}, {pipeline_mode = #tpu.pipeline_mode<synchronous>, transform_indices = @transform_8, window_bounds = array<i64: 32, 4>}, {pipeline_mode = #tpu.pipeline_mode<synchronous>, transform_indices = @transform_9, window_bounds = array<i64: 1, 4>}, {transform_indices = @transform_10, window_bounds = array<i64: 2, 32>}]} {
    %c0 = arith.constant 0 : index
    %c0_0 = arith.constant 0 : index
    %c0_1 = arith.constant 0 : index
    %0 = vector.load %arg1[%c0, %c0_0, %c0_1] : memref<2x8x4xf32, #tpu.memory_space<vmem>>, vector<2x8x4xf32>
    %1 = vector.shape_cast %0 : vector<2x8x4xf32> to vector<16x4xf32>
    %c0_2 = arith.constant 0 : index
    %c0_3 = arith.constant 0 : index
    %2 = vector.load %arg2[%c0_2, %c0_3] : memref<4x32xf32, #tpu.memory_space<vmem>>, vector<4x32xf32>
    %cst = arith.constant dense<0.000000e+00> : vector<16x32xf32>
    %3 = tpu.matmul %1, %2, %cst {dimension_numbers = #tpu.dot_dimension_numbers<[1], [0], [0], [1], [0, 0, 1, 1], [], []>} : vector<16x4xf32>, vector<4x32xf32>, vector<16x32xf32> -> vector<16x32xf32>
    %c0_4 = arith.constant 0 : index
    %c0_5 = arith.constant 0 : index
    %4 = vector.load %arg3[%c0_4, %c0_5] : memref<1x32xf32, #tpu.memory_space<vmem>>, vector<1x32xf32>
    %5 = vector.broadcast %4 : vector<1x32xf32> to vector<16x32xf32>
    %6 = arith.addf %3, %5 : vector<16x32xf32>
    %7 = vector.shape_cast %6 : vector<16x32xf32> to vector<2x8x32xf32>
    %c0_6 = arith.constant 0 : index
    %c0_7 = arith.constant 0 : index
    %c0_8 = arith.constant 0 : index
    %8 = vector.load %arg4[%c0_6, %c0_7, %c0_8] : memref<16x8x32xf32, #tpu.memory_space<vmem>>, vector<1x8x32xf32>
    %9 = vector.shape_cast %8 : vector<1x8x32xf32> to vector<8x32xf32>
    %10 = vector.shape_cast %9 : vector<8x32xf32> to vector<1x8x32xf32>
    %11 = vector.extract_strided_slice %7 {offsets = [0, 0, 0], sizes = [2, 1, 32], strides = [1, 1, 1]} : vector<2x8x32xf32> to vector<2x1x32xf32>
    %12 = vector.broadcast %10 : vector<1x8x32xf32> to vector<2x8x32xf32>
    %13 = vector.broadcast %11 : vector<2x1x32xf32> to vector<2x8x32xf32>
    %14 = arith.mulf %12, %13 : vector<2x8x32xf32>
    %c1 = arith.constant 1 : index
    %c0_9 = arith.constant 0 : index
    %c0_10 = arith.constant 0 : index
    %15 = vector.load %arg4[%c1, %c0_9, %c0_10] : memref<16x8x32xf32, #tpu.memory_space<vmem>>, vector<1x8x32xf32>
    %16 = vector.shape_cast %15 : vector<1x8x32xf32> to vector<8x32xf32>
    %17 = vector.shape_cast %16 : vector<8x32xf32> to vector<1x8x32xf32>
    %18 = vector.extract_strided_slice %7 {offsets = [0, 1, 0], sizes = [2, 1, 32], strides = [1, 1, 1]} : vector<2x8x32xf32> to vector<2x1x32xf32>
    %19 = vector.broadcast %17 : vector<1x8x32xf32> to vector<2x8x32xf32>
    %20 = vector.broadcast %18 : vector<2x1x32xf32> to vector<2x8x32xf32>
    %21 = arith.mulf %19, %20 : vector<2x8x32xf32>
    %c2 = arith.constant 2 : index
    %c0_11 = arith.constant 0 : index
    %c0_12 = arith.constant 0 : index
    %22 = vector.load %arg4[%c2, %c0_11, %c0_12] : memref<16x8x32xf32, #tpu.memory_space<vmem>>, vector<1x8x32xf32>
    %23 = vector.shape_cast %22 : vector<1x8x32xf32> to vector<8x32xf32>
    %24 = vector.shape_cast %23 : vector<8x32xf32> to vector<1x8x32xf32>
    %25 = vector.extract_strided_slice %7 {offsets = [0, 2, 0], sizes = [2, 1, 32], strides = [1, 1, 1]} : vector<2x8x32xf32> to vector<2x1x32xf32>
    %26 = vector.broadcast %24 : vector<1x8x32xf32> to vector<2x8x32xf32>
    %27 = vector.broadcast %25 : vector<2x1x32xf32> to vector<2x8x32xf32>
    %28 = arith.mulf %26, %27 : vector<2x8x32xf32>
    %29 = arith.addf %14, %28 : vector<2x8x32xf32>
    %c4 = arith.constant 4 : index
    %c0_13 = arith.constant 0 : index
    %c0_14 = arith.constant 0 : index
    %30 = vector.load %arg4[%c4, %c0_13, %c0_14] : memref<16x8x32xf32, #tpu.memory_space<vmem>>, vector<1x8x32xf32>
    %31 = vector.shape_cast %30 : vector<1x8x32xf32> to vector<8x32xf32>
    %32 = vector.shape_cast %31 : vector<8x32xf32> to vector<1x8x32xf32>
    %33 = vector.extract_strided_slice %7 {offsets = [0, 4, 0], sizes = [2, 1, 32], strides = [1, 1, 1]} : vector<2x8x32xf32> to vector<2x1x32xf32>
    %34 = vector.broadcast %32 : vector<1x8x32xf32> to vector<2x8x32xf32>
    %35 = vector.broadcast %33 : vector<2x1x32xf32> to vector<2x8x32xf32>
    %36 = arith.mulf %34, %35 : vector<2x8x32xf32>
    %37 = arith.addf %29, %36 : vector<2x8x32xf32>
    %c6 = arith.constant 6 : index
    %c0_15 = arith.constant 0 : index
    %c0_16 = arith.constant 0 : index
    %38 = vector.load %arg4[%c6, %c0_15, %c0_16] : memref<16x8x32xf32, #tpu.memory_space<vmem>>, vector<1x8x32xf32>
    %39 = vector.shape_cast %38 : vector<1x8x32xf32> to vector<8x32xf32>
    %40 = vector.shape_cast %39 : vector<8x32xf32> to vector<1x8x32xf32>
    %41 = vector.extract_strided_slice %7 {offsets = [0, 6, 0], sizes = [2, 1, 32], strides = [1, 1, 1]} : vector<2x8x32xf32> to vector<2x1x32xf32>
    %42 = vector.broadcast %40 : vector<1x8x32xf32> to vector<2x8x32xf32>
    %43 = vector.broadcast %41 : vector<2x1x32xf32> to vector<2x8x32xf32>
    %44 = arith.mulf %42, %43 : vector<2x8x32xf32>
    %45 = arith.addf %37, %44 : vector<2x8x32xf32>
    %c3 = arith.constant 3 : index
    %c0_17 = arith.constant 0 : index
    %c0_18 = arith.constant 0 : index
    %46 = vector.load %arg4[%c3, %c0_17, %c0_18] : memref<16x8x32xf32, #tpu.memory_space<vmem>>, vector<1x8x32xf32>
    %47 = vector.shape_cast %46 : vector<1x8x32xf32> to vector<8x32xf32>
    %48 = vector.shape_cast %47 : vector<8x32xf32> to vector<1x8x32xf32>
    %49 = vector.extract_strided_slice %7 {offsets = [0, 3, 0], sizes = [2, 1, 32], strides = [1, 1, 1]} : vector<2x8x32xf32> to vector<2x1x32xf32>
    %50 = vector.broadcast %48 : vector<1x8x32xf32> to vector<2x8x32xf32>
    %51 = vector.broadcast %49 : vector<2x1x32xf32> to vector<2x8x32xf32>
    %52 = arith.mulf %50, %51 : vector<2x8x32xf32>
    %53 = arith.addf %21, %52 : vector<2x8x32xf32>
    %c5 = arith.constant 5 : index
    %c0_19 = arith.constant 0 : index
    %c0_20 = arith.constant 0 : index
    %54 = vector.load %arg4[%c5, %c0_19, %c0_20] : memref<16x8x32xf32, #tpu.memory_space<vmem>>, vector<1x8x32xf32>
    %55 = vector.shape_cast %54 : vector<1x8x32xf32> to vector<8x32xf32>
    %56 = vector.shape_cast %55 : vector<8x32xf32> to vector<1x8x32xf32>
    %57 = vector.extract_strided_slice %7 {offsets = [0, 5, 0], sizes = [2, 1, 32], strides = [1, 1, 1]} : vector<2x8x32xf32> to vector<2x1x32xf32>
    %58 = vector.broadcast %56 : vector<1x8x32xf32> to vector<2x8x32xf32>
    %59 = vector.broadcast %57 : vector<2x1x32xf32> to vector<2x8x32xf32>
    %60 = arith.mulf %58, %59 : vector<2x8x32xf32>
    %61 = arith.addf %53, %60 : vector<2x8x32xf32>
    %c7 = arith.constant 7 : index
    %c0_21 = arith.constant 0 : index
    %c0_22 = arith.constant 0 : index
    %62 = vector.load %arg4[%c7, %c0_21, %c0_22] : memref<16x8x32xf32, #tpu.memory_space<vmem>>, vector<1x8x32xf32>
    %63 = vector.shape_cast %62 : vector<1x8x32xf32> to vector<8x32xf32>
    %64 = vector.shape_cast %63 : vector<8x32xf32> to vector<1x8x32xf32>
    %65 = vector.extract_strided_slice %7 {offsets = [0, 7, 0], sizes = [2, 1, 32], strides = [1, 1, 1]} : vector<2x8x32xf32> to vector<2x1x32xf32>
    %66 = vector.broadcast %64 : vector<1x8x32xf32> to vector<2x8x32xf32>
    %67 = vector.broadcast %65 : vector<2x1x32xf32> to vector<2x8x32xf32>
    %68 = arith.mulf %66, %67 : vector<2x8x32xf32>
    %69 = arith.addf %61, %68 : vector<2x8x32xf32>
    %70 = arith.addf %45, %69 : vector<2x8x32xf32>
    %c0_23 = arith.constant 0 : index
    %c0_24 = arith.constant 0 : index
    %c0_25 = arith.constant 0 : index
    %71 = vector.load %arg5[%c0_23, %c0_24, %c0_25] : memref<16x8x32xf32, #tpu.memory_space<vmem>>, vector<1x8x32xf32>
    %72 = vector.shape_cast %71 : vector<1x8x32xf32> to vector<8x32xf32>
    %73 = vector.shape_cast %72 : vector<8x32xf32> to vector<1x8x32xf32>
    %74 = vector.extract_strided_slice %70 {offsets = [0, 0, 0], sizes = [2, 1, 32], strides = [1, 1, 1]} : vector<2x8x32xf32> to vector<2x1x32xf32>
    %75 = vector.broadcast %73 : vector<1x8x32xf32> to vector<2x8x32xf32>
    %76 = vector.broadcast %74 : vector<2x1x32xf32> to vector<2x8x32xf32>
    %77 = arith.mulf %75, %76 : vector<2x8x32xf32>
    %c1_26 = arith.constant 1 : index
    %c0_27 = arith.constant 0 : index
    %c0_28 = arith.constant 0 : index
    %78 = vector.load %arg5[%c1_26, %c0_27, %c0_28] : memref<16x8x32xf32, #tpu.memory_space<vmem>>, vector<1x8x32xf32>
    %79 = vector.shape_cast %78 : vector<1x8x32xf32> to vector<8x32xf32>
    %80 = vector.shape_cast %79 : vector<8x32xf32> to vector<1x8x32xf32>
    %81 = vector.extract_strided_slice %70 {offsets = [0, 1, 0], sizes = [2, 1, 32], strides = [1, 1, 1]} : vector<2x8x32xf32> to vector<2x1x32xf32>
    %82 = vector.broadcast %80 : vector<1x8x32xf32> to vector<2x8x32xf32>
    %83 = vector.broadcast %81 : vector<2x1x32xf32> to vector<2x8x32xf32>
    %84 = arith.mulf %82, %83 : vector<2x8x32xf32>
    %c2_29 = arith.constant 2 : index
    %c0_30 = arith.constant 0 : index
    %c0_31 = arith.constant 0 : index
    %85 = vector.load %arg5[%c2_29, %c0_30, %c0_31] : memref<16x8x32xf32, #tpu.memory_space<vmem>>, vector<1x8x32xf32>
    %86 = vector.shape_cast %85 : vector<1x8x32xf32> to vector<8x32xf32>
    %87 = vector.shape_cast %86 : vector<8x32xf32> to vector<1x8x32xf32>
    %88 = vector.extract_strided_slice %70 {offsets = [0, 2, 0], sizes = [2, 1, 32], strides = [1, 1, 1]} : vector<2x8x32xf32> to vector<2x1x32xf32>
    %89 = vector.broadcast %87 : vector<1x8x32xf32> to vector<2x8x32xf32>
    %90 = vector.broadcast %88 : vector<2x1x32xf32> to vector<2x8x32xf32>
    %91 = arith.mulf %89, %90 : vector<2x8x32xf32>
    %92 = arith.addf %77, %91 : vector<2x8x32xf32>
    %c4_32 = arith.constant 4 : index
    %c0_33 = arith.constant 0 : index
    %c0_34 = arith.constant 0 : index
    %93 = vector.load %arg5[%c4_32, %c0_33, %c0_34] : memref<16x8x32xf32, #tpu.memory_space<vmem>>, vector<1x8x32xf32>
    %94 = vector.shape_cast %93 : vector<1x8x32xf32> to vector<8x32xf32>
    %95 = vector.shape_cast %94 : vector<8x32xf32> to vector<1x8x32xf32>
    %96 = vector.extract_strided_slice %70 {offsets = [0, 4, 0], sizes = [2, 1, 32], strides = [1, 1, 1]} : vector<2x8x32xf32> to vector<2x1x32xf32>
    %97 = vector.broadcast %95 : vector<1x8x32xf32> to vector<2x8x32xf32>
    %98 = vector.broadcast %96 : vector<2x1x32xf32> to vector<2x8x32xf32>
    %99 = arith.mulf %97, %98 : vector<2x8x32xf32>
    %100 = arith.addf %92, %99 : vector<2x8x32xf32>
    %c6_35 = arith.constant 6 : index
    %c0_36 = arith.constant 0 : index
    %c0_37 = arith.constant 0 : index
    %101 = vector.load %arg5[%c6_35, %c0_36, %c0_37] : memref<16x8x32xf32, #tpu.memory_space<vmem>>, vector<1x8x32xf32>
    %102 = vector.shape_cast %101 : vector<1x8x32xf32> to vector<8x32xf32>
    %103 = vector.shape_cast %102 : vector<8x32xf32> to vector<1x8x32xf32>
    %104 = vector.extract_strided_slice %70 {offsets = [0, 6, 0], sizes = [2, 1, 32], strides = [1, 1, 1]} : vector<2x8x32xf32> to vector<2x1x32xf32>
    %105 = vector.broadcast %103 : vector<1x8x32xf32> to vector<2x8x32xf32>
    %106 = vector.broadcast %104 : vector<2x1x32xf32> to vector<2x8x32xf32>
    %107 = arith.mulf %105, %106 : vector<2x8x32xf32>
    %108 = arith.addf %100, %107 : vector<2x8x32xf32>
    %c3_38 = arith.constant 3 : index
    %c0_39 = arith.constant 0 : index
    %c0_40 = arith.constant 0 : index
    %109 = vector.load %arg5[%c3_38, %c0_39, %c0_40] : memref<16x8x32xf32, #tpu.memory_space<vmem>>, vector<1x8x32xf32>
    %110 = vector.shape_cast %109 : vector<1x8x32xf32> to vector<8x32xf32>
    %111 = vector.shape_cast %110 : vector<8x32xf32> to vector<1x8x32xf32>
    %112 = vector.extract_strided_slice %70 {offsets = [0, 3, 0], sizes = [2, 1, 32], strides = [1, 1, 1]} : vector<2x8x32xf32> to vector<2x1x32xf32>
    %113 = vector.broadcast %111 : vector<1x8x32xf32> to vector<2x8x32xf32>
    %114 = vector.broadcast %112 : vector<2x1x32xf32> to vector<2x8x32xf32>
    %115 = arith.mulf %113, %114 : vector<2x8x32xf32>
    %116 = arith.addf %84, %115 : vector<2x8x32xf32>
    %c5_41 = arith.constant 5 : index
    %c0_42 = arith.constant 0 : index
    %c0_43 = arith.constant 0 : index
    %117 = vector.load %arg5[%c5_41, %c0_42, %c0_43] : memref<16x8x32xf32, #tpu.memory_space<vmem>>, vector<1x8x32xf32>
    %118 = vector.shape_cast %117 : vector<1x8x32xf32> to vector<8x32xf32>
    %119 = vector.shape_cast %118 : vector<8x32xf32> to vector<1x8x32xf32>
    %120 = vector.extract_strided_slice %70 {offsets = [0, 5, 0], sizes = [2, 1, 32], strides = [1, 1, 1]} : vector<2x8x32xf32> to vector<2x1x32xf32>
    %121 = vector.broadcast %119 : vector<1x8x32xf32> to vector<2x8x32xf32>
    %122 = vector.broadcast %120 : vector<2x1x32xf32> to vector<2x8x32xf32>
    %123 = arith.mulf %121, %122 : vector<2x8x32xf32>
    %124 = arith.addf %116, %123 : vector<2x8x32xf32>
    %c7_44 = arith.constant 7 : index
    %c0_45 = arith.constant 0 : index
    %c0_46 = arith.constant 0 : index
    %125 = vector.load %arg5[%c7_44, %c0_45, %c0_46] : memref<16x8x32xf32, #tpu.memory_space<vmem>>, vector<1x8x32xf32>
    %126 = vector.shape_cast %125 : vector<1x8x32xf32> to vector<8x32xf32>
    %127 = vector.shape_cast %126 : vector<8x32xf32> to vector<1x8x32xf32>
    %128 = vector.extract_strided_slice %70 {offsets = [0, 7, 0], sizes = [2, 1, 32], strides = [1, 1, 1]} : vector<2x8x32xf32> to vector<2x1x32xf32>
    %129 = vector.broadcast %127 : vector<1x8x32xf32> to vector<2x8x32xf32>
    %130 = vector.broadcast %128 : vector<2x1x32xf32> to vector<2x8x32xf32>
    %131 = arith.mulf %129, %130 : vector<2x8x32xf32>
    %132 = arith.addf %124, %131 : vector<2x8x32xf32>
    %133 = arith.addf %108, %132 : vector<2x8x32xf32>
    %134 = vector.shape_cast %133 : vector<2x8x32xf32> to vector<16x32xf32>
    %cst_47 = arith.constant 5.000000e-01 : f32
    %135 = vector.broadcast %cst_47 : f32 to vector<16x32xf32>
    %136 = arith.mulf %135, %134 : vector<16x32xf32>
    %cst_48 = arith.constant 4.471500e-02 : f32
    %137 = vector.broadcast %cst_48 : f32 to vector<16x32xf32>
    %138 = arith.mulf %137, %134 : vector<16x32xf32>
    %139 = arith.mulf %138, %134 : vector<16x32xf32>
    %140 = arith.mulf %139, %134 : vector<16x32xf32>
    %141 = arith.addf %134, %140 : vector<16x32xf32>
    %cst_49 = arith.constant 0.797884583 : f32
    %142 = vector.broadcast %cst_49 : f32 to vector<16x32xf32>
    %143 = arith.mulf %142, %141 : vector<16x32xf32>
    %144 = math.tanh %143 : vector<16x32xf32>
    %cst_50 = arith.constant 1.000000e+00 : f32
    %145 = vector.broadcast %cst_50 : f32 to vector<16x32xf32>
    %146 = arith.addf %145, %144 : vector<16x32xf32>
    %147 = arith.mulf %136, %146 : vector<16x32xf32>
    %c0_51 = arith.constant 0 : index
    %c0_52 = arith.constant 0 : index
    %c0_53 = arith.constant 0 : index
    %148 = vector.load %arg6[%c0_51, %c0_52, %c0_53] : memref<2x32x32xf32, #tpu.memory_space<vmem>>, vector<1x32x32xf32>
    %149 = vector.shape_cast %148 : vector<1x32x32xf32> to vector<32x32xf32>
    %cst_54 = arith.constant dense<0.000000e+00> : vector<16x32xf32>
    %150 = tpu.matmul %147, %149, %cst_54 {dimension_numbers = #tpu.dot_dimension_numbers<[1], [0], [0], [1], [0, 0, 1, 1], [], []>} : vector<16x32xf32>, vector<32x32xf32>, vector<16x32xf32> -> vector<16x32xf32>
    %c0_55 = arith.constant 0 : index
    %c0_56 = arith.constant 0 : index
    %c0_57 = arith.constant 0 : index
    %151 = vector.load %arg7[%c0_55, %c0_56, %c0_57] : memref<2x1x32xf32, #tpu.memory_space<vmem>>, vector<1x1x32xf32>
    %152 = vector.shape_cast %151 : vector<1x1x32xf32> to vector<1x32xf32>
    %153 = vector.broadcast %152 : vector<1x32xf32> to vector<16x32xf32>
    %154 = arith.addf %150, %153 : vector<16x32xf32>
    %155 = vector.shape_cast %154 : vector<16x32xf32> to vector<2x8x32xf32>
    %156 = arith.addf %155, %133 : vector<2x8x32xf32>
    %157 = arith.addf %156, %7 : vector<2x8x32xf32>
    %c8 = arith.constant 8 : index
    %c0_58 = arith.constant 0 : index
    %c0_59 = arith.constant 0 : index
    %158 = vector.load %arg4[%c8, %c0_58, %c0_59] : memref<16x8x32xf32, #tpu.memory_space<vmem>>, vector<1x8x32xf32>
    %159 = vector.shape_cast %158 : vector<1x8x32xf32> to vector<8x32xf32>
    %160 = vector.shape_cast %159 : vector<8x32xf32> to vector<1x8x32xf32>
    %161 = vector.extract_strided_slice %157 {offsets = [0, 0, 0], sizes = [2, 1, 32], strides = [1, 1, 1]} : vector<2x8x32xf32> to vector<2x1x32xf32>
    %162 = vector.broadcast %160 : vector<1x8x32xf32> to vector<2x8x32xf32>
    %163 = vector.broadcast %161 : vector<2x1x32xf32> to vector<2x8x32xf32>
    %164 = arith.mulf %162, %163 : vector<2x8x32xf32>
    %c9 = arith.constant 9 : index
    %c0_60 = arith.constant 0 : index
    %c0_61 = arith.constant 0 : index
    %165 = vector.load %arg4[%c9, %c0_60, %c0_61] : memref<16x8x32xf32, #tpu.memory_space<vmem>>, vector<1x8x32xf32>
    %166 = vector.shape_cast %165 : vector<1x8x32xf32> to vector<8x32xf32>
    %167 = vector.shape_cast %166 : vector<8x32xf32> to vector<1x8x32xf32>
    %168 = vector.extract_strided_slice %157 {offsets = [0, 1, 0], sizes = [2, 1, 32], strides = [1, 1, 1]} : vector<2x8x32xf32> to vector<2x1x32xf32>
    %169 = vector.broadcast %167 : vector<1x8x32xf32> to vector<2x8x32xf32>
    %170 = vector.broadcast %168 : vector<2x1x32xf32> to vector<2x8x32xf32>
    %171 = arith.mulf %169, %170 : vector<2x8x32xf32>
    %c10 = arith.constant 10 : index
    %c0_62 = arith.constant 0 : index
    %c0_63 = arith.constant 0 : index
    %172 = vector.load %arg4[%c10, %c0_62, %c0_63] : memref<16x8x32xf32, #tpu.memory_space<vmem>>, vector<1x8x32xf32>
    %173 = vector.shape_cast %172 : vector<1x8x32xf32> to vector<8x32xf32>
    %174 = vector.shape_cast %173 : vector<8x32xf32> to vector<1x8x32xf32>
    %175 = vector.extract_strided_slice %157 {offsets = [0, 2, 0], sizes = [2, 1, 32], strides = [1, 1, 1]} : vector<2x8x32xf32> to vector<2x1x32xf32>
    %176 = vector.broadcast %174 : vector<1x8x32xf32> to vector<2x8x32xf32>
    %177 = vector.broadcast %175 : vector<2x1x32xf32> to vector<2x8x32xf32>
    %178 = arith.mulf %176, %177 : vector<2x8x32xf32>
    %179 = arith.addf %164, %178 : vector<2x8x32xf32>
    %c12 = arith.constant 12 : index
    %c0_64 = arith.constant 0 : index
    %c0_65 = arith.constant 0 : index
    %180 = vector.load %arg4[%c12, %c0_64, %c0_65] : memref<16x8x32xf32, #tpu.memory_space<vmem>>, vector<1x8x32xf32>
    %181 = vector.shape_cast %180 : vector<1x8x32xf32> to vector<8x32xf32>
    %182 = vector.shape_cast %181 : vector<8x32xf32> to vector<1x8x32xf32>
    %183 = vector.extract_strided_slice %157 {offsets = [0, 4, 0], sizes = [2, 1, 32], strides = [1, 1, 1]} : vector<2x8x32xf32> to vector<2x1x32xf32>
    %184 = vector.broadcast %182 : vector<1x8x32xf32> to vector<2x8x32xf32>
    %185 = vector.broadcast %183 : vector<2x1x32xf32> to vector<2x8x32xf32>
    %186 = arith.mulf %184, %185 : vector<2x8x32xf32>
    %187 = arith.addf %179, %186 : vector<2x8x32xf32>
    %c14 = arith.constant 14 : index
    %c0_66 = arith.constant 0 : index
    %c0_67 = arith.constant 0 : index
    %188 = vector.load %arg4[%c14, %c0_66, %c0_67] : memref<16x8x32xf32, #tpu.memory_space<vmem>>, vector<1x8x32xf32>
    %189 = vector.shape_cast %188 : vector<1x8x32xf32> to vector<8x32xf32>
    %190 = vector.shape_cast %189 : vector<8x32xf32> to vector<1x8x32xf32>
    %191 = vector.extract_strided_slice %157 {offsets = [0, 6, 0], sizes = [2, 1, 32], strides = [1, 1, 1]} : vector<2x8x32xf32> to vector<2x1x32xf32>
    %192 = vector.broadcast %190 : vector<1x8x32xf32> to vector<2x8x32xf32>
    %193 = vector.broadcast %191 : vector<2x1x32xf32> to vector<2x8x32xf32>
    %194 = arith.mulf %192, %193 : vector<2x8x32xf32>
    %195 = arith.addf %187, %194 : vector<2x8x32xf32>
    %c11 = arith.constant 11 : index
    %c0_68 = arith.constant 0 : index
    %c0_69 = arith.constant 0 : index
    %196 = vector.load %arg4[%c11, %c0_68, %c0_69] : memref<16x8x32xf32, #tpu.memory_space<vmem>>, vector<1x8x32xf32>
    %197 = vector.shape_cast %196 : vector<1x8x32xf32> to vector<8x32xf32>
    %198 = vector.shape_cast %197 : vector<8x32xf32> to vector<1x8x32xf32>
    %199 = vector.extract_strided_slice %157 {offsets = [0, 3, 0], sizes = [2, 1, 32], strides = [1, 1, 1]} : vector<2x8x32xf32> to vector<2x1x32xf32>
    %200 = vector.broadcast %198 : vector<1x8x32xf32> to vector<2x8x32xf32>
    %201 = vector.broadcast %199 : vector<2x1x32xf32> to vector<2x8x32xf32>
    %202 = arith.mulf %200, %201 : vector<2x8x32xf32>
    %203 = arith.addf %171, %202 : vector<2x8x32xf32>
    %c13 = arith.constant 13 : index
    %c0_70 = arith.constant 0 : index
    %c0_71 = arith.constant 0 : index
    %204 = vector.load %arg4[%c13, %c0_70, %c0_71] : memref<16x8x32xf32, #tpu.memory_space<vmem>>, vector<1x8x32xf32>
    %205 = vector.shape_cast %204 : vector<1x8x32xf32> to vector<8x32xf32>
    %206 = vector.shape_cast %205 : vector<8x32xf32> to vector<1x8x32xf32>
    %207 = vector.extract_strided_slice %157 {offsets = [0, 5, 0], sizes = [2, 1, 32], strides = [1, 1, 1]} : vector<2x8x32xf32> to vector<2x1x32xf32>
    %208 = vector.broadcast %206 : vector<1x8x32xf32> to vector<2x8x32xf32>
    %209 = vector.broadcast %207 : vector<2x1x32xf32> to vector<2x8x32xf32>
    %210 = arith.mulf %208, %209 : vector<2x8x32xf32>
    %211 = arith.addf %203, %210 : vector<2x8x32xf32>
    %c15 = arith.constant 15 : index
    %c0_72 = arith.constant 0 : index
    %c0_73 = arith.constant 0 : index
    %212 = vector.load %arg4[%c15, %c0_72, %c0_73] : memref<16x8x32xf32, #tpu.memory_space<vmem>>, vector<1x8x32xf32>
    %213 = vector.shape_cast %212 : vector<1x8x32xf32> to vector<8x32xf32>
    %214 = vector.shape_cast %213 : vector<8x32xf32> to vector<1x8x32xf32>
    %215 = vector.extract_strided_slice %157 {offsets = [0, 7, 0], sizes = [2, 1, 32], strides = [1, 1, 1]} : vector<2x8x32xf32> to vector<2x1x32xf32>
    %216 = vector.broadcast %214 : vector<1x8x32xf32> to vector<2x8x32xf32>
    %217 = vector.broadcast %215 : vector<2x1x32xf32> to vector<2x8x32xf32>
    %218 = arith.mulf %216, %217 : vector<2x8x32xf32>
    %219 = arith.addf %211, %218 : vector<2x8x32xf32>
    %220 = arith.addf %195, %219 : vector<2x8x32xf32>
    %c8_74 = arith.constant 8 : index
    %c0_75 = arith.constant 0 : index
    %c0_76 = arith.constant 0 : index
    %221 = vector.load %arg5[%c8_74, %c0_75, %c0_76] : memref<16x8x32xf32, #tpu.memory_space<vmem>>, vector<1x8x32xf32>
    %222 = vector.shape_cast %221 : vector<1x8x32xf32> to vector<8x32xf32>
    %223 = vector.shape_cast %222 : vector<8x32xf32> to vector<1x8x32xf32>
    %224 = vector.extract_strided_slice %220 {offsets = [0, 0, 0], sizes = [2, 1, 32], strides = [1, 1, 1]} : vector<2x8x32xf32> to vector<2x1x32xf32>
    %225 = vector.broadcast %223 : vector<1x8x32xf32> to vector<2x8x32xf32>
    %226 = vector.broadcast %224 : vector<2x1x32xf32> to vector<2x8x32xf32>
    %227 = arith.mulf %225, %226 : vector<2x8x32xf32>
    %c9_77 = arith.constant 9 : index
    %c0_78 = arith.constant 0 : index
    %c0_79 = arith.constant 0 : index
    %228 = vector.load %arg5[%c9_77, %c0_78, %c0_79] : memref<16x8x32xf32, #tpu.memory_space<vmem>>, vector<1x8x32xf32>
    %229 = vector.shape_cast %228 : vector<1x8x32xf32> to vector<8x32xf32>
    %230 = vector.shape_cast %229 : vector<8x32xf32> to vector<1x8x32xf32>
    %231 = vector.extract_strided_slice %220 {offsets = [0, 1, 0], sizes = [2, 1, 32], strides = [1, 1, 1]} : vector<2x8x32xf32> to vector<2x1x32xf32>
    %232 = vector.broadcast %230 : vector<1x8x32xf32> to vector<2x8x32xf32>
    %233 = vector.broadcast %231 : vector<2x1x32xf32> to vector<2x8x32xf32>
    %234 = arith.mulf %232, %233 : vector<2x8x32xf32>
    %c10_80 = arith.constant 10 : index
    %c0_81 = arith.constant 0 : index
    %c0_82 = arith.constant 0 : index
    %235 = vector.load %arg5[%c10_80, %c0_81, %c0_82] : memref<16x8x32xf32, #tpu.memory_space<vmem>>, vector<1x8x32xf32>
    %236 = vector.shape_cast %235 : vector<1x8x32xf32> to vector<8x32xf32>
    %237 = vector.shape_cast %236 : vector<8x32xf32> to vector<1x8x32xf32>
    %238 = vector.extract_strided_slice %220 {offsets = [0, 2, 0], sizes = [2, 1, 32], strides = [1, 1, 1]} : vector<2x8x32xf32> to vector<2x1x32xf32>
    %239 = vector.broadcast %237 : vector<1x8x32xf32> to vector<2x8x32xf32>
    %240 = vector.broadcast %238 : vector<2x1x32xf32> to vector<2x8x32xf32>
    %241 = arith.mulf %239, %240 : vector<2x8x32xf32>
    %242 = arith.addf %227, %241 : vector<2x8x32xf32>
    %c12_83 = arith.constant 12 : index
    %c0_84 = arith.constant 0 : index
    %c0_85 = arith.constant 0 : index
    %243 = vector.load %arg5[%c12_83, %c0_84, %c0_85] : memref<16x8x32xf32, #tpu.memory_space<vmem>>, vector<1x8x32xf32>
    %244 = vector.shape_cast %243 : vector<1x8x32xf32> to vector<8x32xf32>
    %245 = vector.shape_cast %244 : vector<8x32xf32> to vector<1x8x32xf32>
    %246 = vector.extract_strided_slice %220 {offsets = [0, 4, 0], sizes = [2, 1, 32], strides = [1, 1, 1]} : vector<2x8x32xf32> to vector<2x1x32xf32>
    %247 = vector.broadcast %245 : vector<1x8x32xf32> to vector<2x8x32xf32>
    %248 = vector.broadcast %246 : vector<2x1x32xf32> to vector<2x8x32xf32>
    %249 = arith.mulf %247, %248 : vector<2x8x32xf32>
    %250 = arith.addf %242, %249 : vector<2x8x32xf32>
    %c14_86 = arith.constant 14 : index
    %c0_87 = arith.constant 0 : index
    %c0_88 = arith.constant 0 : index
    %251 = vector.load %arg5[%c14_86, %c0_87, %c0_88] : memref<16x8x32xf32, #tpu.memory_space<vmem>>, vector<1x8x32xf32>
    %252 = vector.shape_cast %251 : vector<1x8x32xf32> to vector<8x32xf32>
    %253 = vector.shape_cast %252 : vector<8x32xf32> to vector<1x8x32xf32>
    %254 = vector.extract_strided_slice %220 {offsets = [0, 6, 0], sizes = [2, 1, 32], strides = [1, 1, 1]} : vector<2x8x32xf32> to vector<2x1x32xf32>
    %255 = vector.broadcast %253 : vector<1x8x32xf32> to vector<2x8x32xf32>
    %256 = vector.broadcast %254 : vector<2x1x32xf32> to vector<2x8x32xf32>
    %257 = arith.mulf %255, %256 : vector<2x8x32xf32>
    %258 = arith.addf %250, %257 : vector<2x8x32xf32>
    %c11_89 = arith.constant 11 : index
    %c0_90 = arith.constant 0 : index
    %c0_91 = arith.constant 0 : index
    %259 = vector.load %arg5[%c11_89, %c0_90, %c0_91] : memref<16x8x32xf32, #tpu.memory_space<vmem>>, vector<1x8x32xf32>
    %260 = vector.shape_cast %259 : vector<1x8x32xf32> to vector<8x32xf32>
    %261 = vector.shape_cast %260 : vector<8x32xf32> to vector<1x8x32xf32>
    %262 = vector.extract_strided_slice %220 {offsets = [0, 3, 0], sizes = [2, 1, 32], strides = [1, 1, 1]} : vector<2x8x32xf32> to vector<2x1x32xf32>
    %263 = vector.broadcast %261 : vector<1x8x32xf32> to vector<2x8x32xf32>
    %264 = vector.broadcast %262 : vector<2x1x32xf32> to vector<2x8x32xf32>
    %265 = arith.mulf %263, %264 : vector<2x8x32xf32>
    %266 = arith.addf %234, %265 : vector<2x8x32xf32>
    %c13_92 = arith.constant 13 : index
    %c0_93 = arith.constant 0 : index
    %c0_94 = arith.constant 0 : index
    %267 = vector.load %arg5[%c13_92, %c0_93, %c0_94] : memref<16x8x32xf32, #tpu.memory_space<vmem>>, vector<1x8x32xf32>
    %268 = vector.shape_cast %267 : vector<1x8x32xf32> to vector<8x32xf32>
    %269 = vector.shape_cast %268 : vector<8x32xf32> to vector<1x8x32xf32>
    %270 = vector.extract_strided_slice %220 {offsets = [0, 5, 0], sizes = [2, 1, 32], strides = [1, 1, 1]} : vector<2x8x32xf32> to vector<2x1x32xf32>
    %271 = vector.broadcast %269 : vector<1x8x32xf32> to vector<2x8x32xf32>
    %272 = vector.broadcast %270 : vector<2x1x32xf32> to vector<2x8x32xf32>
    %273 = arith.mulf %271, %272 : vector<2x8x32xf32>
    %274 = arith.addf %266, %273 : vector<2x8x32xf32>
    %c15_95 = arith.constant 15 : index
    %c0_96 = arith.constant 0 : index
    %c0_97 = arith.constant 0 : index
    %275 = vector.load %arg5[%c15_95, %c0_96, %c0_97] : memref<16x8x32xf32, #tpu.memory_space<vmem>>, vector<1x8x32xf32>
    %276 = vector.shape_cast %275 : vector<1x8x32xf32> to vector<8x32xf32>
    %277 = vector.shape_cast %276 : vector<8x32xf32> to vector<1x8x32xf32>
    %278 = vector.extract_strided_slice %220 {offsets = [0, 7, 0], sizes = [2, 1, 32], strides = [1, 1, 1]} : vector<2x8x32xf32> to vector<2x1x32xf32>
    %279 = vector.broadcast %277 : vector<1x8x32xf32> to vector<2x8x32xf32>
    %280 = vector.broadcast %278 : vector<2x1x32xf32> to vector<2x8x32xf32>
    %281 = arith.mulf %279, %280 : vector<2x8x32xf32>
    %282 = arith.addf %274, %281 : vector<2x8x32xf32>
    %283 = arith.addf %258, %282 : vector<2x8x32xf32>
    %284 = vector.shape_cast %283 : vector<2x8x32xf32> to vector<16x32xf32>
    %cst_98 = arith.constant 5.000000e-01 : f32
    %285 = vector.broadcast %cst_98 : f32 to vector<16x32xf32>
    %286 = arith.mulf %285, %284 : vector<16x32xf32>
    %cst_99 = arith.constant 4.471500e-02 : f32
    %287 = vector.broadcast %cst_99 : f32 to vector<16x32xf32>
    %288 = arith.mulf %287, %284 : vector<16x32xf32>
    %289 = arith.mulf %288, %284 : vector<16x32xf32>
    %290 = arith.mulf %289, %284 : vector<16x32xf32>
    %291 = arith.addf %284, %290 : vector<16x32xf32>
    %cst_100 = arith.constant 0.797884583 : f32
    %292 = vector.broadcast %cst_100 : f32 to vector<16x32xf32>
    %293 = arith.mulf %292, %291 : vector<16x32xf32>
    %294 = math.tanh %293 : vector<16x32xf32>
    %cst_101 = arith.constant 1.000000e+00 : f32
    %295 = vector.broadcast %cst_101 : f32 to vector<16x32xf32>
    %296 = arith.addf %295, %294 : vector<16x32xf32>
    %297 = arith.mulf %286, %296 : vector<16x32xf32>
    %c1_102 = arith.constant 1 : index
    %c0_103 = arith.constant 0 : index
    %c0_104 = arith.constant 0 : index
    %298 = vector.load %arg6[%c1_102, %c0_103, %c0_104] : memref<2x32x32xf32, #tpu.memory_space<vmem>>, vector<1x32x32xf32>
    %299 = vector.shape_cast %298 : vector<1x32x32xf32> to vector<32x32xf32>
    %cst_105 = arith.constant dense<0.000000e+00> : vector<16x32xf32>
    %300 = tpu.matmul %297, %299, %cst_105 {dimension_numbers = #tpu.dot_dimension_numbers<[1], [0], [0], [1], [0, 0, 1, 1], [], []>} : vector<16x32xf32>, vector<32x32xf32>, vector<16x32xf32> -> vector<16x32xf32>
    %c1_106 = arith.constant 1 : index
    %c0_107 = arith.constant 0 : index
    %c0_108 = arith.constant 0 : index
    %301 = vector.load %arg7[%c1_106, %c0_107, %c0_108] : memref<2x1x32xf32, #tpu.memory_space<vmem>>, vector<1x1x32xf32>
    %302 = vector.shape_cast %301 : vector<1x1x32xf32> to vector<1x32xf32>
    %303 = vector.broadcast %302 : vector<1x32xf32> to vector<16x32xf32>
    %304 = arith.addf %300, %303 : vector<16x32xf32>
    %305 = vector.shape_cast %304 : vector<16x32xf32> to vector<2x8x32xf32>
    %306 = arith.addf %305, %283 : vector<2x8x32xf32>
    %307 = arith.addf %306, %157 : vector<2x8x32xf32>
    %c0_109 = arith.constant 0 : index
    %c0_110 = arith.constant 0 : index
    %c0_111 = arith.constant 0 : index
    %308 = vector.load %arg8[%c0_109, %c0_110, %c0_111] : memref<8x8x32xf32, #tpu.memory_space<vmem>>, vector<1x8x32xf32>
    %309 = vector.shape_cast %308 : vector<1x8x32xf32> to vector<8x32xf32>
    %310 = vector.shape_cast %309 : vector<8x32xf32> to vector<1x8x32xf32>
    %311 = vector.extract_strided_slice %307 {offsets = [0, 0, 0], sizes = [2, 1, 32], strides = [1, 1, 1]} : vector<2x8x32xf32> to vector<2x1x32xf32>
    %312 = vector.broadcast %310 : vector<1x8x32xf32> to vector<2x8x32xf32>
    %313 = vector.broadcast %311 : vector<2x1x32xf32> to vector<2x8x32xf32>
    %314 = arith.mulf %312, %313 : vector<2x8x32xf32>
    %c1_112 = arith.constant 1 : index
    %c0_113 = arith.constant 0 : index
    %c0_114 = arith.constant 0 : index
    %315 = vector.load %arg8[%c1_112, %c0_113, %c0_114] : memref<8x8x32xf32, #tpu.memory_space<vmem>>, vector<1x8x32xf32>
    %316 = vector.shape_cast %315 : vector<1x8x32xf32> to vector<8x32xf32>
    %317 = vector.shape_cast %316 : vector<8x32xf32> to vector<1x8x32xf32>
    %318 = vector.extract_strided_slice %307 {offsets = [0, 1, 0], sizes = [2, 1, 32], strides = [1, 1, 1]} : vector<2x8x32xf32> to vector<2x1x32xf32>
    %319 = vector.broadcast %317 : vector<1x8x32xf32> to vector<2x8x32xf32>
    %320 = vector.broadcast %318 : vector<2x1x32xf32> to vector<2x8x32xf32>
    %321 = arith.mulf %319, %320 : vector<2x8x32xf32>
    %c2_115 = arith.constant 2 : index
    %c0_116 = arith.constant 0 : index
    %c0_117 = arith.constant 0 : index
    %322 = vector.load %arg8[%c2_115, %c0_116, %c0_117] : memref<8x8x32xf32, #tpu.memory_space<vmem>>, vector<1x8x32xf32>
    %323 = vector.shape_cast %322 : vector<1x8x32xf32> to vector<8x32xf32>
    %324 = vector.shape_cast %323 : vector<8x32xf32> to vector<1x8x32xf32>
    %325 = vector.extract_strided_slice %307 {offsets = [0, 2, 0], sizes = [2, 1, 32], strides = [1, 1, 1]} : vector<2x8x32xf32> to vector<2x1x32xf32>
    %326 = vector.broadcast %324 : vector<1x8x32xf32> to vector<2x8x32xf32>
    %327 = vector.broadcast %325 : vector<2x1x32xf32> to vector<2x8x32xf32>
    %328 = arith.mulf %326, %327 : vector<2x8x32xf32>
    %329 = arith.addf %314, %328 : vector<2x8x32xf32>
    %c4_118 = arith.constant 4 : index
    %c0_119 = arith.constant 0 : index
    %c0_120 = arith.constant 0 : index
    %330 = vector.load %arg8[%c4_118, %c0_119, %c0_120] : memref<8x8x32xf32, #tpu.memory_space<vmem>>, vector<1x8x32xf32>
    %331 = vector.shape_cast %330 : vector<1x8x32xf32> to vector<8x32xf32>
    %332 = vector.shape_cast %331 : vector<8x32xf32> to vector<1x8x32xf32>
    %333 = vector.extract_strided_slice %307 {offsets = [0, 4, 0], sizes = [2, 1, 32], strides = [1, 1, 1]} : vector<2x8x32xf32> to vector<2x1x32xf32>
    %334 = vector.broadcast %332 : vector<1x8x32xf32> to vector<2x8x32xf32>
    %335 = vector.broadcast %333 : vector<2x1x32xf32> to vector<2x8x32xf32>
    %336 = arith.mulf %334, %335 : vector<2x8x32xf32>
    %337 = arith.addf %329, %336 : vector<2x8x32xf32>
    %c6_121 = arith.constant 6 : index
    %c0_122 = arith.constant 0 : index
    %c0_123 = arith.constant 0 : index
    %338 = vector.load %arg8[%c6_121, %c0_122, %c0_123] : memref<8x8x32xf32, #tpu.memory_space<vmem>>, vector<1x8x32xf32>
    %339 = vector.shape_cast %338 : vector<1x8x32xf32> to vector<8x32xf32>
    %340 = vector.shape_cast %339 : vector<8x32xf32> to vector<1x8x32xf32>
    %341 = vector.extract_strided_slice %307 {offsets = [0, 6, 0], sizes = [2, 1, 32], strides = [1, 1, 1]} : vector<2x8x32xf32> to vector<2x1x32xf32>
    %342 = vector.broadcast %340 : vector<1x8x32xf32> to vector<2x8x32xf32>
    %343 = vector.broadcast %341 : vector<2x1x32xf32> to vector<2x8x32xf32>
    %344 = arith.mulf %342, %343 : vector<2x8x32xf32>
    %345 = arith.addf %337, %344 : vector<2x8x32xf32>
    %c3_124 = arith.constant 3 : index
    %c0_125 = arith.constant 0 : index
    %c0_126 = arith.constant 0 : index
    %346 = vector.load %arg8[%c3_124, %c0_125, %c0_126] : memref<8x8x32xf32, #tpu.memory_space<vmem>>, vector<1x8x32xf32>
    %347 = vector.shape_cast %346 : vector<1x8x32xf32> to vector<8x32xf32>
    %348 = vector.shape_cast %347 : vector<8x32xf32> to vector<1x8x32xf32>
    %349 = vector.extract_strided_slice %307 {offsets = [0, 3, 0], sizes = [2, 1, 32], strides = [1, 1, 1]} : vector<2x8x32xf32> to vector<2x1x32xf32>
    %350 = vector.broadcast %348 : vector<1x8x32xf32> to vector<2x8x32xf32>
    %351 = vector.broadcast %349 : vector<2x1x32xf32> to vector<2x8x32xf32>
    %352 = arith.mulf %350, %351 : vector<2x8x32xf32>
    %353 = arith.addf %321, %352 : vector<2x8x32xf32>
    %c5_127 = arith.constant 5 : index
    %c0_128 = arith.constant 0 : index
    %c0_129 = arith.constant 0 : index
    %354 = vector.load %arg8[%c5_127, %c0_128, %c0_129] : memref<8x8x32xf32, #tpu.memory_space<vmem>>, vector<1x8x32xf32>
    %355 = vector.shape_cast %354 : vector<1x8x32xf32> to vector<8x32xf32>
    %356 = vector.shape_cast %355 : vector<8x32xf32> to vector<1x8x32xf32>
    %357 = vector.extract_strided_slice %307 {offsets = [0, 5, 0], sizes = [2, 1, 32], strides = [1, 1, 1]} : vector<2x8x32xf32> to vector<2x1x32xf32>
    %358 = vector.broadcast %356 : vector<1x8x32xf32> to vector<2x8x32xf32>
    %359 = vector.broadcast %357 : vector<2x1x32xf32> to vector<2x8x32xf32>
    %360 = arith.mulf %358, %359 : vector<2x8x32xf32>
    %361 = arith.addf %353, %360 : vector<2x8x32xf32>
    %c7_130 = arith.constant 7 : index
    %c0_131 = arith.constant 0 : index
    %c0_132 = arith.constant 0 : index
    %362 = vector.load %arg8[%c7_130, %c0_131, %c0_132] : memref<8x8x32xf32, #tpu.memory_space<vmem>>, vector<1x8x32xf32>
    %363 = vector.shape_cast %362 : vector<1x8x32xf32> to vector<8x32xf32>
    %364 = vector.shape_cast %363 : vector<8x32xf32> to vector<1x8x32xf32>
    %365 = vector.extract_strided_slice %307 {offsets = [0, 7, 0], sizes = [2, 1, 32], strides = [1, 1, 1]} : vector<2x8x32xf32> to vector<2x1x32xf32>
    %366 = vector.broadcast %364 : vector<1x8x32xf32> to vector<2x8x32xf32>
    %367 = vector.broadcast %365 : vector<2x1x32xf32> to vector<2x8x32xf32>
    %368 = arith.mulf %366, %367 : vector<2x8x32xf32>
    %369 = arith.addf %361, %368 : vector<2x8x32xf32>
    %370 = arith.addf %345, %369 : vector<2x8x32xf32>
    %371 = vector.shape_cast %370 : vector<2x8x32xf32> to vector<16x32xf32>
    %cst_133 = arith.constant 5.000000e-01 : f32
    %372 = vector.broadcast %cst_133 : f32 to vector<16x32xf32>
    %373 = arith.mulf %372, %371 : vector<16x32xf32>
    %cst_134 = arith.constant 4.471500e-02 : f32
    %374 = vector.broadcast %cst_134 : f32 to vector<16x32xf32>
    %375 = arith.mulf %374, %371 : vector<16x32xf32>
    %376 = arith.mulf %375, %371 : vector<16x32xf32>
    %377 = arith.mulf %376, %371 : vector<16x32xf32>
    %378 = arith.addf %371, %377 : vector<16x32xf32>
    %cst_135 = arith.constant 0.797884583 : f32
    %379 = vector.broadcast %cst_135 : f32 to vector<16x32xf32>
    %380 = arith.mulf %379, %378 : vector<16x32xf32>
    %381 = math.tanh %380 : vector<16x32xf32>
    %cst_136 = arith.constant 1.000000e+00 : f32
    %382 = vector.broadcast %cst_136 : f32 to vector<16x32xf32>
    %383 = arith.addf %382, %381 : vector<16x32xf32>
    %384 = arith.mulf %373, %383 : vector<16x32xf32>
    %c0_137 = arith.constant 0 : index
    %c0_138 = arith.constant 0 : index
    %385 = vector.load %arg9[%c0_137, %c0_138] : memref<32x4xf32, #tpu.memory_space<vmem>>, vector<32x4xf32>
    %cst_139 = arith.constant dense<0.000000e+00> : vector<16x4xf32>
    %386 = tpu.matmul %384, %385, %cst_139 {dimension_numbers = #tpu.dot_dimension_numbers<[1], [0], [0], [1], [0, 0, 1, 1], [], []>} : vector<16x32xf32>, vector<32x4xf32>, vector<16x4xf32> -> vector<16x4xf32>
    %c0_140 = arith.constant 0 : index
    %c0_141 = arith.constant 0 : index
    %387 = vector.load %arg10[%c0_140, %c0_141] : memref<1x4xf32, #tpu.memory_space<vmem>>, vector<1x4xf32>
    %388 = vector.broadcast %387 : vector<1x4xf32> to vector<16x4xf32>
    %389 = arith.addf %386, %388 : vector<16x4xf32>
    %390 = vector.shape_cast %389 : vector<16x4xf32> to vector<2x32xf32>
    %c0_142 = arith.constant 0 : index
    %c0_143 = arith.constant 0 : index
    %391 = vector.load %arg11[%c0_142, %c0_143] : memref<2x32xf32, #tpu.memory_space<vmem>>, vector<2x32xf32>
    tpu.vector_store %arg11[%c0_142, %c0_143], %390 {strides = array<i32>} : memref<2x32xf32, #tpu.memory_space<vmem>>, vector<2x32xf32>,
    return
  }
  func.func @transform_0(%arg0: i32) -> (i32, i32, i32) {
    %c0_i32 = arith.constant 0 : i32
    %c0_i32_0 = arith.constant 0 : i32
    %c0_i32_1 = arith.constant 0 : i32
    return %arg0, %c0_i32, %c0_i32_0 : i32, i32, i32
  }
  func.func @transform_1(%arg0: i32) -> (i32, i32) {
    %c0_i32 = arith.constant 0 : i32
    %c0_i32_0 = arith.constant 0 : i32
    %c0_i32_1 = arith.constant 0 : i32
    return %c0_i32, %c0_i32_0 : i32, i32
  }
  func.func @transform_2(%arg0: i32) -> (i32, i32) {
    %c0_i32 = arith.constant 0 : i32
    %c0_i32_0 = arith.constant 0 : i32
    %c0_i32_1 = arith.constant 0 : i32
    return %c0_i32, %c0_i32_0 : i32, i32
  }
  func.func @transform_3(%arg0: i32) -> (i32, i32, i32) {
    %c0_i32 = arith.constant 0 : i32
    %c0_i32_0 = arith.constant 0 : i32
    %c0_i32_1 = arith.constant 0 : i32
    %c0_i32_2 = arith.constant 0 : i32
    return %c0_i32, %c0_i32_0, %c0_i32_1 : i32, i32, i32
  }
  func.func @transform_4(%arg0: i32) -> (i32, i32, i32) {
    %c0_i32 = arith.constant 0 : i32
    %c0_i32_0 = arith.constant 0 : i32
    %c0_i32_1 = arith.constant 0 : i32
    %c0_i32_2 = arith.constant 0 : i32
    return %c0_i32, %c0_i32_0, %c0_i32_1 : i32, i32, i32
  }
  func.func @transform_5(%arg0: i32) -> (i32, i32, i32) {
    %c0_i32 = arith.constant 0 : i32
    %c0_i32_0 = arith.constant 0 : i32
    %c0_i32_1 = arith.constant 0 : i32
    %c0_i32_2 = arith.constant 0 : i32
    return %c0_i32, %c0_i32_0, %c0_i32_1 : i32, i32, i32
  }
  func.func @transform_6(%arg0: i32) -> (i32, i32, i32) {
    %c0_i32 = arith.constant 0 : i32
    %c0_i32_0 = arith.constant 0 : i32
    %c0_i32_1 = arith.constant 0 : i32
    %c0_i32_2 = arith.constant 0 : i32
    return %c0_i32, %c0_i32_0, %c0_i32_1 : i32, i32, i32
  }
  func.func @transform_7(%arg0: i32) -> (i32, i32, i32) {
    %c0_i32 = arith.constant 0 : i32
    %c0_i32_0 = arith.constant 0 : i32
    %c0_i32_1 = arith.constant 0 : i32
    %c0_i32_2 = arith.constant 0 : i32
    return %c0_i32, %c0_i32_0, %c0_i32_1 : i32, i32, i32
  }
  func.func @transform_8(%arg0: i32) -> (i32, i32) {
    %c0_i32 = arith.constant 0 : i32
    %c0_i32_0 = arith.constant 0 : i32
    %c0_i32_1 = arith.constant 0 : i32
    return %c0_i32, %c0_i32_0 : i32, i32
  }
  func.func @transform_9(%arg0: i32) -> (i32, i32) {
    %c0_i32 = arith.constant 0 : i32
    %c0_i32_0 = arith.constant 0 : i32
    %c0_i32_1 = arith.constant 0 : i32
    return %c0_i32, %c0_i32_0 : i32, i32
  }
  func.func @transform_10(%arg0: i32) -> (i32, i32) {
    %c0_i32 = arith.constant 0 : i32
    %c0_i32_0 = arith.constant 0 : i32
    return %arg0, %c0_i32 : i32, i32
  }
}

module attributes {stable_mosaic.version = 11 : i64} {
  func.func @_spacetime_fused_kernel(%arg0: i32, %arg1: memref<2x8x4xf32, #tpu.memory_space<vmem>>, %arg2: memref<4x32xf32, #tpu.memory_space<vmem>>, %arg3: memref<1x32xf32, #tpu.memory_space<vmem>>, %arg4: memref<16x8x32xf32, #tpu.memory_space<vmem>>, %arg5: memref<16x8x32xf32, #tpu.memory_space<vmem>>, %arg6: memref<2x32x32xf32, #tpu.memory_space<vmem>>, %arg7: memref<2x1x32xf32, #tpu.memory_space<vmem>>, %arg8: memref<8x8x32xf32, #tpu.memory_space<vmem>>, %arg9: memref<32x4xf32, #tpu.memory_space<vmem>>, %arg10: memref<1x4xf32, #tpu.memory_space<vmem>>, %arg11: memref<2x32xf32, #tpu.memory_space<vmem>>) attributes {dimension_semantics = [#tpu.dimension_semantics<parallel>], iteration_bounds = array<i64: 1>, scalar_prefetch = 0 : i64, scratch_operands = 0 : i64, tpu.core_type = #tpu.core_type<tc>, window_params = [{transform_indices = @transform_0, window_bounds = array<i64: 2, 8, 4>}, {pipeline_mode = #tpu.pipeline_mode<synchronous>, transform_indices = @transform_1, window_bounds = array<i64: 4, 32>}, {pipeline_mode = #tpu.pipeline_mode<synchronous>, transform_indices = @transform_2, window_bounds = array<i64: 1, 32>}, {pipeline_mode = #tpu.pipeline_mode<synchronous>, transform_indices = @transform_3, window_bounds = array<i64: 16, 8, 32>}, {pipeline_mode = #tpu.pipeline_mode<synchronous>, transform_indices = @transform_4, window_bounds = array<i64: 16, 8, 32>}, {pipeline_mode = #tpu.pipeline_mode<synchronous>, transform_indices = @transform_5, window_bounds = array<i64: 2, 32, 32>}, {pipeline_mode = #tpu.pipeline_mode<synchronous>, transform_indices = @transform_6, window_bounds = array<i64: 2, 1, 32>}, {pipeline_mode = #tpu.pipeline_mode<synchronous>, transform_indices = @transform_7, window_bounds = array<i64: 8, 8, 32>}, {pipeline_mode = #tpu.pipeline_mode<synchronous>, transform_indices = @transform_8, window_bounds = array<i64: 32, 4>}, {pipeline_mode = #tpu.pipeline_mode<synchronous>, transform_indices = @transform_9, window_bounds = array<i64: 1, 4>}, {transform_indices = @transform_10, window_bounds = array<i64: 2, 32>}]} {
    %c0 = arith.constant 0 : index
    %c0_0 = arith.constant 0 : index
    %c0_1 = arith.constant 0 : index
    %0 = vector.load %arg1[%c0, %c0_0, %c0_1] : memref<2x8x4xf32, #tpu.memory_space<vmem>>, vector<2x8x4xf32>
    %1 = vector.shape_cast %0 : vector<2x8x4xf32> to vector<16x4xf32>
    %c0_2 = arith.constant 0 : index
    %c0_3 = arith.constant 0 : index
    %2 = vector.load %arg2[%c0_2, %c0_3] : memref<4x32xf32, #tpu.memory_space<vmem>>, vector<4x32xf32>
    %cst = arith.constant dense<0.000000e+00> : vector<16x32xf32>
    %3 = tpu.matmul %1, %2, %cst {dimension_numbers = #tpu.dot_dimension_numbers<[1], [0], [0], [1], [0, 0, 1, 1], [], []>} : vector<16x4xf32>, vector<4x32xf32>, vector<16x32xf32> -> vector<16x32xf32>
    %c0_4 = arith.constant 0 : index
    %c0_5 = arith.constant 0 : index
    %4 = vector.load %arg3[%c0_4, %c0_5] : memref<1x32xf32, #tpu.memory_space<vmem>>, vector<1x32xf32>
    %5 = vector.broadcast %4 : vector<1x32xf32> to vector<16x32xf32>
    %6 = arith.addf %3, %5 : vector<16x32xf32>
    %7 = vector.shape_cast %6 : vector<16x32xf32> to vector<2x8x32xf32>
    %c0_6 = arith.constant 0 : index
    %c0_7 = arith.constant 0 : index
    %c0_8 = arith.constant 0 : index
    %8 = vector.load %arg4[%c0_6, %c0_7, %c0_8] : memref<16x8x32xf32, #tpu.memory_space<vmem>>, vector<1x8x32xf32>
    %9 = vector.shape_cast %8 : vector<1x8x32xf32> to vector<8x32xf32>
    %10 = vector.shape_cast %9 : vector<8x32xf32> to vector<1x8x32xf32>
    %11 = vector.extract_strided_slice %7 {offsets = [0, 0, 0], sizes = [2, 1, 32], strides = [1, 1, 1]} : vector<2x8x32xf32> to vector<2x1x32xf32>
    %12 = vector.broadcast %10 : vector<1x8x32xf32> to vector<2x8x32xf32>
    %13 = vector.broadcast %11 : vector<2x1x32xf32> to vector<2x8x32xf32>
    %14 = arith.mulf %12, %13 : vector<2x8x32xf32>
    %c1 = arith.constant 1 : index
    %c0_9 = arith.constant 0 : index
    %c0_10 = arith.constant 0 : index
    %15 = vector.load %arg4[%c1, %c0_9, %c0_10] : memref<16x8x32xf32, #tpu.memory_space<vmem>>, vector<1x8x32xf32>
    %16 = vector.shape_cast %15 : vector<1x8x32xf32> to vector<8x32xf32>
    %17 = vector.shape_cast %16 : vector<8x32xf32> to vector<1x8x32xf32>
    %18 = vector.extract_strided_slice %7 {offsets = [0, 1, 0], sizes = [2, 1, 32], strides = [1, 1, 1]} : vector<2x8x32xf32> to vector<2x1x32xf32>
    %19 = vector.broadcast %17 : vector<1x8x32xf32> to vector<2x8x32xf32>
    %20 = vector.broadcast %18 : vector<2x1x32xf32> to vector<2x8x32xf32>
    %21 = arith.mulf %19, %20 : vector<2x8x32xf32>
    %c2 = arith.constant 2 : index
    %c0_11 = arith.constant 0 : index
    %c0_12 = arith.constant 0 : index
    %22 = vector.load %arg4[%c2, %c0_11, %c0_12] : memref<16x8x32xf32, #tpu.memory_space<vmem>>, vector<1x8x32xf32>
    %23 = vector.shape_cast %22 : vector<1x8x32xf32> to vector<8x32xf32>
    %24 = vector.shape_cast %23 : vector<8x32xf32> to vector<1x8x32xf32>
    %25 = vector.extract_strided_slice %7 {offsets = [0, 2, 0], sizes = [2, 1, 32], strides = [1, 1, 1]} : vector<2x8x32xf32> to vector<2x1x32xf32>
    %26 = vector.broadcast %24 : vector<1x8x32xf32> to vector<2x8x32xf32>
    %27 = vector.broadcast %25 : vector<2x1x32xf32> to vector<2x8x32xf32>
    %28 = arith.mulf %26, %27 : vector<2x8x32xf32>
    %29 = arith.addf %14, %28 : vector<2x8x32xf32>
    %c4 = arith.constant 4 : index
    %c0_13 = arith.constant 0 : index
    %c0_14 = arith.constant 0 : index
    %30 = vector.load %arg4[%c4, %c0_13, %c0_14] : memref<16x8x32xf32, #tpu.memory_space<vmem>>, vector<1x8x32xf32>
    %31 = vector.shape_cast %30 : vector<1x8x32xf32> to vector<8x32xf32>
    %32 = vector.shape_cast %31 : vector<8x32xf32> to vector<1x8x32xf32>
    %33 = vector.extract_strided_slice %7 {offsets = [0, 4, 0], sizes = [2, 1, 32], strides = [1, 1, 1]} : vector<2x8x32xf32> to vector<2x1x32xf32>
    %34 = vector.broadcast %32 : vector<1x8x32xf32> to vector<2x8x32xf32>
    %35 = vector.broadcast %33 : vector<2x1x32xf32> to vector<2x8x32xf32>
    %36 = arith.mulf %34, %35 : vector<2x8x32xf32>
    %37 = arith.addf %29, %36 : vector<2x8x32xf32>
    %c6 = arith.constant 6 : index
    %c0_15 = arith.constant 0 : index
    %c0_16 = arith.constant 0 : index
    %38 = vector.load %arg4[%c6, %c0_15, %c0_16] : memref<16x8x32xf32, #tpu.memory_space<vmem>>, vector<1x8x32xf32>
    %39 = vector.shape_cast %38 : vector<1x8x32xf32> to vector<8x32xf32>
    %40 = vector.shape_cast %39 : vector<8x32xf32> to vector<1x8x32xf32>
    %41 = vector.extract_strided_slice %7 {offsets = [0, 6, 0], sizes = [2, 1, 32], strides = [1, 1, 1]} : vector<2x8x32xf32> to vector<2x1x32xf32>
    %42 = vector.broadcast %40 : vector<1x8x32xf32> to vector<2x8x32xf32>
    %43 = vector.broadcast %41 : vector<2x1x32xf32> to vector<2x8x32xf32>
    %44 = arith.mulf %42, %43 : vector<2x8x32xf32>
    %45 = arith.addf %37, %44 : vector<2x8x32xf32>
    %c3 = arith.constant 3 : index
    %c0_17 = arith.constant 0 : index
    %c0_18 = arith.constant 0 : index
    %46 = vector.load %arg4[%c3, %c0_17, %c0_18] : memref<16x8x32xf32, #tpu.memory_space<vmem>>, vector<1x8x32xf32>
    %47 = vector.shape_cast %46 : vector<1x8x32xf32> to vector<8x32xf32>
    %48 = vector.shape_cast %47 : vector<8x32xf32> to vector<1x8x32xf32>
    %49 = vector.extract_strided_slice %7 {offsets = [0, 3, 0], sizes = [2, 1, 32], strides = [1, 1, 1]} : vector<2x8x32xf32> to vector<2x1x32xf32>
    %50 = vector.broadcast %48 : vector<1x8x32xf32> to vector<2x8x32xf32>
    %51 = vector.broadcast %49 : vector<2x1x32xf32> to vector<2x8x32xf32>
    %52 = arith.mulf %50, %51 : vector<2x8x32xf32>
    %53 = arith.addf %21, %52 : vector<2x8x32xf32>
    %c5 = arith.constant 5 : index
    %c0_19 = arith.constant 0 : index
    %c0_20 = arith.constant 0 : index
    %54 = vector.load %arg4[%c5, %c0_19, %c0_20] : memref<16x8x32xf32, #tpu.memory_space<vmem>>, vector<1x8x32xf32>
    %55 = vector.shape_cast %54 : vector<1x8x32xf32> to vector<8x32xf32>
    %56 = vector.shape_cast %55 : vector<8x32xf32> to vector<1x8x32xf32>
    %57 = vector.extract_strided_slice %7 {offsets = [0, 5, 0], sizes = [2, 1, 32], strides = [1, 1, 1]} : vector<2x8x32xf32> to vector<2x1x32xf32>
    %58 = vector.broadcast %56 : vector<1x8x32xf32> to vector<2x8x32xf32>
    %59 = vector.broadcast %57 : vector<2x1x32xf32> to vector<2x8x32xf32>
    %60 = arith.mulf %58, %59 : vector<2x8x32xf32>
    %61 = arith.addf %53, %60 : vector<2x8x32xf32>
    %c7 = arith.constant 7 : index
    %c0_21 = arith.constant 0 : index
    %c0_22 = arith.constant 0 : index
    %62 = vector.load %arg4[%c7, %c0_21, %c0_22] : memref<16x8x32xf32, #tpu.memory_space<vmem>>, vector<1x8x32xf32>
    %63 = vector.shape_cast %62 : vector<1x8x32xf32> to vector<8x32xf32>
    %64 = vector.shape_cast %63 : vector<8x32xf32> to vector<1x8x32xf32>
    %65 = vector.extract_strided_slice %7 {offsets = [0, 7, 0], sizes = [2, 1, 32], strides = [1, 1, 1]} : vector<2x8x32xf32> to vector<2x1x32xf32>
    %66 = vector.broadcast %64 : vector<1x8x32xf32> to vector<2x8x32xf32>
    %67 = vector.broadcast %65 : vector<2x1x32xf32> to vector<2x8x32xf32>
    %68 = arith.mulf %66, %67 : vector<2x8x32xf32>
    %69 = arith.addf %61, %68 : vector<2x8x32xf32>
    %70 = arith.addf %45, %69 : vector<2x8x32xf32>
    %c0_23 = arith.constant 0 : index
    %c0_24 = arith.constant 0 : index
    %c0_25 = arith.constant 0 : index
    %71 = vector.load %arg5[%c0_23, %c0_24, %c0_25] : memref<16x8x32xf32, #tpu.memory_space<vmem>>, vector<1x8x32xf32>
    %72 = vector.shape_cast %71 : vector<1x8x32xf32> to vector<8x32xf32>
    %73 = vector.shape_cast %72 : vector<8x32xf32> to vector<1x8x32xf32>
    %74 = vector.extract_strided_slice %70 {offsets = [0, 0, 0], sizes = [2, 1, 32], strides = [1, 1, 1]} : vector<2x8x32xf32> to vector<2x1x32xf32>
    %75 = vector.broadcast %73 : vector<1x8x32xf32> to vector<2x8x32xf32>
    %76 = vector.broadcast %74 : vector<2x1x32xf32> to vector<2x8x32xf32>
    %77 = arith.mulf %75, %76 : vector<2x8x32xf32>
    %c1_26 = arith.constant 1 : index
    %c0_27 = arith.constant 0 : index
    %c0_28 = arith.constant 0 : index
    %78 = vector.load %arg5[%c1_26, %c0_27, %c0_28] : memref<16x8x32xf32, #tpu.memory_space<vmem>>, vector<1x8x32xf32>
    %79 = vector.shape_cast %78 : vector<1x8x32xf32> to vector<8x32xf32>
    %80 = vector.shape_cast %79 : vector<8x32xf32> to vector<1x8x32xf32>
    %81 = vector.extract_strided_slice %70 {offsets = [0, 1, 0], sizes = [2, 1, 32], strides = [1, 1, 1]} : vector<2x8x32xf32> to vector<2x1x32xf32>
    %82 = vector.broadcast %80 : vector<1x8x32xf32> to vector<2x8x32xf32>
    %83 = vector.broadcast %81 : vector<2x1x32xf32> to vector<2x8x32xf32>
    %84 = arith.mulf %82, %83 : vector<2x8x32xf32>
    %c2_29 = arith.constant 2 : index
    %c0_30 = arith.constant 0 : index
    %c0_31 = arith.constant 0 : index
    %85 = vector.load %arg5[%c2_29, %c0_30, %c0_31] : memref<16x8x32xf32, #tpu.memory_space<vmem>>, vector<1x8x32xf32>
    %86 = vector.shape_cast %85 : vector<1x8x32xf32> to vector<8x32xf32>
    %87 = vector.shape_cast %86 : vector<8x32xf32> to vector<1x8x32xf32>
    %88 = vector.extract_strided_slice %70 {offsets = [0, 2, 0], sizes = [2, 1, 32], strides = [1, 1, 1]} : vector<2x8x32xf32> to vector<2x1x32xf32>
    %89 = vector.broadcast %87 : vector<1x8x32xf32> to vector<2x8x32xf32>
    %90 = vector.broadcast %88 : vector<2x1x32xf32> to vector<2x8x32xf32>
    %91 = arith.mulf %89, %90 : vector<2x8x32xf32>
    %92 = arith.addf %77, %91 : vector<2x8x32xf32>
    %c4_32 = arith.constant 4 : index
    %c0_33 = arith.constant 0 : index
    %c0_34 = arith.constant 0 : index
    %93 = vector.load %arg5[%c4_32, %c0_33, %c0_34] : memref<16x8x32xf32, #tpu.memory_space<vmem>>, vector<1x8x32xf32>
    %94 = vector.shape_cast %93 : vector<1x8x32xf32> to vector<8x32xf32>
    %95 = vector.shape_cast %94 : vector<8x32xf32> to vector<1x8x32xf32>
    %96 = vector.extract_strided_slice %70 {offsets = [0, 4, 0], sizes = [2, 1, 32], strides = [1, 1, 1]} : vector<2x8x32xf32> to vector<2x1x32xf32>
    %97 = vector.broadcast %95 : vector<1x8x32xf32> to vector<2x8x32xf32>
    %98 = vector.broadcast %96 : vector<2x1x32xf32> to vector<2x8x32xf32>
    %99 = arith.mulf %97, %98 : vector<2x8x32xf32>
    %100 = arith.addf %92, %99 : vector<2x8x32xf32>
    %c6_35 = arith.constant 6 : index
    %c0_36 = arith.constant 0 : index
    %c0_37 = arith.constant 0 : index
    %101 = vector.load %arg5[%c6_35, %c0_36, %c0_37] : memref<16x8x32xf32, #tpu.memory_space<vmem>>, vector<1x8x32xf32>
    %102 = vector.shape_cast %101 : vector<1x8x32xf32> to vector<8x32xf32>
    %103 = vector.shape_cast %102 : vector<8x32xf32> to vector<1x8x32xf32>
    %104 = vector.extract_strided_slice %70 {offsets = [0, 6, 0], sizes = [2, 1, 32], strides = [1, 1, 1]} : vector<2x8x32xf32> to vector<2x1x32xf32>
    %105 = vector.broadcast %103 : vector<1x8x32xf32> to vector<2x8x32xf32>
    %106 = vector.broadcast %104 : vector<2x1x32xf32> to vector<2x8x32xf32>
    %107 = arith.mulf %105, %106 : vector<2x8x32xf32>
    %108 = arith.addf %100, %107 : vector<2x8x32xf32>
    %c3_38 = arith.constant 3 : index
    %c0_39 = arith.constant 0 : index
    %c0_40 = arith.constant 0 : index
    %109 = vector.load %arg5[%c3_38, %c0_39, %c0_40] : memref<16x8x32xf32, #tpu.memory_space<vmem>>, vector<1x8x32xf32>
    %110 = vector.shape_cast %109 : vector<1x8x32xf32> to vector<8x32xf32>
    %111 = vector.shape_cast %110 : vector<8x32xf32> to vector<1x8x32xf32>
    %112 = vector.extract_strided_slice %70 {offsets = [0, 3, 0], sizes = [2, 1, 32], strides = [1, 1, 1]} : vector<2x8x32xf32> to vector<2x1x32xf32>
    %113 = vector.broadcast %111 : vector<1x8x32xf32> to vector<2x8x32xf32>
    %114 = vector.broadcast %112 : vector<2x1x32xf32> to vector<2x8x32xf32>
    %115 = arith.mulf %113, %114 : vector<2x8x32xf32>
    %116 = arith.addf %84, %115 : vector<2x8x32xf32>
    %c5_41 = arith.constant 5 : index
    %c0_42 = arith.constant 0 : index
    %c0_43 = arith.constant 0 : index
    %117 = vector.load %arg5[%c5_41, %c0_42, %c0_43] : memref<16x8x32xf32, #tpu.memory_space<vmem>>, vector<1x8x32xf32>
    %118 = vector.shape_cast %117 : vector<1x8x32xf32> to vector<8x32xf32>
    %119 = vector.shape_cast %118 : vector<8x32xf32> to vector<1x8x32xf32>
    %120 = vector.extract_strided_slice %70 {offsets = [0, 5, 0], sizes = [2, 1, 32], strides = [1, 1, 1]} : vector<2x8x32xf32> to vector<2x1x32xf32>
    %121 = vector.broadcast %119 : vector<1x8x32xf32> to vector<2x8x32xf32>
    %122 = vector.broadcast %120 : vector<2x1x32xf32> to vector<2x8x32xf32>
    %123 = arith.mulf %121, %122 : vector<2x8x32xf32>
    %124 = arith.addf %116, %123 : vector<2x8x32xf32>
    %c7_44 = arith.constant 7 : index
    %c0_45 = arith.constant 0 : index
    %c0_46 = arith.constant 0 : index
    %125 = vector.load %arg5[%c7_44, %c0_45, %c0_46] : memref<16x8x32xf32, #tpu.memory_space<vmem>>, vector<1x8x32xf32>
    %126 = vector.shape_cast %125 : vector<1x8x32xf32> to vector<8x32xf32>
    %127 = vector.shape_cast %126 : vector<8x32xf32> to vector<1x8x32xf32>
    %128 = vector.extract_strided_slice %70 {offsets = [0, 7, 0], sizes = [2, 1, 32], strides = [1, 1, 1]} : vector<2x8x32xf32> to vector<2x1x32xf32>
    %129 = vector.broadcast %127 : vector<1x8x32xf32> to vector<2x8x32xf32>
    %130 = vector.broadcast %128 : vector<2x1x32xf32> to vector<2x8x32xf32>
    %131 = arith.mulf %129, %130 : vector<2x8x32xf32>
    %132 = arith.addf %124, %131 : vector<2x8x32xf32>
    %133 = arith.addf %108, %132 : vector<2x8x32xf32>
    %134 = vector.shape_cast %133 : vector<2x8x32xf32> to vector<16x32xf32>
    %cst_47 = arith.constant 5.000000e-01 : f32
    %135 = vector.broadcast %cst_47 : f32 to vector<16x32xf32>
    %136 = arith.mulf %135, %134 : vector<16x32xf32>
    %cst_48 = arith.constant 4.471500e-02 : f32
    %137 = vector.broadcast %cst_48 : f32 to vector<16x32xf32>
    %138 = arith.mulf %137, %134 : vector<16x32xf32>
    %139 = arith.mulf %138, %134 : vector<16x32xf32>
    %140 = arith.mulf %139, %134 : vector<16x32xf32>
    %141 = arith.addf %134, %140 : vector<16x32xf32>
    %cst_49 = arith.constant 0.797884583 : f32
    %142 = vector.broadcast %cst_49 : f32 to vector<16x32xf32>
    %143 = arith.mulf %142, %141 : vector<16x32xf32>
    %144 = math.tanh %143 : vector<16x32xf32>
    %cst_50 = arith.constant 1.000000e+00 : f32
    %145 = vector.broadcast %cst_50 : f32 to vector<16x32xf32>
    %146 = arith.addf %145, %144 : vector<16x32xf32>
    %147 = arith.mulf %136, %146 : vector<16x32xf32>
    %c0_51 = arith.constant 0 : index
    %c0_52 = arith.constant 0 : index
    %c0_53 = arith.constant 0 : index
    %148 = vector.load %arg6[%c0_51, %c0_52, %c0_53] : memref<2x32x32xf32, #tpu.memory_space<vmem>>, vector<1x32x32xf32>
    %149 = vector.shape_cast %148 : vector<1x32x32xf32> to vector<32x32xf32>
    %cst_54 = arith.constant dense<0.000000e+00> : vector<16x32xf32>
    %150 = tpu.matmul %147, %149, %cst_54 {dimension_numbers = #tpu.dot_dimension_numbers<[1], [0], [0], [1], [0, 0, 1, 1], [], []>} : vector<16x32xf32>, vector<32x32xf32>, vector<16x32xf32> -> vector<16x32xf32>
    %c0_55 = arith.constant 0 : index
    %c0_56 = arith.constant 0 : index
    %c0_57 = arith.constant 0 : index
    %151 = vector.load %arg7[%c0_55, %c0_56, %c0_57] : memref<2x1x32xf32, #tpu.memory_space<vmem>>, vector<1x1x32xf32>
    %152 = vector.shape_cast %151 : vector<1x1x32xf32> to vector<1x32xf32>
    %153 = vector.broadcast %152 : vector<1x32xf32> to vector<16x32xf32>
    %154 = arith.addf %150, %153 : vector<16x32xf32>
    %155 = vector.shape_cast %154 : vector<16x32xf32> to vector<2x8x32xf32>
    %156 = arith.addf %155, %133 : vector<2x8x32xf32>
    %157 = arith.addf %156, %7 : vector<2x8x32xf32>
    %c8 = arith.constant 8 : index
    %c0_58 = arith.constant 0 : index
    %c0_59 = arith.constant 0 : index
    %158 = vector.load %arg4[%c8, %c0_58, %c0_59] : memref<16x8x32xf32, #tpu.memory_space<vmem>>, vector<1x8x32xf32>
    %159 = vector.shape_cast %158 : vector<1x8x32xf32> to vector<8x32xf32>
    %160 = vector.shape_cast %159 : vector<8x32xf32> to vector<1x8x32xf32>
    %161 = vector.extract_strided_slice %157 {offsets = [0, 0, 0], sizes = [2, 1, 32], strides = [1, 1, 1]} : vector<2x8x32xf32> to vector<2x1x32xf32>
    %162 = vector.broadcast %160 : vector<1x8x32xf32> to vector<2x8x32xf32>
    %163 = vector.broadcast %161 : vector<2x1x32xf32> to vector<2x8x32xf32>
    %164 = arith.mulf %162, %163 : vector<2x8x32xf32>
    %c9 = arith.constant 9 : index
    %c0_60 = arith.constant 0 : index
    %c0_61 = arith.constant 0 : index
    %165 = vector.load %arg4[%c9, %c0_60, %c0_61] : memref<16x8x32xf32, #tpu.memory_space<vmem>>, vector<1x8x32xf32>
    %166 = vector.shape_cast %165 : vector<1x8x32xf32> to vector<8x32xf32>
    %167 = vector.shape_cast %166 : vector<8x32xf32> to vector<1x8x32xf32>
    %168 = vector.extract_strided_slice %157 {offsets = [0, 1, 0], sizes = [2, 1, 32], strides = [1, 1, 1]} : vector<2x8x32xf32> to vector<2x1x32xf32>
    %169 = vector.broadcast %167 : vector<1x8x32xf32> to vector<2x8x32xf32>
    %170 = vector.broadcast %168 : vector<2x1x32xf32> to vector<2x8x32xf32>
    %171 = arith.mulf %169, %170 : vector<2x8x32xf32>
    %c10 = arith.constant 10 : index
    %c0_62 = arith.constant 0 : index
    %c0_63 = arith.constant 0 : index
    %172 = vector.load %arg4[%c10, %c0_62, %c0_63] : memref<16x8x32xf32, #tpu.memory_space<vmem>>, vector<1x8x32xf32>
    %173 = vector.shape_cast %172 : vector<1x8x32xf32> to vector<8x32xf32>
    %174 = vector.shape_cast %173 : vector<8x32xf32> to vector<1x8x32xf32>
    %175 = vector.extract_strided_slice %157 {offsets = [0, 2, 0], sizes = [2, 1, 32], strides = [1, 1, 1]} : vector<2x8x32xf32> to vector<2x1x32xf32>
    %176 = vector.broadcast %174 : vector<1x8x32xf32> to vector<2x8x32xf32>
    %177 = vector.broadcast %175 : vector<2x1x32xf32> to vector<2x8x32xf32>
    %178 = arith.mulf %176, %177 : vector<2x8x32xf32>
    %179 = arith.addf %164, %178 : vector<2x8x32xf32>
    %c12 = arith.constant 12 : index
    %c0_64 = arith.constant 0 : index
    %c0_65 = arith.constant 0 : index
    %180 = vector.load %arg4[%c12, %c0_64, %c0_65] : memref<16x8x32xf32, #tpu.memory_space<vmem>>, vector<1x8x32xf32>
    %181 = vector.shape_cast %180 : vector<1x8x32xf32> to vector<8x32xf32>
    %182 = vector.shape_cast %181 : vector<8x32xf32> to vector<1x8x32xf32>
    %183 = vector.extract_strided_slice %157 {offsets = [0, 4, 0], sizes = [2, 1, 32], strides = [1, 1, 1]} : vector<2x8x32xf32> to vector<2x1x32xf32>
    %184 = vector.broadcast %182 : vector<1x8x32xf32> to vector<2x8x32xf32>
    %185 = vector.broadcast %183 : vector<2x1x32xf32> to vector<2x8x32xf32>
    %186 = arith.mulf %184, %185 : vector<2x8x32xf32>
    %187 = arith.addf %179, %186 : vector<2x8x32xf32>
    %c14 = arith.constant 14 : index
    %c0_66 = arith.constant 0 : index
    %c0_67 = arith.constant 0 : index
    %188 = vector.load %arg4[%c14, %c0_66, %c0_67] : memref<16x8x32xf32, #tpu.memory_space<vmem>>, vector<1x8x32xf32>
    %189 = vector.shape_cast %188 : vector<1x8x32xf32> to vector<8x32xf32>
    %190 = vector.shape_cast %189 : vector<8x32xf32> to vector<1x8x32xf32>
    %191 = vector.extract_strided_slice %157 {offsets = [0, 6, 0], sizes = [2, 1, 32], strides = [1, 1, 1]} : vector<2x8x32xf32> to vector<2x1x32xf32>
    %192 = vector.broadcast %190 : vector<1x8x32xf32> to vector<2x8x32xf32>
    %193 = vector.broadcast %191 : vector<2x1x32xf32> to vector<2x8x32xf32>
    %194 = arith.mulf %192, %193 : vector<2x8x32xf32>
    %195 = arith.addf %187, %194 : vector<2x8x32xf32>
    %c11 = arith.constant 11 : index
    %c0_68 = arith.constant 0 : index
    %c0_69 = arith.constant 0 : index
    %196 = vector.load %arg4[%c11, %c0_68, %c0_69] : memref<16x8x32xf32, #tpu.memory_space<vmem>>, vector<1x8x32xf32>
    %197 = vector.shape_cast %196 : vector<1x8x32xf32> to vector<8x32xf32>
    %198 = vector.shape_cast %197 : vector<8x32xf32> to vector<1x8x32xf32>
    %199 = vector.extract_strided_slice %157 {offsets = [0, 3, 0], sizes = [2, 1, 32], strides = [1, 1, 1]} : vector<2x8x32xf32> to vector<2x1x32xf32>
    %200 = vector.broadcast %198 : vector<1x8x32xf32> to vector<2x8x32xf32>
    %201 = vector.broadcast %199 : vector<2x1x32xf32> to vector<2x8x32xf32>
    %202 = arith.mulf %200, %201 : vector<2x8x32xf32>
    %203 = arith.addf %171, %202 : vector<2x8x32xf32>
    %c13 = arith.constant 13 : index
    %c0_70 = arith.constant 0 : index
    %c0_71 = arith.constant 0 : index
    %204 = vector.load %arg4[%c13, %c0_70, %c0_71] : memref<16x8x32xf32, #tpu.memory_space<vmem>>, vector<1x8x32xf32>
    %205 = vector.shape_cast %204 : vector<1x8x32xf32> to vector<8x32xf32>
    %206 = vector.shape_cast %205 : vector<8x32xf32> to vector<1x8x32xf32>
    %207 = vector.extract_strided_slice %157 {offsets = [0, 5, 0], sizes = [2, 1, 32], strides = [1, 1, 1]} : vector<2x8x32xf32> to vector<2x1x32xf32>
    %208 = vector.broadcast %206 : vector<1x8x32xf32> to vector<2x8x32xf32>
    %209 = vector.broadcast %207 : vector<2x1x32xf32> to vector<2x8x32xf32>
    %210 = arith.mulf %208, %209 : vector<2x8x32xf32>
    %211 = arith.addf %203, %210 : vector<2x8x32xf32>
    %c15 = arith.constant 15 : index
    %c0_72 = arith.constant 0 : index
    %c0_73 = arith.constant 0 : index
    %212 = vector.load %arg4[%c15, %c0_72, %c0_73] : memref<16x8x32xf32, #tpu.memory_space<vmem>>, vector<1x8x32xf32>
    %213 = vector.shape_cast %212 : vector<1x8x32xf32> to vector<8x32xf32>
    %214 = vector.shape_cast %213 : vector<8x32xf32> to vector<1x8x32xf32>
    %215 = vector.extract_strided_slice %157 {offsets = [0, 7, 0], sizes = [2, 1, 32], strides = [1, 1, 1]} : vector<2x8x32xf32> to vector<2x1x32xf32>
    %216 = vector.broadcast %214 : vector<1x8x32xf32> to vector<2x8x32xf32>
    %217 = vector.broadcast %215 : vector<2x1x32xf32> to vector<2x8x32xf32>
    %218 = arith.mulf %216, %217 : vector<2x8x32xf32>
    %219 = arith.addf %211, %218 : vector<2x8x32xf32>
    %220 = arith.addf %195, %219 : vector<2x8x32xf32>
    %c8_74 = arith.constant 8 : index
    %c0_75 = arith.constant 0 : index
    %c0_76 = arith.constant 0 : index
    %221 = vector.load %arg5[%c8_74, %c0_75, %c0_76] : memref<16x8x32xf32, #tpu.memory_space<vmem>>, vector<1x8x32xf32>
    %222 = vector.shape_cast %221 : vector<1x8x32xf32> to vector<8x32xf32>
    %223 = vector.shape_cast %222 : vector<8x32xf32> to vector<1x8x32xf32>
    %224 = vector.extract_strided_slice %220 {offsets = [0, 0, 0], sizes = [2, 1, 32], strides = [1, 1, 1]} : vector<2x8x32xf32> to vector<2x1x32xf32>
    %225 = vector.broadcast %223 : vector<1x8x32xf32> to vector<2x8x32xf32>
    %226 = vector.broadcast %224 : vector<2x1x32xf32> to vector<2x8x32xf32>
    %227 = arith.mulf %225, %226 : vector<2x8x32xf32>
    %c9_77 = arith.constant 9 : index
    %c0_78 = arith.constant 0 : index
    %c0_79 = arith.constant 0 : index
    %228 = vector.load %arg5[%c9_77, %c0_78, %c0_79] : memref<16x8x32xf32, #tpu.memory_space<vmem>>, vector<1x8x32xf32>
    %229 = vector.shape_cast %228 : vector<1x8x32xf32> to vector<8x32xf32>
    %230 = vector.shape_cast %229 : vector<8x32xf32> to vector<1x8x32xf32>
    %231 = vector.extract_strided_slice %220 {offsets = [0, 1, 0], sizes = [2, 1, 32], strides = [1, 1, 1]} : vector<2x8x32xf32> to vector<2x1x32xf32>
    %232 = vector.broadcast %230 : vector<1x8x32xf32> to vector<2x8x32xf32>
    %233 = vector.broadcast %231 : vector<2x1x32xf32> to vector<2x8x32xf32>
    %234 = arith.mulf %232, %233 : vector<2x8x32xf32>
    %c10_80 = arith.constant 10 : index
    %c0_81 = arith.constant 0 : index
    %c0_82 = arith.constant 0 : index
    %235 = vector.load %arg5[%c10_80, %c0_81, %c0_82] : memref<16x8x32xf32, #tpu.memory_space<vmem>>, vector<1x8x32xf32>
    %236 = vector.shape_cast %235 : vector<1x8x32xf32> to vector<8x32xf32>
    %237 = vector.shape_cast %236 : vector<8x32xf32> to vector<1x8x32xf32>
    %238 = vector.extract_strided_slice %220 {offsets = [0, 2, 0], sizes = [2, 1, 32], strides = [1, 1, 1]} : vector<2x8x32xf32> to vector<2x1x32xf32>
    %239 = vector.broadcast %237 : vector<1x8x32xf32> to vector<2x8x32xf32>
    %240 = vector.broadcast %238 : vector<2x1x32xf32> to vector<2x8x32xf32>
    %241 = arith.mulf %239, %240 : vector<2x8x32xf32>
    %242 = arith.addf %227, %241 : vector<2x8x32xf32>
    %c12_83 = arith.constant 12 : index
    %c0_84 = arith.constant 0 : index
    %c0_85 = arith.constant 0 : index
    %243 = vector.load %arg5[%c12_83, %c0_84, %c0_85] : memref<16x8x32xf32, #tpu.memory_space<vmem>>, vector<1x8x32xf32>
    %244 = vector.shape_cast %243 : vector<1x8x32xf32> to vector<8x32xf32>
    %245 = vector.shape_cast %244 : vector<8x32xf32> to vector<1x8x32xf32>
    %246 = vector.extract_strided_slice %220 {offsets = [0, 4, 0], sizes = [2, 1, 32], strides = [1, 1, 1]} : vector<2x8x32xf32> to vector<2x1x32xf32>
    %247 = vector.broadcast %245 : vector<1x8x32xf32> to vector<2x8x32xf32>
    %248 = vector.broadcast %246 : vector<2x1x32xf32> to vector<2x8x32xf32>
    %249 = arith.mulf %247, %248 : vector<2x8x32xf32>
    %250 = arith.addf %242, %249 : vector<2x8x32xf32>
    %c14_86 = arith.constant 14 : index
    %c0_87 = arith.constant 0 : index
    %c0_88 = arith.constant 0 : index
    %251 = vector.load %arg5[%c14_86, %c0_87, %c0_88] : memref<16x8x32xf32, #tpu.memory_space<vmem>>, vector<1x8x32xf32>
    %252 = vector.shape_cast %251 : vector<1x8x32xf32> to vector<8x32xf32>
    %253 = vector.shape_cast %252 : vector<8x32xf32> to vector<1x8x32xf32>
    %254 = vector.extract_strided_slice %220 {offsets = [0, 6, 0], sizes = [2, 1, 32], strides = [1, 1, 1]} : vector<2x8x32xf32> to vector<2x1x32xf32>
    %255 = vector.broadcast %253 : vector<1x8x32xf32> to vector<2x8x32xf32>
    %256 = vector.broadcast %254 : vector<2x1x32xf32> to vector<2x8x32xf32>
    %257 = arith.mulf %255, %256 : vector<2x8x32xf32>
    %258 = arith.addf %250, %257 : vector<2x8x32xf32>
    %c11_89 = arith.constant 11 : index
    %c0_90 = arith.constant 0 : index
    %c0_91 = arith.constant 0 : index
    %259 = vector.load %arg5[%c11_89, %c0_90, %c0_91] : memref<16x8x32xf32, #tpu.memory_space<vmem>>, vector<1x8x32xf32>
    %260 = vector.shape_cast %259 : vector<1x8x32xf32> to vector<8x32xf32>
    %261 = vector.shape_cast %260 : vector<8x32xf32> to vector<1x8x32xf32>
    %262 = vector.extract_strided_slice %220 {offsets = [0, 3, 0], sizes = [2, 1, 32], strides = [1, 1, 1]} : vector<2x8x32xf32> to vector<2x1x32xf32>
    %263 = vector.broadcast %261 : vector<1x8x32xf32> to vector<2x8x32xf32>
    %264 = vector.broadcast %262 : vector<2x1x32xf32> to vector<2x8x32xf32>
    %265 = arith.mulf %263, %264 : vector<2x8x32xf32>
    %266 = arith.addf %234, %265 : vector<2x8x32xf32>
    %c13_92 = arith.constant 13 : index
    %c0_93 = arith.constant 0 : index
    %c0_94 = arith.constant 0 : index
    %267 = vector.load %arg5[%c13_92, %c0_93, %c0_94] : memref<16x8x32xf32, #tpu.memory_space<vmem>>, vector<1x8x32xf32>
    %268 = vector.shape_cast %267 : vector<1x8x32xf32> to vector<8x32xf32>
    %269 = vector.shape_cast %268 : vector<8x32xf32> to vector<1x8x32xf32>
    %270 = vector.extract_strided_slice %220 {offsets = [0, 5, 0], sizes = [2, 1, 32], strides = [1, 1, 1]} : vector<2x8x32xf32> to vector<2x1x32xf32>
    %271 = vector.broadcast %269 : vector<1x8x32xf32> to vector<2x8x32xf32>
    %272 = vector.broadcast %270 : vector<2x1x32xf32> to vector<2x8x32xf32>
    %273 = arith.mulf %271, %272 : vector<2x8x32xf32>
    %274 = arith.addf %266, %273 : vector<2x8x32xf32>
    %c15_95 = arith.constant 15 : index
    %c0_96 = arith.constant 0 : index
    %c0_97 = arith.constant 0 : index
    %275 = vector.load %arg5[%c15_95, %c0_96, %c0_97] : memref<16x8x32xf32, #tpu.memory_space<vmem>>, vector<1x8x32xf32>
    %276 = vector.shape_cast %275 : vector<1x8x32xf32> to vector<8x32xf32>
    %277 = vector.shape_cast %276 : vector<8x32xf32> to vector<1x8x32xf32>
    %278 = vector.extract_strided_slice %220 {offsets = [0, 7, 0], sizes = [2, 1, 32], strides = [1, 1, 1]} : vector<2x8x32xf32> to vector<2x1x32xf32>
    %279 = vector.broadcast %277 : vector<1x8x32xf32> to vector<2x8x32xf32>
    %280 = vector.broadcast %278 : vector<2x1x32xf32> to vector<2x8x32xf32>
    %281 = arith.mulf %279, %280 : vector<2x8x32xf32>
    %282 = arith.addf %274, %281 : vector<2x8x32xf32>
    %283 = arith.addf %258, %282 : vector<2x8x32xf32>
    %284 = vector.shape_cast %283 : vector<2x8x32xf32> to vector<16x32xf32>
    %cst_98 = arith.constant 5.000000e-01 : f32
    %285 = vector.broadcast %cst_98 : f32 to vector<16x32xf32>
    %286 = arith.mulf %285, %284 : vector<16x32xf32>
    %cst_99 = arith.constant 4.471500e-02 : f32
    %287 = vector.broadcast %cst_99 : f32 to vector<16x32xf32>
    %288 = arith.mulf %287, %284 : vector<16x32xf32>
    %289 = arith.mulf %288, %284 : vector<16x32xf32>
    %290 = arith.mulf %289, %284 : vector<16x32xf32>
    %291 = arith.addf %284, %290 : vector<16x32xf32>
    %cst_100 = arith.constant 0.797884583 : f32
    %292 = vector.broadcast %cst_100 : f32 to vector<16x32xf32>
    %293 = arith.mulf %292, %291 : vector<16x32xf32>
    %294 = math.tanh %293 : vector<16x32xf32>
    %cst_101 = arith.constant 1.000000e+00 : f32
    %295 = vector.broadcast %cst_101 : f32 to vector<16x32xf32>
    %296 = arith.addf %295, %294 : vector<16x32xf32>
    %297 = arith.mulf %286, %296 : vector<16x32xf32>
    %c1_102 = arith.constant 1 : index
    %c0_103 = arith.constant 0 : index
    %c0_104 = arith.constant 0 : index
    %298 = vector.load %arg6[%c1_102, %c0_103, %c0_104] : memref<2x32x32xf32, #tpu.memory_space<vmem>>, vector<1x32x32xf32>
    %299 = vector.shape_cast %298 : vector<1x32x32xf32> to vector<32x32xf32>
    %cst_105 = arith.constant dense<0.000000e+00> : vector<16x32xf32>
    %300 = tpu.matmul %297, %299, %cst_105 {dimension_numbers = #tpu.dot_dimension_numbers<[1], [0], [0], [1], [0, 0, 1, 1], [], []>} : vector<16x32xf32>, vector<32x32xf32>, vector<16x32xf32> -> vector<16x32xf32>
    %c1_106 = arith.constant 1 : index
    %c0_107 = arith.constant 0 : index
    %c0_108 = arith.constant 0 : index
    %301 = vector.load %arg7[%c1_106, %c0_107, %c0_108] : memref<2x1x32xf32, #tpu.memory_space<vmem>>, vector<1x1x32xf32>
    %302 = vector.shape_cast %301 : vector<1x1x32xf32> to vector<1x32xf32>
    %303 = vector.broadcast %302 : vector<1x32xf32> to vector<16x32xf32>
    %304 = arith.addf %300, %303 : vector<16x32xf32>
    %305 = vector.shape_cast %304 : vector<16x32xf32> to vector<2x8x32xf32>
    %306 = arith.addf %305, %283 : vector<2x8x32xf32>
    %307 = arith.addf %306, %157 : vector<2x8x32xf32>
    %c0_109 = arith.constant 0 : index
    %c0_110 = arith.constant 0 : index
    %c0_111 = arith.constant 0 : index
    %308 = vector.load %arg8[%c0_109, %c0_110, %c0_111] : memref<8x8x32xf32, #tpu.memory_space<vmem>>, vector<1x8x32xf32>
    %309 = vector.shape_cast %308 : vector<1x8x32xf32> to vector<8x32xf32>
    %310 = vector.shape_cast %309 : vector<8x32xf32> to vector<1x8x32xf32>
    %311 = vector.extract_strided_slice %307 {offsets = [0, 0, 0], sizes = [2, 1, 32], strides = [1, 1, 1]} : vector<2x8x32xf32> to vector<2x1x32xf32>
    %312 = vector.broadcast %310 : vector<1x8x32xf32> to vector<2x8x32xf32>
    %313 = vector.broadcast %311 : vector<2x1x32xf32> to vector<2x8x32xf32>
    %314 = arith.mulf %312, %313 : vector<2x8x32xf32>
    %c1_112 = arith.constant 1 : index
    %c0_113 = arith.constant 0 : index
    %c0_114 = arith.constant 0 : index
    %315 = vector.load %arg8[%c1_112, %c0_113, %c0_114] : memref<8x8x32xf32, #tpu.memory_space<vmem>>, vector<1x8x32xf32>
    %316 = vector.shape_cast %315 : vector<1x8x32xf32> to vector<8x32xf32>
    %317 = vector.shape_cast %316 : vector<8x32xf32> to vector<1x8x32xf32>
    %318 = vector.extract_strided_slice %307 {offsets = [0, 1, 0], sizes = [2, 1, 32], strides = [1, 1, 1]} : vector<2x8x32xf32> to vector<2x1x32xf32>
    %319 = vector.broadcast %317 : vector<1x8x32xf32> to vector<2x8x32xf32>
    %320 = vector.broadcast %318 : vector<2x1x32xf32> to vector<2x8x32xf32>
    %321 = arith.mulf %319, %320 : vector<2x8x32xf32>
    %c2_115 = arith.constant 2 : index
    %c0_116 = arith.constant 0 : index
    %c0_117 = arith.constant 0 : index
    %322 = vector.load %arg8[%c2_115, %c0_116, %c0_117] : memref<8x8x32xf32, #tpu.memory_space<vmem>>, vector<1x8x32xf32>
    %323 = vector.shape_cast %322 : vector<1x8x32xf32> to vector<8x32xf32>
    %324 = vector.shape_cast %323 : vector<8x32xf32> to vector<1x8x32xf32>
    %325 = vector.extract_strided_slice %307 {offsets = [0, 2, 0], sizes = [2, 1, 32], strides = [1, 1, 1]} : vector<2x8x32xf32> to vector<2x1x32xf32>
    %326 = vector.broadcast %324 : vector<1x8x32xf32> to vector<2x8x32xf32>
    %327 = vector.broadcast %325 : vector<2x1x32xf32> to vector<2x8x32xf32>
    %328 = arith.mulf %326, %327 : vector<2x8x32xf32>
    %329 = arith.addf %314, %328 : vector<2x8x32xf32>
    %c4_118 = arith.constant 4 : index
    %c0_119 = arith.constant 0 : index
    %c0_120 = arith.constant 0 : index
    %330 = vector.load %arg8[%c4_118, %c0_119, %c0_120] : memref<8x8x32xf32, #tpu.memory_space<vmem>>, vector<1x8x32xf32>
    %331 = vector.shape_cast %330 : vector<1x8x32xf32> to vector<8x32xf32>
    %332 = vector.shape_cast %331 : vector<8x32xf32> to vector<1x8x32xf32>
    %333 = vector.extract_strided_slice %307 {offsets = [0, 4, 0], sizes = [2, 1, 32], strides = [1, 1, 1]} : vector<2x8x32xf32> to vector<2x1x32xf32>
    %334 = vector.broadcast %332 : vector<1x8x32xf32> to vector<2x8x32xf32>
    %335 = vector.broadcast %333 : vector<2x1x32xf32> to vector<2x8x32xf32>
    %336 = arith.mulf %334, %335 : vector<2x8x32xf32>
    %337 = arith.addf %329, %336 : vector<2x8x32xf32>
    %c6_121 = arith.constant 6 : index
    %c0_122 = arith.constant 0 : index
    %c0_123 = arith.constant 0 : index
    %338 = vector.load %arg8[%c6_121, %c0_122, %c0_123] : memref<8x8x32xf32, #tpu.memory_space<vmem>>, vector<1x8x32xf32>
    %339 = vector.shape_cast %338 : vector<1x8x32xf32> to vector<8x32xf32>
    %340 = vector.shape_cast %339 : vector<8x32xf32> to vector<1x8x32xf32>
    %341 = vector.extract_strided_slice %307 {offsets = [0, 6, 0], sizes = [2, 1, 32], strides = [1, 1, 1]} : vector<2x8x32xf32> to vector<2x1x32xf32>
    %342 = vector.broadcast %340 : vector<1x8x32xf32> to vector<2x8x32xf32>
    %343 = vector.broadcast %341 : vector<2x1x32xf32> to vector<2x8x32xf32>
    %344 = arith.mulf %342, %343 : vector<2x8x32xf32>
    %345 = arith.addf %337, %344 : vector<2x8x32xf32>
    %c3_124 = arith.constant 3 : index
    %c0_125 = arith.constant 0 : index
    %c0_126 = arith.constant 0 : index
    %346 = vector.load %arg8[%c3_124, %c0_125, %c0_126] : memref<8x8x32xf32, #tpu.memory_space<vmem>>, vector<1x8x32xf32>
    %347 = vector.shape_cast %346 : vector<1x8x32xf32> to vector<8x32xf32>
    %348 = vector.shape_cast %347 : vector<8x32xf32> to vector<1x8x32xf32>
    %349 = vector.extract_strided_slice %307 {offsets = [0, 3, 0], sizes = [2, 1, 32], strides = [1, 1, 1]} : vector<2x8x32xf32> to vector<2x1x32xf32>
    %350 = vector.broadcast %348 : vector<1x8x32xf32> to vector<2x8x32xf32>
    %351 = vector.broadcast %349 : vector<2x1x32xf32> to vector<2x8x32xf32>
    %352 = arith.mulf %350, %351 : vector<2x8x32xf32>
    %353 = arith.addf %321, %352 : vector<2x8x32xf32>
    %c5_127 = arith.constant 5 : index
    %c0_128 = arith.constant 0 : index
    %c0_129 = arith.constant 0 : index
    %354 = vector.load %arg8[%c5_127, %c0_128, %c0_129] : memref<8x8x32xf32, #tpu.memory_space<vmem>>, vector<1x8x32xf32>
    %355 = vector.shape_cast %354 : vector<1x8x32xf32> to vector<8x32xf32>
    %356 = vector.shape_cast %355 : vector<8x32xf32> to vector<1x8x32xf32>
    %357 = vector.extract_strided_slice %307 {offsets = [0, 5, 0], sizes = [2, 1, 32], strides = [1, 1, 1]} : vector<2x8x32xf32> to vector<2x1x32xf32>
    %358 = vector.broadcast %356 : vector<1x8x32xf32> to vector<2x8x32xf32>
    %359 = vector.broadcast %357 : vector<2x1x32xf32> to vector<2x8x32xf32>
    %360 = arith.mulf %358, %359 : vector<2x8x32xf32>
    %361 = arith.addf %353, %360 : vector<2x8x32xf32>
    %c7_130 = arith.constant 7 : index
    %c0_131 = arith.constant 0 : index
    %c0_132 = arith.constant 0 : index
    %362 = vector.load %arg8[%c7_130, %c0_131, %c0_132] : memref<8x8x32xf32, #tpu.memory_space<vmem>>, vector<1x8x32xf32>
    %363 = vector.shape_cast %362 : vector<1x8x32xf32> to vector<8x32xf32>
    %364 = vector.shape_cast %363 : vector<8x32xf32> to vector<1x8x32xf32>
    %365 = vector.extract_strided_slice %307 {offsets = [0, 7, 0], sizes = [2, 1, 32], strides = [1, 1, 1]} : vector<2x8x32xf32> to vector<2x1x32xf32>
    %366 = vector.broadcast %364 : vector<1x8x32xf32> to vector<2x8x32xf32>
    %367 = vector.broadcast %365 : vector<2x1x32xf32> to vector<2x8x32xf32>
    %368 = arith.mulf %366, %367 : vector<2x8x32xf32>
    %369 = arith.addf %361, %368 : vector<2x8x32xf32>
    %370 = arith.addf %345, %369 : vector<2x8x32xf32>
    %371 = vector.shape_cast %370 : vector<2x8x32xf32> to vector<16x32xf32>
    %cst_133 = arith.constant 5.000000e-01 : f32
    %372 = vector.broadcast %cst_133 : f32 to vector<16x32xf32>
    %373 = arith.mulf %372, %371 : vector<16x32xf32>
    %cst_134 = arith.constant 4.471500e-02 : f32
    %374 = vector.broadcast %cst_134 : f32 to vector<16x32xf32>
    %375 = arith.mulf %374, %371 : vector<16x32xf32>
    %376 = arith.mulf %375, %371 : vector<16x32xf32>
    %377 = arith.mulf %376, %371 : vector<16x32xf32>
    %378 = arith.addf %371, %377 : vector<16x32xf32>
    %cst_135 = arith.constant 0.797884583 : f32
    %379 = vector.broadcast %cst_135 : f32 to vector<16x32xf32>
    %380 = arith.mulf %379, %378 : vector<16x32xf32>
    %381 = math.tanh %380 : vector<16x32xf32>
    %cst_136 = arith.constant 1.000000e+00 : f32
    %382 = vector.broadcast %cst_136 : f32 to vector<16x32xf32>
    %383 = arith.addf %382, %381 : vector<16x32xf32>
    %384 = arith.mulf %373, %383 : vector<16x32xf32>
    %c0_137 = arith.constant 0 : index
    %c0_138 = arith.constant 0 : index
    %385 = vector.load %arg9[%c0_137, %c0_138] : memref<32x4xf32, #tpu.memory_space<vmem>>, vector<32x4xf32>
    %cst_139 = arith.constant dense<0.000000e+00> : vector<16x4xf32>
    %386 = tpu.matmul %384, %385, %cst_139 {dimension_numbers = #tpu.dot_dimension_numbers<[1], [0], [0], [1], [0, 0, 1, 1], [], []>} : vector<16x32xf32>, vector<32x4xf32>, vector<16x4xf32> -> vector<16x4xf32>
    %c0_140 = arith.constant 0 : index
    %c0_141 = arith.constant 0 : index
    %387 = vector.load %arg10[%c0_140, %c0_141] : memref<1x4xf32, #tpu.memory_space<vmem>>, vector<1x4xf32>
    %388 = vector.broadcast %387 : vector<1x4xf32> to vector<16x4xf32>
    %389 = arith.addf %386, %388 : vector<16x4xf32>
    %390 = vector.shape_cast %389 : vector<16x4xf32> to vector<2x32xf32>
    %c0_142 = arith.constant 0 : index
    %c0_143 = arith.constant 0 : index
    %391 = vector.load %arg11[%c0_142, %c0_143] : memref<2x32xf32, #tpu.memory_space<vmem>>, vector<2x32xf32>
    tpu.vector_store %arg11[%c0_142, %c0_143], %390 {strides = array<i32>} : memref<2x32xf32, #tpu.memory_space<vmem>>, vector<2x32xf32>,
    return
  }
  func.func @transform_0(%arg0: i32) -> (i32, i32, i32) {
    %c0_i32 = arith.constant 0 : i32
    %c0_i32_0 = arith.constant 0 : i32
    %c0_i32_1 = arith.constant 0 : i32
    return %arg0, %c0_i32, %c0_i32_0 : i32, i32, i32
  }
  func.func @transform_1(%arg0: i32) -> (i32, i32) {
    %c0_i32 = arith.constant 0 : i32
    %c0_i32_0 = arith.constant 0 : i32
    %c0_i32_1 = arith.constant 0 : i32
    return %c0_i32, %c0_i32_0 : i32, i32
  }
  func.func @transform_2(%arg0: i32) -> (i32, i32) {
    %c0_i32 = arith.constant 0 : i32
    %c0_i32_0 = arith.constant 0 : i32
    %c0_i32_1 = arith.constant 0 : i32
    return %c0_i32, %c0_i32_0 : i32, i32
  }
  func.func @transform_3(%arg0: i32) -> (i32, i32, i32) {
    %c0_i32 = arith.constant 0 : i32
    %c0_i32_0 = arith.constant 0 : i32
    %c0_i32_1 = arith.constant 0 : i32
    %c0_i32_2 = arith.constant 0 : i32
    return %c0_i32, %c0_i32_0, %c0_i32_1 : i32, i32, i32
  }
  func.func @transform_4(%arg0: i32) -> (i32, i32, i32) {
    %c0_i32 = arith.constant 0 : i32
    %c0_i32_0 = arith.constant 0 : i32
    %c0_i32_1 = arith.constant 0 : i32
    %c0_i32_2 = arith.constant 0 : i32
    return %c0_i32, %c0_i32_0, %c0_i32_1 : i32, i32, i32
  }
  func.func @transform_5(%arg0: i32) -> (i32, i32, i32) {
    %c0_i32 = arith.constant 0 : i32
    %c0_i32_0 = arith.constant 0 : i32
    %c0_i32_1 = arith.constant 0 : i32
    %c0_i32_2 = arith.constant 0 : i32
    return %c0_i32, %c0_i32_0, %c0_i32_1 : i32, i32, i32
  }
  func.func @transform_6(%arg0: i32) -> (i32, i32, i32) {
    %c0_i32 = arith.constant 0 : i32
    %c0_i32_0 = arith.constant 0 : i32
    %c0_i32_1 = arith.constant 0 : i32
    %c0_i32_2 = arith.constant 0 : i32
    return %c0_i32, %c0_i32_0, %c0_i32_1 : i32, i32, i32
  }
  func.func @transform_7(%arg0: i32) -> (i32, i32, i32) {
    %c0_i32 = arith.constant 0 : i32
    %c0_i32_0 = arith.constant 0 : i32
    %c0_i32_1 = arith.constant 0 : i32
    %c0_i32_2 = arith.constant 0 : i32
    return %c0_i32, %c0_i32_0, %c0_i32_1 : i32, i32, i32
  }
  func.func @transform_8(%arg0: i32) -> (i32, i32) {
    %c0_i32 = arith.constant 0 : i32
    %c0_i32_0 = arith.constant 0 : i32
    %c0_i32_1 = arith.constant 0 : i32
    return %c0_i32, %c0_i32_0 : i32, i32
  }
  func.func @transform_9(%arg0: i32) -> (i32, i32) {
    %c0_i32 = arith.constant 0 : i32
    %c0_i32_0 = arith.constant 0 : i32
    %c0_i32_1 = arith.constant 0 : i32
    return %c0_i32, %c0_i32_0 : i32, i32
  }
  func.func @transform_10(%arg0: i32) -> (i32, i32) {
    %c0_i32 = arith.constant 0 : i32
    %c0_i32_0 = arith.constant 0 : i32
    return %arg0, %c0_i32 : i32, i32
  }
}

module attributes {stable_mosaic.version = 11 : i64} {
  func.func @_spacetime_fused_kernel(%arg0: i32, %arg1: memref<2x8x4xf32, #tpu.memory_space<vmem>>, %arg2: memref<4x32xf32, #tpu.memory_space<vmem>>, %arg3: memref<1x32xf32, #tpu.memory_space<vmem>>, %arg4: memref<16x8x32xf32, #tpu.memory_space<vmem>>, %arg5: memref<16x8x32xf32, #tpu.memory_space<vmem>>, %arg6: memref<2x32x32xf32, #tpu.memory_space<vmem>>, %arg7: memref<2x1x32xf32, #tpu.memory_space<vmem>>, %arg8: memref<8x8x32xf32, #tpu.memory_space<vmem>>, %arg9: memref<32x4xf32, #tpu.memory_space<vmem>>, %arg10: memref<1x4xf32, #tpu.memory_space<vmem>>, %arg11: memref<2x32xf32, #tpu.memory_space<vmem>>) attributes {dimension_semantics = [#tpu.dimension_semantics<parallel>], iteration_bounds = array<i64: 1>, scalar_prefetch = 0 : i64, scratch_operands = 0 : i64, tpu.core_type = #tpu.core_type<tc>, window_params = [{transform_indices = @transform_0, window_bounds = array<i64: 2, 8, 4>}, {pipeline_mode = #tpu.pipeline_mode<synchronous>, transform_indices = @transform_1, window_bounds = array<i64: 4, 32>}, {pipeline_mode = #tpu.pipeline_mode<synchronous>, transform_indices = @transform_2, window_bounds = array<i64: 1, 32>}, {pipeline_mode = #tpu.pipeline_mode<synchronous>, transform_indices = @transform_3, window_bounds = array<i64: 16, 8, 32>}, {pipeline_mode = #tpu.pipeline_mode<synchronous>, transform_indices = @transform_4, window_bounds = array<i64: 16, 8, 32>}, {pipeline_mode = #tpu.pipeline_mode<synchronous>, transform_indices = @transform_5, window_bounds = array<i64: 2, 32, 32>}, {pipeline_mode = #tpu.pipeline_mode<synchronous>, transform_indices = @transform_6, window_bounds = array<i64: 2, 1, 32>}, {pipeline_mode = #tpu.pipeline_mode<synchronous>, transform_indices = @transform_7, window_bounds = array<i64: 8, 8, 32>}, {pipeline_mode = #tpu.pipeline_mode<synchronous>, transform_indices = @transform_8, window_bounds = array<i64: 32, 4>}, {pipeline_mode = #tpu.pipeline_mode<synchronous>, transform_indices = @transform_9, window_bounds = array<i64: 1, 4>}, {transform_indices = @transform_10, window_bounds = array<i64: 2, 32>}]} {
    %c0 = arith.constant 0 : index
    %c0_0 = arith.constant 0 : index
    %c0_1 = arith.constant 0 : index
    %0 = vector.load %arg1[%c0, %c0_0, %c0_1] : memref<2x8x4xf32, #tpu.memory_space<vmem>>, vector<2x8x4xf32>
    %1 = vector.shape_cast %0 : vector<2x8x4xf32> to vector<16x4xf32>
    %c0_2 = arith.constant 0 : index
    %c0_3 = arith.constant 0 : index
    %2 = vector.load %arg2[%c0_2, %c0_3] : memref<4x32xf32, #tpu.memory_space<vmem>>, vector<4x32xf32>
    %cst = arith.constant dense<0.000000e+00> : vector<16x32xf32>
    %3 = tpu.matmul %1, %2, %cst {dimension_numbers = #tpu.dot_dimension_numbers<[1], [0], [0], [1], [0, 0, 1, 1], [], []>} : vector<16x4xf32>, vector<4x32xf32>, vector<16x32xf32> -> vector<16x32xf32>
    %c0_4 = arith.constant 0 : index
    %c0_5 = arith.constant 0 : index
    %4 = vector.load %arg3[%c0_4, %c0_5] : memref<1x32xf32, #tpu.memory_space<vmem>>, vector<1x32xf32>
    %5 = vector.broadcast %4 : vector<1x32xf32> to vector<16x32xf32>
    %6 = arith.addf %3, %5 : vector<16x32xf32>
    %7 = vector.shape_cast %6 : vector<16x32xf32> to vector<2x8x32xf32>
    %c0_6 = arith.constant 0 : index
    %c0_7 = arith.constant 0 : index
    %c0_8 = arith.constant 0 : index
    %8 = vector.load %arg4[%c0_6, %c0_7, %c0_8] : memref<16x8x32xf32, #tpu.memory_space<vmem>>, vector<1x8x32xf32>
    %9 = vector.shape_cast %8 : vector<1x8x32xf32> to vector<8x32xf32>
    %10 = vector.shape_cast %9 : vector<8x32xf32> to vector<1x8x32xf32>
    %11 = vector.extract_strided_slice %7 {offsets = [0, 0, 0], sizes = [2, 1, 32], strides = [1, 1, 1]} : vector<2x8x32xf32> to vector<2x1x32xf32>
    %12 = vector.broadcast %10 : vector<1x8x32xf32> to vector<2x8x32xf32>
    %13 = vector.broadcast %11 : vector<2x1x32xf32> to vector<2x8x32xf32>
    %14 = arith.mulf %12, %13 : vector<2x8x32xf32>
    %c1 = arith.constant 1 : index
    %c0_9 = arith.constant 0 : index
    %c0_10 = arith.constant 0 : index
    %15 = vector.load %arg4[%c1, %c0_9, %c0_10] : memref<16x8x32xf32, #tpu.memory_space<vmem>>, vector<1x8x32xf32>
    %16 = vector.shape_cast %15 : vector<1x8x32xf32> to vector<8x32xf32>
    %17 = vector.shape_cast %16 : vector<8x32xf32> to vector<1x8x32xf32>
    %18 = vector.extract_strided_slice %7 {offsets = [0, 1, 0], sizes = [2, 1, 32], strides = [1, 1, 1]} : vector<2x8x32xf32> to vector<2x1x32xf32>
    %19 = vector.broadcast %17 : vector<1x8x32xf32> to vector<2x8x32xf32>
    %20 = vector.broadcast %18 : vector<2x1x32xf32> to vector<2x8x32xf32>
    %21 = arith.mulf %19, %20 : vector<2x8x32xf32>
    %c2 = arith.constant 2 : index
    %c0_11 = arith.constant 0 : index
    %c0_12 = arith.constant 0 : index
    %22 = vector.load %arg4[%c2, %c0_11, %c0_12] : memref<16x8x32xf32, #tpu.memory_space<vmem>>, vector<1x8x32xf32>
    %23 = vector.shape_cast %22 : vector<1x8x32xf32> to vector<8x32xf32>
    %24 = vector.shape_cast %23 : vector<8x32xf32> to vector<1x8x32xf32>
    %25 = vector.extract_strided_slice %7 {offsets = [0, 2, 0], sizes = [2, 1, 32], strides = [1, 1, 1]} : vector<2x8x32xf32> to vector<2x1x32xf32>
    %26 = vector.broadcast %24 : vector<1x8x32xf32> to vector<2x8x32xf32>
    %27 = vector.broadcast %25 : vector<2x1x32xf32> to vector<2x8x32xf32>
    %28 = arith.mulf %26, %27 : vector<2x8x32xf32>
    %29 = arith.addf %14, %28 : vector<2x8x32xf32>
    %c4 = arith.constant 4 : index
    %c0_13 = arith.constant 0 : index
    %c0_14 = arith.constant 0 : index
    %30 = vector.load %arg4[%c4, %c0_13, %c0_14] : memref<16x8x32xf32, #tpu.memory_space<vmem>>, vector<1x8x32xf32>
    %31 = vector.shape_cast %30 : vector<1x8x32xf32> to vector<8x32xf32>
    %32 = vector.shape_cast %31 : vector<8x32xf32> to vector<1x8x32xf32>
    %33 = vector.extract_strided_slice %7 {offsets = [0, 4, 0], sizes = [2, 1, 32], strides = [1, 1, 1]} : vector<2x8x32xf32> to vector<2x1x32xf32>
    %34 = vector.broadcast %32 : vector<1x8x32xf32> to vector<2x8x32xf32>
    %35 = vector.broadcast %33 : vector<2x1x32xf32> to vector<2x8x32xf32>
    %36 = arith.mulf %34, %35 : vector<2x8x32xf32>
    %37 = arith.addf %29, %36 : vector<2x8x32xf32>
    %c6 = arith.constant 6 : index
    %c0_15 = arith.constant 0 : index
    %c0_16 = arith.constant 0 : index
    %38 = vector.load %arg4[%c6, %c0_15, %c0_16] : memref<16x8x32xf32, #tpu.memory_space<vmem>>, vector<1x8x32xf32>
    %39 = vector.shape_cast %38 : vector<1x8x32xf32> to vector<8x32xf32>
    %40 = vector.shape_cast %39 : vector<8x32xf32> to vector<1x8x32xf32>
    %41 = vector.extract_strided_slice %7 {offsets = [0, 6, 0], sizes = [2, 1, 32], strides = [1, 1, 1]} : vector<2x8x32xf32> to vector<2x1x32xf32>
    %42 = vector.broadcast %40 : vector<1x8x32xf32> to vector<2x8x32xf32>
    %43 = vector.broadcast %41 : vector<2x1x32xf32> to vector<2x8x32xf32>
    %44 = arith.mulf %42, %43 : vector<2x8x32xf32>
    %45 = arith.addf %37, %44 : vector<2x8x32xf32>
    %c3 = arith.constant 3 : index
    %c0_17 = arith.constant 0 : index
    %c0_18 = arith.constant 0 : index
    %46 = vector.load %arg4[%c3, %c0_17, %c0_18] : memref<16x8x32xf32, #tpu.memory_space<vmem>>, vector<1x8x32xf32>
    %47 = vector.shape_cast %46 : vector<1x8x32xf32> to vector<8x32xf32>
    %48 = vector.shape_cast %47 : vector<8x32xf32> to vector<1x8x32xf32>
    %49 = vector.extract_strided_slice %7 {offsets = [0, 3, 0], sizes = [2, 1, 32], strides = [1, 1, 1]} : vector<2x8x32xf32> to vector<2x1x32xf32>
    %50 = vector.broadcast %48 : vector<1x8x32xf32> to vector<2x8x32xf32>
    %51 = vector.broadcast %49 : vector<2x1x32xf32> to vector<2x8x32xf32>
    %52 = arith.mulf %50, %51 : vector<2x8x32xf32>
    %53 = arith.addf %21, %52 : vector<2x8x32xf32>
    %c5 = arith.constant 5 : index
    %c0_19 = arith.constant 0 : index
    %c0_20 = arith.constant 0 : index
    %54 = vector.load %arg4[%c5, %c0_19, %c0_20] : memref<16x8x32xf32, #tpu.memory_space<vmem>>, vector<1x8x32xf32>
    %55 = vector.shape_cast %54 : vector<1x8x32xf32> to vector<8x32xf32>
    %56 = vector.shape_cast %55 : vector<8x32xf32> to vector<1x8x32xf32>
    %57 = vector.extract_strided_slice %7 {offsets = [0, 5, 0], sizes = [2, 1, 32], strides = [1, 1, 1]} : vector<2x8x32xf32> to vector<2x1x32xf32>
    %58 = vector.broadcast %56 : vector<1x8x32xf32> to vector<2x8x32xf32>
    %59 = vector.broadcast %57 : vector<2x1x32xf32> to vector<2x8x32xf32>
    %60 = arith.mulf %58, %59 : vector<2x8x32xf32>
    %61 = arith.addf %53, %60 : vector<2x8x32xf32>
    %c7 = arith.constant 7 : index
    %c0_21 = arith.constant 0 : index
    %c0_22 = arith.constant 0 : index
    %62 = vector.load %arg4[%c7, %c0_21, %c0_22] : memref<16x8x32xf32, #tpu.memory_space<vmem>>, vector<1x8x32xf32>
    %63 = vector.shape_cast %62 : vector<1x8x32xf32> to vector<8x32xf32>
    %64 = vector.shape_cast %63 : vector<8x32xf32> to vector<1x8x32xf32>
    %65 = vector.extract_strided_slice %7 {offsets = [0, 7, 0], sizes = [2, 1, 32], strides = [1, 1, 1]} : vector<2x8x32xf32> to vector<2x1x32xf32>
    %66 = vector.broadcast %64 : vector<1x8x32xf32> to vector<2x8x32xf32>
    %67 = vector.broadcast %65 : vector<2x1x32xf32> to vector<2x8x32xf32>
    %68 = arith.mulf %66, %67 : vector<2x8x32xf32>
    %69 = arith.addf %61, %68 : vector<2x8x32xf32>
    %70 = arith.addf %45, %69 : vector<2x8x32xf32>
    %c0_23 = arith.constant 0 : index
    %c0_24 = arith.constant 0 : index
    %c0_25 = arith.constant 0 : index
    %71 = vector.load %arg5[%c0_23, %c0_24, %c0_25] : memref<16x8x32xf32, #tpu.memory_space<vmem>>, vector<1x8x32xf32>
    %72 = vector.shape_cast %71 : vector<1x8x32xf32> to vector<8x32xf32>
    %73 = vector.shape_cast %72 : vector<8x32xf32> to vector<1x8x32xf32>
    %74 = vector.extract_strided_slice %70 {offsets = [0, 0, 0], sizes = [2, 1, 32], strides = [1, 1, 1]} : vector<2x8x32xf32> to vector<2x1x32xf32>
    %75 = vector.broadcast %73 : vector<1x8x32xf32> to vector<2x8x32xf32>
    %76 = vector.broadcast %74 : vector<2x1x32xf32> to vector<2x8x32xf32>
    %77 = arith.mulf %75, %76 : vector<2x8x32xf32>
    %c1_26 = arith.constant 1 : index
    %c0_27 = arith.constant 0 : index
    %c0_28 = arith.constant 0 : index
    %78 = vector.load %arg5[%c1_26, %c0_27, %c0_28] : memref<16x8x32xf32, #tpu.memory_space<vmem>>, vector<1x8x32xf32>
    %79 = vector.shape_cast %78 : vector<1x8x32xf32> to vector<8x32xf32>
    %80 = vector.shape_cast %79 : vector<8x32xf32> to vector<1x8x32xf32>
    %81 = vector.extract_strided_slice %70 {offsets = [0, 1, 0], sizes = [2, 1, 32], strides = [1, 1, 1]} : vector<2x8x32xf32> to vector<2x1x32xf32>
    %82 = vector.broadcast %80 : vector<1x8x32xf32> to vector<2x8x32xf32>
    %83 = vector.broadcast %81 : vector<2x1x32xf32> to vector<2x8x32xf32>
    %84 = arith.mulf %82, %83 : vector<2x8x32xf32>
    %c2_29 = arith.constant 2 : index
    %c0_30 = arith.constant 0 : index
    %c0_31 = arith.constant 0 : index
    %85 = vector.load %arg5[%c2_29, %c0_30, %c0_31] : memref<16x8x32xf32, #tpu.memory_space<vmem>>, vector<1x8x32xf32>
    %86 = vector.shape_cast %85 : vector<1x8x32xf32> to vector<8x32xf32>
    %87 = vector.shape_cast %86 : vector<8x32xf32> to vector<1x8x32xf32>
    %88 = vector.extract_strided_slice %70 {offsets = [0, 2, 0], sizes = [2, 1, 32], strides = [1, 1, 1]} : vector<2x8x32xf32> to vector<2x1x32xf32>
    %89 = vector.broadcast %87 : vector<1x8x32xf32> to vector<2x8x32xf32>
    %90 = vector.broadcast %88 : vector<2x1x32xf32> to vector<2x8x32xf32>
    %91 = arith.mulf %89, %90 : vector<2x8x32xf32>
    %92 = arith.addf %77, %91 : vector<2x8x32xf32>
    %c4_32 = arith.constant 4 : index
    %c0_33 = arith.constant 0 : index
    %c0_34 = arith.constant 0 : index
    %93 = vector.load %arg5[%c4_32, %c0_33, %c0_34] : memref<16x8x32xf32, #tpu.memory_space<vmem>>, vector<1x8x32xf32>
    %94 = vector.shape_cast %93 : vector<1x8x32xf32> to vector<8x32xf32>
    %95 = vector.shape_cast %94 : vector<8x32xf32> to vector<1x8x32xf32>
    %96 = vector.extract_strided_slice %70 {offsets = [0, 4, 0], sizes = [2, 1, 32], strides = [1, 1, 1]} : vector<2x8x32xf32> to vector<2x1x32xf32>
    %97 = vector.broadcast %95 : vector<1x8x32xf32> to vector<2x8x32xf32>
    %98 = vector.broadcast %96 : vector<2x1x32xf32> to vector<2x8x32xf32>
    %99 = arith.mulf %97, %98 : vector<2x8x32xf32>
    %100 = arith.addf %92, %99 : vector<2x8x32xf32>
    %c6_35 = arith.constant 6 : index
    %c0_36 = arith.constant 0 : index
    %c0_37 = arith.constant 0 : index
    %101 = vector.load %arg5[%c6_35, %c0_36, %c0_37] : memref<16x8x32xf32, #tpu.memory_space<vmem>>, vector<1x8x32xf32>
    %102 = vector.shape_cast %101 : vector<1x8x32xf32> to vector<8x32xf32>
    %103 = vector.shape_cast %102 : vector<8x32xf32> to vector<1x8x32xf32>
    %104 = vector.extract_strided_slice %70 {offsets = [0, 6, 0], sizes = [2, 1, 32], strides = [1, 1, 1]} : vector<2x8x32xf32> to vector<2x1x32xf32>
    %105 = vector.broadcast %103 : vector<1x8x32xf32> to vector<2x8x32xf32>
    %106 = vector.broadcast %104 : vector<2x1x32xf32> to vector<2x8x32xf32>
    %107 = arith.mulf %105, %106 : vector<2x8x32xf32>
    %108 = arith.addf %100, %107 : vector<2x8x32xf32>
    %c3_38 = arith.constant 3 : index
    %c0_39 = arith.constant 0 : index
    %c0_40 = arith.constant 0 : index
    %109 = vector.load %arg5[%c3_38, %c0_39, %c0_40] : memref<16x8x32xf32, #tpu.memory_space<vmem>>, vector<1x8x32xf32>
    %110 = vector.shape_cast %109 : vector<1x8x32xf32> to vector<8x32xf32>
    %111 = vector.shape_cast %110 : vector<8x32xf32> to vector<1x8x32xf32>
    %112 = vector.extract_strided_slice %70 {offsets = [0, 3, 0], sizes = [2, 1, 32], strides = [1, 1, 1]} : vector<2x8x32xf32> to vector<2x1x32xf32>
    %113 = vector.broadcast %111 : vector<1x8x32xf32> to vector<2x8x32xf32>
    %114 = vector.broadcast %112 : vector<2x1x32xf32> to vector<2x8x32xf32>
    %115 = arith.mulf %113, %114 : vector<2x8x32xf32>
    %116 = arith.addf %84, %115 : vector<2x8x32xf32>
    %c5_41 = arith.constant 5 : index
    %c0_42 = arith.constant 0 : index
    %c0_43 = arith.constant 0 : index
    %117 = vector.load %arg5[%c5_41, %c0_42, %c0_43] : memref<16x8x32xf32, #tpu.memory_space<vmem>>, vector<1x8x32xf32>
    %118 = vector.shape_cast %117 : vector<1x8x32xf32> to vector<8x32xf32>
    %119 = vector.shape_cast %118 : vector<8x32xf32> to vector<1x8x32xf32>
    %120 = vector.extract_strided_slice %70 {offsets = [0, 5, 0], sizes = [2, 1, 32], strides = [1, 1, 1]} : vector<2x8x32xf32> to vector<2x1x32xf32>
    %121 = vector.broadcast %119 : vector<1x8x32xf32> to vector<2x8x32xf32>
    %122 = vector.broadcast %120 : vector<2x1x32xf32> to vector<2x8x32xf32>
    %123 = arith.mulf %121, %122 : vector<2x8x32xf32>
    %124 = arith.addf %116, %123 : vector<2x8x32xf32>
    %c7_44 = arith.constant 7 : index
    %c0_45 = arith.constant 0 : index
    %c0_46 = arith.constant 0 : index
    %125 = vector.load %arg5[%c7_44, %c0_45, %c0_46] : memref<16x8x32xf32, #tpu.memory_space<vmem>>, vector<1x8x32xf32>
    %126 = vector.shape_cast %125 : vector<1x8x32xf32> to vector<8x32xf32>
    %127 = vector.shape_cast %126 : vector<8x32xf32> to vector<1x8x32xf32>
    %128 = vector.extract_strided_slice %70 {offsets = [0, 7, 0], sizes = [2, 1, 32], strides = [1, 1, 1]} : vector<2x8x32xf32> to vector<2x1x32xf32>
    %129 = vector.broadcast %127 : vector<1x8x32xf32> to vector<2x8x32xf32>
    %130 = vector.broadcast %128 : vector<2x1x32xf32> to vector<2x8x32xf32>
    %131 = arith.mulf %129, %130 : vector<2x8x32xf32>
    %132 = arith.addf %124, %131 : vector<2x8x32xf32>
    %133 = arith.addf %108, %132 : vector<2x8x32xf32>
    %134 = vector.shape_cast %133 : vector<2x8x32xf32> to vector<16x32xf32>
    %cst_47 = arith.constant 5.000000e-01 : f32
    %135 = vector.broadcast %cst_47 : f32 to vector<16x32xf32>
    %136 = arith.mulf %135, %134 : vector<16x32xf32>
    %cst_48 = arith.constant 4.471500e-02 : f32
    %137 = vector.broadcast %cst_48 : f32 to vector<16x32xf32>
    %138 = arith.mulf %137, %134 : vector<16x32xf32>
    %139 = arith.mulf %138, %134 : vector<16x32xf32>
    %140 = arith.mulf %139, %134 : vector<16x32xf32>
    %141 = arith.addf %134, %140 : vector<16x32xf32>
    %cst_49 = arith.constant 0.797884583 : f32
    %142 = vector.broadcast %cst_49 : f32 to vector<16x32xf32>
    %143 = arith.mulf %142, %141 : vector<16x32xf32>
    %144 = math.tanh %143 : vector<16x32xf32>
    %cst_50 = arith.constant 1.000000e+00 : f32
    %145 = vector.broadcast %cst_50 : f32 to vector<16x32xf32>
    %146 = arith.addf %145, %144 : vector<16x32xf32>
    %147 = arith.mulf %136, %146 : vector<16x32xf32>
    %c0_51 = arith.constant 0 : index
    %c0_52 = arith.constant 0 : index
    %c0_53 = arith.constant 0 : index
    %148 = vector.load %arg6[%c0_51, %c0_52, %c0_53] : memref<2x32x32xf32, #tpu.memory_space<vmem>>, vector<1x32x32xf32>
    %149 = vector.shape_cast %148 : vector<1x32x32xf32> to vector<32x32xf32>
    %cst_54 = arith.constant dense<0.000000e+00> : vector<16x32xf32>
    %150 = tpu.matmul %147, %149, %cst_54 {dimension_numbers = #tpu.dot_dimension_numbers<[1], [0], [0], [1], [0, 0, 1, 1], [], []>} : vector<16x32xf32>, vector<32x32xf32>, vector<16x32xf32> -> vector<16x32xf32>
    %c0_55 = arith.constant 0 : index
    %c0_56 = arith.constant 0 : index
    %c0_57 = arith.constant 0 : index
    %151 = vector.load %arg7[%c0_55, %c0_56, %c0_57] : memref<2x1x32xf32, #tpu.memory_space<vmem>>, vector<1x1x32xf32>
    %152 = vector.shape_cast %151 : vector<1x1x32xf32> to vector<1x32xf32>
    %153 = vector.broadcast %152 : vector<1x32xf32> to vector<16x32xf32>
    %154 = arith.addf %150, %153 : vector<16x32xf32>
    %155 = vector.shape_cast %154 : vector<16x32xf32> to vector<2x8x32xf32>
    %156 = arith.addf %155, %133 : vector<2x8x32xf32>
    %157 = arith.addf %156, %7 : vector<2x8x32xf32>
    %c8 = arith.constant 8 : index
    %c0_58 = arith.constant 0 : index
    %c0_59 = arith.constant 0 : index
    %158 = vector.load %arg4[%c8, %c0_58, %c0_59] : memref<16x8x32xf32, #tpu.memory_space<vmem>>, vector<1x8x32xf32>
    %159 = vector.shape_cast %158 : vector<1x8x32xf32> to vector<8x32xf32>
    %160 = vector.shape_cast %159 : vector<8x32xf32> to vector<1x8x32xf32>
    %161 = vector.extract_strided_slice %157 {offsets = [0, 0, 0], sizes = [2, 1, 32], strides = [1, 1, 1]} : vector<2x8x32xf32> to vector<2x1x32xf32>
    %162 = vector.broadcast %160 : vector<1x8x32xf32> to vector<2x8x32xf32>
    %163 = vector.broadcast %161 : vector<2x1x32xf32> to vector<2x8x32xf32>
    %164 = arith.mulf %162, %163 : vector<2x8x32xf32>
    %c9 = arith.constant 9 : index
    %c0_60 = arith.constant 0 : index
    %c0_61 = arith.constant 0 : index
    %165 = vector.load %arg4[%c9, %c0_60, %c0_61] : memref<16x8x32xf32, #tpu.memory_space<vmem>>, vector<1x8x32xf32>
    %166 = vector.shape_cast %165 : vector<1x8x32xf32> to vector<8x32xf32>
    %167 = vector.shape_cast %166 : vector<8x32xf32> to vector<1x8x32xf32>
    %168 = vector.extract_strided_slice %157 {offsets = [0, 1, 0], sizes = [2, 1, 32], strides = [1, 1, 1]} : vector<2x8x32xf32> to vector<2x1x32xf32>
    %169 = vector.broadcast %167 : vector<1x8x32xf32> to vector<2x8x32xf32>
    %170 = vector.broadcast %168 : vector<2x1x32xf32> to vector<2x8x32xf32>
    %171 = arith.mulf %169, %170 : vector<2x8x32xf32>
    %c10 = arith.constant 10 : index
    %c0_62 = arith.constant 0 : index
    %c0_63 = arith.constant 0 : index
    %172 = vector.load %arg4[%c10, %c0_62, %c0_63] : memref<16x8x32xf32, #tpu.memory_space<vmem>>, vector<1x8x32xf32>
    %173 = vector.shape_cast %172 : vector<1x8x32xf32> to vector<8x32xf32>
    %174 = vector.shape_cast %173 : vector<8x32xf32> to vector<1x8x32xf32>
    %175 = vector.extract_strided_slice %157 {offsets = [0, 2, 0], sizes = [2, 1, 32], strides = [1, 1, 1]} : vector<2x8x32xf32> to vector<2x1x32xf32>
    %176 = vector.broadcast %174 : vector<1x8x32xf32> to vector<2x8x32xf32>
    %177 = vector.broadcast %175 : vector<2x1x32xf32> to vector<2x8x32xf32>
    %178 = arith.mulf %176, %177 : vector<2x8x32xf32>
    %179 = arith.addf %164, %178 : vector<2x8x32xf32>
    %c12 = arith.constant 12 : index
    %c0_64 = arith.constant 0 : index
    %c0_65 = arith.constant 0 : index
    %180 = vector.load %arg4[%c12, %c0_64, %c0_65] : memref<16x8x32xf32, #tpu.memory_space<vmem>>, vector<1x8x32xf32>
    %181 = vector.shape_cast %180 : vector<1x8x32xf32> to vector<8x32xf32>
    %182 = vector.shape_cast %181 : vector<8x32xf32> to vector<1x8x32xf32>
    %183 = vector.extract_strided_slice %157 {offsets = [0, 4, 0], sizes = [2, 1, 32], strides = [1, 1, 1]} : vector<2x8x32xf32> to vector<2x1x32xf32>
    %184 = vector.broadcast %182 : vector<1x8x32xf32> to vector<2x8x32xf32>
    %185 = vector.broadcast %183 : vector<2x1x32xf32> to vector<2x8x32xf32>
    %186 = arith.mulf %184, %185 : vector<2x8x32xf32>
    %187 = arith.addf %179, %186 : vector<2x8x32xf32>
    %c14 = arith.constant 14 : index
    %c0_66 = arith.constant 0 : index
    %c0_67 = arith.constant 0 : index
    %188 = vector.load %arg4[%c14, %c0_66, %c0_67] : memref<16x8x32xf32, #tpu.memory_space<vmem>>, vector<1x8x32xf32>
    %189 = vector.shape_cast %188 : vector<1x8x32xf32> to vector<8x32xf32>
    %190 = vector.shape_cast %189 : vector<8x32xf32> to vector<1x8x32xf32>
    %191 = vector.extract_strided_slice %157 {offsets = [0, 6, 0], sizes = [2, 1, 32], strides = [1, 1, 1]} : vector<2x8x32xf32> to vector<2x1x32xf32>
    %192 = vector.broadcast %190 : vector<1x8x32xf32> to vector<2x8x32xf32>
    %193 = vector.broadcast %191 : vector<2x1x32xf32> to vector<2x8x32xf32>
    %194 = arith.mulf %192, %193 : vector<2x8x32xf32>
    %195 = arith.addf %187, %194 : vector<2x8x32xf32>
    %c11 = arith.constant 11 : index
    %c0_68 = arith.constant 0 : index
    %c0_69 = arith.constant 0 : index
    %196 = vector.load %arg4[%c11, %c0_68, %c0_69] : memref<16x8x32xf32, #tpu.memory_space<vmem>>, vector<1x8x32xf32>
    %197 = vector.shape_cast %196 : vector<1x8x32xf32> to vector<8x32xf32>
    %198 = vector.shape_cast %197 : vector<8x32xf32> to vector<1x8x32xf32>
    %199 = vector.extract_strided_slice %157 {offsets = [0, 3, 0], sizes = [2, 1, 32], strides = [1, 1, 1]} : vector<2x8x32xf32> to vector<2x1x32xf32>
    %200 = vector.broadcast %198 : vector<1x8x32xf32> to vector<2x8x32xf32>
    %201 = vector.broadcast %199 : vector<2x1x32xf32> to vector<2x8x32xf32>
    %202 = arith.mulf %200, %201 : vector<2x8x32xf32>
    %203 = arith.addf %171, %202 : vector<2x8x32xf32>
    %c13 = arith.constant 13 : index
    %c0_70 = arith.constant 0 : index
    %c0_71 = arith.constant 0 : index
    %204 = vector.load %arg4[%c13, %c0_70, %c0_71] : memref<16x8x32xf32, #tpu.memory_space<vmem>>, vector<1x8x32xf32>
    %205 = vector.shape_cast %204 : vector<1x8x32xf32> to vector<8x32xf32>
    %206 = vector.shape_cast %205 : vector<8x32xf32> to vector<1x8x32xf32>
    %207 = vector.extract_strided_slice %157 {offsets = [0, 5, 0], sizes = [2, 1, 32], strides = [1, 1, 1]} : vector<2x8x32xf32> to vector<2x1x32xf32>
    %208 = vector.broadcast %206 : vector<1x8x32xf32> to vector<2x8x32xf32>
    %209 = vector.broadcast %207 : vector<2x1x32xf32> to vector<2x8x32xf32>
    %210 = arith.mulf %208, %209 : vector<2x8x32xf32>
    %211 = arith.addf %203, %210 : vector<2x8x32xf32>
    %c15 = arith.constant 15 : index
    %c0_72 = arith.constant 0 : index
    %c0_73 = arith.constant 0 : index
    %212 = vector.load %arg4[%c15, %c0_72, %c0_73] : memref<16x8x32xf32, #tpu.memory_space<vmem>>, vector<1x8x32xf32>
    %213 = vector.shape_cast %212 : vector<1x8x32xf32> to vector<8x32xf32>
    %214 = vector.shape_cast %213 : vector<8x32xf32> to vector<1x8x32xf32>
    %215 = vector.extract_strided_slice %157 {offsets = [0, 7, 0], sizes = [2, 1, 32], strides = [1, 1, 1]} : vector<2x8x32xf32> to vector<2x1x32xf32>
    %216 = vector.broadcast %214 : vector<1x8x32xf32> to vector<2x8x32xf32>
    %217 = vector.broadcast %215 : vector<2x1x32xf32> to vector<2x8x32xf32>
    %218 = arith.mulf %216, %217 : vector<2x8x32xf32>
    %219 = arith.addf %211, %218 : vector<2x8x32xf32>
    %220 = arith.addf %195, %219 : vector<2x8x32xf32>
    %c8_74 = arith.constant 8 : index
    %c0_75 = arith.constant 0 : index
    %c0_76 = arith.constant 0 : index
    %221 = vector.load %arg5[%c8_74, %c0_75, %c0_76] : memref<16x8x32xf32, #tpu.memory_space<vmem>>, vector<1x8x32xf32>
    %222 = vector.shape_cast %221 : vector<1x8x32xf32> to vector<8x32xf32>
    %223 = vector.shape_cast %222 : vector<8x32xf32> to vector<1x8x32xf32>
    %224 = vector.extract_strided_slice %220 {offsets = [0, 0, 0], sizes = [2, 1, 32], strides = [1, 1, 1]} : vector<2x8x32xf32> to vector<2x1x32xf32>
    %225 = vector.broadcast %223 : vector<1x8x32xf32> to vector<2x8x32xf32>
    %226 = vector.broadcast %224 : vector<2x1x32xf32> to vector<2x8x32xf32>
    %227 = arith.mulf %225, %226 : vector<2x8x32xf32>
    %c9_77 = arith.constant 9 : index
    %c0_78 = arith.constant 0 : index
    %c0_79 = arith.constant 0 : index
    %228 = vector.load %arg5[%c9_77, %c0_78, %c0_79] : memref<16x8x32xf32, #tpu.memory_space<vmem>>, vector<1x8x32xf32>
    %229 = vector.shape_cast %228 : vector<1x8x32xf32> to vector<8x32xf32>
    %230 = vector.shape_cast %229 : vector<8x32xf32> to vector<1x8x32xf32>
    %231 = vector.extract_strided_slice %220 {offsets = [0, 1, 0], sizes = [2, 1, 32], strides = [1, 1, 1]} : vector<2x8x32xf32> to vector<2x1x32xf32>
    %232 = vector.broadcast %230 : vector<1x8x32xf32> to vector<2x8x32xf32>
    %233 = vector.broadcast %231 : vector<2x1x32xf32> to vector<2x8x32xf32>
    %234 = arith.mulf %232, %233 : vector<2x8x32xf32>
    %c10_80 = arith.constant 10 : index
    %c0_81 = arith.constant 0 : index
    %c0_82 = arith.constant 0 : index
    %235 = vector.load %arg5[%c10_80, %c0_81, %c0_82] : memref<16x8x32xf32, #tpu.memory_space<vmem>>, vector<1x8x32xf32>
    %236 = vector.shape_cast %235 : vector<1x8x32xf32> to vector<8x32xf32>
    %237 = vector.shape_cast %236 : vector<8x32xf32> to vector<1x8x32xf32>
    %238 = vector.extract_strided_slice %220 {offsets = [0, 2, 0], sizes = [2, 1, 32], strides = [1, 1, 1]} : vector<2x8x32xf32> to vector<2x1x32xf32>
    %239 = vector.broadcast %237 : vector<1x8x32xf32> to vector<2x8x32xf32>
    %240 = vector.broadcast %238 : vector<2x1x32xf32> to vector<2x8x32xf32>
    %241 = arith.mulf %239, %240 : vector<2x8x32xf32>
    %242 = arith.addf %227, %241 : vector<2x8x32xf32>
    %c12_83 = arith.constant 12 : index
    %c0_84 = arith.constant 0 : index
    %c0_85 = arith.constant 0 : index
    %243 = vector.load %arg5[%c12_83, %c0_84, %c0_85] : memref<16x8x32xf32, #tpu.memory_space<vmem>>, vector<1x8x32xf32>
    %244 = vector.shape_cast %243 : vector<1x8x32xf32> to vector<8x32xf32>
    %245 = vector.shape_cast %244 : vector<8x32xf32> to vector<1x8x32xf32>
    %246 = vector.extract_strided_slice %220 {offsets = [0, 4, 0], sizes = [2, 1, 32], strides = [1, 1, 1]} : vector<2x8x32xf32> to vector<2x1x32xf32>
    %247 = vector.broadcast %245 : vector<1x8x32xf32> to vector<2x8x32xf32>
    %248 = vector.broadcast %246 : vector<2x1x32xf32> to vector<2x8x32xf32>
    %249 = arith.mulf %247, %248 : vector<2x8x32xf32>
    %250 = arith.addf %242, %249 : vector<2x8x32xf32>
    %c14_86 = arith.constant 14 : index
    %c0_87 = arith.constant 0 : index
    %c0_88 = arith.constant 0 : index
    %251 = vector.load %arg5[%c14_86, %c0_87, %c0_88] : memref<16x8x32xf32, #tpu.memory_space<vmem>>, vector<1x8x32xf32>
    %252 = vector.shape_cast %251 : vector<1x8x32xf32> to vector<8x32xf32>
    %253 = vector.shape_cast %252 : vector<8x32xf32> to vector<1x8x32xf32>
    %254 = vector.extract_strided_slice %220 {offsets = [0, 6, 0], sizes = [2, 1, 32], strides = [1, 1, 1]} : vector<2x8x32xf32> to vector<2x1x32xf32>
    %255 = vector.broadcast %253 : vector<1x8x32xf32> to vector<2x8x32xf32>
    %256 = vector.broadcast %254 : vector<2x1x32xf32> to vector<2x8x32xf32>
    %257 = arith.mulf %255, %256 : vector<2x8x32xf32>
    %258 = arith.addf %250, %257 : vector<2x8x32xf32>
    %c11_89 = arith.constant 11 : index
    %c0_90 = arith.constant 0 : index
    %c0_91 = arith.constant 0 : index
    %259 = vector.load %arg5[%c11_89, %c0_90, %c0_91] : memref<16x8x32xf32, #tpu.memory_space<vmem>>, vector<1x8x32xf32>
    %260 = vector.shape_cast %259 : vector<1x8x32xf32> to vector<8x32xf32>
    %261 = vector.shape_cast %260 : vector<8x32xf32> to vector<1x8x32xf32>
    %262 = vector.extract_strided_slice %220 {offsets = [0, 3, 0], sizes = [2, 1, 32], strides = [1, 1, 1]} : vector<2x8x32xf32> to vector<2x1x32xf32>
    %263 = vector.broadcast %261 : vector<1x8x32xf32> to vector<2x8x32xf32>
    %264 = vector.broadcast %262 : vector<2x1x32xf32> to vector<2x8x32xf32>
    %265 = arith.mulf %263, %264 : vector<2x8x32xf32>
    %266 = arith.addf %234, %265 : vector<2x8x32xf32>
    %c13_92 = arith.constant 13 : index
    %c0_93 = arith.constant 0 : index
    %c0_94 = arith.constant 0 : index
    %267 = vector.load %arg5[%c13_92, %c0_93, %c0_94] : memref<16x8x32xf32, #tpu.memory_space<vmem>>, vector<1x8x32xf32>
    %268 = vector.shape_cast %267 : vector<1x8x32xf32> to vector<8x32xf32>
    %269 = vector.shape_cast %268 : vector<8x32xf32> to vector<1x8x32xf32>
    %270 = vector.extract_strided_slice %220 {offsets = [0, 5, 0], sizes = [2, 1, 32], strides = [1, 1, 1]} : vector<2x8x32xf32> to vector<2x1x32xf32>
    %271 = vector.broadcast %269 : vector<1x8x32xf32> to vector<2x8x32xf32>
    %272 = vector.broadcast %270 : vector<2x1x32xf32> to vector<2x8x32xf32>
    %273 = arith.mulf %271, %272 : vector<2x8x32xf32>
    %274 = arith.addf %266, %273 : vector<2x8x32xf32>
    %c15_95 = arith.constant 15 : index
    %c0_96 = arith.constant 0 : index
    %c0_97 = arith.constant 0 : index
    %275 = vector.load %arg5[%c15_95, %c0_96, %c0_97] : memref<16x8x32xf32, #tpu.memory_space<vmem>>, vector<1x8x32xf32>
    %276 = vector.shape_cast %275 : vector<1x8x32xf32> to vector<8x32xf32>
    %277 = vector.shape_cast %276 : vector<8x32xf32> to vector<1x8x32xf32>
    %278 = vector.extract_strided_slice %220 {offsets = [0, 7, 0], sizes = [2, 1, 32], strides = [1, 1, 1]} : vector<2x8x32xf32> to vector<2x1x32xf32>
    %279 = vector.broadcast %277 : vector<1x8x32xf32> to vector<2x8x32xf32>
    %280 = vector.broadcast %278 : vector<2x1x32xf32> to vector<2x8x32xf32>
    %281 = arith.mulf %279, %280 : vector<2x8x32xf32>
    %282 = arith.addf %274, %281 : vector<2x8x32xf32>
    %283 = arith.addf %258, %282 : vector<2x8x32xf32>
    %284 = vector.shape_cast %283 : vector<2x8x32xf32> to vector<16x32xf32>
    %cst_98 = arith.constant 5.000000e-01 : f32
    %285 = vector.broadcast %cst_98 : f32 to vector<16x32xf32>
    %286 = arith.mulf %285, %284 : vector<16x32xf32>
    %cst_99 = arith.constant 4.471500e-02 : f32
    %287 = vector.broadcast %cst_99 : f32 to vector<16x32xf32>
    %288 = arith.mulf %287, %284 : vector<16x32xf32>
    %289 = arith.mulf %288, %284 : vector<16x32xf32>
    %290 = arith.mulf %289, %284 : vector<16x32xf32>
    %291 = arith.addf %284, %290 : vector<16x32xf32>
    %cst_100 = arith.constant 0.797884583 : f32
    %292 = vector.broadcast %cst_100 : f32 to vector<16x32xf32>
    %293 = arith.mulf %292, %291 : vector<16x32xf32>
    %294 = math.tanh %293 : vector<16x32xf32>
    %cst_101 = arith.constant 1.000000e+00 : f32
    %295 = vector.broadcast %cst_101 : f32 to vector<16x32xf32>
    %296 = arith.addf %295, %294 : vector<16x32xf32>
    %297 = arith.mulf %286, %296 : vector<16x32xf32>
    %c1_102 = arith.constant 1 : index
    %c0_103 = arith.constant 0 : index
    %c0_104 = arith.constant 0 : index
    %298 = vector.load %arg6[%c1_102, %c0_103, %c0_104] : memref<2x32x32xf32, #tpu.memory_space<vmem>>, vector<1x32x32xf32>
    %299 = vector.shape_cast %298 : vector<1x32x32xf32> to vector<32x32xf32>
    %cst_105 = arith.constant dense<0.000000e+00> : vector<16x32xf32>
    %300 = tpu.matmul %297, %299, %cst_105 {dimension_numbers = #tpu.dot_dimension_numbers<[1], [0], [0], [1], [0, 0, 1, 1], [], []>} : vector<16x32xf32>, vector<32x32xf32>, vector<16x32xf32> -> vector<16x32xf32>
    %c1_106 = arith.constant 1 : index
    %c0_107 = arith.constant 0 : index
    %c0_108 = arith.constant 0 : index
    %301 = vector.load %arg7[%c1_106, %c0_107, %c0_108] : memref<2x1x32xf32, #tpu.memory_space<vmem>>, vector<1x1x32xf32>
    %302 = vector.shape_cast %301 : vector<1x1x32xf32> to vector<1x32xf32>
    %303 = vector.broadcast %302 : vector<1x32xf32> to vector<16x32xf32>
    %304 = arith.addf %300, %303 : vector<16x32xf32>
    %305 = vector.shape_cast %304 : vector<16x32xf32> to vector<2x8x32xf32>
    %306 = arith.addf %305, %283 : vector<2x8x32xf32>
    %307 = arith.addf %306, %157 : vector<2x8x32xf32>
    %c0_109 = arith.constant 0 : index
    %c0_110 = arith.constant 0 : index
    %c0_111 = arith.constant 0 : index
    %308 = vector.load %arg8[%c0_109, %c0_110, %c0_111] : memref<8x8x32xf32, #tpu.memory_space<vmem>>, vector<1x8x32xf32>
    %309 = vector.shape_cast %308 : vector<1x8x32xf32> to vector<8x32xf32>
    %310 = vector.shape_cast %309 : vector<8x32xf32> to vector<1x8x32xf32>
    %311 = vector.extract_strided_slice %307 {offsets = [0, 0, 0], sizes = [2, 1, 32], strides = [1, 1, 1]} : vector<2x8x32xf32> to vector<2x1x32xf32>
    %312 = vector.broadcast %310 : vector<1x8x32xf32> to vector<2x8x32xf32>
    %313 = vector.broadcast %311 : vector<2x1x32xf32> to vector<2x8x32xf32>
    %314 = arith.mulf %312, %313 : vector<2x8x32xf32>
    %c1_112 = arith.constant 1 : index
    %c0_113 = arith.constant 0 : index
    %c0_114 = arith.constant 0 : index
    %315 = vector.load %arg8[%c1_112, %c0_113, %c0_114] : memref<8x8x32xf32, #tpu.memory_space<vmem>>, vector<1x8x32xf32>
    %316 = vector.shape_cast %315 : vector<1x8x32xf32> to vector<8x32xf32>
    %317 = vector.shape_cast %316 : vector<8x32xf32> to vector<1x8x32xf32>
    %318 = vector.extract_strided_slice %307 {offsets = [0, 1, 0], sizes = [2, 1, 32], strides = [1, 1, 1]} : vector<2x8x32xf32> to vector<2x1x32xf32>
    %319 = vector.broadcast %317 : vector<1x8x32xf32> to vector<2x8x32xf32>
    %320 = vector.broadcast %318 : vector<2x1x32xf32> to vector<2x8x32xf32>
    %321 = arith.mulf %319, %320 : vector<2x8x32xf32>
    %c2_115 = arith.constant 2 : index
    %c0_116 = arith.constant 0 : index
    %c0_117 = arith.constant 0 : index
    %322 = vector.load %arg8[%c2_115, %c0_116, %c0_117] : memref<8x8x32xf32, #tpu.memory_space<vmem>>, vector<1x8x32xf32>
    %323 = vector.shape_cast %322 : vector<1x8x32xf32> to vector<8x32xf32>
    %324 = vector.shape_cast %323 : vector<8x32xf32> to vector<1x8x32xf32>
    %325 = vector.extract_strided_slice %307 {offsets = [0, 2, 0], sizes = [2, 1, 32], strides = [1, 1, 1]} : vector<2x8x32xf32> to vector<2x1x32xf32>
    %326 = vector.broadcast %324 : vector<1x8x32xf32> to vector<2x8x32xf32>
    %327 = vector.broadcast %325 : vector<2x1x32xf32> to vector<2x8x32xf32>
    %328 = arith.mulf %326, %327 : vector<2x8x32xf32>
    %329 = arith.addf %314, %328 : vector<2x8x32xf32>
    %c4_118 = arith.constant 4 : index
    %c0_119 = arith.constant 0 : index
    %c0_120 = arith.constant 0 : index
    %330 = vector.load %arg8[%c4_118, %c0_119, %c0_120] : memref<8x8x32xf32, #tpu.memory_space<vmem>>, vector<1x8x32xf32>
    %331 = vector.shape_cast %330 : vector<1x8x32xf32> to vector<8x32xf32>
    %332 = vector.shape_cast %331 : vector<8x32xf32> to vector<1x8x32xf32>
    %333 = vector.extract_strided_slice %307 {offsets = [0, 4, 0], sizes = [2, 1, 32], strides = [1, 1, 1]} : vector<2x8x32xf32> to vector<2x1x32xf32>
    %334 = vector.broadcast %332 : vector<1x8x32xf32> to vector<2x8x32xf32>
    %335 = vector.broadcast %333 : vector<2x1x32xf32> to vector<2x8x32xf32>
    %336 = arith.mulf %334, %335 : vector<2x8x32xf32>
    %337 = arith.addf %329, %336 : vector<2x8x32xf32>
    %c6_121 = arith.constant 6 : index
    %c0_122 = arith.constant 0 : index
    %c0_123 = arith.constant 0 : index
    %338 = vector.load %arg8[%c6_121, %c0_122, %c0_123] : memref<8x8x32xf32, #tpu.memory_space<vmem>>, vector<1x8x32xf32>
    %339 = vector.shape_cast %338 : vector<1x8x32xf32> to vector<8x32xf32>
    %340 = vector.shape_cast %339 : vector<8x32xf32> to vector<1x8x32xf32>
    %341 = vector.extract_strided_slice %307 {offsets = [0, 6, 0], sizes = [2, 1, 32], strides = [1, 1, 1]} : vector<2x8x32xf32> to vector<2x1x32xf32>
    %342 = vector.broadcast %340 : vector<1x8x32xf32> to vector<2x8x32xf32>
    %343 = vector.broadcast %341 : vector<2x1x32xf32> to vector<2x8x32xf32>
    %344 = arith.mulf %342, %343 : vector<2x8x32xf32>
    %345 = arith.addf %337, %344 : vector<2x8x32xf32>
    %c3_124 = arith.constant 3 : index
    %c0_125 = arith.constant 0 : index
    %c0_126 = arith.constant 0 : index
    %346 = vector.load %arg8[%c3_124, %c0_125, %c0_126] : memref<8x8x32xf32, #tpu.memory_space<vmem>>, vector<1x8x32xf32>
    %347 = vector.shape_cast %346 : vector<1x8x32xf32> to vector<8x32xf32>
    %348 = vector.shape_cast %347 : vector<8x32xf32> to vector<1x8x32xf32>
    %349 = vector.extract_strided_slice %307 {offsets = [0, 3, 0], sizes = [2, 1, 32], strides = [1, 1, 1]} : vector<2x8x32xf32> to vector<2x1x32xf32>
    %350 = vector.broadcast %348 : vector<1x8x32xf32> to vector<2x8x32xf32>
    %351 = vector.broadcast %349 : vector<2x1x32xf32> to vector<2x8x32xf32>
    %352 = arith.mulf %350, %351 : vector<2x8x32xf32>
    %353 = arith.addf %321, %352 : vector<2x8x32xf32>
    %c5_127 = arith.constant 5 : index
    %c0_128 = arith.constant 0 : index
    %c0_129 = arith.constant 0 : index
    %354 = vector.load %arg8[%c5_127, %c0_128, %c0_129] : memref<8x8x32xf32, #tpu.memory_space<vmem>>, vector<1x8x32xf32>
    %355 = vector.shape_cast %354 : vector<1x8x32xf32> to vector<8x32xf32>
    %356 = vector.shape_cast %355 : vector<8x32xf32> to vector<1x8x32xf32>
    %357 = vector.extract_strided_slice %307 {offsets = [0, 5, 0], sizes = [2, 1, 32], strides = [1, 1, 1]} : vector<2x8x32xf32> to vector<2x1x32xf32>
    %358 = vector.broadcast %356 : vector<1x8x32xf32> to vector<2x8x32xf32>
    %359 = vector.broadcast %357 : vector<2x1x32xf32> to vector<2x8x32xf32>
    %360 = arith.mulf %358, %359 : vector<2x8x32xf32>
    %361 = arith.addf %353, %360 : vector<2x8x32xf32>
    %c7_130 = arith.constant 7 : index
    %c0_131 = arith.constant 0 : index
    %c0_132 = arith.constant 0 : index
    %362 = vector.load %arg8[%c7_130, %c0_131, %c0_132] : memref<8x8x32xf32, #tpu.memory_space<vmem>>, vector<1x8x32xf32>
    %363 = vector.shape_cast %362 : vector<1x8x32xf32> to vector<8x32xf32>
    %364 = vector.shape_cast %363 : vector<8x32xf32> to vector<1x8x32xf32>
    %365 = vector.extract_strided_slice %307 {offsets = [0, 7, 0], sizes = [2, 1, 32], strides = [1, 1, 1]} : vector<2x8x32xf32> to vector<2x1x32xf32>
    %366 = vector.broadcast %364 : vector<1x8x32xf32> to vector<2x8x32xf32>
    %367 = vector.broadcast %365 : vector<2x1x32xf32> to vector<2x8x32xf32>
    %368 = arith.mulf %366, %367 : vector<2x8x32xf32>
    %369 = arith.addf %361, %368 : vector<2x8x32xf32>
    %370 = arith.addf %345, %369 : vector<2x8x32xf32>
    %371 = vector.extract_strided_slice %370 {offsets = [0, 0, 0], sizes = [2, 1, 32], strides = [1, 1, 1]} : vector<2x8x32xf32> to vector<2x1x32xf32>
    %372 = vector.shape_cast %371 : vector<2x1x32xf32> to vector<2x32xf32>
    %cst_133 = arith.constant 5.000000e-01 : f32
    %373 = vector.broadcast %cst_133 : f32 to vector<2x32xf32>
    %374 = arith.mulf %373, %372 : vector<2x32xf32>
    %cst_134 = arith.constant 4.471500e-02 : f32
    %375 = vector.broadcast %cst_134 : f32 to vector<2x32xf32>
    %376 = arith.mulf %375, %372 : vector<2x32xf32>
    %377 = arith.mulf %376, %372 : vector<2x32xf32>
    %378 = arith.mulf %377, %372 : vector<2x32xf32>
    %379 = arith.addf %372, %378 : vector<2x32xf32>
    %cst_135 = arith.constant 0.797884583 : f32
    %380 = vector.broadcast %cst_135 : f32 to vector<2x32xf32>
    %381 = arith.mulf %380, %379 : vector<2x32xf32>
    %382 = math.tanh %381 : vector<2x32xf32>
    %cst_136 = arith.constant 1.000000e+00 : f32
    %383 = vector.broadcast %cst_136 : f32 to vector<2x32xf32>
    %384 = arith.addf %383, %382 : vector<2x32xf32>
    %385 = arith.mulf %374, %384 : vector<2x32xf32>
    %c0_137 = arith.constant 0 : index
    %c0_138 = arith.constant 0 : index
    %386 = vector.load %arg9[%c0_137, %c0_138] : memref<32x4xf32, #tpu.memory_space<vmem>>, vector<32x4xf32>
    %cst_139 = arith.constant dense<0.000000e+00> : vector<2x4xf32>
    %387 = tpu.matmul %385, %386, %cst_139 {dimension_numbers = #tpu.dot_dimension_numbers<[1], [0], [0], [1], [0, 0, 1, 1], [], []>} : vector<2x32xf32>, vector<32x4xf32>, vector<2x4xf32> -> vector<2x4xf32>
    %c0_140 = arith.constant 0 : index
    %c0_141 = arith.constant 0 : index
    %388 = vector.load %arg10[%c0_140, %c0_141] : memref<1x4xf32, #tpu.memory_space<vmem>>, vector<1x4xf32>
    %389 = vector.broadcast %388 : vector<1x4xf32> to vector<2x4xf32>
    %390 = arith.addf %387, %389 : vector<2x4xf32>
    %c0_142 = arith.constant 0 : index
    %c0_143 = arith.constant 0 : index
    %391 = vector.load %arg11[%c0_142, %c0_143] : memref<2x32xf32, #tpu.memory_space<vmem>>, vector<2x4xf32>
    tpu.vector_store %arg11[%c0_142, %c0_143], %390 {strides = array<i32>} : memref<2x32xf32, #tpu.memory_space<vmem>>, vector<2x4xf32>,
    %392 = vector.extract_strided_slice %370 {offsets = [0, 1, 0], sizes = [2, 1, 32], strides = [1, 1, 1]} : vector<2x8x32xf32> to vector<2x1x32xf32>
    %393 = vector.shape_cast %392 : vector<2x1x32xf32> to vector<2x32xf32>
    %cst_144 = arith.constant 5.000000e-01 : f32
    %394 = vector.broadcast %cst_144 : f32 to vector<2x32xf32>
    %395 = arith.mulf %394, %393 : vector<2x32xf32>
    %cst_145 = arith.constant 4.471500e-02 : f32
    %396 = vector.broadcast %cst_145 : f32 to vector<2x32xf32>
    %397 = arith.mulf %396, %393 : vector<2x32xf32>
    %398 = arith.mulf %397, %393 : vector<2x32xf32>
    %399 = arith.mulf %398, %393 : vector<2x32xf32>
    %400 = arith.addf %393, %399 : vector<2x32xf32>
    %cst_146 = arith.constant 0.797884583 : f32
    %401 = vector.broadcast %cst_146 : f32 to vector<2x32xf32>
    %402 = arith.mulf %401, %400 : vector<2x32xf32>
    %403 = math.tanh %402 : vector<2x32xf32>
    %cst_147 = arith.constant 1.000000e+00 : f32
    %404 = vector.broadcast %cst_147 : f32 to vector<2x32xf32>
    %405 = arith.addf %404, %403 : vector<2x32xf32>
    %406 = arith.mulf %395, %405 : vector<2x32xf32>
    %c0_148 = arith.constant 0 : index
    %c0_149 = arith.constant 0 : index
    %407 = vector.load %arg9[%c0_148, %c0_149] : memref<32x4xf32, #tpu.memory_space<vmem>>, vector<32x4xf32>
    %cst_150 = arith.constant dense<0.000000e+00> : vector<2x4xf32>
    %408 = tpu.matmul %406, %407, %cst_150 {dimension_numbers = #tpu.dot_dimension_numbers<[1], [0], [0], [1], [0, 0, 1, 1], [], []>} : vector<2x32xf32>, vector<32x4xf32>, vector<2x4xf32> -> vector<2x4xf32>
    %c0_151 = arith.constant 0 : index
    %c0_152 = arith.constant 0 : index
    %409 = vector.load %arg10[%c0_151, %c0_152] : memref<1x4xf32, #tpu.memory_space<vmem>>, vector<1x4xf32>
    %410 = vector.broadcast %409 : vector<1x4xf32> to vector<2x4xf32>
    %411 = arith.addf %408, %410 : vector<2x4xf32>
    %c0_153 = arith.constant 0 : index
    %c4_154 = arith.constant 4 : index
    %412 = vector.load %arg11[%c0_153, %c4_154] : memref<2x32xf32, #tpu.memory_space<vmem>>, vector<2x4xf32>
    tpu.vector_store %arg11[%c0_153, %c4_154], %411 {strides = array<i32>} : memref<2x32xf32, #tpu.memory_space<vmem>>, vector<2x4xf32>,
    %413 = vector.extract_strided_slice %370 {offsets = [0, 2, 0], sizes = [2, 1, 32], strides = [1, 1, 1]} : vector<2x8x32xf32> to vector<2x1x32xf32>
    %414 = vector.shape_cast %413 : vector<2x1x32xf32> to vector<2x32xf32>
    %cst_155 = arith.constant 5.000000e-01 : f32
    %415 = vector.broadcast %cst_155 : f32 to vector<2x32xf32>
    %416 = arith.mulf %415, %414 : vector<2x32xf32>
    %cst_156 = arith.constant 4.471500e-02 : f32
    %417 = vector.broadcast %cst_156 : f32 to vector<2x32xf32>
    %418 = arith.mulf %417, %414 : vector<2x32xf32>
    %419 = arith.mulf %418, %414 : vector<2x32xf32>
    %420 = arith.mulf %419, %414 : vector<2x32xf32>
    %421 = arith.addf %414, %420 : vector<2x32xf32>
    %cst_157 = arith.constant 0.797884583 : f32
    %422 = vector.broadcast %cst_157 : f32 to vector<2x32xf32>
    %423 = arith.mulf %422, %421 : vector<2x32xf32>
    %424 = math.tanh %423 : vector<2x32xf32>
    %cst_158 = arith.constant 1.000000e+00 : f32
    %425 = vector.broadcast %cst_158 : f32 to vector<2x32xf32>
    %426 = arith.addf %425, %424 : vector<2x32xf32>
    %427 = arith.mulf %416, %426 : vector<2x32xf32>
    %c0_159 = arith.constant 0 : index
    %c0_160 = arith.constant 0 : index
    %428 = vector.load %arg9[%c0_159, %c0_160] : memref<32x4xf32, #tpu.memory_space<vmem>>, vector<32x4xf32>
    %cst_161 = arith.constant dense<0.000000e+00> : vector<2x4xf32>
    %429 = tpu.matmul %427, %428, %cst_161 {dimension_numbers = #tpu.dot_dimension_numbers<[1], [0], [0], [1], [0, 0, 1, 1], [], []>} : vector<2x32xf32>, vector<32x4xf32>, vector<2x4xf32> -> vector<2x4xf32>
    %c0_162 = arith.constant 0 : index
    %c0_163 = arith.constant 0 : index
    %430 = vector.load %arg10[%c0_162, %c0_163] : memref<1x4xf32, #tpu.memory_space<vmem>>, vector<1x4xf32>
    %431 = vector.broadcast %430 : vector<1x4xf32> to vector<2x4xf32>
    %432 = arith.addf %429, %431 : vector<2x4xf32>
    %c0_164 = arith.constant 0 : index
    %c8_165 = arith.constant 8 : index
    %433 = vector.load %arg11[%c0_164, %c8_165] : memref<2x32xf32, #tpu.memory_space<vmem>>, vector<2x4xf32>
    tpu.vector_store %arg11[%c0_164, %c8_165], %432 {strides = array<i32>} : memref<2x32xf32, #tpu.memory_space<vmem>>, vector<2x4xf32>,
    %434 = vector.extract_strided_slice %370 {offsets = [0, 3, 0], sizes = [2, 1, 32], strides = [1, 1, 1]} : vector<2x8x32xf32> to vector<2x1x32xf32>
    %435 = vector.shape_cast %434 : vector<2x1x32xf32> to vector<2x32xf32>
    %cst_166 = arith.constant 5.000000e-01 : f32
    %436 = vector.broadcast %cst_166 : f32 to vector<2x32xf32>
    %437 = arith.mulf %436, %435 : vector<2x32xf32>
    %cst_167 = arith.constant 4.471500e-02 : f32
    %438 = vector.broadcast %cst_167 : f32 to vector<2x32xf32>
    %439 = arith.mulf %438, %435 : vector<2x32xf32>
    %440 = arith.mulf %439, %435 : vector<2x32xf32>
    %441 = arith.mulf %440, %435 : vector<2x32xf32>
    %442 = arith.addf %435, %441 : vector<2x32xf32>
    %cst_168 = arith.constant 0.797884583 : f32
    %443 = vector.broadcast %cst_168 : f32 to vector<2x32xf32>
    %444 = arith.mulf %443, %442 : vector<2x32xf32>
    %445 = math.tanh %444 : vector<2x32xf32>
    %cst_169 = arith.constant 1.000000e+00 : f32
    %446 = vector.broadcast %cst_169 : f32 to vector<2x32xf32>
    %447 = arith.addf %446, %445 : vector<2x32xf32>
    %448 = arith.mulf %437, %447 : vector<2x32xf32>
    %c0_170 = arith.constant 0 : index
    %c0_171 = arith.constant 0 : index
    %449 = vector.load %arg9[%c0_170, %c0_171] : memref<32x4xf32, #tpu.memory_space<vmem>>, vector<32x4xf32>
    %cst_172 = arith.constant dense<0.000000e+00> : vector<2x4xf32>
    %450 = tpu.matmul %448, %449, %cst_172 {dimension_numbers = #tpu.dot_dimension_numbers<[1], [0], [0], [1], [0, 0, 1, 1], [], []>} : vector<2x32xf32>, vector<32x4xf32>, vector<2x4xf32> -> vector<2x4xf32>
    %c0_173 = arith.constant 0 : index
    %c0_174 = arith.constant 0 : index
    %451 = vector.load %arg10[%c0_173, %c0_174] : memref<1x4xf32, #tpu.memory_space<vmem>>, vector<1x4xf32>
    %452 = vector.broadcast %451 : vector<1x4xf32> to vector<2x4xf32>
    %453 = arith.addf %450, %452 : vector<2x4xf32>
    %c0_175 = arith.constant 0 : index
    %c12_176 = arith.constant 12 : index
    %454 = vector.load %arg11[%c0_175, %c12_176] : memref<2x32xf32, #tpu.memory_space<vmem>>, vector<2x4xf32>
    tpu.vector_store %arg11[%c0_175, %c12_176], %453 {strides = array<i32>} : memref<2x32xf32, #tpu.memory_space<vmem>>, vector<2x4xf32>,
    %455 = vector.extract_strided_slice %370 {offsets = [0, 4, 0], sizes = [2, 1, 32], strides = [1, 1, 1]} : vector<2x8x32xf32> to vector<2x1x32xf32>
    %456 = vector.shape_cast %455 : vector<2x1x32xf32> to vector<2x32xf32>
    %cst_177 = arith.constant 5.000000e-01 : f32
    %457 = vector.broadcast %cst_177 : f32 to vector<2x32xf32>
    %458 = arith.mulf %457, %456 : vector<2x32xf32>
    %cst_178 = arith.constant 4.471500e-02 : f32
    %459 = vector.broadcast %cst_178 : f32 to vector<2x32xf32>
    %460 = arith.mulf %459, %456 : vector<2x32xf32>
    %461 = arith.mulf %460, %456 : vector<2x32xf32>
    %462 = arith.mulf %461, %456 : vector<2x32xf32>
    %463 = arith.addf %456, %462 : vector<2x32xf32>
    %cst_179 = arith.constant 0.797884583 : f32
    %464 = vector.broadcast %cst_179 : f32 to vector<2x32xf32>
    %465 = arith.mulf %464, %463 : vector<2x32xf32>
    %466 = math.tanh %465 : vector<2x32xf32>
    %cst_180 = arith.constant 1.000000e+00 : f32
    %467 = vector.broadcast %cst_180 : f32 to vector<2x32xf32>
    %468 = arith.addf %467, %466 : vector<2x32xf32>
    %469 = arith.mulf %458, %468 : vector<2x32xf32>
    %c0_181 = arith.constant 0 : index
    %c0_182 = arith.constant 0 : index
    %470 = vector.load %arg9[%c0_181, %c0_182] : memref<32x4xf32, #tpu.memory_space<vmem>>, vector<32x4xf32>
    %cst_183 = arith.constant dense<0.000000e+00> : vector<2x4xf32>
    %471 = tpu.matmul %469, %470, %cst_183 {dimension_numbers = #tpu.dot_dimension_numbers<[1], [0], [0], [1], [0, 0, 1, 1], [], []>} : vector<2x32xf32>, vector<32x4xf32>, vector<2x4xf32> -> vector<2x4xf32>
    %c0_184 = arith.constant 0 : index
    %c0_185 = arith.constant 0 : index
    %472 = vector.load %arg10[%c0_184, %c0_185] : memref<1x4xf32, #tpu.memory_space<vmem>>, vector<1x4xf32>
    %473 = vector.broadcast %472 : vector<1x4xf32> to vector<2x4xf32>
    %474 = arith.addf %471, %473 : vector<2x4xf32>
    %c0_186 = arith.constant 0 : index
    %c16 = arith.constant 16 : index
    %475 = vector.load %arg11[%c0_186, %c16] : memref<2x32xf32, #tpu.memory_space<vmem>>, vector<2x4xf32>
    tpu.vector_store %arg11[%c0_186, %c16], %474 {strides = array<i32>} : memref<2x32xf32, #tpu.memory_space<vmem>>, vector<2x4xf32>,
    %476 = vector.extract_strided_slice %370 {offsets = [0, 5, 0], sizes = [2, 1, 32], strides = [1, 1, 1]} : vector<2x8x32xf32> to vector<2x1x32xf32>
    %477 = vector.shape_cast %476 : vector<2x1x32xf32> to vector<2x32xf32>
    %cst_187 = arith.constant 5.000000e-01 : f32
    %478 = vector.broadcast %cst_187 : f32 to vector<2x32xf32>
    %479 = arith.mulf %478, %477 : vector<2x32xf32>
    %cst_188 = arith.constant 4.471500e-02 : f32
    %480 = vector.broadcast %cst_188 : f32 to vector<2x32xf32>
    %481 = arith.mulf %480, %477 : vector<2x32xf32>
    %482 = arith.mulf %481, %477 : vector<2x32xf32>
    %483 = arith.mulf %482, %477 : vector<2x32xf32>
    %484 = arith.addf %477, %483 : vector<2x32xf32>
    %cst_189 = arith.constant 0.797884583 : f32
    %485 = vector.broadcast %cst_189 : f32 to vector<2x32xf32>
    %486 = arith.mulf %485, %484 : vector<2x32xf32>
    %487 = math.tanh %486 : vector<2x32xf32>
    %cst_190 = arith.constant 1.000000e+00 : f32
    %488 = vector.broadcast %cst_190 : f32 to vector<2x32xf32>
    %489 = arith.addf %488, %487 : vector<2x32xf32>
    %490 = arith.mulf %479, %489 : vector<2x32xf32>
    %c0_191 = arith.constant 0 : index
    %c0_192 = arith.constant 0 : index
    %491 = vector.load %arg9[%c0_191, %c0_192] : memref<32x4xf32, #tpu.memory_space<vmem>>, vector<32x4xf32>
    %cst_193 = arith.constant dense<0.000000e+00> : vector<2x4xf32>
    %492 = tpu.matmul %490, %491, %cst_193 {dimension_numbers = #tpu.dot_dimension_numbers<[1], [0], [0], [1], [0, 0, 1, 1], [], []>} : vector<2x32xf32>, vector<32x4xf32>, vector<2x4xf32> -> vector<2x4xf32>
    %c0_194 = arith.constant 0 : index
    %c0_195 = arith.constant 0 : index
    %493 = vector.load %arg10[%c0_194, %c0_195] : memref<1x4xf32, #tpu.memory_space<vmem>>, vector<1x4xf32>
    %494 = vector.broadcast %493 : vector<1x4xf32> to vector<2x4xf32>
    %495 = arith.addf %492, %494 : vector<2x4xf32>
    %c0_196 = arith.constant 0 : index
    %c20 = arith.constant 20 : index
    %496 = vector.load %arg11[%c0_196, %c20] : memref<2x32xf32, #tpu.memory_space<vmem>>, vector<2x4xf32>
    tpu.vector_store %arg11[%c0_196, %c20], %495 {strides = array<i32>} : memref<2x32xf32, #tpu.memory_space<vmem>>, vector<2x4xf32>,
    %497 = vector.extract_strided_slice %370 {offsets = [0, 6, 0], sizes = [2, 1, 32], strides = [1, 1, 1]} : vector<2x8x32xf32> to vector<2x1x32xf32>
    %498 = vector.shape_cast %497 : vector<2x1x32xf32> to vector<2x32xf32>
    %cst_197 = arith.constant 5.000000e-01 : f32
    %499 = vector.broadcast %cst_197 : f32 to vector<2x32xf32>
    %500 = arith.mulf %499, %498 : vector<2x32xf32>
    %cst_198 = arith.constant 4.471500e-02 : f32
    %501 = vector.broadcast %cst_198 : f32 to vector<2x32xf32>
    %502 = arith.mulf %501, %498 : vector<2x32xf32>
    %503 = arith.mulf %502, %498 : vector<2x32xf32>
    %504 = arith.mulf %503, %498 : vector<2x32xf32>
    %505 = arith.addf %498, %504 : vector<2x32xf32>
    %cst_199 = arith.constant 0.797884583 : f32
    %506 = vector.broadcast %cst_199 : f32 to vector<2x32xf32>
    %507 = arith.mulf %506, %505 : vector<2x32xf32>
    %508 = math.tanh %507 : vector<2x32xf32>
    %cst_200 = arith.constant 1.000000e+00 : f32
    %509 = vector.broadcast %cst_200 : f32 to vector<2x32xf32>
    %510 = arith.addf %509, %508 : vector<2x32xf32>
    %511 = arith.mulf %500, %510 : vector<2x32xf32>
    %c0_201 = arith.constant 0 : index
    %c0_202 = arith.constant 0 : index
    %512 = vector.load %arg9[%c0_201, %c0_202] : memref<32x4xf32, #tpu.memory_space<vmem>>, vector<32x4xf32>
    %cst_203 = arith.constant dense<0.000000e+00> : vector<2x4xf32>
    %513 = tpu.matmul %511, %512, %cst_203 {dimension_numbers = #tpu.dot_dimension_numbers<[1], [0], [0], [1], [0, 0, 1, 1], [], []>} : vector<2x32xf32>, vector<32x4xf32>, vector<2x4xf32> -> vector<2x4xf32>
    %c0_204 = arith.constant 0 : index
    %c0_205 = arith.constant 0 : index
    %514 = vector.load %arg10[%c0_204, %c0_205] : memref<1x4xf32, #tpu.memory_space<vmem>>, vector<1x4xf32>
    %515 = vector.broadcast %514 : vector<1x4xf32> to vector<2x4xf32>
    %516 = arith.addf %513, %515 : vector<2x4xf32>
    %c0_206 = arith.constant 0 : index
    %c24 = arith.constant 24 : index
    %517 = vector.load %arg11[%c0_206, %c24] : memref<2x32xf32, #tpu.memory_space<vmem>>, vector<2x4xf32>
    tpu.vector_store %arg11[%c0_206, %c24], %516 {strides = array<i32>} : memref<2x32xf32, #tpu.memory_space<vmem>>, vector<2x4xf32>,
    %518 = vector.extract_strided_slice %370 {offsets = [0, 7, 0], sizes = [2, 1, 32], strides = [1, 1, 1]} : vector<2x8x32xf32> to vector<2x1x32xf32>
    %519 = vector.shape_cast %518 : vector<2x1x32xf32> to vector<2x32xf32>
    %cst_207 = arith.constant 5.000000e-01 : f32
    %520 = vector.broadcast %cst_207 : f32 to vector<2x32xf32>
    %521 = arith.mulf %520, %519 : vector<2x32xf32>
    %cst_208 = arith.constant 4.471500e-02 : f32
    %522 = vector.broadcast %cst_208 : f32 to vector<2x32xf32>
    %523 = arith.mulf %522, %519 : vector<2x32xf32>
    %524 = arith.mulf %523, %519 : vector<2x32xf32>
    %525 = arith.mulf %524, %519 : vector<2x32xf32>
    %526 = arith.addf %519, %525 : vector<2x32xf32>
    %cst_209 = arith.constant 0.797884583 : f32
    %527 = vector.broadcast %cst_209 : f32 to vector<2x32xf32>
    %528 = arith.mulf %527, %526 : vector<2x32xf32>
    %529 = math.tanh %528 : vector<2x32xf32>
    %cst_210 = arith.constant 1.000000e+00 : f32
    %530 = vector.broadcast %cst_210 : f32 to vector<2x32xf32>
    %531 = arith.addf %530, %529 : vector<2x32xf32>
    %532 = arith.mulf %521, %531 : vector<2x32xf32>
    %c0_211 = arith.constant 0 : index
    %c0_212 = arith.constant 0 : index
    %533 = vector.load %arg9[%c0_211, %c0_212] : memref<32x4xf32, #tpu.memory_space<vmem>>, vector<32x4xf32>
    %cst_213 = arith.constant dense<0.000000e+00> : vector<2x4xf32>
    %534 = tpu.matmul %532, %533, %cst_213 {dimension_numbers = #tpu.dot_dimension_numbers<[1], [0], [0], [1], [0, 0, 1, 1], [], []>} : vector<2x32xf32>, vector<32x4xf32>, vector<2x4xf32> -> vector<2x4xf32>
    %c0_214 = arith.constant 0 : index
    %c0_215 = arith.constant 0 : index
    %535 = vector.load %arg10[%c0_214, %c0_215] : memref<1x4xf32, #tpu.memory_space<vmem>>, vector<1x4xf32>
    %536 = vector.broadcast %535 : vector<1x4xf32> to vector<2x4xf32>
    %537 = arith.addf %534, %536 : vector<2x4xf32>
    %c0_216 = arith.constant 0 : index
    %c28 = arith.constant 28 : index
    %538 = vector.load %arg11[%c0_216, %c28] : memref<2x32xf32, #tpu.memory_space<vmem>>, vector<2x4xf32>
    tpu.vector_store %arg11[%c0_216, %c28], %537 {strides = array<i32>} : memref<2x32xf32, #tpu.memory_space<vmem>>, vector<2x4xf32>,
    return
  }
  func.func @transform_0(%arg0: i32) -> (i32, i32, i32) {
    %c0_i32 = arith.constant 0 : i32
    %c0_i32_0 = arith.constant 0 : i32
    %c0_i32_1 = arith.constant 0 : i32
    return %arg0, %c0_i32, %c0_i32_0 : i32, i32, i32
  }
  func.func @transform_1(%arg0: i32) -> (i32, i32) {
    %c0_i32 = arith.constant 0 : i32
    %c0_i32_0 = arith.constant 0 : i32
    %c0_i32_1 = arith.constant 0 : i32
    return %c0_i32, %c0_i32_0 : i32, i32
  }
  func.func @transform_2(%arg0: i32) -> (i32, i32) {
    %c0_i32 = arith.constant 0 : i32
    %c0_i32_0 = arith.constant 0 : i32
    %c0_i32_1 = arith.constant 0 : i32
    return %c0_i32, %c0_i32_0 : i32, i32
  }
  func.func @transform_3(%arg0: i32) -> (i32, i32, i32) {
    %c0_i32 = arith.constant 0 : i32
    %c0_i32_0 = arith.constant 0 : i32
    %c0_i32_1 = arith.constant 0 : i32
    %c0_i32_2 = arith.constant 0 : i32
    return %c0_i32, %c0_i32_0, %c0_i32_1 : i32, i32, i32
  }
  func.func @transform_4(%arg0: i32) -> (i32, i32, i32) {
    %c0_i32 = arith.constant 0 : i32
    %c0_i32_0 = arith.constant 0 : i32
    %c0_i32_1 = arith.constant 0 : i32
    %c0_i32_2 = arith.constant 0 : i32
    return %c0_i32, %c0_i32_0, %c0_i32_1 : i32, i32, i32
  }
  func.func @transform_5(%arg0: i32) -> (i32, i32, i32) {
    %c0_i32 = arith.constant 0 : i32
    %c0_i32_0 = arith.constant 0 : i32
    %c0_i32_1 = arith.constant 0 : i32
    %c0_i32_2 = arith.constant 0 : i32
    return %c0_i32, %c0_i32_0, %c0_i32_1 : i32, i32, i32
  }
  func.func @transform_6(%arg0: i32) -> (i32, i32, i32) {
    %c0_i32 = arith.constant 0 : i32
    %c0_i32_0 = arith.constant 0 : i32
    %c0_i32_1 = arith.constant 0 : i32
    %c0_i32_2 = arith.constant 0 : i32
    return %c0_i32, %c0_i32_0, %c0_i32_1 : i32, i32, i32
  }
  func.func @transform_7(%arg0: i32) -> (i32, i32, i32) {
    %c0_i32 = arith.constant 0 : i32
    %c0_i32_0 = arith.constant 0 : i32
    %c0_i32_1 = arith.constant 0 : i32
    %c0_i32_2 = arith.constant 0 : i32
    return %c0_i32, %c0_i32_0, %c0_i32_1 : i32, i32, i32
  }
  func.func @transform_8(%arg0: i32) -> (i32, i32) {
    %c0_i32 = arith.constant 0 : i32
    %c0_i32_0 = arith.constant 0 : i32
    %c0_i32_1 = arith.constant 0 : i32
    return %c0_i32, %c0_i32_0 : i32, i32
  }
  func.func @transform_9(%arg0: i32) -> (i32, i32) {
    %c0_i32 = arith.constant 0 : i32
    %c0_i32_0 = arith.constant 0 : i32
    %c0_i32_1 = arith.constant 0 : i32
    return %c0_i32, %c0_i32_0 : i32, i32
  }
  func.func @transform_10(%arg0: i32) -> (i32, i32) {
    %c0_i32 = arith.constant 0 : i32
    %c0_i32_0 = arith.constant 0 : i32
    return %arg0, %c0_i32 : i32, i32
  }
}

module attributes {stable_mosaic.version = 11 : i64} {
  func.func @_spacetime_fused_kernel(%arg0: i32, %arg1: memref<2x8x4xf32, #tpu.memory_space<vmem>>, %arg2: memref<4x32xf32, #tpu.memory_space<vmem>>, %arg3: memref<1x32xf32, #tpu.memory_space<vmem>>, %arg4: memref<16x8x32xf32, #tpu.memory_space<vmem>>, %arg5: memref<16x8x32xf32, #tpu.memory_space<vmem>>, %arg6: memref<2x32x32xf32, #tpu.memory_space<vmem>>, %arg7: memref<2x1x32xf32, #tpu.memory_space<vmem>>, %arg8: memref<8x8x32xf32, #tpu.memory_space<vmem>>, %arg9: memref<32x4xf32, #tpu.memory_space<vmem>>, %arg10: memref<1x4xf32, #tpu.memory_space<vmem>>, %arg11: memref<2x32xf32, #tpu.memory_space<vmem>>) attributes {dimension_semantics = [#tpu.dimension_semantics<parallel>], iteration_bounds = array<i64: 1>, scalar_prefetch = 0 : i64, scratch_operands = 0 : i64, tpu.core_type = #tpu.core_type<tc>, window_params = [{transform_indices = @transform_0, window_bounds = array<i64: 2, 8, 4>}, {pipeline_mode = #tpu.pipeline_mode<synchronous>, transform_indices = @transform_1, window_bounds = array<i64: 4, 32>}, {pipeline_mode = #tpu.pipeline_mode<synchronous>, transform_indices = @transform_2, window_bounds = array<i64: 1, 32>}, {pipeline_mode = #tpu.pipeline_mode<synchronous>, transform_indices = @transform_3, window_bounds = array<i64: 16, 8, 32>}, {pipeline_mode = #tpu.pipeline_mode<synchronous>, transform_indices = @transform_4, window_bounds = array<i64: 16, 8, 32>}, {pipeline_mode = #tpu.pipeline_mode<synchronous>, transform_indices = @transform_5, window_bounds = array<i64: 2, 32, 32>}, {pipeline_mode = #tpu.pipeline_mode<synchronous>, transform_indices = @transform_6, window_bounds = array<i64: 2, 1, 32>}, {pipeline_mode = #tpu.pipeline_mode<synchronous>, transform_indices = @transform_7, window_bounds = array<i64: 8, 8, 32>}, {pipeline_mode = #tpu.pipeline_mode<synchronous>, transform_indices = @transform_8, window_bounds = array<i64: 32, 4>}, {pipeline_mode = #tpu.pipeline_mode<synchronous>, transform_indices = @transform_9, window_bounds = array<i64: 1, 4>}, {transform_indices = @transform_10, window_bounds = array<i64: 2, 32>}]} {
    %c0 = arith.constant 0 : index
    %c0_0 = arith.constant 0 : index
    %c0_1 = arith.constant 0 : index
    %0 = vector.load %arg1[%c0, %c0_0, %c0_1] : memref<2x8x4xf32, #tpu.memory_space<vmem>>, vector<2x8x4xf32>
    %1 = vector.shape_cast %0 : vector<2x8x4xf32> to vector<16x4xf32>
    %c0_2 = arith.constant 0 : index
    %c0_3 = arith.constant 0 : index
    %2 = vector.load %arg2[%c0_2, %c0_3] : memref<4x32xf32, #tpu.memory_space<vmem>>, vector<4x32xf32>
    %cst = arith.constant dense<0.000000e+00> : vector<16x32xf32>
    %3 = tpu.matmul %1, %2, %cst {dimension_numbers = #tpu.dot_dimension_numbers<[1], [0], [0], [1], [0, 0, 1, 1], [], []>} : vector<16x4xf32>, vector<4x32xf32>, vector<16x32xf32> -> vector<16x32xf32>
    %c0_4 = arith.constant 0 : index
    %c0_5 = arith.constant 0 : index
    %4 = vector.load %arg3[%c0_4, %c0_5] : memref<1x32xf32, #tpu.memory_space<vmem>>, vector<1x32xf32>
    %5 = vector.broadcast %4 : vector<1x32xf32> to vector<16x32xf32>
    %6 = arith.addf %3, %5 : vector<16x32xf32>
    %7 = vector.shape_cast %6 : vector<16x32xf32> to vector<2x8x32xf32>
    %c0_6 = arith.constant 0 : index
    %c0_7 = arith.constant 0 : index
    %c0_8 = arith.constant 0 : index
    %8 = vector.load %arg4[%c0_6, %c0_7, %c0_8] : memref<16x8x32xf32, #tpu.memory_space<vmem>>, vector<1x8x32xf32>
    %9 = vector.shape_cast %8 : vector<1x8x32xf32> to vector<8x32xf32>
    %10 = vector.shape_cast %9 : vector<8x32xf32> to vector<1x8x32xf32>
    %11 = vector.extract_strided_slice %7 {offsets = [0, 0, 0], sizes = [2, 1, 32], strides = [1, 1, 1]} : vector<2x8x32xf32> to vector<2x1x32xf32>
    %12 = vector.broadcast %10 : vector<1x8x32xf32> to vector<2x8x32xf32>
    %13 = vector.broadcast %11 : vector<2x1x32xf32> to vector<2x8x32xf32>
    %14 = arith.mulf %12, %13 : vector<2x8x32xf32>
    %c1 = arith.constant 1 : index
    %c0_9 = arith.constant 0 : index
    %c0_10 = arith.constant 0 : index
    %15 = vector.load %arg4[%c1, %c0_9, %c0_10] : memref<16x8x32xf32, #tpu.memory_space<vmem>>, vector<1x8x32xf32>
    %16 = vector.shape_cast %15 : vector<1x8x32xf32> to vector<8x32xf32>
    %17 = vector.shape_cast %16 : vector<8x32xf32> to vector<1x8x32xf32>
    %18 = vector.extract_strided_slice %7 {offsets = [0, 1, 0], sizes = [2, 1, 32], strides = [1, 1, 1]} : vector<2x8x32xf32> to vector<2x1x32xf32>
    %19 = vector.broadcast %17 : vector<1x8x32xf32> to vector<2x8x32xf32>
    %20 = vector.broadcast %18 : vector<2x1x32xf32> to vector<2x8x32xf32>
    %21 = arith.mulf %19, %20 : vector<2x8x32xf32>
    %c2 = arith.constant 2 : index
    %c0_11 = arith.constant 0 : index
    %c0_12 = arith.constant 0 : index
    %22 = vector.load %arg4[%c2, %c0_11, %c0_12] : memref<16x8x32xf32, #tpu.memory_space<vmem>>, vector<1x8x32xf32>
    %23 = vector.shape_cast %22 : vector<1x8x32xf32> to vector<8x32xf32>
    %24 = vector.shape_cast %23 : vector<8x32xf32> to vector<1x8x32xf32>
    %25 = vector.extract_strided_slice %7 {offsets = [0, 2, 0], sizes = [2, 1, 32], strides = [1, 1, 1]} : vector<2x8x32xf32> to vector<2x1x32xf32>
    %26 = vector.broadcast %24 : vector<1x8x32xf32> to vector<2x8x32xf32>
    %27 = vector.broadcast %25 : vector<2x1x32xf32> to vector<2x8x32xf32>
    %28 = arith.mulf %26, %27 : vector<2x8x32xf32>
    %29 = arith.addf %14, %28 : vector<2x8x32xf32>
    %c4 = arith.constant 4 : index
    %c0_13 = arith.constant 0 : index
    %c0_14 = arith.constant 0 : index
    %30 = vector.load %arg4[%c4, %c0_13, %c0_14] : memref<16x8x32xf32, #tpu.memory_space<vmem>>, vector<1x8x32xf32>
    %31 = vector.shape_cast %30 : vector<1x8x32xf32> to vector<8x32xf32>
    %32 = vector.shape_cast %31 : vector<8x32xf32> to vector<1x8x32xf32>
    %33 = vector.extract_strided_slice %7 {offsets = [0, 4, 0], sizes = [2, 1, 32], strides = [1, 1, 1]} : vector<2x8x32xf32> to vector<2x1x32xf32>
    %34 = vector.broadcast %32 : vector<1x8x32xf32> to vector<2x8x32xf32>
    %35 = vector.broadcast %33 : vector<2x1x32xf32> to vector<2x8x32xf32>
    %36 = arith.mulf %34, %35 : vector<2x8x32xf32>
    %37 = arith.addf %29, %36 : vector<2x8x32xf32>
    %c6 = arith.constant 6 : index
    %c0_15 = arith.constant 0 : index
    %c0_16 = arith.constant 0 : index
    %38 = vector.load %arg4[%c6, %c0_15, %c0_16] : memref<16x8x32xf32, #tpu.memory_space<vmem>>, vector<1x8x32xf32>
    %39 = vector.shape_cast %38 : vector<1x8x32xf32> to vector<8x32xf32>
    %40 = vector.shape_cast %39 : vector<8x32xf32> to vector<1x8x32xf32>
    %41 = vector.extract_strided_slice %7 {offsets = [0, 6, 0], sizes = [2, 1, 32], strides = [1, 1, 1]} : vector<2x8x32xf32> to vector<2x1x32xf32>
    %42 = vector.broadcast %40 : vector<1x8x32xf32> to vector<2x8x32xf32>
    %43 = vector.broadcast %41 : vector<2x1x32xf32> to vector<2x8x32xf32>
    %44 = arith.mulf %42, %43 : vector<2x8x32xf32>
    %45 = arith.addf %37, %44 : vector<2x8x32xf32>
    %c3 = arith.constant 3 : index
    %c0_17 = arith.constant 0 : index
    %c0_18 = arith.constant 0 : index
    %46 = vector.load %arg4[%c3, %c0_17, %c0_18] : memref<16x8x32xf32, #tpu.memory_space<vmem>>, vector<1x8x32xf32>
    %47 = vector.shape_cast %46 : vector<1x8x32xf32> to vector<8x32xf32>
    %48 = vector.shape_cast %47 : vector<8x32xf32> to vector<1x8x32xf32>
    %49 = vector.extract_strided_slice %7 {offsets = [0, 3, 0], sizes = [2, 1, 32], strides = [1, 1, 1]} : vector<2x8x32xf32> to vector<2x1x32xf32>
    %50 = vector.broadcast %48 : vector<1x8x32xf32> to vector<2x8x32xf32>
    %51 = vector.broadcast %49 : vector<2x1x32xf32> to vector<2x8x32xf32>
    %52 = arith.mulf %50, %51 : vector<2x8x32xf32>
    %53 = arith.addf %21, %52 : vector<2x8x32xf32>
    %c5 = arith.constant 5 : index
    %c0_19 = arith.constant 0 : index
    %c0_20 = arith.constant 0 : index
    %54 = vector.load %arg4[%c5, %c0_19, %c0_20] : memref<16x8x32xf32, #tpu.memory_space<vmem>>, vector<1x8x32xf32>
    %55 = vector.shape_cast %54 : vector<1x8x32xf32> to vector<8x32xf32>
    %56 = vector.shape_cast %55 : vector<8x32xf32> to vector<1x8x32xf32>
    %57 = vector.extract_strided_slice %7 {offsets = [0, 5, 0], sizes = [2, 1, 32], strides = [1, 1, 1]} : vector<2x8x32xf32> to vector<2x1x32xf32>
    %58 = vector.broadcast %56 : vector<1x8x32xf32> to vector<2x8x32xf32>
    %59 = vector.broadcast %57 : vector<2x1x32xf32> to vector<2x8x32xf32>
    %60 = arith.mulf %58, %59 : vector<2x8x32xf32>
    %61 = arith.addf %53, %60 : vector<2x8x32xf32>
    %c7 = arith.constant 7 : index
    %c0_21 = arith.constant 0 : index
    %c0_22 = arith.constant 0 : index
    %62 = vector.load %arg4[%c7, %c0_21, %c0_22] : memref<16x8x32xf32, #tpu.memory_space<vmem>>, vector<1x8x32xf32>
    %63 = vector.shape_cast %62 : vector<1x8x32xf32> to vector<8x32xf32>
    %64 = vector.shape_cast %63 : vector<8x32xf32> to vector<1x8x32xf32>
    %65 = vector.extract_strided_slice %7 {offsets = [0, 7, 0], sizes = [2, 1, 32], strides = [1, 1, 1]} : vector<2x8x32xf32> to vector<2x1x32xf32>
    %66 = vector.broadcast %64 : vector<1x8x32xf32> to vector<2x8x32xf32>
    %67 = vector.broadcast %65 : vector<2x1x32xf32> to vector<2x8x32xf32>
    %68 = arith.mulf %66, %67 : vector<2x8x32xf32>
    %69 = arith.addf %61, %68 : vector<2x8x32xf32>
    %70 = arith.addf %45, %69 : vector<2x8x32xf32>
    %c0_23 = arith.constant 0 : index
    %c0_24 = arith.constant 0 : index
    %c0_25 = arith.constant 0 : index
    %71 = vector.load %arg5[%c0_23, %c0_24, %c0_25] : memref<16x8x32xf32, #tpu.memory_space<vmem>>, vector<1x8x32xf32>
    %72 = vector.shape_cast %71 : vector<1x8x32xf32> to vector<8x32xf32>
    %73 = vector.shape_cast %72 : vector<8x32xf32> to vector<1x8x32xf32>
    %74 = vector.extract_strided_slice %70 {offsets = [0, 0, 0], sizes = [2, 1, 32], strides = [1, 1, 1]} : vector<2x8x32xf32> to vector<2x1x32xf32>
    %75 = vector.broadcast %73 : vector<1x8x32xf32> to vector<2x8x32xf32>
    %76 = vector.broadcast %74 : vector<2x1x32xf32> to vector<2x8x32xf32>
    %77 = arith.mulf %75, %76 : vector<2x8x32xf32>
    %c1_26 = arith.constant 1 : index
    %c0_27 = arith.constant 0 : index
    %c0_28 = arith.constant 0 : index
    %78 = vector.load %arg5[%c1_26, %c0_27, %c0_28] : memref<16x8x32xf32, #tpu.memory_space<vmem>>, vector<1x8x32xf32>
    %79 = vector.shape_cast %78 : vector<1x8x32xf32> to vector<8x32xf32>
    %80 = vector.shape_cast %79 : vector<8x32xf32> to vector<1x8x32xf32>
    %81 = vector.extract_strided_slice %70 {offsets = [0, 1, 0], sizes = [2, 1, 32], strides = [1, 1, 1]} : vector<2x8x32xf32> to vector<2x1x32xf32>
    %82 = vector.broadcast %80 : vector<1x8x32xf32> to vector<2x8x32xf32>
    %83 = vector.broadcast %81 : vector<2x1x32xf32> to vector<2x8x32xf32>
    %84 = arith.mulf %82, %83 : vector<2x8x32xf32>
    %c2_29 = arith.constant 2 : index
    %c0_30 = arith.constant 0 : index
    %c0_31 = arith.constant 0 : index
    %85 = vector.load %arg5[%c2_29, %c0_30, %c0_31] : memref<16x8x32xf32, #tpu.memory_space<vmem>>, vector<1x8x32xf32>
    %86 = vector.shape_cast %85 : vector<1x8x32xf32> to vector<8x32xf32>
    %87 = vector.shape_cast %86 : vector<8x32xf32> to vector<1x8x32xf32>
    %88 = vector.extract_strided_slice %70 {offsets = [0, 2, 0], sizes = [2, 1, 32], strides = [1, 1, 1]} : vector<2x8x32xf32> to vector<2x1x32xf32>
    %89 = vector.broadcast %87 : vector<1x8x32xf32> to vector<2x8x32xf32>
    %90 = vector.broadcast %88 : vector<2x1x32xf32> to vector<2x8x32xf32>
    %91 = arith.mulf %89, %90 : vector<2x8x32xf32>
    %92 = arith.addf %77, %91 : vector<2x8x32xf32>
    %c4_32 = arith.constant 4 : index
    %c0_33 = arith.constant 0 : index
    %c0_34 = arith.constant 0 : index
    %93 = vector.load %arg5[%c4_32, %c0_33, %c0_34] : memref<16x8x32xf32, #tpu.memory_space<vmem>>, vector<1x8x32xf32>
    %94 = vector.shape_cast %93 : vector<1x8x32xf32> to vector<8x32xf32>
    %95 = vector.shape_cast %94 : vector<8x32xf32> to vector<1x8x32xf32>
    %96 = vector.extract_strided_slice %70 {offsets = [0, 4, 0], sizes = [2, 1, 32], strides = [1, 1, 1]} : vector<2x8x32xf32> to vector<2x1x32xf32>
    %97 = vector.broadcast %95 : vector<1x8x32xf32> to vector<2x8x32xf32>
    %98 = vector.broadcast %96 : vector<2x1x32xf32> to vector<2x8x32xf32>
    %99 = arith.mulf %97, %98 : vector<2x8x32xf32>
    %100 = arith.addf %92, %99 : vector<2x8x32xf32>
    %c6_35 = arith.constant 6 : index
    %c0_36 = arith.constant 0 : index
    %c0_37 = arith.constant 0 : index
    %101 = vector.load %arg5[%c6_35, %c0_36, %c0_37] : memref<16x8x32xf32, #tpu.memory_space<vmem>>, vector<1x8x32xf32>
    %102 = vector.shape_cast %101 : vector<1x8x32xf32> to vector<8x32xf32>
    %103 = vector.shape_cast %102 : vector<8x32xf32> to vector<1x8x32xf32>
    %104 = vector.extract_strided_slice %70 {offsets = [0, 6, 0], sizes = [2, 1, 32], strides = [1, 1, 1]} : vector<2x8x32xf32> to vector<2x1x32xf32>
    %105 = vector.broadcast %103 : vector<1x8x32xf32> to vector<2x8x32xf32>
    %106 = vector.broadcast %104 : vector<2x1x32xf32> to vector<2x8x32xf32>
    %107 = arith.mulf %105, %106 : vector<2x8x32xf32>
    %108 = arith.addf %100, %107 : vector<2x8x32xf32>
    %c3_38 = arith.constant 3 : index
    %c0_39 = arith.constant 0 : index
    %c0_40 = arith.constant 0 : index
    %109 = vector.load %arg5[%c3_38, %c0_39, %c0_40] : memref<16x8x32xf32, #tpu.memory_space<vmem>>, vector<1x8x32xf32>
    %110 = vector.shape_cast %109 : vector<1x8x32xf32> to vector<8x32xf32>
    %111 = vector.shape_cast %110 : vector<8x32xf32> to vector<1x8x32xf32>
    %112 = vector.extract_strided_slice %70 {offsets = [0, 3, 0], sizes = [2, 1, 32], strides = [1, 1, 1]} : vector<2x8x32xf32> to vector<2x1x32xf32>
    %113 = vector.broadcast %111 : vector<1x8x32xf32> to vector<2x8x32xf32>
    %114 = vector.broadcast %112 : vector<2x1x32xf32> to vector<2x8x32xf32>
    %115 = arith.mulf %113, %114 : vector<2x8x32xf32>
    %116 = arith.addf %84, %115 : vector<2x8x32xf32>
    %c5_41 = arith.constant 5 : index
    %c0_42 = arith.constant 0 : index
    %c0_43 = arith.constant 0 : index
    %117 = vector.load %arg5[%c5_41, %c0_42, %c0_43] : memref<16x8x32xf32, #tpu.memory_space<vmem>>, vector<1x8x32xf32>
    %118 = vector.shape_cast %117 : vector<1x8x32xf32> to vector<8x32xf32>
    %119 = vector.shape_cast %118 : vector<8x32xf32> to vector<1x8x32xf32>
    %120 = vector.extract_strided_slice %70 {offsets = [0, 5, 0], sizes = [2, 1, 32], strides = [1, 1, 1]} : vector<2x8x32xf32> to vector<2x1x32xf32>
    %121 = vector.broadcast %119 : vector<1x8x32xf32> to vector<2x8x32xf32>
    %122 = vector.broadcast %120 : vector<2x1x32xf32> to vector<2x8x32xf32>
    %123 = arith.mulf %121, %122 : vector<2x8x32xf32>
    %124 = arith.addf %116, %123 : vector<2x8x32xf32>
    %c7_44 = arith.constant 7 : index
    %c0_45 = arith.constant 0 : index
    %c0_46 = arith.constant 0 : index
    %125 = vector.load %arg5[%c7_44, %c0_45, %c0_46] : memref<16x8x32xf32, #tpu.memory_space<vmem>>, vector<1x8x32xf32>
    %126 = vector.shape_cast %125 : vector<1x8x32xf32> to vector<8x32xf32>
    %127 = vector.shape_cast %126 : vector<8x32xf32> to vector<1x8x32xf32>
    %128 = vector.extract_strided_slice %70 {offsets = [0, 7, 0], sizes = [2, 1, 32], strides = [1, 1, 1]} : vector<2x8x32xf32> to vector<2x1x32xf32>
    %129 = vector.broadcast %127 : vector<1x8x32xf32> to vector<2x8x32xf32>
    %130 = vector.broadcast %128 : vector<2x1x32xf32> to vector<2x8x32xf32>
    %131 = arith.mulf %129, %130 : vector<2x8x32xf32>
    %132 = arith.addf %124, %131 : vector<2x8x32xf32>
    %133 = arith.addf %108, %132 : vector<2x8x32xf32>
    %134 = vector.shape_cast %133 : vector<2x8x32xf32> to vector<16x32xf32>
    %cst_47 = arith.constant 5.000000e-01 : f32
    %135 = vector.broadcast %cst_47 : f32 to vector<16x32xf32>
    %136 = arith.mulf %135, %134 : vector<16x32xf32>
    %cst_48 = arith.constant 4.471500e-02 : f32
    %137 = vector.broadcast %cst_48 : f32 to vector<16x32xf32>
    %138 = arith.mulf %137, %134 : vector<16x32xf32>
    %139 = arith.mulf %138, %134 : vector<16x32xf32>
    %140 = arith.mulf %139, %134 : vector<16x32xf32>
    %141 = arith.addf %134, %140 : vector<16x32xf32>
    %cst_49 = arith.constant 0.797884583 : f32
    %142 = vector.broadcast %cst_49 : f32 to vector<16x32xf32>
    %143 = arith.mulf %142, %141 : vector<16x32xf32>
    %144 = math.tanh %143 : vector<16x32xf32>
    %cst_50 = arith.constant 1.000000e+00 : f32
    %145 = vector.broadcast %cst_50 : f32 to vector<16x32xf32>
    %146 = arith.addf %145, %144 : vector<16x32xf32>
    %147 = arith.mulf %136, %146 : vector<16x32xf32>
    %c0_51 = arith.constant 0 : index
    %c0_52 = arith.constant 0 : index
    %c0_53 = arith.constant 0 : index
    %148 = vector.load %arg6[%c0_51, %c0_52, %c0_53] : memref<2x32x32xf32, #tpu.memory_space<vmem>>, vector<1x32x32xf32>
    %149 = vector.shape_cast %148 : vector<1x32x32xf32> to vector<32x32xf32>
    %cst_54 = arith.constant dense<0.000000e+00> : vector<16x32xf32>
    %150 = tpu.matmul %147, %149, %cst_54 {dimension_numbers = #tpu.dot_dimension_numbers<[1], [0], [0], [1], [0, 0, 1, 1], [], []>} : vector<16x32xf32>, vector<32x32xf32>, vector<16x32xf32> -> vector<16x32xf32>
    %c0_55 = arith.constant 0 : index
    %c0_56 = arith.constant 0 : index
    %c0_57 = arith.constant 0 : index
    %151 = vector.load %arg7[%c0_55, %c0_56, %c0_57] : memref<2x1x32xf32, #tpu.memory_space<vmem>>, vector<1x1x32xf32>
    %152 = vector.shape_cast %151 : vector<1x1x32xf32> to vector<1x32xf32>
    %153 = vector.broadcast %152 : vector<1x32xf32> to vector<16x32xf32>
    %154 = arith.addf %150, %153 : vector<16x32xf32>
    %155 = vector.shape_cast %154 : vector<16x32xf32> to vector<2x8x32xf32>
    %156 = arith.addf %155, %133 : vector<2x8x32xf32>
    %157 = arith.addf %156, %7 : vector<2x8x32xf32>
    %c8 = arith.constant 8 : index
    %c0_58 = arith.constant 0 : index
    %c0_59 = arith.constant 0 : index
    %158 = vector.load %arg4[%c8, %c0_58, %c0_59] : memref<16x8x32xf32, #tpu.memory_space<vmem>>, vector<1x8x32xf32>
    %159 = vector.shape_cast %158 : vector<1x8x32xf32> to vector<8x32xf32>
    %160 = vector.shape_cast %159 : vector<8x32xf32> to vector<1x8x32xf32>
    %161 = vector.extract_strided_slice %157 {offsets = [0, 0, 0], sizes = [2, 1, 32], strides = [1, 1, 1]} : vector<2x8x32xf32> to vector<2x1x32xf32>
    %162 = vector.broadcast %160 : vector<1x8x32xf32> to vector<2x8x32xf32>
    %163 = vector.broadcast %161 : vector<2x1x32xf32> to vector<2x8x32xf32>
    %164 = arith.mulf %162, %163 : vector<2x8x32xf32>
    %c9 = arith.constant 9 : index
    %c0_60 = arith.constant 0 : index
    %c0_61 = arith.constant 0 : index
    %165 = vector.load %arg4[%c9, %c0_60, %c0_61] : memref<16x8x32xf32, #tpu.memory_space<vmem>>, vector<1x8x32xf32>
    %166 = vector.shape_cast %165 : vector<1x8x32xf32> to vector<8x32xf32>
    %167 = vector.shape_cast %166 : vector<8x32xf32> to vector<1x8x32xf32>
    %168 = vector.extract_strided_slice %157 {offsets = [0, 1, 0], sizes = [2, 1, 32], strides = [1, 1, 1]} : vector<2x8x32xf32> to vector<2x1x32xf32>
    %169 = vector.broadcast %167 : vector<1x8x32xf32> to vector<2x8x32xf32>
    %170 = vector.broadcast %168 : vector<2x1x32xf32> to vector<2x8x32xf32>
    %171 = arith.mulf %169, %170 : vector<2x8x32xf32>
    %c10 = arith.constant 10 : index
    %c0_62 = arith.constant 0 : index
    %c0_63 = arith.constant 0 : index
    %172 = vector.load %arg4[%c10, %c0_62, %c0_63] : memref<16x8x32xf32, #tpu.memory_space<vmem>>, vector<1x8x32xf32>
    %173 = vector.shape_cast %172 : vector<1x8x32xf32> to vector<8x32xf32>
    %174 = vector.shape_cast %173 : vector<8x32xf32> to vector<1x8x32xf32>
    %175 = vector.extract_strided_slice %157 {offsets = [0, 2, 0], sizes = [2, 1, 32], strides = [1, 1, 1]} : vector<2x8x32xf32> to vector<2x1x32xf32>
    %176 = vector.broadcast %174 : vector<1x8x32xf32> to vector<2x8x32xf32>
    %177 = vector.broadcast %175 : vector<2x1x32xf32> to vector<2x8x32xf32>
    %178 = arith.mulf %176, %177 : vector<2x8x32xf32>
    %179 = arith.addf %164, %178 : vector<2x8x32xf32>
    %c12 = arith.constant 12 : index
    %c0_64 = arith.constant 0 : index
    %c0_65 = arith.constant 0 : index
    %180 = vector.load %arg4[%c12, %c0_64, %c0_65] : memref<16x8x32xf32, #tpu.memory_space<vmem>>, vector<1x8x32xf32>
    %181 = vector.shape_cast %180 : vector<1x8x32xf32> to vector<8x32xf32>
    %182 = vector.shape_cast %181 : vector<8x32xf32> to vector<1x8x32xf32>
    %183 = vector.extract_strided_slice %157 {offsets = [0, 4, 0], sizes = [2, 1, 32], strides = [1, 1, 1]} : vector<2x8x32xf32> to vector<2x1x32xf32>
    %184 = vector.broadcast %182 : vector<1x8x32xf32> to vector<2x8x32xf32>
    %185 = vector.broadcast %183 : vector<2x1x32xf32> to vector<2x8x32xf32>
    %186 = arith.mulf %184, %185 : vector<2x8x32xf32>
    %187 = arith.addf %179, %186 : vector<2x8x32xf32>
    %c14 = arith.constant 14 : index
    %c0_66 = arith.constant 0 : index
    %c0_67 = arith.constant 0 : index
    %188 = vector.load %arg4[%c14, %c0_66, %c0_67] : memref<16x8x32xf32, #tpu.memory_space<vmem>>, vector<1x8x32xf32>
    %189 = vector.shape_cast %188 : vector<1x8x32xf32> to vector<8x32xf32>
    %190 = vector.shape_cast %189 : vector<8x32xf32> to vector<1x8x32xf32>
    %191 = vector.extract_strided_slice %157 {offsets = [0, 6, 0], sizes = [2, 1, 32], strides = [1, 1, 1]} : vector<2x8x32xf32> to vector<2x1x32xf32>
    %192 = vector.broadcast %190 : vector<1x8x32xf32> to vector<2x8x32xf32>
    %193 = vector.broadcast %191 : vector<2x1x32xf32> to vector<2x8x32xf32>
    %194 = arith.mulf %192, %193 : vector<2x8x32xf32>
    %195 = arith.addf %187, %194 : vector<2x8x32xf32>
    %c11 = arith.constant 11 : index
    %c0_68 = arith.constant 0 : index
    %c0_69 = arith.constant 0 : index
    %196 = vector.load %arg4[%c11, %c0_68, %c0_69] : memref<16x8x32xf32, #tpu.memory_space<vmem>>, vector<1x8x32xf32>
    %197 = vector.shape_cast %196 : vector<1x8x32xf32> to vector<8x32xf32>
    %198 = vector.shape_cast %197 : vector<8x32xf32> to vector<1x8x32xf32>
    %199 = vector.extract_strided_slice %157 {offsets = [0, 3, 0], sizes = [2, 1, 32], strides = [1, 1, 1]} : vector<2x8x32xf32> to vector<2x1x32xf32>
    %200 = vector.broadcast %198 : vector<1x8x32xf32> to vector<2x8x32xf32>
    %201 = vector.broadcast %199 : vector<2x1x32xf32> to vector<2x8x32xf32>
    %202 = arith.mulf %200, %201 : vector<2x8x32xf32>
    %203 = arith.addf %171, %202 : vector<2x8x32xf32>
    %c13 = arith.constant 13 : index
    %c0_70 = arith.constant 0 : index
    %c0_71 = arith.constant 0 : index
    %204 = vector.load %arg4[%c13, %c0_70, %c0_71] : memref<16x8x32xf32, #tpu.memory_space<vmem>>, vector<1x8x32xf32>
    %205 = vector.shape_cast %204 : vector<1x8x32xf32> to vector<8x32xf32>
    %206 = vector.shape_cast %205 : vector<8x32xf32> to vector<1x8x32xf32>
    %207 = vector.extract_strided_slice %157 {offsets = [0, 5, 0], sizes = [2, 1, 32], strides = [1, 1, 1]} : vector<2x8x32xf32> to vector<2x1x32xf32>
    %208 = vector.broadcast %206 : vector<1x8x32xf32> to vector<2x8x32xf32>
    %209 = vector.broadcast %207 : vector<2x1x32xf32> to vector<2x8x32xf32>
    %210 = arith.mulf %208, %209 : vector<2x8x32xf32>
    %211 = arith.addf %203, %210 : vector<2x8x32xf32>
    %c15 = arith.constant 15 : index
    %c0_72 = arith.constant 0 : index
    %c0_73 = arith.constant 0 : index
    %212 = vector.load %arg4[%c15, %c0_72, %c0_73] : memref<16x8x32xf32, #tpu.memory_space<vmem>>, vector<1x8x32xf32>
    %213 = vector.shape_cast %212 : vector<1x8x32xf32> to vector<8x32xf32>
    %214 = vector.shape_cast %213 : vector<8x32xf32> to vector<1x8x32xf32>
    %215 = vector.extract_strided_slice %157 {offsets = [0, 7, 0], sizes = [2, 1, 32], strides = [1, 1, 1]} : vector<2x8x32xf32> to vector<2x1x32xf32>
    %216 = vector.broadcast %214 : vector<1x8x32xf32> to vector<2x8x32xf32>
    %217 = vector.broadcast %215 : vector<2x1x32xf32> to vector<2x8x32xf32>
    %218 = arith.mulf %216, %217 : vector<2x8x32xf32>
    %219 = arith.addf %211, %218 : vector<2x8x32xf32>
    %220 = arith.addf %195, %219 : vector<2x8x32xf32>
    %c8_74 = arith.constant 8 : index
    %c0_75 = arith.constant 0 : index
    %c0_76 = arith.constant 0 : index
    %221 = vector.load %arg5[%c8_74, %c0_75, %c0_76] : memref<16x8x32xf32, #tpu.memory_space<vmem>>, vector<1x8x32xf32>
    %222 = vector.shape_cast %221 : vector<1x8x32xf32> to vector<8x32xf32>
    %223 = vector.shape_cast %222 : vector<8x32xf32> to vector<1x8x32xf32>
    %224 = vector.extract_strided_slice %220 {offsets = [0, 0, 0], sizes = [2, 1, 32], strides = [1, 1, 1]} : vector<2x8x32xf32> to vector<2x1x32xf32>
    %225 = vector.broadcast %223 : vector<1x8x32xf32> to vector<2x8x32xf32>
    %226 = vector.broadcast %224 : vector<2x1x32xf32> to vector<2x8x32xf32>
    %227 = arith.mulf %225, %226 : vector<2x8x32xf32>
    %c9_77 = arith.constant 9 : index
    %c0_78 = arith.constant 0 : index
    %c0_79 = arith.constant 0 : index
    %228 = vector.load %arg5[%c9_77, %c0_78, %c0_79] : memref<16x8x32xf32, #tpu.memory_space<vmem>>, vector<1x8x32xf32>
    %229 = vector.shape_cast %228 : vector<1x8x32xf32> to vector<8x32xf32>
    %230 = vector.shape_cast %229 : vector<8x32xf32> to vector<1x8x32xf32>
    %231 = vector.extract_strided_slice %220 {offsets = [0, 1, 0], sizes = [2, 1, 32], strides = [1, 1, 1]} : vector<2x8x32xf32> to vector<2x1x32xf32>
    %232 = vector.broadcast %230 : vector<1x8x32xf32> to vector<2x8x32xf32>
    %233 = vector.broadcast %231 : vector<2x1x32xf32> to vector<2x8x32xf32>
    %234 = arith.mulf %232, %233 : vector<2x8x32xf32>
    %c10_80 = arith.constant 10 : index
    %c0_81 = arith.constant 0 : index
    %c0_82 = arith.constant 0 : index
    %235 = vector.load %arg5[%c10_80, %c0_81, %c0_82] : memref<16x8x32xf32, #tpu.memory_space<vmem>>, vector<1x8x32xf32>
    %236 = vector.shape_cast %235 : vector<1x8x32xf32> to vector<8x32xf32>
    %237 = vector.shape_cast %236 : vector<8x32xf32> to vector<1x8x32xf32>
    %238 = vector.extract_strided_slice %220 {offsets = [0, 2, 0], sizes = [2, 1, 32], strides = [1, 1, 1]} : vector<2x8x32xf32> to vector<2x1x32xf32>
    %239 = vector.broadcast %237 : vector<1x8x32xf32> to vector<2x8x32xf32>
    %240 = vector.broadcast %238 : vector<2x1x32xf32> to vector<2x8x32xf32>
    %241 = arith.mulf %239, %240 : vector<2x8x32xf32>
    %242 = arith.addf %227, %241 : vector<2x8x32xf32>
    %c12_83 = arith.constant 12 : index
    %c0_84 = arith.constant 0 : index
    %c0_85 = arith.constant 0 : index
    %243 = vector.load %arg5[%c12_83, %c0_84, %c0_85] : memref<16x8x32xf32, #tpu.memory_space<vmem>>, vector<1x8x32xf32>
    %244 = vector.shape_cast %243 : vector<1x8x32xf32> to vector<8x32xf32>
    %245 = vector.shape_cast %244 : vector<8x32xf32> to vector<1x8x32xf32>
    %246 = vector.extract_strided_slice %220 {offsets = [0, 4, 0], sizes = [2, 1, 32], strides = [1, 1, 1]} : vector<2x8x32xf32> to vector<2x1x32xf32>
    %247 = vector.broadcast %245 : vector<1x8x32xf32> to vector<2x8x32xf32>
    %248 = vector.broadcast %246 : vector<2x1x32xf32> to vector<2x8x32xf32>
    %249 = arith.mulf %247, %248 : vector<2x8x32xf32>
    %250 = arith.addf %242, %249 : vector<2x8x32xf32>
    %c14_86 = arith.constant 14 : index
    %c0_87 = arith.constant 0 : index
    %c0_88 = arith.constant 0 : index
    %251 = vector.load %arg5[%c14_86, %c0_87, %c0_88] : memref<16x8x32xf32, #tpu.memory_space<vmem>>, vector<1x8x32xf32>
    %252 = vector.shape_cast %251 : vector<1x8x32xf32> to vector<8x32xf32>
    %253 = vector.shape_cast %252 : vector<8x32xf32> to vector<1x8x32xf32>
    %254 = vector.extract_strided_slice %220 {offsets = [0, 6, 0], sizes = [2, 1, 32], strides = [1, 1, 1]} : vector<2x8x32xf32> to vector<2x1x32xf32>
    %255 = vector.broadcast %253 : vector<1x8x32xf32> to vector<2x8x32xf32>
    %256 = vector.broadcast %254 : vector<2x1x32xf32> to vector<2x8x32xf32>
    %257 = arith.mulf %255, %256 : vector<2x8x32xf32>
    %258 = arith.addf %250, %257 : vector<2x8x32xf32>
    %c11_89 = arith.constant 11 : index
    %c0_90 = arith.constant 0 : index
    %c0_91 = arith.constant 0 : index
    %259 = vector.load %arg5[%c11_89, %c0_90, %c0_91] : memref<16x8x32xf32, #tpu.memory_space<vmem>>, vector<1x8x32xf32>
    %260 = vector.shape_cast %259 : vector<1x8x32xf32> to vector<8x32xf32>
    %261 = vector.shape_cast %260 : vector<8x32xf32> to vector<1x8x32xf32>
    %262 = vector.extract_strided_slice %220 {offsets = [0, 3, 0], sizes = [2, 1, 32], strides = [1, 1, 1]} : vector<2x8x32xf32> to vector<2x1x32xf32>
    %263 = vector.broadcast %261 : vector<1x8x32xf32> to vector<2x8x32xf32>
    %264 = vector.broadcast %262 : vector<2x1x32xf32> to vector<2x8x32xf32>
    %265 = arith.mulf %263, %264 : vector<2x8x32xf32>
    %266 = arith.addf %234, %265 : vector<2x8x32xf32>
    %c13_92 = arith.constant 13 : index
    %c0_93 = arith.constant 0 : index
    %c0_94 = arith.constant 0 : index
    %267 = vector.load %arg5[%c13_92, %c0_93, %c0_94] : memref<16x8x32xf32, #tpu.memory_space<vmem>>, vector<1x8x32xf32>
    %268 = vector.shape_cast %267 : vector<1x8x32xf32> to vector<8x32xf32>
    %269 = vector.shape_cast %268 : vector<8x32xf32> to vector<1x8x32xf32>
    %270 = vector.extract_strided_slice %220 {offsets = [0, 5, 0], sizes = [2, 1, 32], strides = [1, 1, 1]} : vector<2x8x32xf32> to vector<2x1x32xf32>
    %271 = vector.broadcast %269 : vector<1x8x32xf32> to vector<2x8x32xf32>
    %272 = vector.broadcast %270 : vector<2x1x32xf32> to vector<2x8x32xf32>
    %273 = arith.mulf %271, %272 : vector<2x8x32xf32>
    %274 = arith.addf %266, %273 : vector<2x8x32xf32>
    %c15_95 = arith.constant 15 : index
    %c0_96 = arith.constant 0 : index
    %c0_97 = arith.constant 0 : index
    %275 = vector.load %arg5[%c15_95, %c0_96, %c0_97] : memref<16x8x32xf32, #tpu.memory_space<vmem>>, vector<1x8x32xf32>
    %276 = vector.shape_cast %275 : vector<1x8x32xf32> to vector<8x32xf32>
    %277 = vector.shape_cast %276 : vector<8x32xf32> to vector<1x8x32xf32>
    %278 = vector.extract_strided_slice %220 {offsets = [0, 7, 0], sizes = [2, 1, 32], strides = [1, 1, 1]} : vector<2x8x32xf32> to vector<2x1x32xf32>
    %279 = vector.broadcast %277 : vector<1x8x32xf32> to vector<2x8x32xf32>
    %280 = vector.broadcast %278 : vector<2x1x32xf32> to vector<2x8x32xf32>
    %281 = arith.mulf %279, %280 : vector<2x8x32xf32>
    %282 = arith.addf %274, %281 : vector<2x8x32xf32>
    %283 = arith.addf %258, %282 : vector<2x8x32xf32>
    %284 = vector.shape_cast %283 : vector<2x8x32xf32> to vector<16x32xf32>
    %cst_98 = arith.constant 5.000000e-01 : f32
    %285 = vector.broadcast %cst_98 : f32 to vector<16x32xf32>
    %286 = arith.mulf %285, %284 : vector<16x32xf32>
    %cst_99 = arith.constant 4.471500e-02 : f32
    %287 = vector.broadcast %cst_99 : f32 to vector<16x32xf32>
    %288 = arith.mulf %287, %284 : vector<16x32xf32>
    %289 = arith.mulf %288, %284 : vector<16x32xf32>
    %290 = arith.mulf %289, %284 : vector<16x32xf32>
    %291 = arith.addf %284, %290 : vector<16x32xf32>
    %cst_100 = arith.constant 0.797884583 : f32
    %292 = vector.broadcast %cst_100 : f32 to vector<16x32xf32>
    %293 = arith.mulf %292, %291 : vector<16x32xf32>
    %294 = math.tanh %293 : vector<16x32xf32>
    %cst_101 = arith.constant 1.000000e+00 : f32
    %295 = vector.broadcast %cst_101 : f32 to vector<16x32xf32>
    %296 = arith.addf %295, %294 : vector<16x32xf32>
    %297 = arith.mulf %286, %296 : vector<16x32xf32>
    %c1_102 = arith.constant 1 : index
    %c0_103 = arith.constant 0 : index
    %c0_104 = arith.constant 0 : index
    %298 = vector.load %arg6[%c1_102, %c0_103, %c0_104] : memref<2x32x32xf32, #tpu.memory_space<vmem>>, vector<1x32x32xf32>
    %299 = vector.shape_cast %298 : vector<1x32x32xf32> to vector<32x32xf32>
    %cst_105 = arith.constant dense<0.000000e+00> : vector<16x32xf32>
    %300 = tpu.matmul %297, %299, %cst_105 {dimension_numbers = #tpu.dot_dimension_numbers<[1], [0], [0], [1], [0, 0, 1, 1], [], []>} : vector<16x32xf32>, vector<32x32xf32>, vector<16x32xf32> -> vector<16x32xf32>
    %c1_106 = arith.constant 1 : index
    %c0_107 = arith.constant 0 : index
    %c0_108 = arith.constant 0 : index
    %301 = vector.load %arg7[%c1_106, %c0_107, %c0_108] : memref<2x1x32xf32, #tpu.memory_space<vmem>>, vector<1x1x32xf32>
    %302 = vector.shape_cast %301 : vector<1x1x32xf32> to vector<1x32xf32>
    %303 = vector.broadcast %302 : vector<1x32xf32> to vector<16x32xf32>
    %304 = arith.addf %300, %303 : vector<16x32xf32>
    %305 = vector.shape_cast %304 : vector<16x32xf32> to vector<2x8x32xf32>
    %306 = arith.addf %305, %283 : vector<2x8x32xf32>
    %307 = arith.addf %306, %157 : vector<2x8x32xf32>
    %c0_109 = arith.constant 0 : index
    %c0_110 = arith.constant 0 : index
    %c0_111 = arith.constant 0 : index
    %308 = vector.load %arg8[%c0_109, %c0_110, %c0_111] : memref<8x8x32xf32, #tpu.memory_space<vmem>>, vector<1x8x32xf32>
    %309 = vector.shape_cast %308 : vector<1x8x32xf32> to vector<8x32xf32>
    %310 = vector.shape_cast %309 : vector<8x32xf32> to vector<1x8x32xf32>
    %311 = vector.extract_strided_slice %307 {offsets = [0, 0, 0], sizes = [2, 1, 32], strides = [1, 1, 1]} : vector<2x8x32xf32> to vector<2x1x32xf32>
    %312 = vector.broadcast %310 : vector<1x8x32xf32> to vector<2x8x32xf32>
    %313 = vector.broadcast %311 : vector<2x1x32xf32> to vector<2x8x32xf32>
    %314 = arith.mulf %312, %313 : vector<2x8x32xf32>
    %c1_112 = arith.constant 1 : index
    %c0_113 = arith.constant 0 : index
    %c0_114 = arith.constant 0 : index
    %315 = vector.load %arg8[%c1_112, %c0_113, %c0_114] : memref<8x8x32xf32, #tpu.memory_space<vmem>>, vector<1x8x32xf32>
    %316 = vector.shape_cast %315 : vector<1x8x32xf32> to vector<8x32xf32>
    %317 = vector.shape_cast %316 : vector<8x32xf32> to vector<1x8x32xf32>
    %318 = vector.extract_strided_slice %307 {offsets = [0, 1, 0], sizes = [2, 1, 32], strides = [1, 1, 1]} : vector<2x8x32xf32> to vector<2x1x32xf32>
    %319 = vector.broadcast %317 : vector<1x8x32xf32> to vector<2x8x32xf32>
    %320 = vector.broadcast %318 : vector<2x1x32xf32> to vector<2x8x32xf32>
    %321 = arith.mulf %319, %320 : vector<2x8x32xf32>
    %c2_115 = arith.constant 2 : index
    %c0_116 = arith.constant 0 : index
    %c0_117 = arith.constant 0 : index
    %322 = vector.load %arg8[%c2_115, %c0_116, %c0_117] : memref<8x8x32xf32, #tpu.memory_space<vmem>>, vector<1x8x32xf32>
    %323 = vector.shape_cast %322 : vector<1x8x32xf32> to vector<8x32xf32>
    %324 = vector.shape_cast %323 : vector<8x32xf32> to vector<1x8x32xf32>
    %325 = vector.extract_strided_slice %307 {offsets = [0, 2, 0], sizes = [2, 1, 32], strides = [1, 1, 1]} : vector<2x8x32xf32> to vector<2x1x32xf32>
    %326 = vector.broadcast %324 : vector<1x8x32xf32> to vector<2x8x32xf32>
    %327 = vector.broadcast %325 : vector<2x1x32xf32> to vector<2x8x32xf32>
    %328 = arith.mulf %326, %327 : vector<2x8x32xf32>
    %329 = arith.addf %314, %328 : vector<2x8x32xf32>
    %c4_118 = arith.constant 4 : index
    %c0_119 = arith.constant 0 : index
    %c0_120 = arith.constant 0 : index
    %330 = vector.load %arg8[%c4_118, %c0_119, %c0_120] : memref<8x8x32xf32, #tpu.memory_space<vmem>>, vector<1x8x32xf32>
    %331 = vector.shape_cast %330 : vector<1x8x32xf32> to vector<8x32xf32>
    %332 = vector.shape_cast %331 : vector<8x32xf32> to vector<1x8x32xf32>
    %333 = vector.extract_strided_slice %307 {offsets = [0, 4, 0], sizes = [2, 1, 32], strides = [1, 1, 1]} : vector<2x8x32xf32> to vector<2x1x32xf32>
    %334 = vector.broadcast %332 : vector<1x8x32xf32> to vector<2x8x32xf32>
    %335 = vector.broadcast %333 : vector<2x1x32xf32> to vector<2x8x32xf32>
    %336 = arith.mulf %334, %335 : vector<2x8x32xf32>
    %337 = arith.addf %329, %336 : vector<2x8x32xf32>
    %c6_121 = arith.constant 6 : index
    %c0_122 = arith.constant 0 : index
    %c0_123 = arith.constant 0 : index
    %338 = vector.load %arg8[%c6_121, %c0_122, %c0_123] : memref<8x8x32xf32, #tpu.memory_space<vmem>>, vector<1x8x32xf32>
    %339 = vector.shape_cast %338 : vector<1x8x32xf32> to vector<8x32xf32>
    %340 = vector.shape_cast %339 : vector<8x32xf32> to vector<1x8x32xf32>
    %341 = vector.extract_strided_slice %307 {offsets = [0, 6, 0], sizes = [2, 1, 32], strides = [1, 1, 1]} : vector<2x8x32xf32> to vector<2x1x32xf32>
    %342 = vector.broadcast %340 : vector<1x8x32xf32> to vector<2x8x32xf32>
    %343 = vector.broadcast %341 : vector<2x1x32xf32> to vector<2x8x32xf32>
    %344 = arith.mulf %342, %343 : vector<2x8x32xf32>
    %345 = arith.addf %337, %344 : vector<2x8x32xf32>
    %c3_124 = arith.constant 3 : index
    %c0_125 = arith.constant 0 : index
    %c0_126 = arith.constant 0 : index
    %346 = vector.load %arg8[%c3_124, %c0_125, %c0_126] : memref<8x8x32xf32, #tpu.memory_space<vmem>>, vector<1x8x32xf32>
    %347 = vector.shape_cast %346 : vector<1x8x32xf32> to vector<8x32xf32>
    %348 = vector.shape_cast %347 : vector<8x32xf32> to vector<1x8x32xf32>
    %349 = vector.extract_strided_slice %307 {offsets = [0, 3, 0], sizes = [2, 1, 32], strides = [1, 1, 1]} : vector<2x8x32xf32> to vector<2x1x32xf32>
    %350 = vector.broadcast %348 : vector<1x8x32xf32> to vector<2x8x32xf32>
    %351 = vector.broadcast %349 : vector<2x1x32xf32> to vector<2x8x32xf32>
    %352 = arith.mulf %350, %351 : vector<2x8x32xf32>
    %353 = arith.addf %321, %352 : vector<2x8x32xf32>
    %c5_127 = arith.constant 5 : index
    %c0_128 = arith.constant 0 : index
    %c0_129 = arith.constant 0 : index
    %354 = vector.load %arg8[%c5_127, %c0_128, %c0_129] : memref<8x8x32xf32, #tpu.memory_space<vmem>>, vector<1x8x32xf32>
    %355 = vector.shape_cast %354 : vector<1x8x32xf32> to vector<8x32xf32>
    %356 = vector.shape_cast %355 : vector<8x32xf32> to vector<1x8x32xf32>
    %357 = vector.extract_strided_slice %307 {offsets = [0, 5, 0], sizes = [2, 1, 32], strides = [1, 1, 1]} : vector<2x8x32xf32> to vector<2x1x32xf32>
    %358 = vector.broadcast %356 : vector<1x8x32xf32> to vector<2x8x32xf32>
    %359 = vector.broadcast %357 : vector<2x1x32xf32> to vector<2x8x32xf32>
    %360 = arith.mulf %358, %359 : vector<2x8x32xf32>
    %361 = arith.addf %353, %360 : vector<2x8x32xf32>
    %c7_130 = arith.constant 7 : index
    %c0_131 = arith.constant 0 : index
    %c0_132 = arith.constant 0 : index
    %362 = vector.load %arg8[%c7_130, %c0_131, %c0_132] : memref<8x8x32xf32, #tpu.memory_space<vmem>>, vector<1x8x32xf32>
    %363 = vector.shape_cast %362 : vector<1x8x32xf32> to vector<8x32xf32>
    %364 = vector.shape_cast %363 : vector<8x32xf32> to vector<1x8x32xf32>
    %365 = vector.extract_strided_slice %307 {offsets = [0, 7, 0], sizes = [2, 1, 32], strides = [1, 1, 1]} : vector<2x8x32xf32> to vector<2x1x32xf32>
    %366 = vector.broadcast %364 : vector<1x8x32xf32> to vector<2x8x32xf32>
    %367 = vector.broadcast %365 : vector<2x1x32xf32> to vector<2x8x32xf32>
    %368 = arith.mulf %366, %367 : vector<2x8x32xf32>
    %369 = arith.addf %361, %368 : vector<2x8x32xf32>
    %370 = arith.addf %345, %369 : vector<2x8x32xf32>
    %371 = vector.extract_strided_slice %370 {offsets = [0, 0, 0], sizes = [2, 1, 32], strides = [1, 1, 1]} : vector<2x8x32xf32> to vector<2x1x32xf32>
    %372 = vector.shape_cast %371 : vector<2x1x32xf32> to vector<2x32xf32>
    %cst_133 = arith.constant 5.000000e-01 : f32
    %373 = vector.broadcast %cst_133 : f32 to vector<2x32xf32>
    %374 = arith.mulf %373, %372 : vector<2x32xf32>
    %cst_134 = arith.constant 4.471500e-02 : f32
    %375 = vector.broadcast %cst_134 : f32 to vector<2x32xf32>
    %376 = arith.mulf %375, %372 : vector<2x32xf32>
    %377 = arith.mulf %376, %372 : vector<2x32xf32>
    %378 = arith.mulf %377, %372 : vector<2x32xf32>
    %379 = arith.addf %372, %378 : vector<2x32xf32>
    %cst_135 = arith.constant 0.797884583 : f32
    %380 = vector.broadcast %cst_135 : f32 to vector<2x32xf32>
    %381 = arith.mulf %380, %379 : vector<2x32xf32>
    %382 = math.tanh %381 : vector<2x32xf32>
    %cst_136 = arith.constant 1.000000e+00 : f32
    %383 = vector.broadcast %cst_136 : f32 to vector<2x32xf32>
    %384 = arith.addf %383, %382 : vector<2x32xf32>
    %385 = arith.mulf %374, %384 : vector<2x32xf32>
    %c0_137 = arith.constant 0 : index
    %c0_138 = arith.constant 0 : index
    %386 = vector.load %arg9[%c0_137, %c0_138] : memref<32x4xf32, #tpu.memory_space<vmem>>, vector<32x4xf32>
    %cst_139 = arith.constant dense<0.000000e+00> : vector<2x4xf32>
    %387 = tpu.matmul %385, %386, %cst_139 {dimension_numbers = #tpu.dot_dimension_numbers<[1], [0], [0], [1], [0, 0, 1, 1], [], []>} : vector<2x32xf32>, vector<32x4xf32>, vector<2x4xf32> -> vector<2x4xf32>
    %c0_140 = arith.constant 0 : index
    %c0_141 = arith.constant 0 : index
    %388 = vector.load %arg10[%c0_140, %c0_141] : memref<1x4xf32, #tpu.memory_space<vmem>>, vector<1x4xf32>
    %389 = vector.broadcast %388 : vector<1x4xf32> to vector<2x4xf32>
    %390 = arith.addf %387, %389 : vector<2x4xf32>
    %c0_142 = arith.constant 0 : index
    %c0_143 = arith.constant 0 : index
    %391 = vector.load %arg11[%c0_142, %c0_143] : memref<2x32xf32, #tpu.memory_space<vmem>>, vector<2x4xf32>
    tpu.vector_store %arg11[%c0_142, %c0_143], %390 {strides = array<i32>} : memref<2x32xf32, #tpu.memory_space<vmem>>, vector<2x4xf32>,
    %392 = vector.extract_strided_slice %370 {offsets = [0, 1, 0], sizes = [2, 1, 32], strides = [1, 1, 1]} : vector<2x8x32xf32> to vector<2x1x32xf32>
    %393 = vector.shape_cast %392 : vector<2x1x32xf32> to vector<2x32xf32>
    %cst_144 = arith.constant 5.000000e-01 : f32
    %394 = vector.broadcast %cst_144 : f32 to vector<2x32xf32>
    %395 = arith.mulf %394, %393 : vector<2x32xf32>
    %cst_145 = arith.constant 4.471500e-02 : f32
    %396 = vector.broadcast %cst_145 : f32 to vector<2x32xf32>
    %397 = arith.mulf %396, %393 : vector<2x32xf32>
    %398 = arith.mulf %397, %393 : vector<2x32xf32>
    %399 = arith.mulf %398, %393 : vector<2x32xf32>
    %400 = arith.addf %393, %399 : vector<2x32xf32>
    %cst_146 = arith.constant 0.797884583 : f32
    %401 = vector.broadcast %cst_146 : f32 to vector<2x32xf32>
    %402 = arith.mulf %401, %400 : vector<2x32xf32>
    %403 = math.tanh %402 : vector<2x32xf32>
    %cst_147 = arith.constant 1.000000e+00 : f32
    %404 = vector.broadcast %cst_147 : f32 to vector<2x32xf32>
    %405 = arith.addf %404, %403 : vector<2x32xf32>
    %406 = arith.mulf %395, %405 : vector<2x32xf32>
    %c0_148 = arith.constant 0 : index
    %c0_149 = arith.constant 0 : index
    %407 = vector.load %arg9[%c0_148, %c0_149] : memref<32x4xf32, #tpu.memory_space<vmem>>, vector<32x4xf32>
    %cst_150 = arith.constant dense<0.000000e+00> : vector<2x4xf32>
    %408 = tpu.matmul %406, %407, %cst_150 {dimension_numbers = #tpu.dot_dimension_numbers<[1], [0], [0], [1], [0, 0, 1, 1], [], []>} : vector<2x32xf32>, vector<32x4xf32>, vector<2x4xf32> -> vector<2x4xf32>
    %c0_151 = arith.constant 0 : index
    %c0_152 = arith.constant 0 : index
    %409 = vector.load %arg10[%c0_151, %c0_152] : memref<1x4xf32, #tpu.memory_space<vmem>>, vector<1x4xf32>
    %410 = vector.broadcast %409 : vector<1x4xf32> to vector<2x4xf32>
    %411 = arith.addf %408, %410 : vector<2x4xf32>
    %c0_153 = arith.constant 0 : index
    %c4_154 = arith.constant 4 : index
    %412 = vector.load %arg11[%c0_153, %c4_154] : memref<2x32xf32, #tpu.memory_space<vmem>>, vector<2x4xf32>
    tpu.vector_store %arg11[%c0_153, %c4_154], %411 {strides = array<i32>} : memref<2x32xf32, #tpu.memory_space<vmem>>, vector<2x4xf32>,
    %413 = vector.extract_strided_slice %370 {offsets = [0, 2, 0], sizes = [2, 1, 32], strides = [1, 1, 1]} : vector<2x8x32xf32> to vector<2x1x32xf32>
    %414 = vector.shape_cast %413 : vector<2x1x32xf32> to vector<2x32xf32>
    %cst_155 = arith.constant 5.000000e-01 : f32
    %415 = vector.broadcast %cst_155 : f32 to vector<2x32xf32>
    %416 = arith.mulf %415, %414 : vector<2x32xf32>
    %cst_156 = arith.constant 4.471500e-02 : f32
    %417 = vector.broadcast %cst_156 : f32 to vector<2x32xf32>
    %418 = arith.mulf %417, %414 : vector<2x32xf32>
    %419 = arith.mulf %418, %414 : vector<2x32xf32>
    %420 = arith.mulf %419, %414 : vector<2x32xf32>
    %421 = arith.addf %414, %420 : vector<2x32xf32>
    %cst_157 = arith.constant 0.797884583 : f32
    %422 = vector.broadcast %cst_157 : f32 to vector<2x32xf32>
    %423 = arith.mulf %422, %421 : vector<2x32xf32>
    %424 = math.tanh %423 : vector<2x32xf32>
    %cst_158 = arith.constant 1.000000e+00 : f32
    %425 = vector.broadcast %cst_158 : f32 to vector<2x32xf32>
    %426 = arith.addf %425, %424 : vector<2x32xf32>
    %427 = arith.mulf %416, %426 : vector<2x32xf32>
    %c0_159 = arith.constant 0 : index
    %c0_160 = arith.constant 0 : index
    %428 = vector.load %arg9[%c0_159, %c0_160] : memref<32x4xf32, #tpu.memory_space<vmem>>, vector<32x4xf32>
    %cst_161 = arith.constant dense<0.000000e+00> : vector<2x4xf32>
    %429 = tpu.matmul %427, %428, %cst_161 {dimension_numbers = #tpu.dot_dimension_numbers<[1], [0], [0], [1], [0, 0, 1, 1], [], []>} : vector<2x32xf32>, vector<32x4xf32>, vector<2x4xf32> -> vector<2x4xf32>
    %c0_162 = arith.constant 0 : index
    %c0_163 = arith.constant 0 : index
    %430 = vector.load %arg10[%c0_162, %c0_163] : memref<1x4xf32, #tpu.memory_space<vmem>>, vector<1x4xf32>
    %431 = vector.broadcast %430 : vector<1x4xf32> to vector<2x4xf32>
    %432 = arith.addf %429, %431 : vector<2x4xf32>
    %c0_164 = arith.constant 0 : index
    %c8_165 = arith.constant 8 : index
    %433 = vector.load %arg11[%c0_164, %c8_165] : memref<2x32xf32, #tpu.memory_space<vmem>>, vector<2x4xf32>
    tpu.vector_store %arg11[%c0_164, %c8_165], %432 {strides = array<i32>} : memref<2x32xf32, #tpu.memory_space<vmem>>, vector<2x4xf32>,
    %434 = vector.extract_strided_slice %370 {offsets = [0, 3, 0], sizes = [2, 1, 32], strides = [1, 1, 1]} : vector<2x8x32xf32> to vector<2x1x32xf32>
    %435 = vector.shape_cast %434 : vector<2x1x32xf32> to vector<2x32xf32>
    %cst_166 = arith.constant 5.000000e-01 : f32
    %436 = vector.broadcast %cst_166 : f32 to vector<2x32xf32>
    %437 = arith.mulf %436, %435 : vector<2x32xf32>
    %cst_167 = arith.constant 4.471500e-02 : f32
    %438 = vector.broadcast %cst_167 : f32 to vector<2x32xf32>
    %439 = arith.mulf %438, %435 : vector<2x32xf32>
    %440 = arith.mulf %439, %435 : vector<2x32xf32>
    %441 = arith.mulf %440, %435 : vector<2x32xf32>
    %442 = arith.addf %435, %441 : vector<2x32xf32>
    %cst_168 = arith.constant 0.797884583 : f32
    %443 = vector.broadcast %cst_168 : f32 to vector<2x32xf32>
    %444 = arith.mulf %443, %442 : vector<2x32xf32>
    %445 = math.tanh %444 : vector<2x32xf32>
    %cst_169 = arith.constant 1.000000e+00 : f32
    %446 = vector.broadcast %cst_169 : f32 to vector<2x32xf32>
    %447 = arith.addf %446, %445 : vector<2x32xf32>
    %448 = arith.mulf %437, %447 : vector<2x32xf32>
    %c0_170 = arith.constant 0 : index
    %c0_171 = arith.constant 0 : index
    %449 = vector.load %arg9[%c0_170, %c0_171] : memref<32x4xf32, #tpu.memory_space<vmem>>, vector<32x4xf32>
    %cst_172 = arith.constant dense<0.000000e+00> : vector<2x4xf32>
    %450 = tpu.matmul %448, %449, %cst_172 {dimension_numbers = #tpu.dot_dimension_numbers<[1], [0], [0], [1], [0, 0, 1, 1], [], []>} : vector<2x32xf32>, vector<32x4xf32>, vector<2x4xf32> -> vector<2x4xf32>
    %c0_173 = arith.constant 0 : index
    %c0_174 = arith.constant 0 : index
    %451 = vector.load %arg10[%c0_173, %c0_174] : memref<1x4xf32, #tpu.memory_space<vmem>>, vector<1x4xf32>
    %452 = vector.broadcast %451 : vector<1x4xf32> to vector<2x4xf32>
    %453 = arith.addf %450, %452 : vector<2x4xf32>
    %c0_175 = arith.constant 0 : index
    %c12_176 = arith.constant 12 : index
    %454 = vector.load %arg11[%c0_175, %c12_176] : memref<2x32xf32, #tpu.memory_space<vmem>>, vector<2x4xf32>
    tpu.vector_store %arg11[%c0_175, %c12_176], %453 {strides = array<i32>} : memref<2x32xf32, #tpu.memory_space<vmem>>, vector<2x4xf32>,
    %455 = vector.extract_strided_slice %370 {offsets = [0, 4, 0], sizes = [2, 1, 32], strides = [1, 1, 1]} : vector<2x8x32xf32> to vector<2x1x32xf32>
    %456 = vector.shape_cast %455 : vector<2x1x32xf32> to vector<2x32xf32>
    %cst_177 = arith.constant 5.000000e-01 : f32
    %457 = vector.broadcast %cst_177 : f32 to vector<2x32xf32>
    %458 = arith.mulf %457, %456 : vector<2x32xf32>
    %cst_178 = arith.constant 4.471500e-02 : f32
    %459 = vector.broadcast %cst_178 : f32 to vector<2x32xf32>
    %460 = arith.mulf %459, %456 : vector<2x32xf32>
    %461 = arith.mulf %460, %456 : vector<2x32xf32>
    %462 = arith.mulf %461, %456 : vector<2x32xf32>
    %463 = arith.addf %456, %462 : vector<2x32xf32>
    %cst_179 = arith.constant 0.797884583 : f32
    %464 = vector.broadcast %cst_179 : f32 to vector<2x32xf32>
    %465 = arith.mulf %464, %463 : vector<2x32xf32>
    %466 = math.tanh %465 : vector<2x32xf32>
    %cst_180 = arith.constant 1.000000e+00 : f32
    %467 = vector.broadcast %cst_180 : f32 to vector<2x32xf32>
    %468 = arith.addf %467, %466 : vector<2x32xf32>
    %469 = arith.mulf %458, %468 : vector<2x32xf32>
    %c0_181 = arith.constant 0 : index
    %c0_182 = arith.constant 0 : index
    %470 = vector.load %arg9[%c0_181, %c0_182] : memref<32x4xf32, #tpu.memory_space<vmem>>, vector<32x4xf32>
    %cst_183 = arith.constant dense<0.000000e+00> : vector<2x4xf32>
    %471 = tpu.matmul %469, %470, %cst_183 {dimension_numbers = #tpu.dot_dimension_numbers<[1], [0], [0], [1], [0, 0, 1, 1], [], []>} : vector<2x32xf32>, vector<32x4xf32>, vector<2x4xf32> -> vector<2x4xf32>
    %c0_184 = arith.constant 0 : index
    %c0_185 = arith.constant 0 : index
    %472 = vector.load %arg10[%c0_184, %c0_185] : memref<1x4xf32, #tpu.memory_space<vmem>>, vector<1x4xf32>
    %473 = vector.broadcast %472 : vector<1x4xf32> to vector<2x4xf32>
    %474 = arith.addf %471, %473 : vector<2x4xf32>
    %c0_186 = arith.constant 0 : index
    %c16 = arith.constant 16 : index
    %475 = vector.load %arg11[%c0_186, %c16] : memref<2x32xf32, #tpu.memory_space<vmem>>, vector<2x4xf32>
    tpu.vector_store %arg11[%c0_186, %c16], %474 {strides = array<i32>} : memref<2x32xf32, #tpu.memory_space<vmem>>, vector<2x4xf32>,
    %476 = vector.extract_strided_slice %370 {offsets = [0, 5, 0], sizes = [2, 1, 32], strides = [1, 1, 1]} : vector<2x8x32xf32> to vector<2x1x32xf32>
    %477 = vector.shape_cast %476 : vector<2x1x32xf32> to vector<2x32xf32>
    %cst_187 = arith.constant 5.000000e-01 : f32
    %478 = vector.broadcast %cst_187 : f32 to vector<2x32xf32>
    %479 = arith.mulf %478, %477 : vector<2x32xf32>
    %cst_188 = arith.constant 4.471500e-02 : f32
    %480 = vector.broadcast %cst_188 : f32 to vector<2x32xf32>
    %481 = arith.mulf %480, %477 : vector<2x32xf32>
    %482 = arith.mulf %481, %477 : vector<2x32xf32>
    %483 = arith.mulf %482, %477 : vector<2x32xf32>
    %484 = arith.addf %477, %483 : vector<2x32xf32>
    %cst_189 = arith.constant 0.797884583 : f32
    %485 = vector.broadcast %cst_189 : f32 to vector<2x32xf32>
    %486 = arith.mulf %485, %484 : vector<2x32xf32>
    %487 = math.tanh %486 : vector<2x32xf32>
    %cst_190 = arith.constant 1.000000e+00 : f32
    %488 = vector.broadcast %cst_190 : f32 to vector<2x32xf32>
    %489 = arith.addf %488, %487 : vector<2x32xf32>
    %490 = arith.mulf %479, %489 : vector<2x32xf32>
    %c0_191 = arith.constant 0 : index
    %c0_192 = arith.constant 0 : index
    %491 = vector.load %arg9[%c0_191, %c0_192] : memref<32x4xf32, #tpu.memory_space<vmem>>, vector<32x4xf32>
    %cst_193 = arith.constant dense<0.000000e+00> : vector<2x4xf32>
    %492 = tpu.matmul %490, %491, %cst_193 {dimension_numbers = #tpu.dot_dimension_numbers<[1], [0], [0], [1], [0, 0, 1, 1], [], []>} : vector<2x32xf32>, vector<32x4xf32>, vector<2x4xf32> -> vector<2x4xf32>
    %c0_194 = arith.constant 0 : index
    %c0_195 = arith.constant 0 : index
    %493 = vector.load %arg10[%c0_194, %c0_195] : memref<1x4xf32, #tpu.memory_space<vmem>>, vector<1x4xf32>
    %494 = vector.broadcast %493 : vector<1x4xf32> to vector<2x4xf32>
    %495 = arith.addf %492, %494 : vector<2x4xf32>
    %c0_196 = arith.constant 0 : index
    %c20 = arith.constant 20 : index
    %496 = vector.load %arg11[%c0_196, %c20] : memref<2x32xf32, #tpu.memory_space<vmem>>, vector<2x4xf32>
    tpu.vector_store %arg11[%c0_196, %c20], %495 {strides = array<i32>} : memref<2x32xf32, #tpu.memory_space<vmem>>, vector<2x4xf32>,
    %497 = vector.extract_strided_slice %370 {offsets = [0, 6, 0], sizes = [2, 1, 32], strides = [1, 1, 1]} : vector<2x8x32xf32> to vector<2x1x32xf32>
    %498 = vector.shape_cast %497 : vector<2x1x32xf32> to vector<2x32xf32>
    %cst_197 = arith.constant 5.000000e-01 : f32
    %499 = vector.broadcast %cst_197 : f32 to vector<2x32xf32>
    %500 = arith.mulf %499, %498 : vector<2x32xf32>
    %cst_198 = arith.constant 4.471500e-02 : f32
    %501 = vector.broadcast %cst_198 : f32 to vector<2x32xf32>
    %502 = arith.mulf %501, %498 : vector<2x32xf32>
    %503 = arith.mulf %502, %498 : vector<2x32xf32>
    %504 = arith.mulf %503, %498 : vector<2x32xf32>
    %505 = arith.addf %498, %504 : vector<2x32xf32>
    %cst_199 = arith.constant 0.797884583 : f32
    %506 = vector.broadcast %cst_199 : f32 to vector<2x32xf32>
    %507 = arith.mulf %506, %505 : vector<2x32xf32>
    %508 = math.tanh %507 : vector<2x32xf32>
    %cst_200 = arith.constant 1.000000e+00 : f32
    %509 = vector.broadcast %cst_200 : f32 to vector<2x32xf32>
    %510 = arith.addf %509, %508 : vector<2x32xf32>
    %511 = arith.mulf %500, %510 : vector<2x32xf32>
    %c0_201 = arith.constant 0 : index
    %c0_202 = arith.constant 0 : index
    %512 = vector.load %arg9[%c0_201, %c0_202] : memref<32x4xf32, #tpu.memory_space<vmem>>, vector<32x4xf32>
    %cst_203 = arith.constant dense<0.000000e+00> : vector<2x4xf32>
    %513 = tpu.matmul %511, %512, %cst_203 {dimension_numbers = #tpu.dot_dimension_numbers<[1], [0], [0], [1], [0, 0, 1, 1], [], []>} : vector<2x32xf32>, vector<32x4xf32>, vector<2x4xf32> -> vector<2x4xf32>
    %c0_204 = arith.constant 0 : index
    %c0_205 = arith.constant 0 : index
    %514 = vector.load %arg10[%c0_204, %c0_205] : memref<1x4xf32, #tpu.memory_space<vmem>>, vector<1x4xf32>
    %515 = vector.broadcast %514 : vector<1x4xf32> to vector<2x4xf32>
    %516 = arith.addf %513, %515 : vector<2x4xf32>
    %c0_206 = arith.constant 0 : index
    %c24 = arith.constant 24 : index
    %517 = vector.load %arg11[%c0_206, %c24] : memref<2x32xf32, #tpu.memory_space<vmem>>, vector<2x4xf32>
    tpu.vector_store %arg11[%c0_206, %c24], %516 {strides = array<i32>} : memref<2x32xf32, #tpu.memory_space<vmem>>, vector<2x4xf32>,
    %518 = vector.extract_strided_slice %370 {offsets = [0, 7, 0], sizes = [2, 1, 32], strides = [1, 1, 1]} : vector<2x8x32xf32> to vector<2x1x32xf32>
    %519 = vector.shape_cast %518 : vector<2x1x32xf32> to vector<2x32xf32>
    %cst_207 = arith.constant 5.000000e-01 : f32
    %520 = vector.broadcast %cst_207 : f32 to vector<2x32xf32>
    %521 = arith.mulf %520, %519 : vector<2x32xf32>
    %cst_208 = arith.constant 4.471500e-02 : f32
    %522 = vector.broadcast %cst_208 : f32 to vector<2x32xf32>
    %523 = arith.mulf %522, %519 : vector<2x32xf32>
    %524 = arith.mulf %523, %519 : vector<2x32xf32>
    %525 = arith.mulf %524, %519 : vector<2x32xf32>
    %526 = arith.addf %519, %525 : vector<2x32xf32>
    %cst_209 = arith.constant 0.797884583 : f32
    %527 = vector.broadcast %cst_209 : f32 to vector<2x32xf32>
    %528 = arith.mulf %527, %526 : vector<2x32xf32>
    %529 = math.tanh %528 : vector<2x32xf32>
    %cst_210 = arith.constant 1.000000e+00 : f32
    %530 = vector.broadcast %cst_210 : f32 to vector<2x32xf32>
    %531 = arith.addf %530, %529 : vector<2x32xf32>
    %532 = arith.mulf %521, %531 : vector<2x32xf32>
    %c0_211 = arith.constant 0 : index
    %c0_212 = arith.constant 0 : index
    %533 = vector.load %arg9[%c0_211, %c0_212] : memref<32x4xf32, #tpu.memory_space<vmem>>, vector<32x4xf32>
    %cst_213 = arith.constant dense<0.000000e+00> : vector<2x4xf32>
    %534 = tpu.matmul %532, %533, %cst_213 {dimension_numbers = #tpu.dot_dimension_numbers<[1], [0], [0], [1], [0, 0, 1, 1], [], []>} : vector<2x32xf32>, vector<32x4xf32>, vector<2x4xf32> -> vector<2x4xf32>
    %c0_214 = arith.constant 0 : index
    %c0_215 = arith.constant 0 : index
    %535 = vector.load %arg10[%c0_214, %c0_215] : memref<1x4xf32, #tpu.memory_space<vmem>>, vector<1x4xf32>
    %536 = vector.broadcast %535 : vector<1x4xf32> to vector<2x4xf32>
    %537 = arith.addf %534, %536 : vector<2x4xf32>
    %c0_216 = arith.constant 0 : index
    %c28 = arith.constant 28 : index
    %538 = vector.load %arg11[%c0_216, %c28] : memref<2x32xf32, #tpu.memory_space<vmem>>, vector<2x4xf32>
    tpu.vector_store %arg11[%c0_216, %c28], %537 {strides = array<i32>} : memref<2x32xf32, #tpu.memory_space<vmem>>, vector<2x4xf32>,
    return
  }
  func.func @transform_0(%arg0: i32) -> (i32, i32, i32) {
    %c0_i32 = arith.constant 0 : i32
    %c0_i32_0 = arith.constant 0 : i32
    %c0_i32_1 = arith.constant 0 : i32
    return %arg0, %c0_i32, %c0_i32_0 : i32, i32, i32
  }
  func.func @transform_1(%arg0: i32) -> (i32, i32) {
    %c0_i32 = arith.constant 0 : i32
    %c0_i32_0 = arith.constant 0 : i32
    %c0_i32_1 = arith.constant 0 : i32
    return %c0_i32, %c0_i32_0 : i32, i32
  }
  func.func @transform_2(%arg0: i32) -> (i32, i32) {
    %c0_i32 = arith.constant 0 : i32
    %c0_i32_0 = arith.constant 0 : i32
    %c0_i32_1 = arith.constant 0 : i32
    return %c0_i32, %c0_i32_0 : i32, i32
  }
  func.func @transform_3(%arg0: i32) -> (i32, i32, i32) {
    %c0_i32 = arith.constant 0 : i32
    %c0_i32_0 = arith.constant 0 : i32
    %c0_i32_1 = arith.constant 0 : i32
    %c0_i32_2 = arith.constant 0 : i32
    return %c0_i32, %c0_i32_0, %c0_i32_1 : i32, i32, i32
  }
  func.func @transform_4(%arg0: i32) -> (i32, i32, i32) {
    %c0_i32 = arith.constant 0 : i32
    %c0_i32_0 = arith.constant 0 : i32
    %c0_i32_1 = arith.constant 0 : i32
    %c0_i32_2 = arith.constant 0 : i32
    return %c0_i32, %c0_i32_0, %c0_i32_1 : i32, i32, i32
  }
  func.func @transform_5(%arg0: i32) -> (i32, i32, i32) {
    %c0_i32 = arith.constant 0 : i32
    %c0_i32_0 = arith.constant 0 : i32
    %c0_i32_1 = arith.constant 0 : i32
    %c0_i32_2 = arith.constant 0 : i32
    return %c0_i32, %c0_i32_0, %c0_i32_1 : i32, i32, i32
  }
  func.func @transform_6(%arg0: i32) -> (i32, i32, i32) {
    %c0_i32 = arith.constant 0 : i32
    %c0_i32_0 = arith.constant 0 : i32
    %c0_i32_1 = arith.constant 0 : i32
    %c0_i32_2 = arith.constant 0 : i32
    return %c0_i32, %c0_i32_0, %c0_i32_1 : i32, i32, i32
  }
  func.func @transform_7(%arg0: i32) -> (i32, i32, i32) {
    %c0_i32 = arith.constant 0 : i32
    %c0_i32_0 = arith.constant 0 : i32
    %c0_i32_1 = arith.constant 0 : i32
    %c0_i32_2 = arith.constant 0 : i32
    return %c0_i32, %c0_i32_0, %c0_i32_1 : i32, i32, i32
  }
  func.func @transform_8(%arg0: i32) -> (i32, i32) {
    %c0_i32 = arith.constant 0 : i32
    %c0_i32_0 = arith.constant 0 : i32
    %c0_i32_1 = arith.constant 0 : i32
    return %c0_i32, %c0_i32_0 : i32, i32
  }
  func.func @transform_9(%arg0: i32) -> (i32, i32) {
    %c0_i32 = arith.constant 0 : i32
    %c0_i32_0 = arith.constant 0 : i32
    %c0_i32_1 = arith.constant 0 : i32
    return %c0_i32, %c0_i32_0 : i32, i32
  }
  func.func @transform_10(%arg0: i32) -> (i32, i32) {
    %c0_i32 = arith.constant 0 : i32
    %c0_i32_0 = arith.constant 0 : i32
    return %arg0, %c0_i32 : i32, i32
  }
}

</mosaic_0001>

<llo_original>
// kernel: spacetime_forward.1
$region0: #{spacetime_forward.1}
  #allocation0 [shape = 'u32[]', space=smem, size = 0x4, offset = 0x4, fixed_abs, tag = 'smem constant byte address 0x4 - core index']
  #allocation1 [shape = 'u32[144,128]{1,0:T(1,128)}', space=vmem, size = 0x12000, scoped, tag = 'internal scratch']
  %s0 = inlined_call_operand.vmem [shape: f32[2,8,4], index: 0, kind: input, shape index: {}]
  %s1 = inlined_call_operand.vmem [shape: f32[4,32], index: 1, kind: input, shape index: {}]
  %s2 = inlined_call_operand.vmem [shape: f32[1,32], index: 2, kind: input, shape index: {}]
  %s3 = inlined_call_operand.vmem [shape: f32[16,8,32], index: 3, kind: input, shape index: {}]
  %s4 = inlined_call_operand.vmem [shape: f32[16,8,32], index: 4, kind: input, shape index: {}]
  %s5 = inlined_call_operand.vmem [shape: f32[2,32,32], index: 5, kind: input, shape index: {}]
  %s6 = inlined_call_operand.vmem [shape: f32[2,1,32], index: 6, kind: input, shape index: {}]
  %s7 = inlined_call_operand.vmem [shape: f32[8,8,32], index: 7, kind: input, shape index: {}]
  %s8 = inlined_call_operand.vmem [shape: f32[32,4], index: 8, kind: input, shape index: {}]
  %s9 = inlined_call_operand.vmem [shape: f32[1,4], index: 9, kind: input, shape index: {}]
  %s10 = inlined_call_operand.vmem [shape: f32[2,32], index: 10, kind: output, shape index: {}]
  %s11 = sld [smem:[#allocation0]]
  $region50: #{spacetime_forward.1} parent=0
    _
  %s13 = ssub.s32 1, %s11
  %s14 = scalar_select 0, %s13, %s11
  // Predicated region
  $region2: #{spacetime_forward.1} parent=0 // pred_check
    _
  $region3: #{spacetime_forward.1} parent=0 // pred_check_branch
    %16 = sbr.rel (0) target = $region5
  $region4: #{spacetime_forward.1} parent=0 // pred_region
    _
  $region5: #{spacetime_forward.1} parent=0 // pred_fallthru
    _
  // Predicated region
  $region6: #{spacetime_forward.1} parent=0 // pred_check
    _
  $region7: #{spacetime_forward.1} parent=0 // pred_check_branch
    %18 = sbr.rel (0) target = $region9
  $region8: #{spacetime_forward.1} parent=0 // pred_region
    _
  $region9: #{spacetime_forward.1} parent=0 // pred_fallthru
    _
  // Predicated region
  $region10: #{spacetime_forward.1} parent=0 // pred_check
    _
  $region11: #{spacetime_forward.1} parent=0 // pred_check_branch
    %20 = sbr.rel (0) target = $region13
  $region12: #{spacetime_forward.1} parent=0 // pred_region
    _
  $region13: #{spacetime_forward.1} parent=0 // pred_fallthru
    _
  // Predicated region
  $region14: #{spacetime_forward.1} parent=0 // pred_check
    _
  $region15: #{spacetime_forward.1} parent=0 // pred_check_branch
    %22 = sbr.rel (0) target = $region17
  $region16: #{spacetime_forward.1} parent=0 // pred_region
    _
  $region17: #{spacetime_forward.1} parent=0 // pred_fallthru
    _
  // Predicated region
  $region18: #{spacetime_forward.1} parent=0 // pred_check
    _
  $region19: #{spacetime_forward.1} parent=0 // pred_check_branch
    %24 = sbr.rel (0) target = $region21
  $region20: #{spacetime_forward.1} parent=0 // pred_region
    _
  $region21: #{spacetime_forward.1} parent=0 // pred_fallthru
    _
  // Predicated region
  $region22: #{spacetime_forward.1} parent=0 // pred_check
    _
  $region23: #{spacetime_forward.1} parent=0 // pred_check_branch
    %26 = sbr.rel (0) target = $region25
  $region24: #{spacetime_forward.1} parent=0 // pred_region
    _
  $region25: #{spacetime_forward.1} parent=0 // pred_fallthru
    _
  // Predicated region
  $region26: #{spacetime_forward.1} parent=0 // pred_check
    _
  $region27: #{spacetime_forward.1} parent=0 // pred_check_branch
    %28 = sbr.rel (0) target = $region29
  $region28: #{spacetime_forward.1} parent=0 // pred_region
    _
  $region29: #{spacetime_forward.1} parent=0 // pred_fallthru
    _
  // Predicated region
  $region30: #{spacetime_forward.1} parent=0 // pred_check
    _
  $region31: #{spacetime_forward.1} parent=0 // pred_check_branch
    %30 = sbr.rel (0) target = $region33
  $region32: #{spacetime_forward.1} parent=0 // pred_region
    _
  $region33: #{spacetime_forward.1} parent=0 // pred_fallthru
    _
  // Predicated region
  $region34: #{spacetime_forward.1} parent=0 // pred_check
    _
  $region35: #{spacetime_forward.1} parent=0 // pred_check_branch
    %32 = sbr.rel (0) target = $region37
  $region36: #{spacetime_forward.1} parent=0 // pred_region
    _
  $region37: #{spacetime_forward.1} parent=0 // pred_fallthru
    _
  // Predicated region
  $region38: #{spacetime_forward.1} parent=0 // pred_check
    _
  $region39: #{spacetime_forward.1} parent=0 // pred_check_branch
    %34 = sbr.rel (0) target = $region41
  $region40: #{spacetime_forward.1} parent=0 // pred_region
    _
  $region41: #{spacetime_forward.1} parent=0 // pred_fallthru
    _
  %v35 = vld [vmem:[%s0] sm:$0xff]
  %v36 = vld [vmem:[%s0 + $0x8] sm:$0xff]
  %v37 = vld [vmem:[%s1] sm:$0xf]
  %v38 = vld [vmem:[%s2] sm:$0x1]
  %v40 = vlaneseq
  %v41 = vshrl.u32 %v40, 7
  %v42 = vsub.s32 0, %v41
  %v43 = vrot.slane %v38, %v42
  %vm45 = vcmask 31744
  %v47 = vsel %vm45, %v35, 0
  %v50 = vsel %vm45, %v36, 0
  %vm52 = vcmask 1043456
  %v54 = vsel %vm52, %v37, 0
  %56 = vmatprep.subr.mxu0 0.0
  %57 = vmatpush1.msra.mxu0 0.0
  %58 = vmatprep.subr.mxu0 0.0
  %59 = vmatpush1.msra.mxu0 0.0
  %60 = vmatprep.subr.mxu0 0.0
  %61 = vmatpush1.msra.mxu0 0.0
  %62 = vmatprep.subr.mxu0 0.0
  %63 = vmatpush1.msra.mxu0 0.0
  %64 = vmatprep.subr.mxu0 0.0
  %65 = vmatpush1.msra.mxu0 0.0
  %66 = vmatprep.subr.mxu0 0.0
  %67 = vmatpush1.msra.mxu0 0.0
  %68 = vmatprep.subr.mxu0 0.0
  %69 = vmatpush1.msra.mxu0 0.0
  %70 = vmatprep.subr.mxu0 0.0
  %71 = vmatpush1.msra.mxu0 0.0
  %72 = vmatprep.subr.mxu0 0.0
  %73 = vmatpush1.msra.mxu0 0.0
  %74 = vmatprep.subr.mxu0 0.0
  %75 = vmatpush1.msra.mxu0 0.0
  %76 = vmatprep.subr.mxu0 0.0
  %77 = vmatpush1.msra.mxu0 0.0
  %78 = vmatprep.subr.mxu0 0.0
  %79 = vmatpush1.msra.mxu0 0.0
  %80 = vmatprep.subr.mxu0 0.0
  %81 = vmatpush1.msra.mxu0 0.0
  %82 = vmatprep.subr.mxu0 0.0
  %83 = vmatpush1.msra.mxu0 0.0
  %84 = vmatprep.subr.mxu0 0.0
  %85 = vmatpush1.msra.mxu0 0.0
  %86 = vmatprep.subr.mxu0 0.0
  %87 = vmatpush1.msra.mxu0 %v54
  %88 = vmatprep.subr.mxu0 0.0
  %89 = vmatpush2.msra.mxu0 0.0
  %90 = vmatprep.subr.mxu0 0.0
  %91 = vmatpush2.msra.mxu0 0.0
  %92 = vmatprep.subr.mxu0 0.0
  %93 = vmatpush2.msra.mxu0 0.0
  %94 = vmatprep.subr.mxu0 0.0
  %95 = vmatpush2.msra.mxu0 0.0
  %96 = vmatprep.subr.mxu0 0.0
  %97 = vmatpush2.msra.mxu0 0.0
  %98 = vmatprep.subr.mxu0 0.0
  %99 = vmatpush2.msra.mxu0 0.0
  %100 = vmatprep.subr.mxu0 0.0
  %101 = vmatpush2.msra.mxu0 0.0
  %102 = vmatprep.subr.mxu0 0.0
  %103 = vmatpush2.msra.mxu0 0.0
  %104 = vmatprep.subr.mxu0 0.0
  %105 = vmatpush2.msra.mxu0 0.0
  %106 = vmatprep.subr.mxu0 0.0
  %107 = vmatpush2.msra.mxu0 0.0
  %108 = vmatprep.subr.mxu0 0.0
  %109 = vmatpush2.msra.mxu0 0.0
  %110 = vmatprep.subr.mxu0 0.0
  %111 = vmatpush2.msra.mxu0 0.0
  %112 = vmatprep.subr.mxu0 0.0
  %113 = vmatpush2.msra.mxu0 0.0
  %114 = vmatprep.subr.mxu0 0.0
  %115 = vmatpush2.msra.mxu0 0.0
  %116 = vmatprep.subr.mxu0 0.0
  %117 = vmatpush2.msra.mxu0 0.0
  %118 = vmatprep.subr.mxu0 0.0
  %119 = vmatpush2.msra.mxu0 0.0
  %120 = vmatprep.mubr.f32.mxu0 0.0
  %121 = vmatmul.mubr.f32.gmra.mxu0 %v47
  %v122 = vpop.f32.mrf.mxu0
  %v123 = vadd.f32 %v43, %v122
  %v124 = vpop.f32.mrf.mxu0
  %125 = vmatprep.mubr.f32.mxu0 0.0
  %126 = vmatmul.mubr.f32.gmra.mxu0 %v50
  %v127 = vpop.f32.mrf.mxu0
  %v128 = vadd.f32 %v43, %v127
  %v129 = vpop.f32.mrf.mxu0
  %130 = vdwg.mxu0
  %v131 = vld [vmem:[%s3] sm:$0xff]
  %v132 = vlaneseq
  %v133 = vshrl.u32 %v132, 7
  %v134 = vsub.s32 0, %v133
  %v135 = vrot.slane %v123, %v134
  %v136 = vlaneseq
  %v137 = vshrl.u32 %v136, 7
  %v138 = vsub.s32 0, %v137
  %v139 = vrot.slane %v128, %v138
  %v140 = vmul.f32 %v131, %v135
  %v141 = vmul.f32 %v131, %v139
  %s142 = scalar_lea.vmem %s3, 8
  %v143 = vld [vmem:[%s142] sm:$0xff]
  %v144 = vlaneseq
  %v145 = vshrl.u32 %v144, 7
  %v146 = vsub.s32 1, %v145
  %v147 = vrot.slane %v123, %v146
  %v148 = vlaneseq
  %v149 = vshrl.u32 %v148, 7
  %v150 = vsub.s32 1, %v149
  %v151 = vrot.slane %v128, %v150
  %v152 = vmul.f32 %v143, %v147
  %v153 = vmul.f32 %v143, %v151
  %s154 = scalar_lea.vmem %s3, 16
  %v155 = vld [vmem:[%s154] sm:$0xff]
  %v156 = vlaneseq
  %v157 = vshrl.u32 %v156, 7
  %v158 = vsub.s32 2, %v157
  %v159 = vrot.slane %v123, %v158
  %v160 = vlaneseq
  %v161 = vshrl.u32 %v160, 7
  %v162 = vsub.s32 2, %v161
  %v163 = vrot.slane %v128, %v162
  %v164 = vmul.f32 %v155, %v159
  %v165 = vmul.f32 %v155, %v163
  %v166 = vadd.f32 %v140, %v164
  %v167 = vadd.f32 %v141, %v165
  %s168 = scalar_lea.vmem %s3, 32
  %v169 = vld [vmem:[%s168] sm:$0xff]
  %v170 = vlaneseq
  %v171 = vshrl.u32 %v170, 7
  %v172 = vsub.s32 4, %v171
  %v173 = vrot.slane %v123, %v172
  %v174 = vlaneseq
  %v175 = vshrl.u32 %v174, 7
  %v176 = vsub.s32 4, %v175
  %v177 = vrot.slane %v128, %v176
  %v178 = vmul.f32 %v169, %v173
  %v179 = vmul.f32 %v169, %v177
  %v180 = vadd.f32 %v166, %v178
  %v181 = vadd.f32 %v167, %v179
  %s182 = scalar_lea.vmem %s3, 48
  %v183 = vld [vmem:[%s182] sm:$0xff]
  %v184 = vlaneseq
  %v185 = vshrl.u32 %v184, 7
  %v186 = vsub.s32 6, %v185
  %v187 = vrot.slane %v123, %v186
  %v188 = vlaneseq
  %v189 = vshrl.u32 %v188, 7
  %v190 = vsub.s32 6, %v189
  %v191 = vrot.slane %v128, %v190
  %v192 = vmul.f32 %v183, %v187
  %v193 = vmul.f32 %v183, %v191
  %v194 = vadd.f32 %v180, %v192
  %v195 = vadd.f32 %v181, %v193
  %s196 = scalar_lea.vmem %s3, 24
  %v197 = vld [vmem:[%s196] sm:$0xff]
  %v198 = vlaneseq
  %v199 = vshrl.u32 %v198, 7
  %v200 = vsub.s32 3, %v199
  %v201 = vrot.slane %v123, %v200
  %v202 = vlaneseq
  %v203 = vshrl.u32 %v202, 7
  %v204 = vsub.s32 3, %v203
  %v205 = vrot.slane %v128, %v204
  %v206 = vmul.f32 %v197, %v201
  %v207 = vmul.f32 %v197, %v205
  %v208 = vadd.f32 %v152, %v206
  %v209 = vadd.f32 %v153, %v207
  %s210 = scalar_lea.vmem %s3, 40
  %v211 = vld [vmem:[%s210] sm:$0xff]
  %v212 = vlaneseq
  %v213 = vshrl.u32 %v212, 7
  %v214 = vsub.s32 5, %v213
  %v215 = vrot.slane %v123, %v214
  %v216 = vlaneseq
  %v217 = vshrl.u32 %v216, 7
  %v218 = vsub.s32 5, %v217
  %v219 = vrot.slane %v128, %v218
  %v220 = vmul.f32 %v211, %v215
  %v221 = vmul.f32 %v211, %v219
  %v222 = vadd.f32 %v208, %v220
  %v223 = vadd.f32 %v209, %v221
  %s224 = scalar_lea.vmem %s3, 56
  %v225 = vld [vmem:[%s224] sm:$0xff]
  %v226 = vlaneseq
  %v227 = vshrl.u32 %v226, 7
  %v228 = vsub.s32 7, %v227
  %v229 = vrot.slane %v123, %v228
  %v230 = vlaneseq
  %v231 = vshrl.u32 %v230, 7
  %v232 = vsub.s32 7, %v231
  %v233 = vrot.slane %v128, %v232
  %v234 = vmul.f32 %v225, %v229
  %v235 = vmul.f32 %v225, %v233
  %v236 = vadd.f32 %v222, %v234
  %v237 = vadd.f32 %v223, %v235
  %v238 = vadd.f32 %v194, %v236
  %v239 = vadd.f32 %v195, %v237
  %v240 = vld [vmem:[%s4] sm:$0xff]
  %v241 = vlaneseq
  %v242 = vshrl.u32 %v241, 7
  %v243 = vsub.s32 0, %v242
  %v244 = vrot.slane %v238, %v243
  %v245 = vlaneseq
  %v246 = vshrl.u32 %v245, 7
  %v247 = vsub.s32 0, %v246
  %v248 = vrot.slane %v239, %v247
  %v249 = vmul.f32 %v240, %v244
  %v250 = vmul.f32 %v240, %v248
  %s251 = scalar_lea.vmem %s4, 8
  %v252 = vld [vmem:[%s251] sm:$0xff]
  %v253 = vlaneseq
  %v254 = vshrl.u32 %v253, 7
  %v255 = vsub.s32 1, %v254
  %v256 = vrot.slane %v238, %v255
  %v257 = vlaneseq
  %v258 = vshrl.u32 %v257, 7
  %v259 = vsub.s32 1, %v258
  %v260 = vrot.slane %v239, %v259
  %v261 = vmul.f32 %v252, %v256
  %v262 = vmul.f32 %v252, %v260
  %s263 = scalar_lea.vmem %s4, 16
  %v264 = vld [vmem:[%s263] sm:$0xff]
  %v265 = vlaneseq
  %v266 = vshrl.u32 %v265, 7
  %v267 = vsub.s32 2, %v266
  %v268 = vrot.slane %v238, %v267
  %v269 = vlaneseq
  %v270 = vshrl.u32 %v269, 7
  %v271 = vsub.s32 2, %v270
  %v272 = vrot.slane %v239, %v271
  %v273 = vmul.f32 %v264, %v268
  %v274 = vmul.f32 %v264, %v272
  %v275 = vadd.f32 %v249, %v273
  %v276 = vadd.f32 %v250, %v274
  %s277 = scalar_lea.vmem %s4, 32
  %v278 = vld [vmem:[%s277] sm:$0xff]
  %v279 = vlaneseq
  %v280 = vshrl.u32 %v279, 7
  %v281 = vsub.s32 4, %v280
  %v282 = vrot.slane %v238, %v281
  %v283 = vlaneseq
  %v284 = vshrl.u32 %v283, 7
  %v285 = vsub.s32 4, %v284
  %v286 = vrot.slane %v239, %v285
  %v287 = vmul.f32 %v278, %v282
  %v288 = vmul.f32 %v278, %v286
  %v289 = vadd.f32 %v275, %v287
  %v290 = vadd.f32 %v276, %v288
  %s291 = scalar_lea.vmem %s4, 48
  %v292 = vld [vmem:[%s291] sm:$0xff]
  %v293 = vlaneseq
  %v294 = vshrl.u32 %v293, 7
  %v295 = vsub.s32 6, %v294
  %v296 = vrot.slane %v238, %v295
  %v297 = vlaneseq
  %v298 = vshrl.u32 %v297, 7
  %v299 = vsub.s32 6, %v298
  %v300 = vrot.slane %v239, %v299
  %v301 = vmul.f32 %v292, %v296
  %v302 = vmul.f32 %v292, %v300
  %v303 = vadd.f32 %v289, %v301
  %v304 = vadd.f32 %v290, %v302
  %s305 = scalar_lea.vmem %s4, 24
  %v306 = vld [vmem:[%s305] sm:$0xff]
  %v307 = vlaneseq
  %v308 = vshrl.u32 %v307, 7
  %v309 = vsub.s32 3, %v308
  %v310 = vrot.slane %v238, %v309
  %v311 = vlaneseq
  %v312 = vshrl.u32 %v311, 7
  %v313 = vsub.s32 3, %v312
  %v314 = vrot.slane %v239, %v313
  %v315 = vmul.f32 %v306, %v310
  %v316 = vmul.f32 %v306, %v314
  %v317 = vadd.f32 %v261, %v315
  %v318 = vadd.f32 %v262, %v316
  %s319 = scalar_lea.vmem %s4, 40
  %v320 = vld [vmem:[%s319] sm:$0xff]
  %v321 = vlaneseq
  %v322 = vshrl.u32 %v321, 7
  %v323 = vsub.s32 5, %v322
  %v324 = vrot.slane %v238, %v323
  %v325 = vlaneseq
  %v326 = vshrl.u32 %v325, 7
  %v327 = vsub.s32 5, %v326
  %v328 = vrot.slane %v239, %v327
  %v329 = vmul.f32 %v320, %v324
  %v330 = vmul.f32 %v320, %v328
  %v331 = vadd.f32 %v317, %v329
  %v332 = vadd.f32 %v318, %v330
  %s333 = scalar_lea.vmem %s4, 56
  %v334 = vld [vmem:[%s333] sm:$0xff]
  %v335 = vlaneseq
  %v336 = vshrl.u32 %v335, 7
  %v337 = vsub.s32 7, %v336
  %v338 = vrot.slane %v238, %v337
  %v339 = vlaneseq
  %v340 = vshrl.u32 %v339, 7
  %v341 = vsub.s32 7, %v340
  %v342 = vrot.slane %v239, %v341
  %v343 = vmul.f32 %v334, %v338
  %v344 = vmul.f32 %v334, %v342
  %v345 = vadd.f32 %v331, %v343
  %v346 = vadd.f32 %v332, %v344
  %v347 = vadd.f32 %v303, %v345
  %v348 = vadd.f32 %v304, %v346
  %v349 = vmul.f32 %v347, 0.5
  %v350 = vmul.f32 %v348, 0.5
  %v351 = vmul.f32 %v347, 0.044715
  %v352 = vmul.f32 %v348, 0.044715
  %v353 = vmul.f32 %v351, %v347
  %v354 = vmul.f32 %v352, %v348
  %v355 = vmul.f32 %v353, %v347
  %v356 = vmul.f32 %v354, %v348
  %v357 = vadd.f32 %v347, %v355
  %v358 = vadd.f32 %v348, %v356
  %v359 = vmul.f32 %v357, 0.7978846
  %v360 = vmul.f32 %v358, 0.7978846
  %v361 = vtanh.pop %v359
  %v362 = vtanh.pop %v360
  %v363 = vadd.f32 %v361, 1.0
  %v364 = vadd.f32 %v362, 1.0
  %v365 = vmul.f32 %v349, %v363
  %v366 = vmul.f32 %v350, %v364
  %v367 = vld [vmem:[%s5] sm:$0xff]
  %v368 = vld [vmem:[%s5 + $0x8] sm:$0xff]
  %v369 = vld [vmem:[%s5 + $0x10] sm:$0xff]
  %v370 = vld [vmem:[%s5 + $0x18] sm:$0xff]
  %v371 = vld [vmem:[%s6] sm:$0x1]
  %v373 = vlaneseq
  %v374 = vshrl.u32 %v373, 7
  %v375 = vsub.s32 0, %v374
  %v376 = vrot.slane %v371, %v375
  %vm378 = vcmask 261120
  %v380 = vsel %vm378, %v365, 0
  %v383 = vsel %vm378, %v366, 0
  %385 = vmatprep.subr.mxu0 0.0
  %386 = vmatpush1.msra.mxu0 0.0
  %387 = vmatprep.subr.mxu0 0.0
  %388 = vmatpush1.msra.mxu0 0.0
  %389 = vmatprep.subr.mxu0 0.0
  %390 = vmatpush1.msra.mxu0 0.0
  %391 = vmatprep.subr.mxu0 0.0
  %392 = vmatpush1.msra.mxu0 0.0
  %393 = vmatprep.subr.mxu0 0.0
  %394 = vmatpush1.msra.mxu0 0.0
  %395 = vmatprep.subr.mxu0 0.0
  %396 = vmatpush1.msra.mxu0 0.0
  %397 = vmatprep.subr.mxu0 0.0
  %398 = vmatpush1.msra.mxu0 0.0
  %399 = vmatprep.subr.mxu0 0.0
  %400 = vmatpush1.msra.mxu0 0.0
  %401 = vmatprep.subr.mxu0 0.0
  %402 = vmatpush1.msra.mxu0 0.0
  %403 = vmatprep.subr.mxu0 0.0
  %404 = vmatpush1.msra.mxu0 0.0
  %405 = vmatprep.subr.mxu0 0.0
  %406 = vmatpush1.msra.mxu0 0.0
  %407 = vmatprep.subr.mxu0 0.0
  %408 = vmatpush1.msra.mxu0 0.0
  %409 = vmatprep.subr.mxu0 0.0
  %410 = vmatpush1.msra.mxu0 %v370
  %411 = vmatprep.subr.mxu0 0.0
  %412 = vmatpush1.msra.mxu0 %v369
  %413 = vmatprep.subr.mxu0 0.0
  %414 = vmatpush1.msra.mxu0 %v368
  %415 = vmatprep.subr.mxu0 0.0
  %416 = vmatpush1.msra.mxu0 %v367
  %417 = vmatprep.subr.mxu0 0.0
  %418 = vmatpush2.msra.mxu0 0.0
  %419 = vmatprep.subr.mxu0 0.0
  %420 = vmatpush2.msra.mxu0 0.0
  %421 = vmatprep.subr.mxu0 0.0
  %422 = vmatpush2.msra.mxu0 0.0
  %423 = vmatprep.subr.mxu0 0.0
  %424 = vmatpush2.msra.mxu0 0.0
  %425 = vmatprep.subr.mxu0 0.0
  %426 = vmatpush2.msra.mxu0 0.0
  %427 = vmatprep.subr.mxu0 0.0
  %428 = vmatpush2.msra.mxu0 0.0
  %429 = vmatprep.subr.mxu0 0.0
  %430 = vmatpush2.msra.mxu0 0.0
  %431 = vmatprep.subr.mxu0 0.0
  %432 = vmatpush2.msra.mxu0 0.0
  %433 = vmatprep.subr.mxu0 0.0
  %434 = vmatpush2.msra.mxu0 0.0
  %435 = vmatprep.subr.mxu0 0.0
  %436 = vmatpush2.msra.mxu0 0.0
  %437 = vmatprep.subr.mxu0 0.0
  %438 = vmatpush2.msra.mxu0 0.0
  %439 = vmatprep.subr.mxu0 0.0
  %440 = vmatpush2.msra.mxu0 0.0
  %441 = vmatprep.subr.mxu0 0.0
  %442 = vmatpush2.msra.mxu0 0.0
  %443 = vmatprep.subr.mxu0 0.0
  %444 = vmatpush2.msra.mxu0 0.0
  %445 = vmatprep.subr.mxu0 0.0
  %446 = vmatpush2.msra.mxu0 0.0
  %447 = vmatprep.subr.mxu0 0.0
  %448 = vmatpush2.msra.mxu0 0.0
  %449 = vmatprep.mubr.f32.mxu0 0.0
  %450 = vmatmul.mubr.f32.gmra.mxu0 %v380
  %v451 = vpop.f32.mrf.mxu0
  %v452 = vadd.f32 %v376, %v451
  %v453 = vpop.f32.mrf.mxu0
  %454 = vmatprep.mubr.f32.mxu0 0.0
  %455 = vmatmul.mubr.f32.gmra.mxu0 %v383
  %v456 = vpop.f32.mrf.mxu0
  %v457 = vadd.f32 %v376, %v456
  %v458 = vpop.f32.mrf.mxu0
  %459 = vdwg.mxu0
  %v460 = vadd.f32 %v452, %v347
  %v461 = vadd.f32 %v457, %v348
  %v462 = vadd.f32 %v460, %v123
  %v463 = vadd.f32 %v461, %v128
  %s464 = scalar_lea.vmem %s3, 64
  %v465 = vld [vmem:[%s464] sm:$0xff]
  %v466 = vlaneseq
  %v467 = vshrl.u32 %v466, 7
  %v468 = vsub.s32 0, %v467
  %v469 = vrot.slane %v462, %v468
  %v470 = vlaneseq
  %v471 = vshrl.u32 %v470, 7
  %v472 = vsub.s32 0, %v471
  %v473 = vrot.slane %v463, %v472
  %v474 = vmul.f32 %v465, %v469
  %v475 = vmul.f32 %v465, %v473
  %s476 = scalar_lea.vmem %s3, 72
  %v477 = vld [vmem:[%s476] sm:$0xff]
  %v478 = vlaneseq
  %v479 = vshrl.u32 %v478, 7
  %v480 = vsub.s32 1, %v479
  %v481 = vrot.slane %v462, %v480
  %v482 = vlaneseq
  %v483 = vshrl.u32 %v482, 7
  %v484 = vsub.s32 1, %v483
  %v485 = vrot.slane %v463, %v484
  %v486 = vmul.f32 %v477, %v481
  %v487 = vmul.f32 %v477, %v485
  %s488 = scalar_lea.vmem %s3, 80
  %v489 = vld [vmem:[%s488] sm:$0xff]
  %v490 = vlaneseq
  %v491 = vshrl.u32 %v490, 7
  %v492 = vsub.s32 2, %v491
  %v493 = vrot.slane %v462, %v492
  %v494 = vlaneseq
  %v495 = vshrl.u32 %v494, 7
  %v496 = vsub.s32 2, %v495
  %v497 = vrot.slane %v463, %v496
  %v498 = vmul.f32 %v489, %v493
  %v499 = vmul.f32 %v489, %v497
  %v500 = vadd.f32 %v474, %v498
  %v501 = vadd.f32 %v475, %v499
  %s502 = scalar_lea.vmem %s3, 96
  %v503 = vld [vmem:[%s502] sm:$0xff]
  %v504 = vlaneseq
  %v505 = vshrl.u32 %v504, 7
  %v506 = vsub.s32 4, %v505
  %v507 = vrot.slane %v462, %v506
  %v508 = vlaneseq
  %v509 = vshrl.u32 %v508, 7
  %v510 = vsub.s32 4, %v509
  %v511 = vrot.slane %v463, %v510
  %v512 = vmul.f32 %v503, %v507
  %v513 = vmul.f32 %v503, %v511
  %v514 = vadd.f32 %v500, %v512
  %v515 = vadd.f32 %v501, %v513
  %s516 = scalar_lea.vmem %s3, 112
  %v517 = vld [vmem:[%s516] sm:$0xff]
  %v518 = vlaneseq
  %v519 = vshrl.u32 %v518, 7
  %v520 = vsub.s32 6, %v519
  %v521 = vrot.slane %v462, %v520
  %v522 = vlaneseq
  %v523 = vshrl.u32 %v522, 7
  %v524 = vsub.s32 6, %v523
  %v525 = vrot.slane %v463, %v524
  %v526 = vmul.f32 %v517, %v521
  %v527 = vmul.f32 %v517, %v525
  %v528 = vadd.f32 %v514, %v526
  %v529 = vadd.f32 %v515, %v527
  %s530 = scalar_lea.vmem %s3, 88
  %v531 = vld [vmem:[%s530] sm:$0xff]
  %v532 = vlaneseq
  %v533 = vshrl.u32 %v532, 7
  %v534 = vsub.s32 3, %v533
  %v535 = vrot.slane %v462, %v534
  %v536 = vlaneseq
  %v537 = vshrl.u32 %v536, 7
  %v538 = vsub.s32 3, %v537
  %v539 = vrot.slane %v463, %v538
  %v540 = vmul.f32 %v531, %v535
  %v541 = vmul.f32 %v531, %v539
  %v542 = vadd.f32 %v486, %v540
  %v543 = vadd.f32 %v487, %v541
  %s544 = scalar_lea.vmem %s3, 104
  %v545 = vld [vmem:[%s544] sm:$0xff]
  %v546 = vlaneseq
  %v547 = vshrl.u32 %v546, 7
  %v548 = vsub.s32 5, %v547
  %v549 = vrot.slane %v462, %v548
  %v550 = vlaneseq
  %v551 = vshrl.u32 %v550, 7
  %v552 = vsub.s32 5, %v551
  %v553 = vrot.slane %v463, %v552
  %v554 = vmul.f32 %v545, %v549
  %v555 = vmul.f32 %v545, %v553
  %v556 = vadd.f32 %v542, %v554
  %v557 = vadd.f32 %v543, %v555
  %s558 = scalar_lea.vmem %s3, 120
  %v559 = vld [vmem:[%s558] sm:$0xff]
  %v560 = vlaneseq
  %v561 = vshrl.u32 %v560, 7
  %v562 = vsub.s32 7, %v561
  %v563 = vrot.slane %v462, %v562
  %v564 = vlaneseq
  %v565 = vshrl.u32 %v564, 7
  %v566 = vsub.s32 7, %v565
  %v567 = vrot.slane %v463, %v566
  %v568 = vmul.f32 %v559, %v563
  %v569 = vmul.f32 %v559, %v567
  %v570 = vadd.f32 %v556, %v568
  %v571 = vadd.f32 %v557, %v569
  %v572 = vadd.f32 %v528, %v570
  %v573 = vadd.f32 %v529, %v571
  %s574 = scalar_lea.vmem %s4, 64
  %v575 = vld [vmem:[%s574] sm:$0xff]
  %v576 = vlaneseq
  %v577 = vshrl.u32 %v576, 7
  %v578 = vsub.s32 0, %v577
  %v579 = vrot.slane %v572, %v578
  %v580 = vlaneseq
  %v581 = vshrl.u32 %v580, 7
  %v582 = vsub.s32 0, %v581
  %v583 = vrot.slane %v573, %v582
  %v584 = vmul.f32 %v575, %v579
  %v585 = vmul.f32 %v575, %v583
  %s586 = scalar_lea.vmem %s4, 72
  %v587 = vld [vmem:[%s586] sm:$0xff]
  %v588 = vlaneseq
  %v589 = vshrl.u32 %v588, 7
  %v590 = vsub.s32 1, %v589
  %v591 = vrot.slane %v572, %v590
  %v592 = vlaneseq
  %v593 = vshrl.u32 %v592, 7
  %v594 = vsub.s32 1, %v593
  %v595 = vrot.slane %v573, %v594
  %v596 = vmul.f32 %v587, %v591
  %v597 = vmul.f32 %v587, %v595
  %s598 = scalar_lea.vmem %s4, 80
  %v599 = vld [vmem:[%s598] sm:$0xff]
  %v600 = vlaneseq
  %v601 = vshrl.u32 %v600, 7
  %v602 = vsub.s32 2, %v601
  %v603 = vrot.slane %v572, %v602
  %v604 = vlaneseq
  %v605 = vshrl.u32 %v604, 7
  %v606 = vsub.s32 2, %v605
  %v607 = vrot.slane %v573, %v606
  %v608 = vmul.f32 %v599, %v603
  %v609 = vmul.f32 %v599, %v607
  %v610 = vadd.f32 %v584, %v608
  %v611 = vadd.f32 %v585, %v609
  %s612 = scalar_lea.vmem %s4, 96
  %v613 = vld [vmem:[%s612] sm:$0xff]
  %v614 = vlaneseq
  %v615 = vshrl.u32 %v614, 7
  %v616 = vsub.s32 4, %v615
  %v617 = vrot.slane %v572, %v616
  %v618 = vlaneseq
  %v619 = vshrl.u32 %v618, 7
  %v620 = vsub.s32 4, %v619
  %v621 = vrot.slane %v573, %v620
  %v622 = vmul.f32 %v613, %v617
  %v623 = vmul.f32 %v613, %v621
  %v624 = vadd.f32 %v610, %v622
  %v625 = vadd.f32 %v611, %v623
  %s626 = scalar_lea.vmem %s4, 112
  %v627 = vld [vmem:[%s626] sm:$0xff]
  %v628 = vlaneseq
  %v629 = vshrl.u32 %v628, 7
  %v630 = vsub.s32 6, %v629
  %v631 = vrot.slane %v572, %v630
  %v632 = vlaneseq
  %v633 = vshrl.u32 %v632, 7
  %v634 = vsub.s32 6, %v633
  %v635 = vrot.slane %v573, %v634
  %v636 = vmul.f32 %v627, %v631
  %v637 = vmul.f32 %v627, %v635
  %v638 = vadd.f32 %v624, %v636
  %v639 = vadd.f32 %v625, %v637
  %s640 = scalar_lea.vmem %s4, 88
  %v641 = vld [vmem:[%s640] sm:$0xff]
  %v642 = vlaneseq
  %v643 = vshrl.u32 %v642, 7
  %v644 = vsub.s32 3, %v643
  %v645 = vrot.slane %v572, %v644
  %v646 = vlaneseq
  %v647 = vshrl.u32 %v646, 7
  %v648 = vsub.s32 3, %v647
  %v649 = vrot.slane %v573, %v648
  %v650 = vmul.f32 %v641, %v645
  %v651 = vmul.f32 %v641, %v649
  %v652 = vadd.f32 %v596, %v650
  %v653 = vadd.f32 %v597, %v651
  %s654 = scalar_lea.vmem %s4, 104
  %v655 = vld [vmem:[%s654] sm:$0xff]
  %v656 = vlaneseq
  %v657 = vshrl.u32 %v656, 7
  %v658 = vsub.s32 5, %v657
  %v659 = vrot.slane %v572, %v658
  %v660 = vlaneseq
  %v661 = vshrl.u32 %v660, 7
  %v662 = vsub.s32 5, %v661
  %v663 = vrot.slane %v573, %v662
  %v664 = vmul.f32 %v655, %v659
  %v665 = vmul.f32 %v655, %v663
  %v666 = vadd.f32 %v652, %v664
  %v667 = vadd.f32 %v653, %v665
  %s668 = scalar_lea.vmem %s4, 120
  %v669 = vld [vmem:[%s668] sm:$0xff]
  %v670 = vlaneseq
  %v671 = vshrl.u32 %v670, 7
  %v672 = vsub.s32 7, %v671
  %v673 = vrot.slane %v572, %v672
  %v674 = vlaneseq
  %v675 = vshrl.u32 %v674, 7
  %v676 = vsub.s32 7, %v675
  %v677 = vrot.slane %v573, %v676
  %v678 = vmul.f32 %v669, %v673
  %v679 = vmul.f32 %v669, %v677
  %v680 = vadd.f32 %v666, %v678
  %v681 = vadd.f32 %v667, %v679
  %v682 = vadd.f32 %v638, %v680
  %v683 = vadd.f32 %v639, %v681
  %v684 = vmul.f32 %v682, 0.5
  %v685 = vmul.f32 %v683, 0.5
  %v686 = vmul.f32 %v682, 0.044715
  %v687 = vmul.f32 %v683, 0.044715
  %v688 = vmul.f32 %v686, %v682
  %v689 = vmul.f32 %v687, %v683
  %v690 = vmul.f32 %v688, %v682
  %v691 = vmul.f32 %v689, %v683
  %v692 = vadd.f32 %v682, %v690
  %v693 = vadd.f32 %v683, %v691
  %v694 = vmul.f32 %v692, 0.7978846
  %v695 = vmul.f32 %v693, 0.7978846
  %v696 = vtanh.pop %v694
  %v697 = vtanh.pop %v695
  %v698 = vadd.f32 %v696, 1.0
  %v699 = vadd.f32 %v697, 1.0
  %v700 = vmul.f32 %v684, %v698
  %v701 = vmul.f32 %v685, %v699
  %s702 = scalar_lea.vmem %s5, 32
  %v703 = vld [vmem:[%s702] sm:$0xff]
  %v704 = vld [vmem:[%s702 + $0x8] sm:$0xff]
  %v705 = vld [vmem:[%s702 + $0x10] sm:$0xff]
  %v706 = vld [vmem:[%s702 + $0x18] sm:$0xff]
  %s707 = scalar_lea.vmem %s6, 1
  %v708 = vld [vmem:[%s707] sm:$0x1]
  %v710 = vlaneseq
  %v711 = vshrl.u32 %v710, 7
  %v712 = vsub.s32 0, %v711
  %v713 = vrot.slane %v708, %v712
  %v716 = vsel %vm378, %v700, 0
  %v719 = vsel %vm378, %v701, 0
  %721 = vmatprep.subr.mxu0 0.0
  %722 = vmatpush1.msra.mxu0 0.0
  %723 = vmatprep.subr.mxu0 0.0
  %724 = vmatpush1.msra.mxu0 0.0
  %725 = vmatprep.subr.mxu0 0.0
  %726 = vmatpush1.msra.mxu0 0.0
  %727 = vmatprep.subr.mxu0 0.0
  %728 = vmatpush1.msra.mxu0 0.0
  %729 = vmatprep.subr.mxu0 0.0
  %730 = vmatpush1.msra.mxu0 0.0
  %731 = vmatprep.subr.mxu0 0.0
  %732 = vmatpush1.msra.mxu0 0.0
  %733 = vmatprep.subr.mxu0 0.0
  %734 = vmatpush1.msra.mxu0 0.0
  %735 = vmatprep.subr.mxu0 0.0
  %736 = vmatpush1.msra.mxu0 0.0
  %737 = vmatprep.subr.mxu0 0.0
  %738 = vmatpush1.msra.mxu0 0.0
  %739 = vmatprep.subr.mxu0 0.0
  %740 = vmatpush1.msra.mxu0 0.0
  %741 = vmatprep.subr.mxu0 0.0
  %742 = vmatpush1.msra.mxu0 0.0
  %743 = vmatprep.subr.mxu0 0.0
  %744 = vmatpush1.msra.mxu0 0.0
  %745 = vmatprep.subr.mxu0 0.0
  %746 = vmatpush1.msra.mxu0 %v706
  %747 = vmatprep.subr.mxu0 0.0
  %748 = vmatpush1.msra.mxu0 %v705
  %749 = vmatprep.subr.mxu0 0.0
  %750 = vmatpush1.msra.mxu0 %v704
  %751 = vmatprep.subr.mxu0 0.0
  %752 = vmatpush1.msra.mxu0 %v703
  %753 = vmatprep.subr.mxu0 0.0
  %754 = vmatpush2.msra.mxu0 0.0
  %755 = vmatprep.subr.mxu0 0.0
  %756 = vmatpush2.msra.mxu0 0.0
  %757 = vmatprep.subr.mxu0 0.0
  %758 = vmatpush2.msra.mxu0 0.0
  %759 = vmatprep.subr.mxu0 0.0
  %760 = vmatpush2.msra.mxu0 0.0
  %761 = vmatprep.subr.mxu0 0.0
  %762 = vmatpush2.msra.mxu0 0.0
  %763 = vmatprep.subr.mxu0 0.0
  %764 = vmatpush2.msra.mxu0 0.0
  %765 = vmatprep.subr.mxu0 0.0
  %766 = vmatpush2.msra.mxu0 0.0
  %767 = vmatprep.subr.mxu0 0.0
  %768 = vmatpush2.msra.mxu0 0.0
  %769 = vmatprep.subr.mxu0 0.0
  %770 = vmatpush2.msra.mxu0 0.0
  %771 = vmatprep.subr.mxu0 0.0
  %772 = vmatpush2.msra.mxu0 0.0
  %773 = vmatprep.subr.mxu0 0.0
  %774 = vmatpush2.msra.mxu0 0.0
  %775 = vmatprep.subr.mxu0 0.0
  %776 = vmatpush2.msra.mxu0 0.0
  %777 = vmatprep.subr.mxu0 0.0
  %778 = vmatpush2.msra.mxu0 0.0
  %779 = vmatprep.subr.mxu0 0.0
  %780 = vmatpush2.msra.mxu0 0.0
  %781 = vmatprep.subr.mxu0 0.0
  %782 = vmatpush2.msra.mxu0 0.0
  %783 = vmatprep.subr.mxu0 0.0
  %784 = vmatpush2.msra.mxu0 0.0
  %785 = vmatprep.mubr.f32.mxu0 0.0
  %786 = vmatmul.mubr.f32.gmra.mxu0 %v716
  %v787 = vpop.f32.mrf.mxu0
  %v788 = vadd.f32 %v713, %v787
  %v789 = vpop.f32.mrf.mxu0
  %790 = vmatprep.mubr.f32.mxu0 0.0
  %791 = vmatmul.mubr.f32.gmra.mxu0 %v719
  %v792 = vpop.f32.mrf.mxu0
  %v793 = vadd.f32 %v713, %v792
  %v794 = vpop.f32.mrf.mxu0
  %795 = vdwg.mxu0
  %v796 = vadd.f32 %v788, %v682
  %v797 = vadd.f32 %v793, %v683
  %v798 = vadd.f32 %v796, %v462
  %v799 = vadd.f32 %v797, %v463
  %v800 = vld [vmem:[%s7] sm:$0xff]
  %v801 = vlaneseq
  %v802 = vshrl.u32 %v801, 7
  %v803 = vsub.s32 0, %v802
  %v804 = vrot.slane %v798, %v803
  %v805 = vlaneseq
  %v806 = vshrl.u32 %v805, 7
  %v807 = vsub.s32 0, %v806
  %v808 = vrot.slane %v799, %v807
  %v809 = vmul.f32 %v800, %v804
  %v810 = vmul.f32 %v800, %v808
  %s811 = scalar_lea.vmem %s7, 8
  %v812 = vld [vmem:[%s811] sm:$0xff]
  %v813 = vlaneseq
  %v814 = vshrl.u32 %v813, 7
  %v815 = vsub.s32 1, %v814
  %v816 = vrot.slane %v798, %v815
  %v817 = vlaneseq
  %v818 = vshrl.u32 %v817, 7
  %v819 = vsub.s32 1, %v818
  %v820 = vrot.slane %v799, %v819
  %v821 = vmul.f32 %v812, %v816
  %v822 = vmul.f32 %v812, %v820
  %s823 = scalar_lea.vmem %s7, 16
  %v824 = vld [vmem:[%s823] sm:$0xff]
  %v825 = vlaneseq
  %v826 = vshrl.u32 %v825, 7
  %v827 = vsub.s32 2, %v826
  %v828 = vrot.slane %v798, %v827
  %v829 = vlaneseq
  %v830 = vshrl.u32 %v829, 7
  %v831 = vsub.s32 2, %v830
  %v832 = vrot.slane %v799, %v831
  %v833 = vmul.f32 %v824, %v828
  %v834 = vmul.f32 %v824, %v832
  %v835 = vadd.f32 %v809, %v833
  %v836 = vadd.f32 %v810, %v834
  %s837 = scalar_lea.vmem %s7, 32
  %v838 = vld [vmem:[%s837] sm:$0xff]
  %v839 = vlaneseq
  %v840 = vshrl.u32 %v839, 7
  %v841 = vsub.s32 4, %v840
  %v842 = vrot.slane %v798, %v841
  %v843 = vlaneseq
  %v844 = vshrl.u32 %v843, 7
  %v845 = vsub.s32 4, %v844
  %v846 = vrot.slane %v799, %v845
  %v847 = vmul.f32 %v838, %v842
  %v848 = vmul.f32 %v838, %v846
  %v849 = vadd.f32 %v835, %v847
  %v850 = vadd.f32 %v836, %v848
  %s851 = scalar_lea.vmem %s7, 48
  %v852 = vld [vmem:[%s851] sm:$0xff]
  %v853 = vlaneseq
  %v854 = vshrl.u32 %v853, 7
  %v855 = vsub.s32 6, %v854
  %v856 = vrot.slane %v798, %v855
  %v857 = vlaneseq
  %v858 = vshrl.u32 %v857, 7
  %v859 = vsub.s32 6, %v858
  %v860 = vrot.slane %v799, %v859
  %v861 = vmul.f32 %v852, %v856
  %v862 = vmul.f32 %v852, %v860
  %v863 = vadd.f32 %v849, %v861
  %v864 = vadd.f32 %v850, %v862
  %s865 = scalar_lea.vmem %s7, 24
  %v866 = vld [vmem:[%s865] sm:$0xff]
  %v867 = vlaneseq
  %v868 = vshrl.u32 %v867, 7
  %v869 = vsub.s32 3, %v868
  %v870 = vrot.slane %v798, %v869
  %v871 = vlaneseq
  %v872 = vshrl.u32 %v871, 7
  %v873 = vsub.s32 3, %v872
  %v874 = vrot.slane %v799, %v873
  %v875 = vmul.f32 %v866, %v870
  %v876 = vmul.f32 %v866, %v874
  %v877 = vadd.f32 %v821, %v875
  %v878 = vadd.f32 %v822, %v876
  %s879 = scalar_lea.vmem %s7, 40
  %v880 = vld [vmem:[%s879] sm:$0xff]
  %v881 = vlaneseq
  %v882 = vshrl.u32 %v881, 7
  %v883 = vsub.s32 5, %v882
  %v884 = vrot.slane %v798, %v883
  %v885 = vlaneseq
  %v886 = vshrl.u32 %v885, 7
  %v887 = vsub.s32 5, %v886
  %v888 = vrot.slane %v799, %v887
  %v889 = vmul.f32 %v880, %v884
  %v890 = vmul.f32 %v880, %v888
  %v891 = vadd.f32 %v877, %v889
  %v892 = vadd.f32 %v878, %v890
  %s893 = scalar_lea.vmem %s7, 56
  %v894 = vld [vmem:[%s893] sm:$0xff]
  %v895 = vlaneseq
  %v896 = vshrl.u32 %v895, 7
  %v897 = vsub.s32 7, %v896
  %v898 = vrot.slane %v798, %v897
  %v899 = vlaneseq
  %v900 = vshrl.u32 %v899, 7
  %v901 = vsub.s32 7, %v900
  %v902 = vrot.slane %v799, %v901
  %v903 = vmul.f32 %v894, %v898
  %v904 = vmul.f32 %v894, %v902
  %v905 = vadd.f32 %v891, %v903
  %v906 = vadd.f32 %v892, %v904
  %v907 = vadd.f32 %v863, %v905
  %v908 = vadd.f32 %v864, %v906
  %v909 = vmul.f32 %v907, 0.5
  %v910 = vmul.f32 %v908, 0.5
  %v911 = vmul.f32 %v907, 0.044715
  %v912 = vmul.f32 %v908, 0.044715
  %v913 = vmul.f32 %v911, %v907
  %v914 = vmul.f32 %v912, %v908
  %v915 = vmul.f32 %v913, %v907
  %v916 = vmul.f32 %v914, %v908
  %v917 = vadd.f32 %v907, %v915
  %v918 = vadd.f32 %v908, %v916
  %v919 = vmul.f32 %v917, 0.7978846
  %v920 = vmul.f32 %v918, 0.7978846
  %v921 = vtanh.pop %v919
  %v922 = vtanh.pop %v920
  %v923 = vadd.f32 %v921, 1.0
  %v924 = vadd.f32 %v922, 1.0
  %v925 = vmul.f32 %v909, %v923
  %v926 = vmul.f32 %v910, %v924
  %v927 = vld [vmem:[%s8] sm:$0xff]
  %v928 = vld [vmem:[%s8 + $0x8] sm:$0xff]
  %v929 = vld [vmem:[%s8 + $0x10] sm:$0xff]
  %v930 = vld [vmem:[%s8 + $0x18] sm:$0xff]
  %v931 = vld [vmem:[%s9] sm:$0x1]
  %v933 = vlaneseq
  %v934 = vshrl.u32 %v933, 7
  %v935 = vsub.s32 0, %v934
  %v936 = vrot.slane %v931, %v935
  %v940 = vrot.slane %v926, 7
  %vm941 = vcmask 1041409
  %v942 = vsel %vm941, %v940, %v925
  %v943 = vsel %vm378, %v942, 0
  %945 = vmatprep.subr.mxu0 0.0
  %946 = vmatpush1.msra.mxu0 0.0
  %947 = vmatprep.subr.mxu0 0.0
  %948 = vmatpush1.msra.mxu0 0.0
  %949 = vmatprep.subr.mxu0 0.0
  %950 = vmatpush1.msra.mxu0 0.0
  %951 = vmatprep.subr.mxu0 0.0
  %952 = vmatpush1.msra.mxu0 0.0
  %953 = vmatprep.subr.mxu0 0.0
  %954 = vmatpush1.msra.mxu0 0.0
  %955 = vmatprep.subr.mxu0 0.0
  %956 = vmatpush1.msra.mxu0 0.0
  %957 = vmatprep.subr.mxu0 0.0
  %958 = vmatpush1.msra.mxu0 0.0
  %959 = vmatprep.subr.mxu0 0.0
  %960 = vmatpush1.msra.mxu0 0.0
  %961 = vmatprep.subr.mxu0 0.0
  %962 = vmatpush1.msra.mxu0 0.0
  %963 = vmatprep.subr.mxu0 0.0
  %964 = vmatpush1.msra.mxu0 0.0
  %965 = vmatprep.subr.mxu0 0.0
  %966 = vmatpush1.msra.mxu0 0.0
  %967 = vmatprep.subr.mxu0 0.0
  %968 = vmatpush1.msra.mxu0 0.0
  %969 = vmatprep.subr.mxu0 0.0
  %970 = vmatpush1.msra.mxu0 %v930
  %971 = vmatprep.subr.mxu0 0.0
  %972 = vmatpush1.msra.mxu0 %v929
  %973 = vmatprep.subr.mxu0 0.0
  %974 = vmatpush1.msra.mxu0 %v928
  %975 = vmatprep.subr.mxu0 0.0
  %976 = vmatpush1.msra.mxu0 %v927
  %977 = vmatprep.subr.mxu0 0.0
  %978 = vmatpush2.msra.mxu0 0.0
  %979 = vmatprep.subr.mxu0 0.0
  %980 = vmatpush2.msra.mxu0 0.0
  %981 = vmatprep.subr.mxu0 0.0
  %982 = vmatpush2.msra.mxu0 0.0
  %983 = vmatprep.subr.mxu0 0.0
  %984 = vmatpush2.msra.mxu0 0.0
  %985 = vmatprep.subr.mxu0 0.0
  %986 = vmatpush2.msra.mxu0 0.0
  %987 = vmatprep.subr.mxu0 0.0
  %988 = vmatpush2.msra.mxu0 0.0
  %989 = vmatprep.subr.mxu0 0.0
  %990 = vmatpush2.msra.mxu0 0.0
  %991 = vmatprep.subr.mxu0 0.0
  %992 = vmatpush2.msra.mxu0 0.0
  %993 = vmatprep.subr.mxu0 0.0
  %994 = vmatpush2.msra.mxu0 0.0
  %995 = vmatprep.subr.mxu0 0.0
  %996 = vmatpush2.msra.mxu0 0.0
  %997 = vmatprep.subr.mxu0 0.0
  %998 = vmatpush2.msra.mxu0 0.0
  %999 = vmatprep.subr.mxu0 0.0
  %1000 = vmatpush2.msra.mxu0 0.0
  %1001 = vmatprep.subr.mxu0 0.0
  %1002 = vmatpush2.msra.mxu0 0.0
  %1003 = vmatprep.subr.mxu0 0.0
  %1004 = vmatpush2.msra.mxu0 0.0
  %1005 = vmatprep.subr.mxu0 0.0
  %1006 = vmatpush2.msra.mxu0 0.0
  %1007 = vmatprep.subr.mxu0 0.0
  %1008 = vmatpush2.msra.mxu0 0.0
  %1009 = vmatprep.mubr.f32.mxu0 0.0
  %1010 = vmatmul.mubr.f32.gmra.mxu0 %v943
  %v1011 = vpop.f32.mrf.mxu0
  %v1012 = vadd.f32 %v936, %v1011
  %v1013 = vpop.f32.mrf.mxu0
  %1014 = vdwg.mxu0
  %vm1015 = vcmask 25600
  %1016 = vst.msk [vmem:[%s10] sm:$0x3] %vm1015, %v1012
  %v1017 = vld [vmem:[%s8] sm:$0xff]
  %v1018 = vld [vmem:[%s8 + $0x8] sm:$0xff]
  %v1019 = vld [vmem:[%s8 + $0x10] sm:$0xff]
  %v1020 = vld [vmem:[%s8 + $0x18] sm:$0xff]
  %v1021 = vld [vmem:[%s9] sm:$0x1]
  %v1023 = vlaneseq
  %v1024 = vshrl.u32 %v1023, 7
  %v1025 = vsub.s32 0, %v1024
  %v1026 = vrot.slane %v1021, %v1025
  %v1028 = vrot.slane %v925, 1
  %v1029 = vsel %vm941, %v926, %v1028
  %v1030 = vsel %vm378, %v1029, 0
  %1032 = vmatprep.subr.mxu0 0.0
  %1033 = vmatpush1.msra.mxu0 0.0
  %1034 = vmatprep.subr.mxu0 0.0
  %1035 = vmatpush1.msra.mxu0 0.0
  %1036 = vmatprep.subr.mxu0 0.0
  %1037 = vmatpush1.msra.mxu0 0.0
  %1038 = vmatprep.subr.mxu0 0.0
  %1039 = vmatpush1.msra.mxu0 0.0
  %1040 = vmatprep.subr.mxu0 0.0
  %1041 = vmatpush1.msra.mxu0 0.0
  %1042 = vmatprep.subr.mxu0 0.0
  %1043 = vmatpush1.msra.mxu0 0.0
  %1044 = vmatprep.subr.mxu0 0.0
  %1045 = vmatpush1.msra.mxu0 0.0
  %1046 = vmatprep.subr.mxu0 0.0
  %1047 = vmatpush1.msra.mxu0 0.0
  %1048 = vmatprep.subr.mxu0 0.0
  %1049 = vmatpush1.msra.mxu0 0.0
  %1050 = vmatprep.subr.mxu0 0.0
  %1051 = vmatpush1.msra.mxu0 0.0
  %1052 = vmatprep.subr.mxu0 0.0
  %1053 = vmatpush1.msra.mxu0 0.0
  %1054 = vmatprep.subr.mxu0 0.0
  %1055 = vmatpush1.msra.mxu0 0.0
  %1056 = vmatprep.subr.mxu0 0.0
  %1057 = vmatpush1.msra.mxu0 %v1020
  %1058 = vmatprep.subr.mxu0 0.0
  %1059 = vmatpush1.msra.mxu0 %v1019
  %1060 = vmatprep.subr.mxu0 0.0
  %1061 = vmatpush1.msra.mxu0 %v1018
  %1062 = vmatprep.subr.mxu0 0.0
  %1063 = vmatpush1.msra.mxu0 %v1017
  %1064 = vmatprep.subr.mxu0 0.0
  %1065 = vmatpush2.msra.mxu0 0.0
  %1066 = vmatprep.subr.mxu0 0.0
  %1067 = vmatpush2.msra.mxu0 0.0
  %1068 = vmatprep.subr.mxu0 0.0
  %1069 = vmatpush2.msra.mxu0 0.0
  %1070 = vmatprep.subr.mxu0 0.0
  %1071 = vmatpush2.msra.mxu0 0.0
  %1072 = vmatprep.subr.mxu0 0.0
  %1073 = vmatpush2.msra.mxu0 0.0
  %1074 = vmatprep.subr.mxu0 0.0
  %1075 = vmatpush2.msra.mxu0 0.0
  %1076 = vmatprep.subr.mxu0 0.0
  %1077 = vmatpush2.msra.mxu0 0.0
  %1078 = vmatprep.subr.mxu0 0.0
  %1079 = vmatpush2.msra.mxu0 0.0
  %1080 = vmatprep.subr.mxu0 0.0
  %1081 = vmatpush2.msra.mxu0 0.0
  %1082 = vmatprep.subr.mxu0 0.0
  %1083 = vmatpush2.msra.mxu0 0.0
  %1084 = vmatprep.subr.mxu0 0.0
  %1085 = vmatpush2.msra.mxu0 0.0
  %1086 = vmatprep.subr.mxu0 0.0
  %1087 = vmatpush2.msra.mxu0 0.0
  %1088 = vmatprep.subr.mxu0 0.0
  %1089 = vmatpush2.msra.mxu0 0.0
  %1090 = vmatprep.subr.mxu0 0.0
  %1091 = vmatpush2.msra.mxu0 0.0
  %1092 = vmatprep.subr.mxu0 0.0
  %1093 = vmatpush2.msra.mxu0 0.0
  %1094 = vmatprep.subr.mxu0 0.0
  %1095 = vmatpush2.msra.mxu0 0.0
  %1096 = vmatprep.mubr.f32.mxu0 0.0
  %1097 = vmatmul.mubr.f32.gmra.mxu0 %v1030
  %v1098 = vpop.f32.mrf.mxu0
  %v1099 = vadd.f32 %v1026, %v1098
  %v1100 = vpop.f32.mrf.mxu0
  %1101 = vdwg.mxu0
  %1103 = vrot.lane.b32.xlu0 %v1099, 4
  %v1104 = vpop.permute.xlu0 %1103
  %vm1106 = vcmask 58400
  %1107 = vst.msk [vmem:[%s10] sm:$0x3] %vm1106, %v1104
  %v1108 = vld [vmem:[%s8] sm:$0xff]
  %v1109 = vld [vmem:[%s8 + $0x8] sm:$0xff]
  %v1110 = vld [vmem:[%s8 + $0x10] sm:$0xff]
  %v1111 = vld [vmem:[%s8 + $0x18] sm:$0xff]
  %v1112 = vld [vmem:[%s9] sm:$0x1]
  %v1114 = vlaneseq
  %v1115 = vshrl.u32 %v1114, 7
  %v1116 = vsub.s32 0, %v1115
  %v1117 = vrot.slane %v1112, %v1116
  %v1119 = vrot.slane %v925, 2
  %v1120 = vrot.slane %v926, 1
  %v1121 = vsel %vm941, %v1120, %v1119
  %v1122 = vsel %vm378, %v1121, 0
  %1124 = vmatprep.subr.mxu0 0.0
  %1125 = vmatpush1.msra.mxu0 0.0
  %1126 = vmatprep.subr.mxu0 0.0
  %1127 = vmatpush1.msra.mxu0 0.0
  %1128 = vmatprep.subr.mxu0 0.0
  %1129 = vmatpush1.msra.mxu0 0.0
  %1130 = vmatprep.subr.mxu0 0.0
  %1131 = vmatpush1.msra.mxu0 0.0
  %1132 = vmatprep.subr.mxu0 0.0
  %1133 = vmatpush1.msra.mxu0 0.0
  %1134 = vmatprep.subr.mxu0 0.0
  %1135 = vmatpush1.msra.mxu0 0.0
  %1136 = vmatprep.subr.mxu0 0.0
  %1137 = vmatpush1.msra.mxu0 0.0
  %1138 = vmatprep.subr.mxu0 0.0
  %1139 = vmatpush1.msra.mxu0 0.0
  %1140 = vmatprep.subr.mxu0 0.0
  %1141 = vmatpush1.msra.mxu0 0.0
  %1142 = vmatprep.subr.mxu0 0.0
  %1143 = vmatpush1.msra.mxu0 0.0
  %1144 = vmatprep.subr.mxu0 0.0
  %1145 = vmatpush1.msra.mxu0 0.0
  %1146 = vmatprep.subr.mxu0 0.0
  %1147 = vmatpush1.msra.mxu0 0.0
  %1148 = vmatprep.subr.mxu0 0.0
  %1149 = vmatpush1.msra.mxu0 %v1111
  %1150 = vmatprep.subr.mxu0 0.0
  %1151 = vmatpush1.msra.mxu0 %v1110
  %1152 = vmatprep.subr.mxu0 0.0
  %1153 = vmatpush1.msra.mxu0 %v1109
  %1154 = vmatprep.subr.mxu0 0.0
  %1155 = vmatpush1.msra.mxu0 %v1108
  %1156 = vmatprep.subr.mxu0 0.0
  %1157 = vmatpush2.msra.mxu0 0.0
  %1158 = vmatprep.subr.mxu0 0.0
  %1159 = vmatpush2.msra.mxu0 0.0
  %1160 = vmatprep.subr.mxu0 0.0
  %1161 = vmatpush2.msra.mxu0 0.0
  %1162 = vmatprep.subr.mxu0 0.0
  %1163 = vmatpush2.msra.mxu0 0.0
  %1164 = vmatprep.subr.mxu0 0.0
  %1165 = vmatpush2.msra.mxu0 0.0
  %1166 = vmatprep.subr.mxu0 0.0
  %1167 = vmatpush2.msra.mxu0 0.0
  %1168 = vmatprep.subr.mxu0 0.0
  %1169 = vmatpush2.msra.mxu0 0.0
  %1170 = vmatprep.subr.mxu0 0.0
  %1171 = vmatpush2.msra.mxu0 0.0
  %1172 = vmatprep.subr.mxu0 0.0
  %1173 = vmatpush2.msra.mxu0 0.0
  %1174 = vmatprep.subr.mxu0 0.0
  %1175 = vmatpush2.msra.mxu0 0.0
  %1176 = vmatprep.subr.mxu0 0.0
  %1177 = vmatpush2.msra.mxu0 0.0
  %1178 = vmatprep.subr.mxu0 0.0
  %1179 = vmatpush2.msra.mxu0 0.0
  %1180 = vmatprep.subr.mxu0 0.0
  %1181 = vmatpush2.msra.mxu0 0.0
  %1182 = vmatprep.subr.mxu0 0.0
  %1183 = vmatpush2.msra.mxu0 0.0
  %1184 = vmatprep.subr.mxu0 0.0
  %1185 = vmatpush2.msra.mxu0 0.0
  %1186 = vmatprep.subr.mxu0 0.0
  %1187 = vmatpush2.msra.mxu0 0.0
  %1188 = vmatprep.mubr.f32.mxu0 0.0
  %1189 = vmatmul.mubr.f32.gmra.mxu0 %v1122
  %v1190 = vpop.f32.mrf.mxu0
  %v1191 = vadd.f32 %v1117, %v1190
  %v1192 = vpop.f32.mrf.mxu0
  %1193 = vdwg.mxu0
  %1195 = vrot.lane.b32.xlu0 %v1191, 8
  %v1196 = vpop.permute.xlu0 %1195
  %vm1198 = vcmask 91200
  %1199 = vst.msk [vmem:[%s10] sm:$0x3] %vm1198, %v1196
  %v1200 = vld [vmem:[%s8] sm:$0xff]
  %v1201 = vld [vmem:[%s8 + $0x8] sm:$0xff]
  %v1202 = vld [vmem:[%s8 + $0x10] sm:$0xff]
  %v1203 = vld [vmem:[%s8 + $0x18] sm:$0xff]
  %v1204 = vld [vmem:[%s9] sm:$0x1]
  %v1206 = vlaneseq
  %v1207 = vshrl.u32 %v1206, 7
  %v1208 = vsub.s32 0, %v1207
  %v1209 = vrot.slane %v1204, %v1208
  %v1211 = vrot.slane %v925, 3
  %v1212 = vrot.slane %v926, 2
  %v1213 = vsel %vm941, %v1212, %v1211
  %v1214 = vsel %vm378, %v1213, 0
  %1216 = vmatprep.subr.mxu0 0.0
  %1217 = vmatpush1.msra.mxu0 0.0
  %1218 = vmatprep.subr.mxu0 0.0
  %1219 = vmatpush1.msra.mxu0 0.0
  %1220 = vmatprep.subr.mxu0 0.0
  %1221 = vmatpush1.msra.mxu0 0.0
  %1222 = vmatprep.subr.mxu0 0.0
  %1223 = vmatpush1.msra.mxu0 0.0
  %1224 = vmatprep.subr.mxu0 0.0
  %1225 = vmatpush1.msra.mxu0 0.0
  %1226 = vmatprep.subr.mxu0 0.0
  %1227 = vmatpush1.msra.mxu0 0.0
  %1228 = vmatprep.subr.mxu0 0.0
  %1229 = vmatpush1.msra.mxu0 0.0
  %1230 = vmatprep.subr.mxu0 0.0
  %1231 = vmatpush1.msra.mxu0 0.0
  %1232 = vmatprep.subr.mxu0 0.0
  %1233 = vmatpush1.msra.mxu0 0.0
  %1234 = vmatprep.subr.mxu0 0.0
  %1235 = vmatpush1.msra.mxu0 0.0
  %1236 = vmatprep.subr.mxu0 0.0
  %1237 = vmatpush1.msra.mxu0 0.0
  %1238 = vmatprep.subr.mxu0 0.0
  %1239 = vmatpush1.msra.mxu0 0.0
  %1240 = vmatprep.subr.mxu0 0.0
  %1241 = vmatpush1.msra.mxu0 %v1203
  %1242 = vmatprep.subr.mxu0 0.0
  %1243 = vmatpush1.msra.mxu0 %v1202
  %1244 = vmatprep.subr.mxu0 0.0
  %1245 = vmatpush1.msra.mxu0 %v1201
  %1246 = vmatprep.subr.mxu0 0.0
  %1247 = vmatpush1.msra.mxu0 %v1200
  %1248 = vmatprep.subr.mxu0 0.0
  %1249 = vmatpush2.msra.mxu0 0.0
  %1250 = vmatprep.subr.mxu0 0.0
  %1251 = vmatpush2.msra.mxu0 0.0
  %1252 = vmatprep.subr.mxu0 0.0
  %1253 = vmatpush2.msra.mxu0 0.0
  %1254 = vmatprep.subr.mxu0 0.0
  %1255 = vmatpush2.msra.mxu0 0.0
  %1256 = vmatprep.subr.mxu0 0.0
  %1257 = vmatpush2.msra.mxu0 0.0
  %1258 = vmatprep.subr.mxu0 0.0
  %1259 = vmatpush2.msra.mxu0 0.0
  %1260 = vmatprep.subr.mxu0 0.0
  %1261 = vmatpush2.msra.mxu0 0.0
  %1262 = vmatprep.subr.mxu0 0.0
  %1263 = vmatpush2.msra.mxu0 0.0
  %1264 = vmatprep.subr.mxu0 0.0
  %1265 = vmatpush2.msra.mxu0 0.0
  %1266 = vmatprep.subr.mxu0 0.0
  %1267 = vmatpush2.msra.mxu0 0.0
  %1268 = vmatprep.subr.mxu0 0.0
  %1269 = vmatpush2.msra.mxu0 0.0
  %1270 = vmatprep.subr.mxu0 0.0
  %1271 = vmatpush2.msra.mxu0 0.0
  %1272 = vmatprep.subr.mxu0 0.0
  %1273 = vmatpush2.msra.mxu0 0.0
  %1274 = vmatprep.subr.mxu0 0.0
  %1275 = vmatpush2.msra.mxu0 0.0
  %1276 = vmatprep.subr.mxu0 0.0
  %1277 = vmatpush2.msra.mxu0 0.0
  %1278 = vmatprep.subr.mxu0 0.0
  %1279 = vmatpush2.msra.mxu0 0.0
  %1280 = vmatprep.mubr.f32.mxu0 0.0
  %1281 = vmatmul.mubr.f32.gmra.mxu0 %v1214
  %v1282 = vpop.f32.mrf.mxu0
  %v1283 = vadd.f32 %v1209, %v1282
  %v1284 = vpop.f32.mrf.mxu0
  %1285 = vdwg.mxu0
  %1287 = vrot.lane.b32.xlu0 %v1283, 12
  %v1288 = vpop.permute.xlu0 %1287
  %vm1290 = vcmask 124000
  %1291 = vst.msk [vmem:[%s10] sm:$0x3] %vm1290, %v1288
  %v1292 = vld [vmem:[%s8] sm:$0xff]
  %v1293 = vld [vmem:[%s8 + $0x8] sm:$0xff]
  %v1294 = vld [vmem:[%s8 + $0x10] sm:$0xff]
  %v1295 = vld [vmem:[%s8 + $0x18] sm:$0xff]
  %v1296 = vld [vmem:[%s9] sm:$0x1]
  %v1298 = vlaneseq
  %v1299 = vshrl.u32 %v1298, 7
  %v1300 = vsub.s32 0, %v1299
  %v1301 = vrot.slane %v1296, %v1300
  %v1303 = vrot.slane %v925, 4
  %v1304 = vrot.slane %v926, 3
  %v1305 = vsel %vm941, %v1304, %v1303
  %v1306 = vsel %vm378, %v1305, 0
  %1308 = vmatprep.subr.mxu0 0.0
  %1309 = vmatpush1.msra.mxu0 0.0
  %1310 = vmatprep.subr.mxu0 0.0
  %1311 = vmatpush1.msra.mxu0 0.0
  %1312 = vmatprep.subr.mxu0 0.0
  %1313 = vmatpush1.msra.mxu0 0.0
  %1314 = vmatprep.subr.mxu0 0.0
  %1315 = vmatpush1.msra.mxu0 0.0
  %1316 = vmatprep.subr.mxu0 0.0
  %1317 = vmatpush1.msra.mxu0 0.0
  %1318 = vmatprep.subr.mxu0 0.0
  %1319 = vmatpush1.msra.mxu0 0.0
  %1320 = vmatprep.subr.mxu0 0.0
  %1321 = vmatpush1.msra.mxu0 0.0
  %1322 = vmatprep.subr.mxu0 0.0
  %1323 = vmatpush1.msra.mxu0 0.0
  %1324 = vmatprep.subr.mxu0 0.0
  %1325 = vmatpush1.msra.mxu0 0.0
  %1326 = vmatprep.subr.mxu0 0.0
  %1327 = vmatpush1.msra.mxu0 0.0
  %1328 = vmatprep.subr.mxu0 0.0
  %1329 = vmatpush1.msra.mxu0 0.0
  %1330 = vmatprep.subr.mxu0 0.0
  %1331 = vmatpush1.msra.mxu0 0.0
  %1332 = vmatprep.subr.mxu0 0.0
  %1333 = vmatpush1.msra.mxu0 %v1295
  %1334 = vmatprep.subr.mxu0 0.0
  %1335 = vmatpush1.msra.mxu0 %v1294
  %1336 = vmatprep.subr.mxu0 0.0
  %1337 = vmatpush1.msra.mxu0 %v1293
  %1338 = vmatprep.subr.mxu0 0.0
  %1339 = vmatpush1.msra.mxu0 %v1292
  %1340 = vmatprep.subr.mxu0 0.0
  %1341 = vmatpush2.msra.mxu0 0.0
  %1342 = vmatprep.subr.mxu0 0.0
  %1343 = vmatpush2.msra.mxu0 0.0
  %1344 = vmatprep.subr.mxu0 0.0
  %1345 = vmatpush2.msra.mxu0 0.0
  %1346 = vmatprep.subr.mxu0 0.0
  %1347 = vmatpush2.msra.mxu0 0.0
  %1348 = vmatprep.subr.mxu0 0.0
  %1349 = vmatpush2.msra.mxu0 0.0
  %1350 = vmatprep.subr.mxu0 0.0
  %1351 = vmatpush2.msra.mxu0 0.0
  %1352 = vmatprep.subr.mxu0 0.0
  %1353 = vmatpush2.msra.mxu0 0.0
  %1354 = vmatprep.subr.mxu0 0.0
  %1355 = vmatpush2.msra.mxu0 0.0
  %1356 = vmatprep.subr.mxu0 0.0
  %1357 = vmatpush2.msra.mxu0 0.0
  %1358 = vmatprep.subr.mxu0 0.0
  %1359 = vmatpush2.msra.mxu0 0.0
  %1360 = vmatprep.subr.mxu0 0.0
  %1361 = vmatpush2.msra.mxu0 0.0
  %1362 = vmatprep.subr.mxu0 0.0
  %1363 = vmatpush2.msra.mxu0 0.0
  %1364 = vmatprep.subr.mxu0 0.0
  %1365 = vmatpush2.msra.mxu0 0.0
  %1366 = vmatprep.subr.mxu0 0.0
  %1367 = vmatpush2.msra.mxu0 0.0
  %1368 = vmatprep.subr.mxu0 0.0
  %1369 = vmatpush2.msra.mxu0 0.0
  %1370 = vmatprep.subr.mxu0 0.0
  %1371 = vmatpush2.msra.mxu0 0.0
  %1372 = vmatprep.mubr.f32.mxu0 0.0
  %1373 = vmatmul.mubr.f32.gmra.mxu0 %v1306
  %v1374 = vpop.f32.mrf.mxu0
  %v1375 = vadd.f32 %v1301, %v1374
  %v1376 = vpop.f32.mrf.mxu0
  %1377 = vdwg.mxu0
  %1379 = vrot.lane.b32.xlu0 %v1375, 16
  %v1380 = vpop.permute.xlu0 %1379
  %vm1382 = vcmask 156800
  %1383 = vst.msk [vmem:[%s10] sm:$0x3] %vm1382, %v1380
  %v1384 = vld [vmem:[%s8] sm:$0xff]
  %v1385 = vld [vmem:[%s8 + $0x8] sm:$0xff]
  %v1386 = vld [vmem:[%s8 + $0x10] sm:$0xff]
  %v1387 = vld [vmem:[%s8 + $0x18] sm:$0xff]
  %v1388 = vld [vmem:[%s9] sm:$0x1]
  %v1390 = vlaneseq
  %v1391 = vshrl.u32 %v1390, 7
  %v1392 = vsub.s32 0, %v1391
  %v1393 = vrot.slane %v1388, %v1392
  %v1395 = vrot.slane %v925, 5
  %v1396 = vrot.slane %v926, 4
  %v1397 = vsel %vm941, %v1396, %v1395
  %v1398 = vsel %vm378, %v1397, 0
  %1400 = vmatprep.subr.mxu0 0.0
  %1401 = vmatpush1.msra.mxu0 0.0
  %1402 = vmatprep.subr.mxu0 0.0
  %1403 = vmatpush1.msra.mxu0 0.0
  %1404 = vmatprep.subr.mxu0 0.0
  %1405 = vmatpush1.msra.mxu0 0.0
  %1406 = vmatprep.subr.mxu0 0.0
  %1407 = vmatpush1.msra.mxu0 0.0
  %1408 = vmatprep.subr.mxu0 0.0
  %1409 = vmatpush1.msra.mxu0 0.0
  %1410 = vmatprep.subr.mxu0 0.0
  %1411 = vmatpush1.msra.mxu0 0.0
  %1412 = vmatprep.subr.mxu0 0.0
  %1413 = vmatpush1.msra.mxu0 0.0
  %1414 = vmatprep.subr.mxu0 0.0
  %1415 = vmatpush1.msra.mxu0 0.0
  %1416 = vmatprep.subr.mxu0 0.0
  %1417 = vmatpush1.msra.mxu0 0.0
  %1418 = vmatprep.subr.mxu0 0.0
  %1419 = vmatpush1.msra.mxu0 0.0
  %1420 = vmatprep.subr.mxu0 0.0
  %1421 = vmatpush1.msra.mxu0 0.0
  %1422 = vmatprep.subr.mxu0 0.0
  %1423 = vmatpush1.msra.mxu0 0.0
  %1424 = vmatprep.subr.mxu0 0.0
  %1425 = vmatpush1.msra.mxu0 %v1387
  %1426 = vmatprep.subr.mxu0 0.0
  %1427 = vmatpush1.msra.mxu0 %v1386
  %1428 = vmatprep.subr.mxu0 0.0
  %1429 = vmatpush1.msra.mxu0 %v1385
  %1430 = vmatprep.subr.mxu0 0.0
  %1431 = vmatpush1.msra.mxu0 %v1384
  %1432 = vmatprep.subr.mxu0 0.0
  %1433 = vmatpush2.msra.mxu0 0.0
  %1434 = vmatprep.subr.mxu0 0.0
  %1435 = vmatpush2.msra.mxu0 0.0
  %1436 = vmatprep.subr.mxu0 0.0
  %1437 = vmatpush2.msra.mxu0 0.0
  %1438 = vmatprep.subr.mxu0 0.0
  %1439 = vmatpush2.msra.mxu0 0.0
  %1440 = vmatprep.subr.mxu0 0.0
  %1441 = vmatpush2.msra.mxu0 0.0
  %1442 = vmatprep.subr.mxu0 0.0
  %1443 = vmatpush2.msra.mxu0 0.0
  %1444 = vmatprep.subr.mxu0 0.0
  %1445 = vmatpush2.msra.mxu0 0.0
  %1446 = vmatprep.subr.mxu0 0.0
  %1447 = vmatpush2.msra.mxu0 0.0
  %1448 = vmatprep.subr.mxu0 0.0
  %1449 = vmatpush2.msra.mxu0 0.0
  %1450 = vmatprep.subr.mxu0 0.0
  %1451 = vmatpush2.msra.mxu0 0.0
  %1452 = vmatprep.subr.mxu0 0.0
  %1453 = vmatpush2.msra.mxu0 0.0
  %1454 = vmatprep.subr.mxu0 0.0
  %1455 = vmatpush2.msra.mxu0 0.0
  %1456 = vmatprep.subr.mxu0 0.0
  %1457 = vmatpush2.msra.mxu0 0.0
  %1458 = vmatprep.subr.mxu0 0.0
  %1459 = vmatpush2.msra.mxu0 0.0
  %1460 = vmatprep.subr.mxu0 0.0
  %1461 = vmatpush2.msra.mxu0 0.0
  %1462 = vmatprep.subr.mxu0 0.0
  %1463 = vmatpush2.msra.mxu0 0.0
  %1464 = vmatprep.mubr.f32.mxu0 0.0
  %1465 = vmatmul.mubr.f32.gmra.mxu0 %v1398
  %v1466 = vpop.f32.mrf.mxu0
  %v1467 = vadd.f32 %v1393, %v1466
  %v1468 = vpop.f32.mrf.mxu0
  %1469 = vdwg.mxu0
  %1471 = vrot.lane.b32.xlu0 %v1467, 20
  %v1472 = vpop.permute.xlu0 %1471
  %vm1474 = vcmask 189600
  %1475 = vst.msk [vmem:[%s10] sm:$0x3] %vm1474, %v1472
  %v1476 = vld [vmem:[%s8] sm:$0xff]
  %v1477 = vld [vmem:[%s8 + $0x8] sm:$0xff]
  %v1478 = vld [vmem:[%s8 + $0x10] sm:$0xff]
  %v1479 = vld [vmem:[%s8 + $0x18] sm:$0xff]
  %v1480 = vld [vmem:[%s9] sm:$0x1]
  %v1482 = vlaneseq
  %v1483 = vshrl.u32 %v1482, 7
  %v1484 = vsub.s32 0, %v1483
  %v1485 = vrot.slane %v1480, %v1484
  %v1487 = vrot.slane %v925, 6
  %v1488 = vrot.slane %v926, 5
  %v1489 = vsel %vm941, %v1488, %v1487
  %v1490 = vsel %vm378, %v1489, 0
  %1492 = vmatprep.subr.mxu0 0.0
  %1493 = vmatpush1.msra.mxu0 0.0
  %1494 = vmatprep.subr.mxu0 0.0
  %1495 = vmatpush1.msra.mxu0 0.0
  %1496 = vmatprep.subr.mxu0 0.0
  %1497 = vmatpush1.msra.mxu0 0.0
  %1498 = vmatprep.subr.mxu0 0.0
  %1499 = vmatpush1.msra.mxu0 0.0
  %1500 = vmatprep.subr.mxu0 0.0
  %1501 = vmatpush1.msra.mxu0 0.0
  %1502 = vmatprep.subr.mxu0 0.0
  %1503 = vmatpush1.msra.mxu0 0.0
  %1504 = vmatprep.subr.mxu0 0.0
  %1505 = vmatpush1.msra.mxu0 0.0
  %1506 = vmatprep.subr.mxu0 0.0
  %1507 = vmatpush1.msra.mxu0 0.0
  %1508 = vmatprep.subr.mxu0 0.0
  %1509 = vmatpush1.msra.mxu0 0.0
  %1510 = vmatprep.subr.mxu0 0.0
  %1511 = vmatpush1.msra.mxu0 0.0
  %1512 = vmatprep.subr.mxu0 0.0
  %1513 = vmatpush1.msra.mxu0 0.0
  %1514 = vmatprep.subr.mxu0 0.0
  %1515 = vmatpush1.msra.mxu0 0.0
  %1516 = vmatprep.subr.mxu0 0.0
  %1517 = vmatpush1.msra.mxu0 %v1479
  %1518 = vmatprep.subr.mxu0 0.0
  %1519 = vmatpush1.msra.mxu0 %v1478
  %1520 = vmatprep.subr.mxu0 0.0
  %1521 = vmatpush1.msra.mxu0 %v1477
  %1522 = vmatprep.subr.mxu0 0.0
  %1523 = vmatpush1.msra.mxu0 %v1476
  %1524 = vmatprep.subr.mxu0 0.0
  %1525 = vmatpush2.msra.mxu0 0.0
  %1526 = vmatprep.subr.mxu0 0.0
  %1527 = vmatpush2.msra.mxu0 0.0
  %1528 = vmatprep.subr.mxu0 0.0
  %1529 = vmatpush2.msra.mxu0 0.0
  %1530 = vmatprep.subr.mxu0 0.0
  %1531 = vmatpush2.msra.mxu0 0.0
  %1532 = vmatprep.subr.mxu0 0.0
  %1533 = vmatpush2.msra.mxu0 0.0
  %1534 = vmatprep.subr.mxu0 0.0
  %1535 = vmatpush2.msra.mxu0 0.0
  %1536 = vmatprep.subr.mxu0 0.0
  %1537 = vmatpush2.msra.mxu0 0.0
  %1538 = vmatprep.subr.mxu0 0.0
  %1539 = vmatpush2.msra.mxu0 0.0
  %1540 = vmatprep.subr.mxu0 0.0
  %1541 = vmatpush2.msra.mxu0 0.0
  %1542 = vmatprep.subr.mxu0 0.0
  %1543 = vmatpush2.msra.mxu0 0.0
  %1544 = vmatprep.subr.mxu0 0.0
  %1545 = vmatpush2.msra.mxu0 0.0
  %1546 = vmatprep.subr.mxu0 0.0
  %1547 = vmatpush2.msra.mxu0 0.0
  %1548 = vmatprep.subr.mxu0 0.0
  %1549 = vmatpush2.msra.mxu0 0.0
  %1550 = vmatprep.subr.mxu0 0.0
  %1551 = vmatpush2.msra.mxu0 0.0
  %1552 = vmatprep.subr.mxu0 0.0
  %1553 = vmatpush2.msra.mxu0 0.0
  %1554 = vmatprep.subr.mxu0 0.0
  %1555 = vmatpush2.msra.mxu0 0.0
  %1556 = vmatprep.mubr.f32.mxu0 0.0
  %1557 = vmatmul.mubr.f32.gmra.mxu0 %v1490
  %v1558 = vpop.f32.mrf.mxu0
  %v1559 = vadd.f32 %v1485, %v1558
  %v1560 = vpop.f32.mrf.mxu0
  %1561 = vdwg.mxu0
  %1563 = vrot.lane.b32.xlu0 %v1559, 24
  %v1564 = vpop.permute.xlu0 %1563
  %vm1566 = vcmask 222400
  %1567 = vst.msk [vmem:[%s10] sm:$0x3] %vm1566, %v1564
  %v1568 = vld [vmem:[%s8] sm:$0xff]
  %v1569 = vld [vmem:[%s8 + $0x8] sm:$0xff]
  %v1570 = vld [vmem:[%s8 + $0x10] sm:$0xff]
  %v1571 = vld [vmem:[%s8 + $0x18] sm:$0xff]
  %v1572 = vld [vmem:[%s9] sm:$0x1]
  %v1574 = vlaneseq
  %v1575 = vshrl.u32 %v1574, 7
  %v1576 = vsub.s32 0, %v1575
  %v1577 = vrot.slane %v1572, %v1576
  %v1579 = vrot.slane %v925, 7
  %v1580 = vrot.slane %v926, 6
  %v1581 = vsel %vm941, %v1580, %v1579
  %v1582 = vsel %vm378, %v1581, 0
  %1584 = vmatprep.subr.mxu0 0.0
  %1585 = vmatpush1.msra.mxu0 0.0
  %1586 = vmatprep.subr.mxu0 0.0
  %1587 = vmatpush1.msra.mxu0 0.0
  %1588 = vmatprep.subr.mxu0 0.0
  %1589 = vmatpush1.msra.mxu0 0.0
  %1590 = vmatprep.subr.mxu0 0.0
  %1591 = vmatpush1.msra.mxu0 0.0
  %1592 = vmatprep.subr.mxu0 0.0
  %1593 = vmatpush1.msra.mxu0 0.0
  %1594 = vmatprep.subr.mxu0 0.0
  %1595 = vmatpush1.msra.mxu0 0.0
  %1596 = vmatprep.subr.mxu0 0.0
  %1597 = vmatpush1.msra.mxu0 0.0
  %1598 = vmatprep.subr.mxu0 0.0
  %1599 = vmatpush1.msra.mxu0 0.0
  %1600 = vmatprep.subr.mxu0 0.0
  %1601 = vmatpush1.msra.mxu0 0.0
  %1602 = vmatprep.subr.mxu0 0.0
  %1603 = vmatpush1.msra.mxu0 0.0
  %1604 = vmatprep.subr.mxu0 0.0
  %1605 = vmatpush1.msra.mxu0 0.0
  %1606 = vmatprep.subr.mxu0 0.0
  %1607 = vmatpush1.msra.mxu0 0.0
  %1608 = vmatprep.subr.mxu0 0.0
  %1609 = vmatpush1.msra.mxu0 %v1571
  %1610 = vmatprep.subr.mxu0 0.0
  %1611 = vmatpush1.msra.mxu0 %v1570
  %1612 = vmatprep.subr.mxu0 0.0
  %1613 = vmatpush1.msra.mxu0 %v1569
  %1614 = vmatprep.subr.mxu0 0.0
  %1615 = vmatpush1.msra.mxu0 %v1568
  %1616 = vmatprep.subr.mxu0 0.0
  %1617 = vmatpush2.msra.mxu0 0.0
  %1618 = vmatprep.subr.mxu0 0.0
  %1619 = vmatpush2.msra.mxu0 0.0
  %1620 = vmatprep.subr.mxu0 0.0
  %1621 = vmatpush2.msra.mxu0 0.0
  %1622 = vmatprep.subr.mxu0 0.0
  %1623 = vmatpush2.msra.mxu0 0.0
  %1624 = vmatprep.subr.mxu0 0.0
  %1625 = vmatpush2.msra.mxu0 0.0
  %1626 = vmatprep.subr.mxu0 0.0
  %1627 = vmatpush2.msra.mxu0 0.0
  %1628 = vmatprep.subr.mxu0 0.0
  %1629 = vmatpush2.msra.mxu0 0.0
  %1630 = vmatprep.subr.mxu0 0.0
  %1631 = vmatpush2.msra.mxu0 0.0
  %1632 = vmatprep.subr.mxu0 0.0
  %1633 = vmatpush2.msra.mxu0 0.0
  %1634 = vmatprep.subr.mxu0 0.0
  %1635 = vmatpush2.msra.mxu0 0.0
  %1636 = vmatprep.subr.mxu0 0.0
  %1637 = vmatpush2.msra.mxu0 0.0
  %1638 = vmatprep.subr.mxu0 0.0
  %1639 = vmatpush2.msra.mxu0 0.0
  %1640 = vmatprep.subr.mxu0 0.0
  %1641 = vmatpush2.msra.mxu0 0.0
  %1642 = vmatprep.subr.mxu0 0.0
  %1643 = vmatpush2.msra.mxu0 0.0
  %1644 = vmatprep.subr.mxu0 0.0
  %1645 = vmatpush2.msra.mxu0 0.0
  %1646 = vmatprep.subr.mxu0 0.0
  %1647 = vmatpush2.msra.mxu0 0.0
  %1648 = vmatprep.mubr.f32.mxu0 0.0
  %1649 = vmatmul.mubr.f32.gmra.mxu0 %v1582
  %v1650 = vpop.f32.mrf.mxu0
  %v1651 = vadd.f32 %v1577, %v1650
  %v1652 = vpop.f32.mrf.mxu0
  %1653 = vdwg.mxu0
  %1655 = vrot.lane.b32.xlu0 %v1651, 28
  %v1656 = vpop.permute.xlu0 %1655
  %vm1658 = vcmask 255200
  %1659 = vst.msk [vmem:[%s10] sm:$0x3] %vm1658, %v1656
  // Predicated region
  $region42: #{spacetime_forward.1} parent=0 // pred_check
    _
  $region43: #{spacetime_forward.1} parent=0 // pred_check_branch
    %1661 = sbr.rel (0) target = $region45
  $region44: #{spacetime_forward.1} parent=0 // pred_region
    _
  $region45: #{spacetime_forward.1} parent=0 // pred_fallthru
    _
  // Predicated region
  $region46: #{spacetime_forward.1} parent=0 // pred_check
    _
  $region47: #{spacetime_forward.1} parent=0 // pred_check_branch
    %1663 = sbr.rel (0) target = $region49
  $region48: #{spacetime_forward.1} parent=0 // pred_region
    _
  $region49: #{spacetime_forward.1} parent=0 // pred_fallthru
    _

// kernel: spacetime_forward.1
$region0: #{spacetime_forward.1}
  #allocation0 [shape = 'u32[]', space=smem, size = 0x4, offset = 0x4, fixed_abs, tag = 'smem constant byte address 0x4 - core index']
  #allocation1 [shape = 'u32[144,128]{1,0:T(1,128)}', space=vmem, size = 0x12000, scoped, tag = 'internal scratch']
  %s0 = inlined_call_operand.vmem [shape: f32[2,8,4], index: 0, kind: input, shape index: {}]
  %s1 = inlined_call_operand.vmem [shape: f32[4,32], index: 1, kind: input, shape index: {}]
  %s2 = inlined_call_operand.vmem [shape: f32[1,32], index: 2, kind: input, shape index: {}]
  %s3 = inlined_call_operand.vmem [shape: f32[16,8,32], index: 3, kind: input, shape index: {}]
  %s4 = inlined_call_operand.vmem [shape: f32[16,8,32], index: 4, kind: input, shape index: {}]
  %s5 = inlined_call_operand.vmem [shape: f32[2,32,32], index: 5, kind: input, shape index: {}]
  %s6 = inlined_call_operand.vmem [shape: f32[2,1,32], index: 6, kind: input, shape index: {}]
  %s7 = inlined_call_operand.vmem [shape: f32[8,8,32], index: 7, kind: input, shape index: {}]
  %s8 = inlined_call_operand.vmem [shape: f32[32,4], index: 8, kind: input, shape index: {}]
  %s9 = inlined_call_operand.vmem [shape: f32[1,4], index: 9, kind: input, shape index: {}]
  %s10 = inlined_call_operand.vmem [shape: f32[2,32], index: 10, kind: output, shape index: {}]
  %s11 = sld [smem:[#allocation0]]
  $region50: #{spacetime_forward.1} parent=0
    _
  %s13 = ssub.s32 1, %s11
  %s14 = scalar_select 0, %s13, %s11
  // Predicated region
  $region2: #{spacetime_forward.1} parent=0 // pred_check
    _
  $region3: #{spacetime_forward.1} parent=0 // pred_check_branch
    %16 = sbr.rel (0) target = $region5
  $region4: #{spacetime_forward.1} parent=0 // pred_region
    _
  $region5: #{spacetime_forward.1} parent=0 // pred_fallthru
    _
  // Predicated region
  $region6: #{spacetime_forward.1} parent=0 // pred_check
    _
  $region7: #{spacetime_forward.1} parent=0 // pred_check_branch
    %18 = sbr.rel (0) target = $region9
  $region8: #{spacetime_forward.1} parent=0 // pred_region
    _
  $region9: #{spacetime_forward.1} parent=0 // pred_fallthru
    _
  // Predicated region
  $region10: #{spacetime_forward.1} parent=0 // pred_check
    _
  $region11: #{spacetime_forward.1} parent=0 // pred_check_branch
    %20 = sbr.rel (0) target = $region13
  $region12: #{spacetime_forward.1} parent=0 // pred_region
    _
  $region13: #{spacetime_forward.1} parent=0 // pred_fallthru
    _
  // Predicated region
  $region14: #{spacetime_forward.1} parent=0 // pred_check
    _
  $region15: #{spacetime_forward.1} parent=0 // pred_check_branch
    %22 = sbr.rel (0) target = $region17
  $region16: #{spacetime_forward.1} parent=0 // pred_region
    _
  $region17: #{spacetime_forward.1} parent=0 // pred_fallthru
    _
  // Predicated region
  $region18: #{spacetime_forward.1} parent=0 // pred_check
    _
  $region19: #{spacetime_forward.1} parent=0 // pred_check_branch
    %24 = sbr.rel (0) target = $region21
  $region20: #{spacetime_forward.1} parent=0 // pred_region
    _
  $region21: #{spacetime_forward.1} parent=0 // pred_fallthru
    _
  // Predicated region
  $region22: #{spacetime_forward.1} parent=0 // pred_check
    _
  $region23: #{spacetime_forward.1} parent=0 // pred_check_branch
    %26 = sbr.rel (0) target = $region25
  $region24: #{spacetime_forward.1} parent=0 // pred_region
    _
  $region25: #{spacetime_forward.1} parent=0 // pred_fallthru
    _
  // Predicated region
  $region26: #{spacetime_forward.1} parent=0 // pred_check
    _
  $region27: #{spacetime_forward.1} parent=0 // pred_check_branch
    %28 = sbr.rel (0) target = $region29
  $region28: #{spacetime_forward.1} parent=0 // pred_region
    _
  $region29: #{spacetime_forward.1} parent=0 // pred_fallthru
    _
  // Predicated region
  $region30: #{spacetime_forward.1} parent=0 // pred_check
    _
  $region31: #{spacetime_forward.1} parent=0 // pred_check_branch
    %30 = sbr.rel (0) target = $region33
  $region32: #{spacetime_forward.1} parent=0 // pred_region
    _
  $region33: #{spacetime_forward.1} parent=0 // pred_fallthru
    _
  // Predicated region
  $region34: #{spacetime_forward.1} parent=0 // pred_check
    _
  $region35: #{spacetime_forward.1} parent=0 // pred_check_branch
    %32 = sbr.rel (0) target = $region37
  $region36: #{spacetime_forward.1} parent=0 // pred_region
    _
  $region37: #{spacetime_forward.1} parent=0 // pred_fallthru
    _
  // Predicated region
  $region38: #{spacetime_forward.1} parent=0 // pred_check
    _
  $region39: #{spacetime_forward.1} parent=0 // pred_check_branch
    %34 = sbr.rel (0) target = $region41
  $region40: #{spacetime_forward.1} parent=0 // pred_region
    _
  $region41: #{spacetime_forward.1} parent=0 // pred_fallthru
    _
  %v35 = vld [vmem:[%s0] sm:$0xff]
  %v36 = vld [vmem:[%s0 + $0x8] sm:$0xff]
  %v37 = vld [vmem:[%s1] sm:$0xf]
  %v38 = vld [vmem:[%s2] sm:$0x1]
  %v40 = vlaneseq
  %v41 = vshrl.u32 %v40, 7
  %v42 = vsub.s32 0, %v41
  %v43 = vrot.slane %v38, %v42
  %vm45 = vcmask 31744
  %v47 = vsel %vm45, %v35, 0
  %v50 = vsel %vm45, %v36, 0
  %vm52 = vcmask 1043456
  %v54 = vsel %vm52, %v37, 0
  %56 = vmatprep.subr.mxu0 0.0
  %57 = vmatpush1.msra.mxu0 0.0
  %58 = vmatprep.subr.mxu0 0.0
  %59 = vmatpush1.msra.mxu0 0.0
  %60 = vmatprep.subr.mxu0 0.0
  %61 = vmatpush1.msra.mxu0 0.0
  %62 = vmatprep.subr.mxu0 0.0
  %63 = vmatpush1.msra.mxu0 0.0
  %64 = vmatprep.subr.mxu0 0.0
  %65 = vmatpush1.msra.mxu0 0.0
  %66 = vmatprep.subr.mxu0 0.0
  %67 = vmatpush1.msra.mxu0 0.0
  %68 = vmatprep.subr.mxu0 0.0
  %69 = vmatpush1.msra.mxu0 0.0
  %70 = vmatprep.subr.mxu0 0.0
  %71 = vmatpush1.msra.mxu0 0.0
  %72 = vmatprep.subr.mxu0 0.0
  %73 = vmatpush1.msra.mxu0 0.0
  %74 = vmatprep.subr.mxu0 0.0
  %75 = vmatpush1.msra.mxu0 0.0
  %76 = vmatprep.subr.mxu0 0.0
  %77 = vmatpush1.msra.mxu0 0.0
  %78 = vmatprep.subr.mxu0 0.0
  %79 = vmatpush1.msra.mxu0 0.0
  %80 = vmatprep.subr.mxu0 0.0
  %81 = vmatpush1.msra.mxu0 0.0
  %82 = vmatprep.subr.mxu0 0.0
  %83 = vmatpush1.msra.mxu0 0.0
  %84 = vmatprep.subr.mxu0 0.0
  %85 = vmatpush1.msra.mxu0 0.0
  %86 = vmatprep.subr.mxu0 0.0
  %87 = vmatpush1.msra.mxu0 %v54
  %88 = vmatprep.subr.mxu0 0.0
  %89 = vmatpush2.msra.mxu0 0.0
  %90 = vmatprep.subr.mxu0 0.0
  %91 = vmatpush2.msra.mxu0 0.0
  %92 = vmatprep.subr.mxu0 0.0
  %93 = vmatpush2.msra.mxu0 0.0
  %94 = vmatprep.subr.mxu0 0.0
  %95 = vmatpush2.msra.mxu0 0.0
  %96 = vmatprep.subr.mxu0 0.0
  %97 = vmatpush2.msra.mxu0 0.0
  %98 = vmatprep.subr.mxu0 0.0
  %99 = vmatpush2.msra.mxu0 0.0
  %100 = vmatprep.subr.mxu0 0.0
  %101 = vmatpush2.msra.mxu0 0.0
  %102 = vmatprep.subr.mxu0 0.0
  %103 = vmatpush2.msra.mxu0 0.0
  %104 = vmatprep.subr.mxu0 0.0
  %105 = vmatpush2.msra.mxu0 0.0
  %106 = vmatprep.subr.mxu0 0.0
  %107 = vmatpush2.msra.mxu0 0.0
  %108 = vmatprep.subr.mxu0 0.0
  %109 = vmatpush2.msra.mxu0 0.0
  %110 = vmatprep.subr.mxu0 0.0
  %111 = vmatpush2.msra.mxu0 0.0
  %112 = vmatprep.subr.mxu0 0.0
  %113 = vmatpush2.msra.mxu0 0.0
  %114 = vmatprep.subr.mxu0 0.0
  %115 = vmatpush2.msra.mxu0 0.0
  %116 = vmatprep.subr.mxu0 0.0
  %117 = vmatpush2.msra.mxu0 0.0
  %118 = vmatprep.subr.mxu0 0.0
  %119 = vmatpush2.msra.mxu0 0.0
  %120 = vmatprep.mubr.f32.mxu0 0.0
  %121 = vmatmul.mubr.f32.gmra.mxu0 %v47
  %v122 = vpop.f32.mrf.mxu0
  %v123 = vadd.f32 %v43, %v122
  %v124 = vpop.f32.mrf.mxu0
  %125 = vmatprep.mubr.f32.mxu0 0.0
  %126 = vmatmul.mubr.f32.gmra.mxu0 %v50
  %v127 = vpop.f32.mrf.mxu0
  %v128 = vadd.f32 %v43, %v127
  %v129 = vpop.f32.mrf.mxu0
  %130 = vdwg.mxu0
  %v131 = vld [vmem:[%s3] sm:$0xff]
  %v132 = vlaneseq
  %v133 = vshrl.u32 %v132, 7
  %v134 = vsub.s32 0, %v133
  %v135 = vrot.slane %v123, %v134
  %v136 = vlaneseq
  %v137 = vshrl.u32 %v136, 7
  %v138 = vsub.s32 0, %v137
  %v139 = vrot.slane %v128, %v138
  %v140 = vmul.f32 %v131, %v135
  %v141 = vmul.f32 %v131, %v139
  %s142 = scalar_lea.vmem %s3, 8
  %v143 = vld [vmem:[%s142] sm:$0xff]
  %v144 = vlaneseq
  %v145 = vshrl.u32 %v144, 7
  %v146 = vsub.s32 1, %v145
  %v147 = vrot.slane %v123, %v146
  %v148 = vlaneseq
  %v149 = vshrl.u32 %v148, 7
  %v150 = vsub.s32 1, %v149
  %v151 = vrot.slane %v128, %v150
  %v152 = vmul.f32 %v143, %v147
  %v153 = vmul.f32 %v143, %v151
  %s154 = scalar_lea.vmem %s3, 16
  %v155 = vld [vmem:[%s154] sm:$0xff]
  %v156 = vlaneseq
  %v157 = vshrl.u32 %v156, 7
  %v158 = vsub.s32 2, %v157
  %v159 = vrot.slane %v123, %v158
  %v160 = vlaneseq
  %v161 = vshrl.u32 %v160, 7
  %v162 = vsub.s32 2, %v161
  %v163 = vrot.slane %v128, %v162
  %v164 = vmul.f32 %v155, %v159
  %v165 = vmul.f32 %v155, %v163
  %v166 = vadd.f32 %v140, %v164
  %v167 = vadd.f32 %v141, %v165
  %s168 = scalar_lea.vmem %s3, 32
  %v169 = vld [vmem:[%s168] sm:$0xff]
  %v170 = vlaneseq
  %v171 = vshrl.u32 %v170, 7
  %v172 = vsub.s32 4, %v171
  %v173 = vrot.slane %v123, %v172
  %v174 = vlaneseq
  %v175 = vshrl.u32 %v174, 7
  %v176 = vsub.s32 4, %v175
  %v177 = vrot.slane %v128, %v176
  %v178 = vmul.f32 %v169, %v173
  %v179 = vmul.f32 %v169, %v177
  %v180 = vadd.f32 %v166, %v178
  %v181 = vadd.f32 %v167, %v179
  %s182 = scalar_lea.vmem %s3, 48
  %v183 = vld [vmem:[%s182] sm:$0xff]
  %v184 = vlaneseq
  %v185 = vshrl.u32 %v184, 7
  %v186 = vsub.s32 6, %v185
  %v187 = vrot.slane %v123, %v186
  %v188 = vlaneseq
  %v189 = vshrl.u32 %v188, 7
  %v190 = vsub.s32 6, %v189
  %v191 = vrot.slane %v128, %v190
  %v192 = vmul.f32 %v183, %v187
  %v193 = vmul.f32 %v183, %v191
  %v194 = vadd.f32 %v180, %v192
  %v195 = vadd.f32 %v181, %v193
  %s196 = scalar_lea.vmem %s3, 24
  %v197 = vld [vmem:[%s196] sm:$0xff]
  %v198 = vlaneseq
  %v199 = vshrl.u32 %v198, 7
  %v200 = vsub.s32 3, %v199
  %v201 = vrot.slane %v123, %v200
  %v202 = vlaneseq
  %v203 = vshrl.u32 %v202, 7
  %v204 = vsub.s32 3, %v203
  %v205 = vrot.slane %v128, %v204
  %v206 = vmul.f32 %v197, %v201
  %v207 = vmul.f32 %v197, %v205
  %v208 = vadd.f32 %v152, %v206
  %v209 = vadd.f32 %v153, %v207
  %s210 = scalar_lea.vmem %s3, 40
  %v211 = vld [vmem:[%s210] sm:$0xff]
  %v212 = vlaneseq
  %v213 = vshrl.u32 %v212, 7
  %v214 = vsub.s32 5, %v213
  %v215 = vrot.slane %v123, %v214
  %v216 = vlaneseq
  %v217 = vshrl.u32 %v216, 7
  %v218 = vsub.s32 5, %v217
  %v219 = vrot.slane %v128, %v218
  %v220 = vmul.f32 %v211, %v215
  %v221 = vmul.f32 %v211, %v219
  %v222 = vadd.f32 %v208, %v220
  %v223 = vadd.f32 %v209, %v221
  %s224 = scalar_lea.vmem %s3, 56
  %v225 = vld [vmem:[%s224] sm:$0xff]
  %v226 = vlaneseq
  %v227 = vshrl.u32 %v226, 7
  %v228 = vsub.s32 7, %v227
  %v229 = vrot.slane %v123, %v228
  %v230 = vlaneseq
  %v231 = vshrl.u32 %v230, 7
  %v232 = vsub.s32 7, %v231
  %v233 = vrot.slane %v128, %v232
  %v234 = vmul.f32 %v225, %v229
  %v235 = vmul.f32 %v225, %v233
  %v236 = vadd.f32 %v222, %v234
  %v237 = vadd.f32 %v223, %v235
  %v238 = vadd.f32 %v194, %v236
  %v239 = vadd.f32 %v195, %v237
  %v240 = vld [vmem:[%s4] sm:$0xff]
  %v241 = vlaneseq
  %v242 = vshrl.u32 %v241, 7
  %v243 = vsub.s32 0, %v242
  %v244 = vrot.slane %v238, %v243
  %v245 = vlaneseq
  %v246 = vshrl.u32 %v245, 7
  %v247 = vsub.s32 0, %v246
  %v248 = vrot.slane %v239, %v247
  %v249 = vmul.f32 %v240, %v244
  %v250 = vmul.f32 %v240, %v248
  %s251 = scalar_lea.vmem %s4, 8
  %v252 = vld [vmem:[%s251] sm:$0xff]
  %v253 = vlaneseq
  %v254 = vshrl.u32 %v253, 7
  %v255 = vsub.s32 1, %v254
  %v256 = vrot.slane %v238, %v255
  %v257 = vlaneseq
  %v258 = vshrl.u32 %v257, 7
  %v259 = vsub.s32 1, %v258
  %v260 = vrot.slane %v239, %v259
  %v261 = vmul.f32 %v252, %v256
  %v262 = vmul.f32 %v252, %v260
  %s263 = scalar_lea.vmem %s4, 16
  %v264 = vld [vmem:[%s263] sm:$0xff]
  %v265 = vlaneseq
  %v266 = vshrl.u32 %v265, 7
  %v267 = vsub.s32 2, %v266
  %v268 = vrot.slane %v238, %v267
  %v269 = vlaneseq
  %v270 = vshrl.u32 %v269, 7
  %v271 = vsub.s32 2, %v270
  %v272 = vrot.slane %v239, %v271
  %v273 = vmul.f32 %v264, %v268
  %v274 = vmul.f32 %v264, %v272
  %v275 = vadd.f32 %v249, %v273
  %v276 = vadd.f32 %v250, %v274
  %s277 = scalar_lea.vmem %s4, 32
  %v278 = vld [vmem:[%s277] sm:$0xff]
  %v279 = vlaneseq
  %v280 = vshrl.u32 %v279, 7
  %v281 = vsub.s32 4, %v280
  %v282 = vrot.slane %v238, %v281
  %v283 = vlaneseq
  %v284 = vshrl.u32 %v283, 7
  %v285 = vsub.s32 4, %v284
  %v286 = vrot.slane %v239, %v285
  %v287 = vmul.f32 %v278, %v282
  %v288 = vmul.f32 %v278, %v286
  %v289 = vadd.f32 %v275, %v287
  %v290 = vadd.f32 %v276, %v288
  %s291 = scalar_lea.vmem %s4, 48
  %v292 = vld [vmem:[%s291] sm:$0xff]
  %v293 = vlaneseq
  %v294 = vshrl.u32 %v293, 7
  %v295 = vsub.s32 6, %v294
  %v296 = vrot.slane %v238, %v295
  %v297 = vlaneseq
  %v298 = vshrl.u32 %v297, 7
  %v299 = vsub.s32 6, %v298
  %v300 = vrot.slane %v239, %v299
  %v301 = vmul.f32 %v292, %v296
  %v302 = vmul.f32 %v292, %v300
  %v303 = vadd.f32 %v289, %v301
  %v304 = vadd.f32 %v290, %v302
  %s305 = scalar_lea.vmem %s4, 24
  %v306 = vld [vmem:[%s305] sm:$0xff]
  %v307 = vlaneseq
  %v308 = vshrl.u32 %v307, 7
  %v309 = vsub.s32 3, %v308
  %v310 = vrot.slane %v238, %v309
  %v311 = vlaneseq
  %v312 = vshrl.u32 %v311, 7
  %v313 = vsub.s32 3, %v312
  %v314 = vrot.slane %v239, %v313
  %v315 = vmul.f32 %v306, %v310
  %v316 = vmul.f32 %v306, %v314
  %v317 = vadd.f32 %v261, %v315
  %v318 = vadd.f32 %v262, %v316
  %s319 = scalar_lea.vmem %s4, 40
  %v320 = vld [vmem:[%s319] sm:$0xff]
  %v321 = vlaneseq
  %v322 = vshrl.u32 %v321, 7
  %v323 = vsub.s32 5, %v322
  %v324 = vrot.slane %v238, %v323
  %v325 = vlaneseq
  %v326 = vshrl.u32 %v325, 7
  %v327 = vsub.s32 5, %v326
  %v328 = vrot.slane %v239, %v327
  %v329 = vmul.f32 %v320, %v324
  %v330 = vmul.f32 %v320, %v328
  %v331 = vadd.f32 %v317, %v329
  %v332 = vadd.f32 %v318, %v330
  %s333 = scalar_lea.vmem %s4, 56
  %v334 = vld [vmem:[%s333] sm:$0xff]
  %v335 = vlaneseq
  %v336 = vshrl.u32 %v335, 7
  %v337 = vsub.s32 7, %v336
  %v338 = vrot.slane %v238, %v337
  %v339 = vlaneseq
  %v340 = vshrl.u32 %v339, 7
  %v341 = vsub.s32 7, %v340
  %v342 = vrot.slane %v239, %v341
  %v343 = vmul.f32 %v334, %v338
  %v344 = vmul.f32 %v334, %v342
  %v345 = vadd.f32 %v331, %v343
  %v346 = vadd.f32 %v332, %v344
  %v347 = vadd.f32 %v303, %v345
  %v348 = vadd.f32 %v304, %v346
  %v349 = vmul.f32 %v347, 0.5
  %v350 = vmul.f32 %v348, 0.5
  %v351 = vmul.f32 %v347, 0.044715
  %v352 = vmul.f32 %v348, 0.044715
  %v353 = vmul.f32 %v351, %v347
  %v354 = vmul.f32 %v352, %v348
  %v355 = vmul.f32 %v353, %v347
  %v356 = vmul.f32 %v354, %v348
  %v357 = vadd.f32 %v347, %v355
  %v358 = vadd.f32 %v348, %v356
  %v359 = vmul.f32 %v357, 0.7978846
  %v360 = vmul.f32 %v358, 0.7978846
  %v361 = vtanh.pop %v359
  %v362 = vtanh.pop %v360
  %v363 = vadd.f32 %v361, 1.0
  %v364 = vadd.f32 %v362, 1.0
  %v365 = vmul.f32 %v349, %v363
  %v366 = vmul.f32 %v350, %v364
  %v367 = vld [vmem:[%s5] sm:$0xff]
  %v368 = vld [vmem:[%s5 + $0x8] sm:$0xff]
  %v369 = vld [vmem:[%s5 + $0x10] sm:$0xff]
  %v370 = vld [vmem:[%s5 + $0x18] sm:$0xff]
  %v371 = vld [vmem:[%s6] sm:$0x1]
  %v373 = vlaneseq
  %v374 = vshrl.u32 %v373, 7
  %v375 = vsub.s32 0, %v374
  %v376 = vrot.slane %v371, %v375
  %vm378 = vcmask 261120
  %v380 = vsel %vm378, %v365, 0
  %v383 = vsel %vm378, %v366, 0
  %385 = vmatprep.subr.mxu0 0.0
  %386 = vmatpush1.msra.mxu0 0.0
  %387 = vmatprep.subr.mxu0 0.0
  %388 = vmatpush1.msra.mxu0 0.0
  %389 = vmatprep.subr.mxu0 0.0
  %390 = vmatpush1.msra.mxu0 0.0
  %391 = vmatprep.subr.mxu0 0.0
  %392 = vmatpush1.msra.mxu0 0.0
  %393 = vmatprep.subr.mxu0 0.0
  %394 = vmatpush1.msra.mxu0 0.0
  %395 = vmatprep.subr.mxu0 0.0
  %396 = vmatpush1.msra.mxu0 0.0
  %397 = vmatprep.subr.mxu0 0.0
  %398 = vmatpush1.msra.mxu0 0.0
  %399 = vmatprep.subr.mxu0 0.0
  %400 = vmatpush1.msra.mxu0 0.0
  %401 = vmatprep.subr.mxu0 0.0
  %402 = vmatpush1.msra.mxu0 0.0
  %403 = vmatprep.subr.mxu0 0.0
  %404 = vmatpush1.msra.mxu0 0.0
  %405 = vmatprep.subr.mxu0 0.0
  %406 = vmatpush1.msra.mxu0 0.0
  %407 = vmatprep.subr.mxu0 0.0
  %408 = vmatpush1.msra.mxu0 0.0
  %409 = vmatprep.subr.mxu0 0.0
  %410 = vmatpush1.msra.mxu0 %v370
  %411 = vmatprep.subr.mxu0 0.0
  %412 = vmatpush1.msra.mxu0 %v369
  %413 = vmatprep.subr.mxu0 0.0
  %414 = vmatpush1.msra.mxu0 %v368
  %415 = vmatprep.subr.mxu0 0.0
  %416 = vmatpush1.msra.mxu0 %v367
  %417 = vmatprep.subr.mxu0 0.0
  %418 = vmatpush2.msra.mxu0 0.0
  %419 = vmatprep.subr.mxu0 0.0
  %420 = vmatpush2.msra.mxu0 0.0
  %421 = vmatprep.subr.mxu0 0.0
  %422 = vmatpush2.msra.mxu0 0.0
  %423 = vmatprep.subr.mxu0 0.0
  %424 = vmatpush2.msra.mxu0 0.0
  %425 = vmatprep.subr.mxu0 0.0
  %426 = vmatpush2.msra.mxu0 0.0
  %427 = vmatprep.subr.mxu0 0.0
  %428 = vmatpush2.msra.mxu0 0.0
  %429 = vmatprep.subr.mxu0 0.0
  %430 = vmatpush2.msra.mxu0 0.0
  %431 = vmatprep.subr.mxu0 0.0
  %432 = vmatpush2.msra.mxu0 0.0
  %433 = vmatprep.subr.mxu0 0.0
  %434 = vmatpush2.msra.mxu0 0.0
  %435 = vmatprep.subr.mxu0 0.0
  %436 = vmatpush2.msra.mxu0 0.0
  %437 = vmatprep.subr.mxu0 0.0
  %438 = vmatpush2.msra.mxu0 0.0
  %439 = vmatprep.subr.mxu0 0.0
  %440 = vmatpush2.msra.mxu0 0.0
  %441 = vmatprep.subr.mxu0 0.0
  %442 = vmatpush2.msra.mxu0 0.0
  %443 = vmatprep.subr.mxu0 0.0
  %444 = vmatpush2.msra.mxu0 0.0
  %445 = vmatprep.subr.mxu0 0.0
  %446 = vmatpush2.msra.mxu0 0.0
  %447 = vmatprep.subr.mxu0 0.0
  %448 = vmatpush2.msra.mxu0 0.0
  %449 = vmatprep.mubr.f32.mxu0 0.0
  %450 = vmatmul.mubr.f32.gmra.mxu0 %v380
  %v451 = vpop.f32.mrf.mxu0
  %v452 = vadd.f32 %v376, %v451
  %v453 = vpop.f32.mrf.mxu0
  %454 = vmatprep.mubr.f32.mxu0 0.0
  %455 = vmatmul.mubr.f32.gmra.mxu0 %v383
  %v456 = vpop.f32.mrf.mxu0
  %v457 = vadd.f32 %v376, %v456
  %v458 = vpop.f32.mrf.mxu0
  %459 = vdwg.mxu0
  %v460 = vadd.f32 %v452, %v347
  %v461 = vadd.f32 %v457, %v348
  %v462 = vadd.f32 %v460, %v123
  %v463 = vadd.f32 %v461, %v128
  %s464 = scalar_lea.vmem %s3, 64
  %v465 = vld [vmem:[%s464] sm:$0xff]
  %v466 = vlaneseq
  %v467 = vshrl.u32 %v466, 7
  %v468 = vsub.s32 0, %v467
  %v469 = vrot.slane %v462, %v468
  %v470 = vlaneseq
  %v471 = vshrl.u32 %v470, 7
  %v472 = vsub.s32 0, %v471
  %v473 = vrot.slane %v463, %v472
  %v474 = vmul.f32 %v465, %v469
  %v475 = vmul.f32 %v465, %v473
  %s476 = scalar_lea.vmem %s3, 72
  %v477 = vld [vmem:[%s476] sm:$0xff]
  %v478 = vlaneseq
  %v479 = vshrl.u32 %v478, 7
  %v480 = vsub.s32 1, %v479
  %v481 = vrot.slane %v462, %v480
  %v482 = vlaneseq
  %v483 = vshrl.u32 %v482, 7
  %v484 = vsub.s32 1, %v483
  %v485 = vrot.slane %v463, %v484
  %v486 = vmul.f32 %v477, %v481
  %v487 = vmul.f32 %v477, %v485
  %s488 = scalar_lea.vmem %s3, 80
  %v489 = vld [vmem:[%s488] sm:$0xff]
  %v490 = vlaneseq
  %v491 = vshrl.u32 %v490, 7
  %v492 = vsub.s32 2, %v491
  %v493 = vrot.slane %v462, %v492
  %v494 = vlaneseq
  %v495 = vshrl.u32 %v494, 7
  %v496 = vsub.s32 2, %v495
  %v497 = vrot.slane %v463, %v496
  %v498 = vmul.f32 %v489, %v493
  %v499 = vmul.f32 %v489, %v497
  %v500 = vadd.f32 %v474, %v498
  %v501 = vadd.f32 %v475, %v499
  %s502 = scalar_lea.vmem %s3, 96
  %v503 = vld [vmem:[%s502] sm:$0xff]
  %v504 = vlaneseq
  %v505 = vshrl.u32 %v504, 7
  %v506 = vsub.s32 4, %v505
  %v507 = vrot.slane %v462, %v506
  %v508 = vlaneseq
  %v509 = vshrl.u32 %v508, 7
  %v510 = vsub.s32 4, %v509
  %v511 = vrot.slane %v463, %v510
  %v512 = vmul.f32 %v503, %v507
  %v513 = vmul.f32 %v503, %v511
  %v514 = vadd.f32 %v500, %v512
  %v515 = vadd.f32 %v501, %v513
  %s516 = scalar_lea.vmem %s3, 112
  %v517 = vld [vmem:[%s516] sm:$0xff]
  %v518 = vlaneseq
  %v519 = vshrl.u32 %v518, 7
  %v520 = vsub.s32 6, %v519
  %v521 = vrot.slane %v462, %v520
  %v522 = vlaneseq
  %v523 = vshrl.u32 %v522, 7
  %v524 = vsub.s32 6, %v523
  %v525 = vrot.slane %v463, %v524
  %v526 = vmul.f32 %v517, %v521
  %v527 = vmul.f32 %v517, %v525
  %v528 = vadd.f32 %v514, %v526
  %v529 = vadd.f32 %v515, %v527
  %s530 = scalar_lea.vmem %s3, 88
  %v531 = vld [vmem:[%s530] sm:$0xff]
  %v532 = vlaneseq
  %v533 = vshrl.u32 %v532, 7
  %v534 = vsub.s32 3, %v533
  %v535 = vrot.slane %v462, %v534
  %v536 = vlaneseq
  %v537 = vshrl.u32 %v536, 7
  %v538 = vsub.s32 3, %v537
  %v539 = vrot.slane %v463, %v538
  %v540 = vmul.f32 %v531, %v535
  %v541 = vmul.f32 %v531, %v539
  %v542 = vadd.f32 %v486, %v540
  %v543 = vadd.f32 %v487, %v541
  %s544 = scalar_lea.vmem %s3, 104
  %v545 = vld [vmem:[%s544] sm:$0xff]
  %v546 = vlaneseq
  %v547 = vshrl.u32 %v546, 7
  %v548 = vsub.s32 5, %v547
  %v549 = vrot.slane %v462, %v548
  %v550 = vlaneseq
  %v551 = vshrl.u32 %v550, 7
  %v552 = vsub.s32 5, %v551
  %v553 = vrot.slane %v463, %v552
  %v554 = vmul.f32 %v545, %v549
  %v555 = vmul.f32 %v545, %v553
  %v556 = vadd.f32 %v542, %v554
  %v557 = vadd.f32 %v543, %v555
  %s558 = scalar_lea.vmem %s3, 120
  %v559 = vld [vmem:[%s558] sm:$0xff]
  %v560 = vlaneseq
  %v561 = vshrl.u32 %v560, 7
  %v562 = vsub.s32 7, %v561
  %v563 = vrot.slane %v462, %v562
  %v564 = vlaneseq
  %v565 = vshrl.u32 %v564, 7
  %v566 = vsub.s32 7, %v565
  %v567 = vrot.slane %v463, %v566
  %v568 = vmul.f32 %v559, %v563
  %v569 = vmul.f32 %v559, %v567
  %v570 = vadd.f32 %v556, %v568
  %v571 = vadd.f32 %v557, %v569
  %v572 = vadd.f32 %v528, %v570
  %v573 = vadd.f32 %v529, %v571
  %s574 = scalar_lea.vmem %s4, 64
  %v575 = vld [vmem:[%s574] sm:$0xff]
  %v576 = vlaneseq
  %v577 = vshrl.u32 %v576, 7
  %v578 = vsub.s32 0, %v577
  %v579 = vrot.slane %v572, %v578
  %v580 = vlaneseq
  %v581 = vshrl.u32 %v580, 7
  %v582 = vsub.s32 0, %v581
  %v583 = vrot.slane %v573, %v582
  %v584 = vmul.f32 %v575, %v579
  %v585 = vmul.f32 %v575, %v583
  %s586 = scalar_lea.vmem %s4, 72
  %v587 = vld [vmem:[%s586] sm:$0xff]
  %v588 = vlaneseq
  %v589 = vshrl.u32 %v588, 7
  %v590 = vsub.s32 1, %v589
  %v591 = vrot.slane %v572, %v590
  %v592 = vlaneseq
  %v593 = vshrl.u32 %v592, 7
  %v594 = vsub.s32 1, %v593
  %v595 = vrot.slane %v573, %v594
  %v596 = vmul.f32 %v587, %v591
  %v597 = vmul.f32 %v587, %v595
  %s598 = scalar_lea.vmem %s4, 80
  %v599 = vld [vmem:[%s598] sm:$0xff]
  %v600 = vlaneseq
  %v601 = vshrl.u32 %v600, 7
  %v602 = vsub.s32 2, %v601
  %v603 = vrot.slane %v572, %v602
  %v604 = vlaneseq
  %v605 = vshrl.u32 %v604, 7
  %v606 = vsub.s32 2, %v605
  %v607 = vrot.slane %v573, %v606
  %v608 = vmul.f32 %v599, %v603
  %v609 = vmul.f32 %v599, %v607
  %v610 = vadd.f32 %v584, %v608
  %v611 = vadd.f32 %v585, %v609
  %s612 = scalar_lea.vmem %s4, 96
  %v613 = vld [vmem:[%s612] sm:$0xff]
  %v614 = vlaneseq
  %v615 = vshrl.u32 %v614, 7
  %v616 = vsub.s32 4, %v615
  %v617 = vrot.slane %v572, %v616
  %v618 = vlaneseq
  %v619 = vshrl.u32 %v618, 7
  %v620 = vsub.s32 4, %v619
  %v621 = vrot.slane %v573, %v620
  %v622 = vmul.f32 %v613, %v617
  %v623 = vmul.f32 %v613, %v621
  %v624 = vadd.f32 %v610, %v622
  %v625 = vadd.f32 %v611, %v623
  %s626 = scalar_lea.vmem %s4, 112
  %v627 = vld [vmem:[%s626] sm:$0xff]
  %v628 = vlaneseq
  %v629 = vshrl.u32 %v628, 7
  %v630 = vsub.s32 6, %v629
  %v631 = vrot.slane %v572, %v630
  %v632 = vlaneseq
  %v633 = vshrl.u32 %v632, 7
  %v634 = vsub.s32 6, %v633
  %v635 = vrot.slane %v573, %v634
  %v636 = vmul.f32 %v627, %v631
  %v637 = vmul.f32 %v627, %v635
  %v638 = vadd.f32 %v624, %v636
  %v639 = vadd.f32 %v625, %v637
  %s640 = scalar_lea.vmem %s4, 88
  %v641 = vld [vmem:[%s640] sm:$0xff]
  %v642 = vlaneseq
  %v643 = vshrl.u32 %v642, 7
  %v644 = vsub.s32 3, %v643
  %v645 = vrot.slane %v572, %v644
  %v646 = vlaneseq
  %v647 = vshrl.u32 %v646, 7
  %v648 = vsub.s32 3, %v647
  %v649 = vrot.slane %v573, %v648
  %v650 = vmul.f32 %v641, %v645
  %v651 = vmul.f32 %v641, %v649
  %v652 = vadd.f32 %v596, %v650
  %v653 = vadd.f32 %v597, %v651
  %s654 = scalar_lea.vmem %s4, 104
  %v655 = vld [vmem:[%s654] sm:$0xff]
  %v656 = vlaneseq
  %v657 = vshrl.u32 %v656, 7
  %v658 = vsub.s32 5, %v657
  %v659 = vrot.slane %v572, %v658
  %v660 = vlaneseq
  %v661 = vshrl.u32 %v660, 7
  %v662 = vsub.s32 5, %v661
  %v663 = vrot.slane %v573, %v662
  %v664 = vmul.f32 %v655, %v659
  %v665 = vmul.f32 %v655, %v663
  %v666 = vadd.f32 %v652, %v664
  %v667 = vadd.f32 %v653, %v665
  %s668 = scalar_lea.vmem %s4, 120
  %v669 = vld [vmem:[%s668] sm:$0xff]
  %v670 = vlaneseq
  %v671 = vshrl.u32 %v670, 7
  %v672 = vsub.s32 7, %v671
  %v673 = vrot.slane %v572, %v672
  %v674 = vlaneseq
  %v675 = vshrl.u32 %v674, 7
  %v676 = vsub.s32 7, %v675
  %v677 = vrot.slane %v573, %v676
  %v678 = vmul.f32 %v669, %v673
  %v679 = vmul.f32 %v669, %v677
  %v680 = vadd.f32 %v666, %v678
  %v681 = vadd.f32 %v667, %v679
  %v682 = vadd.f32 %v638, %v680
  %v683 = vadd.f32 %v639, %v681
  %v684 = vmul.f32 %v682, 0.5
  %v685 = vmul.f32 %v683, 0.5
  %v686 = vmul.f32 %v682, 0.044715
  %v687 = vmul.f32 %v683, 0.044715
  %v688 = vmul.f32 %v686, %v682
  %v689 = vmul.f32 %v687, %v683
  %v690 = vmul.f32 %v688, %v682
  %v691 = vmul.f32 %v689, %v683
  %v692 = vadd.f32 %v682, %v690
  %v693 = vadd.f32 %v683, %v691
  %v694 = vmul.f32 %v692, 0.7978846
  %v695 = vmul.f32 %v693, 0.7978846
  %v696 = vtanh.pop %v694
  %v697 = vtanh.pop %v695
  %v698 = vadd.f32 %v696, 1.0
  %v699 = vadd.f32 %v697, 1.0
  %v700 = vmul.f32 %v684, %v698
  %v701 = vmul.f32 %v685, %v699
  %s702 = scalar_lea.vmem %s5, 32
  %v703 = vld [vmem:[%s702] sm:$0xff]
  %v704 = vld [vmem:[%s702 + $0x8] sm:$0xff]
  %v705 = vld [vmem:[%s702 + $0x10] sm:$0xff]
  %v706 = vld [vmem:[%s702 + $0x18] sm:$0xff]
  %s707 = scalar_lea.vmem %s6, 1
  %v708 = vld [vmem:[%s707] sm:$0x1]
  %v710 = vlaneseq
  %v711 = vshrl.u32 %v710, 7
  %v712 = vsub.s32 0, %v711
  %v713 = vrot.slane %v708, %v712
  %v716 = vsel %vm378, %v700, 0
  %v719 = vsel %vm378, %v701, 0
  %721 = vmatprep.subr.mxu0 0.0
  %722 = vmatpush1.msra.mxu0 0.0
  %723 = vmatprep.subr.mxu0 0.0
  %724 = vmatpush1.msra.mxu0 0.0
  %725 = vmatprep.subr.mxu0 0.0
  %726 = vmatpush1.msra.mxu0 0.0
  %727 = vmatprep.subr.mxu0 0.0
  %728 = vmatpush1.msra.mxu0 0.0
  %729 = vmatprep.subr.mxu0 0.0
  %730 = vmatpush1.msra.mxu0 0.0
  %731 = vmatprep.subr.mxu0 0.0
  %732 = vmatpush1.msra.mxu0 0.0
  %733 = vmatprep.subr.mxu0 0.0
  %734 = vmatpush1.msra.mxu0 0.0
  %735 = vmatprep.subr.mxu0 0.0
  %736 = vmatpush1.msra.mxu0 0.0
  %737 = vmatprep.subr.mxu0 0.0
  %738 = vmatpush1.msra.mxu0 0.0
  %739 = vmatprep.subr.mxu0 0.0
  %740 = vmatpush1.msra.mxu0 0.0
  %741 = vmatprep.subr.mxu0 0.0
  %742 = vmatpush1.msra.mxu0 0.0
  %743 = vmatprep.subr.mxu0 0.0
  %744 = vmatpush1.msra.mxu0 0.0
  %745 = vmatprep.subr.mxu0 0.0
  %746 = vmatpush1.msra.mxu0 %v706
  %747 = vmatprep.subr.mxu0 0.0
  %748 = vmatpush1.msra.mxu0 %v705
  %749 = vmatprep.subr.mxu0 0.0
  %750 = vmatpush1.msra.mxu0 %v704
  %751 = vmatprep.subr.mxu0 0.0
  %752 = vmatpush1.msra.mxu0 %v703
  %753 = vmatprep.subr.mxu0 0.0
  %754 = vmatpush2.msra.mxu0 0.0
  %755 = vmatprep.subr.mxu0 0.0
  %756 = vmatpush2.msra.mxu0 0.0
  %757 = vmatprep.subr.mxu0 0.0
  %758 = vmatpush2.msra.mxu0 0.0
  %759 = vmatprep.subr.mxu0 0.0
  %760 = vmatpush2.msra.mxu0 0.0
  %761 = vmatprep.subr.mxu0 0.0
  %762 = vmatpush2.msra.mxu0 0.0
  %763 = vmatprep.subr.mxu0 0.0
  %764 = vmatpush2.msra.mxu0 0.0
  %765 = vmatprep.subr.mxu0 0.0
  %766 = vmatpush2.msra.mxu0 0.0
  %767 = vmatprep.subr.mxu0 0.0
  %768 = vmatpush2.msra.mxu0 0.0
  %769 = vmatprep.subr.mxu0 0.0
  %770 = vmatpush2.msra.mxu0 0.0
  %771 = vmatprep.subr.mxu0 0.0
  %772 = vmatpush2.msra.mxu0 0.0
  %773 = vmatprep.subr.mxu0 0.0
  %774 = vmatpush2.msra.mxu0 0.0
  %775 = vmatprep.subr.mxu0 0.0
  %776 = vmatpush2.msra.mxu0 0.0
  %777 = vmatprep.subr.mxu0 0.0
  %778 = vmatpush2.msra.mxu0 0.0
  %779 = vmatprep.subr.mxu0 0.0
  %780 = vmatpush2.msra.mxu0 0.0
  %781 = vmatprep.subr.mxu0 0.0
  %782 = vmatpush2.msra.mxu0 0.0
  %783 = vmatprep.subr.mxu0 0.0
  %784 = vmatpush2.msra.mxu0 0.0
  %785 = vmatprep.mubr.f32.mxu0 0.0
  %786 = vmatmul.mubr.f32.gmra.mxu0 %v716
  %v787 = vpop.f32.mrf.mxu0
  %v788 = vadd.f32 %v713, %v787
  %v789 = vpop.f32.mrf.mxu0
  %790 = vmatprep.mubr.f32.mxu0 0.0
  %791 = vmatmul.mubr.f32.gmra.mxu0 %v719
  %v792 = vpop.f32.mrf.mxu0
  %v793 = vadd.f32 %v713, %v792
  %v794 = vpop.f32.mrf.mxu0
  %795 = vdwg.mxu0
  %v796 = vadd.f32 %v788, %v682
  %v797 = vadd.f32 %v793, %v683
  %v798 = vadd.f32 %v796, %v462
  %v799 = vadd.f32 %v797, %v463
  %v800 = vld [vmem:[%s7] sm:$0xff]
  %v801 = vlaneseq
  %v802 = vshrl.u32 %v801, 7
  %v803 = vsub.s32 0, %v802
  %v804 = vrot.slane %v798, %v803
  %v805 = vlaneseq
  %v806 = vshrl.u32 %v805, 7
  %v807 = vsub.s32 0, %v806
  %v808 = vrot.slane %v799, %v807
  %v809 = vmul.f32 %v800, %v804
  %v810 = vmul.f32 %v800, %v808
  %s811 = scalar_lea.vmem %s7, 8
  %v812 = vld [vmem:[%s811] sm:$0xff]
  %v813 = vlaneseq
  %v814 = vshrl.u32 %v813, 7
  %v815 = vsub.s32 1, %v814
  %v816 = vrot.slane %v798, %v815
  %v817 = vlaneseq
  %v818 = vshrl.u32 %v817, 7
  %v819 = vsub.s32 1, %v818
  %v820 = vrot.slane %v799, %v819
  %v821 = vmul.f32 %v812, %v816
  %v822 = vmul.f32 %v812, %v820
  %s823 = scalar_lea.vmem %s7, 16
  %v824 = vld [vmem:[%s823] sm:$0xff]
  %v825 = vlaneseq
  %v826 = vshrl.u32 %v825, 7
  %v827 = vsub.s32 2, %v826
  %v828 = vrot.slane %v798, %v827
  %v829 = vlaneseq
  %v830 = vshrl.u32 %v829, 7
  %v831 = vsub.s32 2, %v830
  %v832 = vrot.slane %v799, %v831
  %v833 = vmul.f32 %v824, %v828
  %v834 = vmul.f32 %v824, %v832
  %v835 = vadd.f32 %v809, %v833
  %v836 = vadd.f32 %v810, %v834
  %s837 = scalar_lea.vmem %s7, 32
  %v838 = vld [vmem:[%s837] sm:$0xff]
  %v839 = vlaneseq
  %v840 = vshrl.u32 %v839, 7
  %v841 = vsub.s32 4, %v840
  %v842 = vrot.slane %v798, %v841
  %v843 = vlaneseq
  %v844 = vshrl.u32 %v843, 7
  %v845 = vsub.s32 4, %v844
  %v846 = vrot.slane %v799, %v845
  %v847 = vmul.f32 %v838, %v842
  %v848 = vmul.f32 %v838, %v846
  %v849 = vadd.f32 %v835, %v847
  %v850 = vadd.f32 %v836, %v848
  %s851 = scalar_lea.vmem %s7, 48
  %v852 = vld [vmem:[%s851] sm:$0xff]
  %v853 = vlaneseq
  %v854 = vshrl.u32 %v853, 7
  %v855 = vsub.s32 6, %v854
  %v856 = vrot.slane %v798, %v855
  %v857 = vlaneseq
  %v858 = vshrl.u32 %v857, 7
  %v859 = vsub.s32 6, %v858
  %v860 = vrot.slane %v799, %v859
  %v861 = vmul.f32 %v852, %v856
  %v862 = vmul.f32 %v852, %v860
  %v863 = vadd.f32 %v849, %v861
  %v864 = vadd.f32 %v850, %v862
  %s865 = scalar_lea.vmem %s7, 24
  %v866 = vld [vmem:[%s865] sm:$0xff]
  %v867 = vlaneseq
  %v868 = vshrl.u32 %v867, 7
  %v869 = vsub.s32 3, %v868
  %v870 = vrot.slane %v798, %v869
  %v871 = vlaneseq
  %v872 = vshrl.u32 %v871, 7
  %v873 = vsub.s32 3, %v872
  %v874 = vrot.slane %v799, %v873
  %v875 = vmul.f32 %v866, %v870
  %v876 = vmul.f32 %v866, %v874
  %v877 = vadd.f32 %v821, %v875
  %v878 = vadd.f32 %v822, %v876
  %s879 = scalar_lea.vmem %s7, 40
  %v880 = vld [vmem:[%s879] sm:$0xff]
  %v881 = vlaneseq
  %v882 = vshrl.u32 %v881, 7
  %v883 = vsub.s32 5, %v882
  %v884 = vrot.slane %v798, %v883
  %v885 = vlaneseq
  %v886 = vshrl.u32 %v885, 7
  %v887 = vsub.s32 5, %v886
  %v888 = vrot.slane %v799, %v887
  %v889 = vmul.f32 %v880, %v884
  %v890 = vmul.f32 %v880, %v888
  %v891 = vadd.f32 %v877, %v889
  %v892 = vadd.f32 %v878, %v890
  %s893 = scalar_lea.vmem %s7, 56
  %v894 = vld [vmem:[%s893] sm:$0xff]
  %v895 = vlaneseq
  %v896 = vshrl.u32 %v895, 7
  %v897 = vsub.s32 7, %v896
  %v898 = vrot.slane %v798, %v897
  %v899 = vlaneseq
  %v900 = vshrl.u32 %v899, 7
  %v901 = vsub.s32 7, %v900
  %v902 = vrot.slane %v799, %v901
  %v903 = vmul.f32 %v894, %v898
  %v904 = vmul.f32 %v894, %v902
  %v905 = vadd.f32 %v891, %v903
  %v906 = vadd.f32 %v892, %v904
  %v907 = vadd.f32 %v863, %v905
  %v908 = vadd.f32 %v864, %v906
  %v909 = vmul.f32 %v907, 0.5
  %v910 = vmul.f32 %v908, 0.5
  %v911 = vmul.f32 %v907, 0.044715
  %v912 = vmul.f32 %v908, 0.044715
  %v913 = vmul.f32 %v911, %v907
  %v914 = vmul.f32 %v912, %v908
  %v915 = vmul.f32 %v913, %v907
  %v916 = vmul.f32 %v914, %v908
  %v917 = vadd.f32 %v907, %v915
  %v918 = vadd.f32 %v908, %v916
  %v919 = vmul.f32 %v917, 0.7978846
  %v920 = vmul.f32 %v918, 0.7978846
  %v921 = vtanh.pop %v919
  %v922 = vtanh.pop %v920
  %v923 = vadd.f32 %v921, 1.0
  %v924 = vadd.f32 %v922, 1.0
  %v925 = vmul.f32 %v909, %v923
  %v926 = vmul.f32 %v910, %v924
  %v927 = vld [vmem:[%s8] sm:$0xff]
  %v928 = vld [vmem:[%s8 + $0x8] sm:$0xff]
  %v929 = vld [vmem:[%s8 + $0x10] sm:$0xff]
  %v930 = vld [vmem:[%s8 + $0x18] sm:$0xff]
  %v931 = vld [vmem:[%s9] sm:$0x1]
  %v933 = vlaneseq
  %v934 = vshrl.u32 %v933, 7
  %v935 = vsub.s32 0, %v934
  %v936 = vrot.slane %v931, %v935
  %v940 = vrot.slane %v926, 7
  %vm941 = vcmask 1041409
  %v942 = vsel %vm941, %v940, %v925
  %v943 = vsel %vm378, %v942, 0
  %945 = vmatprep.subr.mxu0 0.0
  %946 = vmatpush1.msra.mxu0 0.0
  %947 = vmatprep.subr.mxu0 0.0
  %948 = vmatpush1.msra.mxu0 0.0
  %949 = vmatprep.subr.mxu0 0.0
  %950 = vmatpush1.msra.mxu0 0.0
  %951 = vmatprep.subr.mxu0 0.0
  %952 = vmatpush1.msra.mxu0 0.0
  %953 = vmatprep.subr.mxu0 0.0
  %954 = vmatpush1.msra.mxu0 0.0
  %955 = vmatprep.subr.mxu0 0.0
  %956 = vmatpush1.msra.mxu0 0.0
  %957 = vmatprep.subr.mxu0 0.0
  %958 = vmatpush1.msra.mxu0 0.0
  %959 = vmatprep.subr.mxu0 0.0
  %960 = vmatpush1.msra.mxu0 0.0
  %961 = vmatprep.subr.mxu0 0.0
  %962 = vmatpush1.msra.mxu0 0.0
  %963 = vmatprep.subr.mxu0 0.0
  %964 = vmatpush1.msra.mxu0 0.0
  %965 = vmatprep.subr.mxu0 0.0
  %966 = vmatpush1.msra.mxu0 0.0
  %967 = vmatprep.subr.mxu0 0.0
  %968 = vmatpush1.msra.mxu0 0.0
  %969 = vmatprep.subr.mxu0 0.0
  %970 = vmatpush1.msra.mxu0 %v930
  %971 = vmatprep.subr.mxu0 0.0
  %972 = vmatpush1.msra.mxu0 %v929
  %973 = vmatprep.subr.mxu0 0.0
  %974 = vmatpush1.msra.mxu0 %v928
  %975 = vmatprep.subr.mxu0 0.0
  %976 = vmatpush1.msra.mxu0 %v927
  %977 = vmatprep.subr.mxu0 0.0
  %978 = vmatpush2.msra.mxu0 0.0
  %979 = vmatprep.subr.mxu0 0.0
  %980 = vmatpush2.msra.mxu0 0.0
  %981 = vmatprep.subr.mxu0 0.0
  %982 = vmatpush2.msra.mxu0 0.0
  %983 = vmatprep.subr.mxu0 0.0
  %984 = vmatpush2.msra.mxu0 0.0
  %985 = vmatprep.subr.mxu0 0.0
  %986 = vmatpush2.msra.mxu0 0.0
  %987 = vmatprep.subr.mxu0 0.0
  %988 = vmatpush2.msra.mxu0 0.0
  %989 = vmatprep.subr.mxu0 0.0
  %990 = vmatpush2.msra.mxu0 0.0
  %991 = vmatprep.subr.mxu0 0.0
  %992 = vmatpush2.msra.mxu0 0.0
  %993 = vmatprep.subr.mxu0 0.0
  %994 = vmatpush2.msra.mxu0 0.0
  %995 = vmatprep.subr.mxu0 0.0
  %996 = vmatpush2.msra.mxu0 0.0
  %997 = vmatprep.subr.mxu0 0.0
  %998 = vmatpush2.msra.mxu0 0.0
  %999 = vmatprep.subr.mxu0 0.0
  %1000 = vmatpush2.msra.mxu0 0.0
  %1001 = vmatprep.subr.mxu0 0.0
  %1002 = vmatpush2.msra.mxu0 0.0
  %1003 = vmatprep.subr.mxu0 0.0
  %1004 = vmatpush2.msra.mxu0 0.0
  %1005 = vmatprep.subr.mxu0 0.0
  %1006 = vmatpush2.msra.mxu0 0.0
  %1007 = vmatprep.subr.mxu0 0.0
  %1008 = vmatpush2.msra.mxu0 0.0
  %1009 = vmatprep.mubr.f32.mxu0 0.0
  %1010 = vmatmul.mubr.f32.gmra.mxu0 %v943
  %v1011 = vpop.f32.mrf.mxu0
  %v1012 = vadd.f32 %v936, %v1011
  %v1013 = vpop.f32.mrf.mxu0
  %1014 = vdwg.mxu0
  %vm1015 = vcmask 25600
  %1016 = vst.msk [vmem:[%s10] sm:$0x3] %vm1015, %v1012
  %v1017 = vld [vmem:[%s8] sm:$0xff]
  %v1018 = vld [vmem:[%s8 + $0x8] sm:$0xff]
  %v1019 = vld [vmem:[%s8 + $0x10] sm:$0xff]
  %v1020 = vld [vmem:[%s8 + $0x18] sm:$0xff]
  %v1021 = vld [vmem:[%s9] sm:$0x1]
  %v1023 = vlaneseq
  %v1024 = vshrl.u32 %v1023, 7
  %v1025 = vsub.s32 0, %v1024
  %v1026 = vrot.slane %v1021, %v1025
  %v1028 = vrot.slane %v925, 1
  %v1029 = vsel %vm941, %v926, %v1028
  %v1030 = vsel %vm378, %v1029, 0
  %1032 = vmatprep.subr.mxu0 0.0
  %1033 = vmatpush1.msra.mxu0 0.0
  %1034 = vmatprep.subr.mxu0 0.0
  %1035 = vmatpush1.msra.mxu0 0.0
  %1036 = vmatprep.subr.mxu0 0.0
  %1037 = vmatpush1.msra.mxu0 0.0
  %1038 = vmatprep.subr.mxu0 0.0
  %1039 = vmatpush1.msra.mxu0 0.0
  %1040 = vmatprep.subr.mxu0 0.0
  %1041 = vmatpush1.msra.mxu0 0.0
  %1042 = vmatprep.subr.mxu0 0.0
  %1043 = vmatpush1.msra.mxu0 0.0
  %1044 = vmatprep.subr.mxu0 0.0
  %1045 = vmatpush1.msra.mxu0 0.0
  %1046 = vmatprep.subr.mxu0 0.0
  %1047 = vmatpush1.msra.mxu0 0.0
  %1048 = vmatprep.subr.mxu0 0.0
  %1049 = vmatpush1.msra.mxu0 0.0
  %1050 = vmatprep.subr.mxu0 0.0
  %1051 = vmatpush1.msra.mxu0 0.0
  %1052 = vmatprep.subr.mxu0 0.0
  %1053 = vmatpush1.msra.mxu0 0.0
  %1054 = vmatprep.subr.mxu0 0.0
  %1055 = vmatpush1.msra.mxu0 0.0
  %1056 = vmatprep.subr.mxu0 0.0
  %1057 = vmatpush1.msra.mxu0 %v1020
  %1058 = vmatprep.subr.mxu0 0.0
  %1059 = vmatpush1.msra.mxu0 %v1019
  %1060 = vmatprep.subr.mxu0 0.0
  %1061 = vmatpush1.msra.mxu0 %v1018
  %1062 = vmatprep.subr.mxu0 0.0
  %1063 = vmatpush1.msra.mxu0 %v1017
  %1064 = vmatprep.subr.mxu0 0.0
  %1065 = vmatpush2.msra.mxu0 0.0
  %1066 = vmatprep.subr.mxu0 0.0
  %1067 = vmatpush2.msra.mxu0 0.0
  %1068 = vmatprep.subr.mxu0 0.0
  %1069 = vmatpush2.msra.mxu0 0.0
  %1070 = vmatprep.subr.mxu0 0.0
  %1071 = vmatpush2.msra.mxu0 0.0
  %1072 = vmatprep.subr.mxu0 0.0
  %1073 = vmatpush2.msra.mxu0 0.0
  %1074 = vmatprep.subr.mxu0 0.0
  %1075 = vmatpush2.msra.mxu0 0.0
  %1076 = vmatprep.subr.mxu0 0.0
  %1077 = vmatpush2.msra.mxu0 0.0
  %1078 = vmatprep.subr.mxu0 0.0
  %1079 = vmatpush2.msra.mxu0 0.0
  %1080 = vmatprep.subr.mxu0 0.0
  %1081 = vmatpush2.msra.mxu0 0.0
  %1082 = vmatprep.subr.mxu0 0.0
  %1083 = vmatpush2.msra.mxu0 0.0
  %1084 = vmatprep.subr.mxu0 0.0
  %1085 = vmatpush2.msra.mxu0 0.0
  %1086 = vmatprep.subr.mxu0 0.0
  %1087 = vmatpush2.msra.mxu0 0.0
  %1088 = vmatprep.subr.mxu0 0.0
  %1089 = vmatpush2.msra.mxu0 0.0
  %1090 = vmatprep.subr.mxu0 0.0
  %1091 = vmatpush2.msra.mxu0 0.0
  %1092 = vmatprep.subr.mxu0 0.0
  %1093 = vmatpush2.msra.mxu0 0.0
  %1094 = vmatprep.subr.mxu0 0.0
  %1095 = vmatpush2.msra.mxu0 0.0
  %1096 = vmatprep.mubr.f32.mxu0 0.0
  %1097 = vmatmul.mubr.f32.gmra.mxu0 %v1030
  %v1098 = vpop.f32.mrf.mxu0
  %v1099 = vadd.f32 %v1026, %v1098
  %v1100 = vpop.f32.mrf.mxu0
  %1101 = vdwg.mxu0
  %1103 = vrot.lane.b32.xlu0 %v1099, 4
  %v1104 = vpop.permute.xlu0 %1103
  %vm1106 = vcmask 58400
  %1107 = vst.msk [vmem:[%s10] sm:$0x3] %vm1106, %v1104
  %v1108 = vld [vmem:[%s8] sm:$0xff]
  %v1109 = vld [vmem:[%s8 + $0x8] sm:$0xff]
  %v1110 = vld [vmem:[%s8 + $0x10] sm:$0xff]
  %v1111 = vld [vmem:[%s8 + $0x18] sm:$0xff]
  %v1112 = vld [vmem:[%s9] sm:$0x1]
  %v1114 = vlaneseq
  %v1115 = vshrl.u32 %v1114, 7
  %v1116 = vsub.s32 0, %v1115
  %v1117 = vrot.slane %v1112, %v1116
  %v1119 = vrot.slane %v925, 2
  %v1120 = vrot.slane %v926, 1
  %v1121 = vsel %vm941, %v1120, %v1119
  %v1122 = vsel %vm378, %v1121, 0
  %1124 = vmatprep.subr.mxu0 0.0
  %1125 = vmatpush1.msra.mxu0 0.0
  %1126 = vmatprep.subr.mxu0 0.0
  %1127 = vmatpush1.msra.mxu0 0.0
  %1128 = vmatprep.subr.mxu0 0.0
  %1129 = vmatpush1.msra.mxu0 0.0
  %1130 = vmatprep.subr.mxu0 0.0
  %1131 = vmatpush1.msra.mxu0 0.0
  %1132 = vmatprep.subr.mxu0 0.0
  %1133 = vmatpush1.msra.mxu0 0.0
  %1134 = vmatprep.subr.mxu0 0.0
  %1135 = vmatpush1.msra.mxu0 0.0
  %1136 = vmatprep.subr.mxu0 0.0
  %1137 = vmatpush1.msra.mxu0 0.0
  %1138 = vmatprep.subr.mxu0 0.0
  %1139 = vmatpush1.msra.mxu0 0.0
  %1140 = vmatprep.subr.mxu0 0.0
  %1141 = vmatpush1.msra.mxu0 0.0
  %1142 = vmatprep.subr.mxu0 0.0
  %1143 = vmatpush1.msra.mxu0 0.0
  %1144 = vmatprep.subr.mxu0 0.0
  %1145 = vmatpush1.msra.mxu0 0.0
  %1146 = vmatprep.subr.mxu0 0.0
  %1147 = vmatpush1.msra.mxu0 0.0
  %1148 = vmatprep.subr.mxu0 0.0
  %1149 = vmatpush1.msra.mxu0 %v1111
  %1150 = vmatprep.subr.mxu0 0.0
  %1151 = vmatpush1.msra.mxu0 %v1110
  %1152 = vmatprep.subr.mxu0 0.0
  %1153 = vmatpush1.msra.mxu0 %v1109
  %1154 = vmatprep.subr.mxu0 0.0
  %1155 = vmatpush1.msra.mxu0 %v1108
  %1156 = vmatprep.subr.mxu0 0.0
  %1157 = vmatpush2.msra.mxu0 0.0
  %1158 = vmatprep.subr.mxu0 0.0
  %1159 = vmatpush2.msra.mxu0 0.0
  %1160 = vmatprep.subr.mxu0 0.0
  %1161 = vmatpush2.msra.mxu0 0.0
  %1162 = vmatprep.subr.mxu0 0.0
  %1163 = vmatpush2.msra.mxu0 0.0
  %1164 = vmatprep.subr.mxu0 0.0
  %1165 = vmatpush2.msra.mxu0 0.0
  %1166 = vmatprep.subr.mxu0 0.0
  %1167 = vmatpush2.msra.mxu0 0.0
  %1168 = vmatprep.subr.mxu0 0.0
  %1169 = vmatpush2.msra.mxu0 0.0
  %1170 = vmatprep.subr.mxu0 0.0
  %1171 = vmatpush2.msra.mxu0 0.0
  %1172 = vmatprep.subr.mxu0 0.0
  %1173 = vmatpush2.msra.mxu0 0.0
  %1174 = vmatprep.subr.mxu0 0.0
  %1175 = vmatpush2.msra.mxu0 0.0
  %1176 = vmatprep.subr.mxu0 0.0
  %1177 = vmatpush2.msra.mxu0 0.0
  %1178 = vmatprep.subr.mxu0 0.0
  %1179 = vmatpush2.msra.mxu0 0.0
  %1180 = vmatprep.subr.mxu0 0.0
  %1181 = vmatpush2.msra.mxu0 0.0
  %1182 = vmatprep.subr.mxu0 0.0
  %1183 = vmatpush2.msra.mxu0 0.0
  %1184 = vmatprep.subr.mxu0 0.0
  %1185 = vmatpush2.msra.mxu0 0.0
  %1186 = vmatprep.subr.mxu0 0.0
  %1187 = vmatpush2.msra.mxu0 0.0
  %1188 = vmatprep.mubr.f32.mxu0 0.0
  %1189 = vmatmul.mubr.f32.gmra.mxu0 %v1122
  %v1190 = vpop.f32.mrf.mxu0
  %v1191 = vadd.f32 %v1117, %v1190
  %v1192 = vpop.f32.mrf.mxu0
  %1193 = vdwg.mxu0
  %1195 = vrot.lane.b32.xlu0 %v1191, 8
  %v1196 = vpop.permute.xlu0 %1195
  %vm1198 = vcmask 91200
  %1199 = vst.msk [vmem:[%s10] sm:$0x3] %vm1198, %v1196
  %v1200 = vld [vmem:[%s8] sm:$0xff]
  %v1201 = vld [vmem:[%s8 + $0x8] sm:$0xff]
  %v1202 = vld [vmem:[%s8 + $0x10] sm:$0xff]
  %v1203 = vld [vmem:[%s8 + $0x18] sm:$0xff]
  %v1204 = vld [vmem:[%s9] sm:$0x1]
  %v1206 = vlaneseq
  %v1207 = vshrl.u32 %v1206, 7
  %v1208 = vsub.s32 0, %v1207
  %v1209 = vrot.slane %v1204, %v1208
  %v1211 = vrot.slane %v925, 3
  %v1212 = vrot.slane %v926, 2
  %v1213 = vsel %vm941, %v1212, %v1211
  %v1214 = vsel %vm378, %v1213, 0
  %1216 = vmatprep.subr.mxu0 0.0
  %1217 = vmatpush1.msra.mxu0 0.0
  %1218 = vmatprep.subr.mxu0 0.0
  %1219 = vmatpush1.msra.mxu0 0.0
  %1220 = vmatprep.subr.mxu0 0.0
  %1221 = vmatpush1.msra.mxu0 0.0
  %1222 = vmatprep.subr.mxu0 0.0
  %1223 = vmatpush1.msra.mxu0 0.0
  %1224 = vmatprep.subr.mxu0 0.0
  %1225 = vmatpush1.msra.mxu0 0.0
  %1226 = vmatprep.subr.mxu0 0.0
  %1227 = vmatpush1.msra.mxu0 0.0
  %1228 = vmatprep.subr.mxu0 0.0
  %1229 = vmatpush1.msra.mxu0 0.0
  %1230 = vmatprep.subr.mxu0 0.0
  %1231 = vmatpush1.msra.mxu0 0.0
  %1232 = vmatprep.subr.mxu0 0.0
  %1233 = vmatpush1.msra.mxu0 0.0
  %1234 = vmatprep.subr.mxu0 0.0
  %1235 = vmatpush1.msra.mxu0 0.0
  %1236 = vmatprep.subr.mxu0 0.0
  %1237 = vmatpush1.msra.mxu0 0.0
  %1238 = vmatprep.subr.mxu0 0.0
  %1239 = vmatpush1.msra.mxu0 0.0
  %1240 = vmatprep.subr.mxu0 0.0
  %1241 = vmatpush1.msra.mxu0 %v1203
  %1242 = vmatprep.subr.mxu0 0.0
  %1243 = vmatpush1.msra.mxu0 %v1202
  %1244 = vmatprep.subr.mxu0 0.0
  %1245 = vmatpush1.msra.mxu0 %v1201
  %1246 = vmatprep.subr.mxu0 0.0
  %1247 = vmatpush1.msra.mxu0 %v1200
  %1248 = vmatprep.subr.mxu0 0.0
  %1249 = vmatpush2.msra.mxu0 0.0
  %1250 = vmatprep.subr.mxu0 0.0
  %1251 = vmatpush2.msra.mxu0 0.0
  %1252 = vmatprep.subr.mxu0 0.0
  %1253 = vmatpush2.msra.mxu0 0.0
  %1254 = vmatprep.subr.mxu0 0.0
  %1255 = vmatpush2.msra.mxu0 0.0
  %1256 = vmatprep.subr.mxu0 0.0
  %1257 = vmatpush2.msra.mxu0 0.0
  %1258 = vmatprep.subr.mxu0 0.0
  %1259 = vmatpush2.msra.mxu0 0.0
  %1260 = vmatprep.subr.mxu0 0.0
  %1261 = vmatpush2.msra.mxu0 0.0
  %1262 = vmatprep.subr.mxu0 0.0
  %1263 = vmatpush2.msra.mxu0 0.0
  %1264 = vmatprep.subr.mxu0 0.0
  %1265 = vmatpush2.msra.mxu0 0.0
  %1266 = vmatprep.subr.mxu0 0.0
  %1267 = vmatpush2.msra.mxu0 0.0
  %1268 = vmatprep.subr.mxu0 0.0
  %1269 = vmatpush2.msra.mxu0 0.0
  %1270 = vmatprep.subr.mxu0 0.0
  %1271 = vmatpush2.msra.mxu0 0.0
  %1272 = vmatprep.subr.mxu0 0.0
  %1273 = vmatpush2.msra.mxu0 0.0
  %1274 = vmatprep.subr.mxu0 0.0
  %1275 = vmatpush2.msra.mxu0 0.0
  %1276 = vmatprep.subr.mxu0 0.0
  %1277 = vmatpush2.msra.mxu0 0.0
  %1278 = vmatprep.subr.mxu0 0.0
  %1279 = vmatpush2.msra.mxu0 0.0
  %1280 = vmatprep.mubr.f32.mxu0 0.0
  %1281 = vmatmul.mubr.f32.gmra.mxu0 %v1214
  %v1282 = vpop.f32.mrf.mxu0
  %v1283 = vadd.f32 %v1209, %v1282
  %v1284 = vpop.f32.mrf.mxu0
  %1285 = vdwg.mxu0
  %1287 = vrot.lane.b32.xlu0 %v1283, 12
  %v1288 = vpop.permute.xlu0 %1287
  %vm1290 = vcmask 124000
  %1291 = vst.msk [vmem:[%s10] sm:$0x3] %vm1290, %v1288
  %v1292 = vld [vmem:[%s8] sm:$0xff]
  %v1293 = vld [vmem:[%s8 + $0x8] sm:$0xff]
  %v1294 = vld [vmem:[%s8 + $0x10] sm:$0xff]
  %v1295 = vld [vmem:[%s8 + $0x18] sm:$0xff]
  %v1296 = vld [vmem:[%s9] sm:$0x1]
  %v1298 = vlaneseq
  %v1299 = vshrl.u32 %v1298, 7
  %v1300 = vsub.s32 0, %v1299
  %v1301 = vrot.slane %v1296, %v1300
  %v1303 = vrot.slane %v925, 4
  %v1304 = vrot.slane %v926, 3
  %v1305 = vsel %vm941, %v1304, %v1303
  %v1306 = vsel %vm378, %v1305, 0
  %1308 = vmatprep.subr.mxu0 0.0
  %1309 = vmatpush1.msra.mxu0 0.0
  %1310 = vmatprep.subr.mxu0 0.0
  %1311 = vmatpush1.msra.mxu0 0.0
  %1312 = vmatprep.subr.mxu0 0.0
  %1313 = vmatpush1.msra.mxu0 0.0
  %1314 = vmatprep.subr.mxu0 0.0
  %1315 = vmatpush1.msra.mxu0 0.0
  %1316 = vmatprep.subr.mxu0 0.0
  %1317 = vmatpush1.msra.mxu0 0.0
  %1318 = vmatprep.subr.mxu0 0.0
  %1319 = vmatpush1.msra.mxu0 0.0
  %1320 = vmatprep.subr.mxu0 0.0
  %1321 = vmatpush1.msra.mxu0 0.0
  %1322 = vmatprep.subr.mxu0 0.0
  %1323 = vmatpush1.msra.mxu0 0.0
  %1324 = vmatprep.subr.mxu0 0.0
  %1325 = vmatpush1.msra.mxu0 0.0
  %1326 = vmatprep.subr.mxu0 0.0
  %1327 = vmatpush1.msra.mxu0 0.0
  %1328 = vmatprep.subr.mxu0 0.0
  %1329 = vmatpush1.msra.mxu0 0.0
  %1330 = vmatprep.subr.mxu0 0.0
  %1331 = vmatpush1.msra.mxu0 0.0
  %1332 = vmatprep.subr.mxu0 0.0
  %1333 = vmatpush1.msra.mxu0 %v1295
  %1334 = vmatprep.subr.mxu0 0.0
  %1335 = vmatpush1.msra.mxu0 %v1294
  %1336 = vmatprep.subr.mxu0 0.0
  %1337 = vmatpush1.msra.mxu0 %v1293
  %1338 = vmatprep.subr.mxu0 0.0
  %1339 = vmatpush1.msra.mxu0 %v1292
  %1340 = vmatprep.subr.mxu0 0.0
  %1341 = vmatpush2.msra.mxu0 0.0
  %1342 = vmatprep.subr.mxu0 0.0
  %1343 = vmatpush2.msra.mxu0 0.0
  %1344 = vmatprep.subr.mxu0 0.0
  %1345 = vmatpush2.msra.mxu0 0.0
  %1346 = vmatprep.subr.mxu0 0.0
  %1347 = vmatpush2.msra.mxu0 0.0
  %1348 = vmatprep.subr.mxu0 0.0
  %1349 = vmatpush2.msra.mxu0 0.0
  %1350 = vmatprep.subr.mxu0 0.0
  %1351 = vmatpush2.msra.mxu0 0.0
  %1352 = vmatprep.subr.mxu0 0.0
  %1353 = vmatpush2.msra.mxu0 0.0
  %1354 = vmatprep.subr.mxu0 0.0
  %1355 = vmatpush2.msra.mxu0 0.0
  %1356 = vmatprep.subr.mxu0 0.0
  %1357 = vmatpush2.msra.mxu0 0.0
  %1358 = vmatprep.subr.mxu0 0.0
  %1359 = vmatpush2.msra.mxu0 0.0
  %1360 = vmatprep.subr.mxu0 0.0
  %1361 = vmatpush2.msra.mxu0 0.0
  %1362 = vmatprep.subr.mxu0 0.0
  %1363 = vmatpush2.msra.mxu0 0.0
  %1364 = vmatprep.subr.mxu0 0.0
  %1365 = vmatpush2.msra.mxu0 0.0
  %1366 = vmatprep.subr.mxu0 0.0
  %1367 = vmatpush2.msra.mxu0 0.0
  %1368 = vmatprep.subr.mxu0 0.0
  %1369 = vmatpush2.msra.mxu0 0.0
  %1370 = vmatprep.subr.mxu0 0.0
  %1371 = vmatpush2.msra.mxu0 0.0
  %1372 = vmatprep.mubr.f32.mxu0 0.0
  %1373 = vmatmul.mubr.f32.gmra.mxu0 %v1306
  %v1374 = vpop.f32.mrf.mxu0
  %v1375 = vadd.f32 %v1301, %v1374
  %v1376 = vpop.f32.mrf.mxu0
  %1377 = vdwg.mxu0
  %1379 = vrot.lane.b32.xlu0 %v1375, 16
  %v1380 = vpop.permute.xlu0 %1379
  %vm1382 = vcmask 156800
  %1383 = vst.msk [vmem:[%s10] sm:$0x3] %vm1382, %v1380
  %v1384 = vld [vmem:[%s8] sm:$0xff]
  %v1385 = vld [vmem:[%s8 + $0x8] sm:$0xff]
  %v1386 = vld [vmem:[%s8 + $0x10] sm:$0xff]
  %v1387 = vld [vmem:[%s8 + $0x18] sm:$0xff]
  %v1388 = vld [vmem:[%s9] sm:$0x1]
  %v1390 = vlaneseq
  %v1391 = vshrl.u32 %v1390, 7
  %v1392 = vsub.s32 0, %v1391
  %v1393 = vrot.slane %v1388, %v1392
  %v1395 = vrot.slane %v925, 5
  %v1396 = vrot.slane %v926, 4
  %v1397 = vsel %vm941, %v1396, %v1395
  %v1398 = vsel %vm378, %v1397, 0
  %1400 = vmatprep.subr.mxu0 0.0
  %1401 = vmatpush1.msra.mxu0 0.0
  %1402 = vmatprep.subr.mxu0 0.0
  %1403 = vmatpush1.msra.mxu0 0.0
  %1404 = vmatprep.subr.mxu0 0.0
  %1405 = vmatpush1.msra.mxu0 0.0
  %1406 = vmatprep.subr.mxu0 0.0
  %1407 = vmatpush1.msra.mxu0 0.0
  %1408 = vmatprep.subr.mxu0 0.0
  %1409 = vmatpush1.msra.mxu0 0.0
  %1410 = vmatprep.subr.mxu0 0.0
  %1411 = vmatpush1.msra.mxu0 0.0
  %1412 = vmatprep.subr.mxu0 0.0
  %1413 = vmatpush1.msra.mxu0 0.0
  %1414 = vmatprep.subr.mxu0 0.0
  %1415 = vmatpush1.msra.mxu0 0.0
  %1416 = vmatprep.subr.mxu0 0.0
  %1417 = vmatpush1.msra.mxu0 0.0
  %1418 = vmatprep.subr.mxu0 0.0
  %1419 = vmatpush1.msra.mxu0 0.0
  %1420 = vmatprep.subr.mxu0 0.0
  %1421 = vmatpush1.msra.mxu0 0.0
  %1422 = vmatprep.subr.mxu0 0.0
  %1423 = vmatpush1.msra.mxu0 0.0
  %1424 = vmatprep.subr.mxu0 0.0
  %1425 = vmatpush1.msra.mxu0 %v1387
  %1426 = vmatprep.subr.mxu0 0.0
  %1427 = vmatpush1.msra.mxu0 %v1386
  %1428 = vmatprep.subr.mxu0 0.0
  %1429 = vmatpush1.msra.mxu0 %v1385
  %1430 = vmatprep.subr.mxu0 0.0
  %1431 = vmatpush1.msra.mxu0 %v1384
  %1432 = vmatprep.subr.mxu0 0.0
  %1433 = vmatpush2.msra.mxu0 0.0
  %1434 = vmatprep.subr.mxu0 0.0
  %1435 = vmatpush2.msra.mxu0 0.0
  %1436 = vmatprep.subr.mxu0 0.0
  %1437 = vmatpush2.msra.mxu0 0.0
  %1438 = vmatprep.subr.mxu0 0.0
  %1439 = vmatpush2.msra.mxu0 0.0
  %1440 = vmatprep.subr.mxu0 0.0
  %1441 = vmatpush2.msra.mxu0 0.0
  %1442 = vmatprep.subr.mxu0 0.0
  %1443 = vmatpush2.msra.mxu0 0.0
  %1444 = vmatprep.subr.mxu0 0.0
  %1445 = vmatpush2.msra.mxu0 0.0
  %1446 = vmatprep.subr.mxu0 0.0
  %1447 = vmatpush2.msra.mxu0 0.0
  %1448 = vmatprep.subr.mxu0 0.0
  %1449 = vmatpush2.msra.mxu0 0.0
  %1450 = vmatprep.subr.mxu0 0.0
  %1451 = vmatpush2.msra.mxu0 0.0
  %1452 = vmatprep.subr.mxu0 0.0
  %1453 = vmatpush2.msra.mxu0 0.0
  %1454 = vmatprep.subr.mxu0 0.0
  %1455 = vmatpush2.msra.mxu0 0.0
  %1456 = vmatprep.subr.mxu0 0.0
  %1457 = vmatpush2.msra.mxu0 0.0
  %1458 = vmatprep.subr.mxu0 0.0
  %1459 = vmatpush2.msra.mxu0 0.0
  %1460 = vmatprep.subr.mxu0 0.0
  %1461 = vmatpush2.msra.mxu0 0.0
  %1462 = vmatprep.subr.mxu0 0.0
  %1463 = vmatpush2.msra.mxu0 0.0
  %1464 = vmatprep.mubr.f32.mxu0 0.0
  %1465 = vmatmul.mubr.f32.gmra.mxu0 %v1398
  %v1466 = vpop.f32.mrf.mxu0
  %v1467 = vadd.f32 %v1393, %v1466
  %v1468 = vpop.f32.mrf.mxu0
  %1469 = vdwg.mxu0
  %1471 = vrot.lane.b32.xlu0 %v1467, 20
  %v1472 = vpop.permute.xlu0 %1471
  %vm1474 = vcmask 189600
  %1475 = vst.msk [vmem:[%s10] sm:$0x3] %vm1474, %v1472
  %v1476 = vld [vmem:[%s8] sm:$0xff]
  %v1477 = vld [vmem:[%s8 + $0x8] sm:$0xff]
  %v1478 = vld [vmem:[%s8 + $0x10] sm:$0xff]
  %v1479 = vld [vmem:[%s8 + $0x18] sm:$0xff]
  %v1480 = vld [vmem:[%s9] sm:$0x1]
  %v1482 = vlaneseq
  %v1483 = vshrl.u32 %v1482, 7
  %v1484 = vsub.s32 0, %v1483
  %v1485 = vrot.slane %v1480, %v1484
  %v1487 = vrot.slane %v925, 6
  %v1488 = vrot.slane %v926, 5
  %v1489 = vsel %vm941, %v1488, %v1487
  %v1490 = vsel %vm378, %v1489, 0
  %1492 = vmatprep.subr.mxu0 0.0
  %1493 = vmatpush1.msra.mxu0 0.0
  %1494 = vmatprep.subr.mxu0 0.0
  %1495 = vmatpush1.msra.mxu0 0.0
  %1496 = vmatprep.subr.mxu0 0.0
  %1497 = vmatpush1.msra.mxu0 0.0
  %1498 = vmatprep.subr.mxu0 0.0
  %1499 = vmatpush1.msra.mxu0 0.0
  %1500 = vmatprep.subr.mxu0 0.0
  %1501 = vmatpush1.msra.mxu0 0.0
  %1502 = vmatprep.subr.mxu0 0.0
  %1503 = vmatpush1.msra.mxu0 0.0
  %1504 = vmatprep.subr.mxu0 0.0
  %1505 = vmatpush1.msra.mxu0 0.0
  %1506 = vmatprep.subr.mxu0 0.0
  %1507 = vmatpush1.msra.mxu0 0.0
  %1508 = vmatprep.subr.mxu0 0.0
  %1509 = vmatpush1.msra.mxu0 0.0
  %1510 = vmatprep.subr.mxu0 0.0
  %1511 = vmatpush1.msra.mxu0 0.0
  %1512 = vmatprep.subr.mxu0 0.0
  %1513 = vmatpush1.msra.mxu0 0.0
  %1514 = vmatprep.subr.mxu0 0.0
  %1515 = vmatpush1.msra.mxu0 0.0
  %1516 = vmatprep.subr.mxu0 0.0
  %1517 = vmatpush1.msra.mxu0 %v1479
  %1518 = vmatprep.subr.mxu0 0.0
  %1519 = vmatpush1.msra.mxu0 %v1478
  %1520 = vmatprep.subr.mxu0 0.0
  %1521 = vmatpush1.msra.mxu0 %v1477
  %1522 = vmatprep.subr.mxu0 0.0
  %1523 = vmatpush1.msra.mxu0 %v1476
  %1524 = vmatprep.subr.mxu0 0.0
  %1525 = vmatpush2.msra.mxu0 0.0
  %1526 = vmatprep.subr.mxu0 0.0
  %1527 = vmatpush2.msra.mxu0 0.0
  %1528 = vmatprep.subr.mxu0 0.0
  %1529 = vmatpush2.msra.mxu0 0.0
  %1530 = vmatprep.subr.mxu0 0.0
  %1531 = vmatpush2.msra.mxu0 0.0
  %1532 = vmatprep.subr.mxu0 0.0
  %1533 = vmatpush2.msra.mxu0 0.0
  %1534 = vmatprep.subr.mxu0 0.0
  %1535 = vmatpush2.msra.mxu0 0.0
  %1536 = vmatprep.subr.mxu0 0.0
  %1537 = vmatpush2.msra.mxu0 0.0
  %1538 = vmatprep.subr.mxu0 0.0
  %1539 = vmatpush2.msra.mxu0 0.0
  %1540 = vmatprep.subr.mxu0 0.0
  %1541 = vmatpush2.msra.mxu0 0.0
  %1542 = vmatprep.subr.mxu0 0.0
  %1543 = vmatpush2.msra.mxu0 0.0
  %1544 = vmatprep.subr.mxu0 0.0
  %1545 = vmatpush2.msra.mxu0 0.0
  %1546 = vmatprep.subr.mxu0 0.0
  %1547 = vmatpush2.msra.mxu0 0.0
  %1548 = vmatprep.subr.mxu0 0.0
  %1549 = vmatpush2.msra.mxu0 0.0
  %1550 = vmatprep.subr.mxu0 0.0
  %1551 = vmatpush2.msra.mxu0 0.0
  %1552 = vmatprep.subr.mxu0 0.0
  %1553 = vmatpush2.msra.mxu0 0.0
  %1554 = vmatprep.subr.mxu0 0.0
  %1555 = vmatpush2.msra.mxu0 0.0
  %1556 = vmatprep.mubr.f32.mxu0 0.0
  %1557 = vmatmul.mubr.f32.gmra.mxu0 %v1490
  %v1558 = vpop.f32.mrf.mxu0
  %v1559 = vadd.f32 %v1485, %v1558
  %v1560 = vpop.f32.mrf.mxu0
  %1561 = vdwg.mxu0
  %1563 = vrot.lane.b32.xlu0 %v1559, 24
  %v1564 = vpop.permute.xlu0 %1563
  %vm1566 = vcmask 222400
  %1567 = vst.msk [vmem:[%s10] sm:$0x3] %vm1566, %v1564
  %v1568 = vld [vmem:[%s8] sm:$0xff]
  %v1569 = vld [vmem:[%s8 + $0x8] sm:$0xff]
  %v1570 = vld [vmem:[%s8 + $0x10] sm:$0xff]
  %v1571 = vld [vmem:[%s8 + $0x18] sm:$0xff]
  %v1572 = vld [vmem:[%s9] sm:$0x1]
  %v1574 = vlaneseq
  %v1575 = vshrl.u32 %v1574, 7
  %v1576 = vsub.s32 0, %v1575
  %v1577 = vrot.slane %v1572, %v1576
  %v1579 = vrot.slane %v925, 7
  %v1580 = vrot.slane %v926, 6
  %v1581 = vsel %vm941, %v1580, %v1579
  %v1582 = vsel %vm378, %v1581, 0
  %1584 = vmatprep.subr.mxu0 0.0
  %1585 = vmatpush1.msra.mxu0 0.0
  %1586 = vmatprep.subr.mxu0 0.0
  %1587 = vmatpush1.msra.mxu0 0.0
  %1588 = vmatprep.subr.mxu0 0.0
  %1589 = vmatpush1.msra.mxu0 0.0
  %1590 = vmatprep.subr.mxu0 0.0
  %1591 = vmatpush1.msra.mxu0 0.0
  %1592 = vmatprep.subr.mxu0 0.0
  %1593 = vmatpush1.msra.mxu0 0.0
  %1594 = vmatprep.subr.mxu0 0.0
  %1595 = vmatpush1.msra.mxu0 0.0
  %1596 = vmatprep.subr.mxu0 0.0
  %1597 = vmatpush1.msra.mxu0 0.0
  %1598 = vmatprep.subr.mxu0 0.0
  %1599 = vmatpush1.msra.mxu0 0.0
  %1600 = vmatprep.subr.mxu0 0.0
  %1601 = vmatpush1.msra.mxu0 0.0
  %1602 = vmatprep.subr.mxu0 0.0
  %1603 = vmatpush1.msra.mxu0 0.0
  %1604 = vmatprep.subr.mxu0 0.0
  %1605 = vmatpush1.msra.mxu0 0.0
  %1606 = vmatprep.subr.mxu0 0.0
  %1607 = vmatpush1.msra.mxu0 0.0
  %1608 = vmatprep.subr.mxu0 0.0
  %1609 = vmatpush1.msra.mxu0 %v1571
  %1610 = vmatprep.subr.mxu0 0.0
  %1611 = vmatpush1.msra.mxu0 %v1570
  %1612 = vmatprep.subr.mxu0 0.0
  %1613 = vmatpush1.msra.mxu0 %v1569
  %1614 = vmatprep.subr.mxu0 0.0
  %1615 = vmatpush1.msra.mxu0 %v1568
  %1616 = vmatprep.subr.mxu0 0.0
  %1617 = vmatpush2.msra.mxu0 0.0
  %1618 = vmatprep.subr.mxu0 0.0
  %1619 = vmatpush2.msra.mxu0 0.0
  %1620 = vmatprep.subr.mxu0 0.0
  %1621 = vmatpush2.msra.mxu0 0.0
  %1622 = vmatprep.subr.mxu0 0.0
  %1623 = vmatpush2.msra.mxu0 0.0
  %1624 = vmatprep.subr.mxu0 0.0
  %1625 = vmatpush2.msra.mxu0 0.0
  %1626 = vmatprep.subr.mxu0 0.0
  %1627 = vmatpush2.msra.mxu0 0.0
  %1628 = vmatprep.subr.mxu0 0.0
  %1629 = vmatpush2.msra.mxu0 0.0
  %1630 = vmatprep.subr.mxu0 0.0
  %1631 = vmatpush2.msra.mxu0 0.0
  %1632 = vmatprep.subr.mxu0 0.0
  %1633 = vmatpush2.msra.mxu0 0.0
  %1634 = vmatprep.subr.mxu0 0.0
  %1635 = vmatpush2.msra.mxu0 0.0
  %1636 = vmatprep.subr.mxu0 0.0
  %1637 = vmatpush2.msra.mxu0 0.0
  %1638 = vmatprep.subr.mxu0 0.0
  %1639 = vmatpush2.msra.mxu0 0.0
  %1640 = vmatprep.subr.mxu0 0.0
  %1641 = vmatpush2.msra.mxu0 0.0
  %1642 = vmatprep.subr.mxu0 0.0
  %1643 = vmatpush2.msra.mxu0 0.0
  %1644 = vmatprep.subr.mxu0 0.0
  %1645 = vmatpush2.msra.mxu0 0.0
  %1646 = vmatprep.subr.mxu0 0.0
  %1647 = vmatpush2.msra.mxu0 0.0
  %1648 = vmatprep.mubr.f32.mxu0 0.0
  %1649 = vmatmul.mubr.f32.gmra.mxu0 %v1582
  %v1650 = vpop.f32.mrf.mxu0
  %v1651 = vadd.f32 %v1577, %v1650
  %v1652 = vpop.f32.mrf.mxu0
  %1653 = vdwg.mxu0
  %1655 = vrot.lane.b32.xlu0 %v1651, 28
  %v1656 = vpop.permute.xlu0 %1655
  %vm1658 = vcmask 255200
  %1659 = vst.msk [vmem:[%s10] sm:$0x3] %vm1658, %v1656
  // Predicated region
  $region42: #{spacetime_forward.1} parent=0 // pred_check
    _
  $region43: #{spacetime_forward.1} parent=0 // pred_check_branch
    %1661 = sbr.rel (0) target = $region45
  $region44: #{spacetime_forward.1} parent=0 // pred_region
    _
  $region45: #{spacetime_forward.1} parent=0 // pred_fallthru
    _
  // Predicated region
  $region46: #{spacetime_forward.1} parent=0 // pred_check
    _
  $region47: #{spacetime_forward.1} parent=0 // pred_check_branch
    %1663 = sbr.rel (0) target = $region49
  $region48: #{spacetime_forward.1} parent=0 // pred_region
    _
  $region49: #{spacetime_forward.1} parent=0 // pred_fallthru
    _

</llo_original>
